<compile_context>
chip_gen: v6e
topology: v6e:2x2x1
jax: 0.10.0
libtpu: 0.0.40
codegen_flags: <defaults>
</compile_context>

<pallas_src>
import functools

import jax
import jax.numpy as jnp
from jax import lax
from jax.experimental import pallas as pl
from jax.experimental.pallas import tpu as pltpu


# ---------------------------------------------------------------------------
# In-kernel helpers
# ---------------------------------------------------------------------------
def _zero_margins(buf, top, bottom, left, right):
    """Zero the pad margins of a (Hp, Wp, C) VMEM scratch ref (static widths)."""
    Hp, Wp, C = buf.shape
    if top > 0:
        buf[0:top, :, :] = jnp.zeros((top, Wp, C), buf.dtype)
    if bottom > 0:
        buf[Hp - bottom:Hp, :, :] = jnp.zeros((bottom, Wp, C), buf.dtype)
    if left > 0:
        buf[:, 0:left, :] = jnp.zeros((Hp, left, C), buf.dtype)
    if right > 0:
        buf[:, Wp - right:Wp, :] = jnp.zeros((Hp, right, C), buf.dtype)


def _conv3x3_rows(xp_ref, w_ref, H, W):
    """3x3 'same' conv over a zero-padded bf16 scratch ref.

    xp_ref: (H+2, W+2, C) bf16, w_ref: (3, 3*C, Co) bf16 (kernel-row major,
    inner order (kw, ci)).  Computed as 3 accumulated (H*W, 3*C) @ (3*C, Co)
    MXU matmuls (one per kernel row) -> f32 (H*W, Co).
    Avoids the (H, W, 9*C) im2col temporary of the previous version.
    """
    C = xp_ref.shape[-1]
    acc = None
    for dy in range(3):
        taps = [xp_ref[dy:dy + H, dx:dx + W, :] for dx in range(3)]
        patch = jnp.concatenate(taps, axis=-1).reshape(H * W, 3 * C)
        part = jnp.dot(patch, w_ref[dy], preferred_element_type=jnp.float32)
        acc = part if acc is None else acc + part
    return acc


# ---------------------------------------------------------------------------
# Fused kernel: up-conv + pad + concat + Conv3x3+ReLU + Conv3x3+ReLU
# ---------------------------------------------------------------------------
def _fused_up_kernel(H, W, H1, W1, offY, offX,
                     x1_ref, x2_ref, wu_ref, bu_ref,
                     w1a_ref, w1b_ref, b1_ref, w2_ref, b2_ref,
                     o_ref, x1p, x2p, hp):
    # x1_ref: (1, H1, W1, Cin) bf16  (low-res input to the transposed conv)
    # x2_ref: (1, H,  W,  Ch ) bf16  (skip connection)
    Cin = x1_ref.shape[-1]
    Ch = x2_ref.shape[-1]
    Co = o_ref.shape[-1]
    Hu, Wu = 2 * H1, 2 * W1

    # Zero only the pad margins (interiors are fully rewritten below).  Done
    # every grid step so correctness holds even if the axis is core-sharded.
    _zero_margins(x2p, 1, 1, 1, 1)
    _zero_margins(hp, 1, 1, 1, 1)
    _zero_margins(x1p, 1 + offY, (H + 2) - (1 + offY + Hu),
                  1 + offX, (W + 2) - (1 + offX + Wu))

    # Skip connection into its padded scratch.
    x2p[1:H + 1, 1:W + 1, :] = x2_ref[0]

    # ConvTranspose2d(k=2, s=2): kernel==stride => no overlap, so it is one
    # (H1*W1, Cin) x (Cin, 4*Ch) matmul.  Depth-to-space stays in VMEM:
    # a row-major reshape of each (ki, kj) lane group gives the interleave.
    y = jnp.dot(x1_ref[0].reshape(H1 * W1, Cin), wu_ref[...],
                preferred_element_type=jnp.float32)
    y = y + bu_ref[0][None, :]                               # (H1*W1, 4*Ch) f32
    sub = [y[:, k * Ch:(k + 1) * Ch].reshape(H1, W1, Ch) for k in range(4)]
    rows0 = jnp.stack([sub[0], sub[1]], axis=2).reshape(H1, Wu, Ch)  # even rows
    rows1 = jnp.stack([sub[2], sub[3]], axis=2).reshape(H1, Wu, Ch)  # odd rows
    up_full = jnp.stack([rows0, rows1], axis=1).reshape(Hu, Wu, Ch)
    x1p[1 + offY:1 + offY + Hu, 1 + offX:1 + offX + Wu, :] = \
        up_full.astype(x1p.dtype)

    # conv1 over the virtual concat([x2, up(x1)]): split weights, one f32 acc.
    acc1 = (_conv3x3_rows(x2p, w1a_ref, H, W)
            + _conv3x3_rows(x1p, w1b_ref, H, W))
    h = jnp.maximum(acc1 + b1_ref[0][None, :], 0.0)          # (H*W, Co) f32
    hp[1:H + 1, 1:W + 1, :] = h.reshape(H, W, Co).astype(hp.dtype)

    # conv2 + ReLU straight to the (bf16) output block.
    acc2 = _conv3x3_rows(hp, w2_ref, H, W)
    out = jnp.maximum(acc2 + b2_ref[0][None, :], 0.0)
    o_ref[0] = out.reshape(H, W, Co).astype(o_ref.dtype)


# ---------------------------------------------------------------------------
# Up.forward equivalent.  x1_nchw: [B, Cin, H1, W1], x2_nchw: [B, Cin//2, H2, W2]
# ---------------------------------------------------------------------------
def up_forward(params, x1_nchw, x2_nchw):
    # NCHW -> NHWC, bf16 activations (f32 MXU accumulation inside the kernel).
    x1 = jnp.transpose(x1_nchw, (0, 2, 3, 1)).astype(jnp.bfloat16)
    x2 = jnp.transpose(x2_nchw, (0, 2, 3, 1)).astype(jnp.bfloat16)
    B, H1, W1, Cin = x1.shape
    _, H, W, Ch = x2.shape
    assert Cin == 2 * Ch, (Cin, Ch)
    Co = params["c1_w"].shape[0]
    Hu, Wu = 2 * H1, 2 * W1
    diffY, diffX = H - Hu, W - Wu
    # VMEM refs have no runtime bounds check -> refuse negative padding.
    assert diffY >= 0 and diffX >= 0, "up(x1) larger than x2 is not supported"
    offY, offX = diffY // 2, diffX // 2

    # ConvTranspose2d weights: [ci, co, ki, kj] -> [ci, (ki, kj, co)] flat.
    wu = jnp.transpose(params["up_w"], (0, 2, 3, 1)).reshape(Cin, 4 * Ch)
    wu = wu.astype(jnp.bfloat16)
    bu = jnp.tile(params["up_b"], 4).reshape(1, 4 * Ch).astype(jnp.float32)

    # Conv weights in kernel-row-major im2col order: [co, ci, kh, kw] ->
    # [kh, kw, ci, co] -> [3, 3*cin, Co].  conv1 is split along its input
    # channels ([:Ch] sees x2, [Ch:] sees up(x1)) so the concat never exists.
    def conv_w(w, cin):
        return jnp.transpose(w, (2, 3, 1, 0)).reshape(3, 3 * cin, -1).astype(jnp.bfloat16)

    w1a = conv_w(params["c1_w"][:, :Ch], Ch)
    w1b = conv_w(params["c1_w"][:, Ch:], Ch)
    w2m = conv_w(params["c2_w"], Co)
    b1m = params["c1_b"].reshape(1, Co).astype(jnp.float32)
    b2m = params["c2_b"].reshape(1, Co).astype(jnp.float32)

    kern = functools.partial(_fused_up_kernel, H, W, H1, W1, offY, offX)

    # TODO(synk): add row-strip tiling with a 2-row halo (grid=(B, H//strip))
    #             for large decoder feature maps -- needed under v7x's 64 MiB
    #             VMEM and to shard across its 2 TensorCores when B is small.
    # TODO(synk): if Co < 128, present a lane-dense (1, H, W*Co) output block
    #             to avoid masked partial stores.
    out = pl.pallas_call(
        kern,
        out_shape=jax.ShapeDtypeStruct((B, H, W, Co), jnp.bfloat16),
        grid=(B,),
        in_specs=[
            pl.BlockSpec((1, H1, W1, Cin), lambda b: (b, 0, 0, 0)),
            pl.BlockSpec((1, H, W, Ch), lambda b: (b, 0, 0, 0)),
            pl.BlockSpec((Cin, 4 * Ch), lambda b: (0, 0)),
            pl.BlockSpec((1, 4 * Ch), lambda b: (0, 0)),
            pl.BlockSpec((3, 3 * Ch, Co), lambda b: (0, 0, 0)),
            pl.BlockSpec((3, 3 * Ch, Co), lambda b: (0, 0, 0)),
            pl.BlockSpec((1, Co), lambda b: (0, 0)),
            pl.BlockSpec((3, 3 * Co, Co), lambda b: (0, 0, 0)),
            pl.BlockSpec((1, Co), lambda b: (0, 0)),
        ],
        out_specs=pl.BlockSpec((1, H, W, Co), lambda b: (b, 0, 0, 0)),
        scratch_shapes=[
            pltpu.VMEM((H + 2, W + 2, Ch), jnp.bfloat16),   # padded up(x1)
            pltpu.VMEM((H + 2, W + 2, Ch), jnp.bfloat16),   # padded x2
            pltpu.VMEM((H + 2, W + 2, Co), jnp.bfloat16),   # padded conv1 out
        ],
        compiler_params=pltpu.CompilerParams(
            dimension_semantics=("parallel",),
            # <= ~40 MiB keeps headroom on v7x (64 MiB physical per core).
            vmem_limit_bytes=40 * 1024 * 1024),
    )(x1, x2, wu, bu, w1a, w1b, b1m, w2m, b2m)

    return jnp.transpose(out, (0, 3, 1, 2))   # back to NCHW (bf16)


# ---------------------------------------------------------------------------
# Pure-JAX f32 reference (for correctness checking only).
# ---------------------------------------------------------------------------
def up_forward_reference(params, x1_nchw, x2_nchw):
    x1 = jnp.transpose(x1_nchw, (0, 2, 3, 1))
    x2 = jnp.transpose(x2_nchw, (0, 2, 3, 1))
    B, H1, W1, Cin = x1.shape
    Ch = Cin // 2
    y = jnp.einsum("bijc,cokl->bikjlo", x1, params["up_w"])
    y = y.reshape(B, 2 * H1, 2 * W1, Ch) + params["up_b"]
    dY = x2.shape[1] - y.shape[1]
    dX = x2.shape[2] - y.shape[2]
    y = jnp.pad(y, ((0, 0), (dY // 2, dY - dY // 2),
                    (dX // 2, dX - dX // 2), (0, 0)))
    x = jnp.concatenate([x2, y], axis=-1)

    def conv(v, w, b):
        return jax.nn.relu(lax.conv_general_dilated(
            v, jnp.transpose(w, (2, 3, 1, 0)), (1, 1), "SAME",
            dimension_numbers=("NHWC", "HWIO", "NHWC")) + b)

    x = conv(x, params["c1_w"], params["c1_b"])
    x = conv(x, params["c2_w"], params["c2_b"])
    return jnp.transpose(x, (0, 3, 1, 2))


def init_params(key, in_channels, out_channels):
    k = jax.random.split(key, 6)
    half = in_channels // 2
    scale = 0.1
    return {
        # ConvTranspose2d(in_channels, in_channels//2, k=2, s=2)
        "up_w": scale * jax.random.normal(k[0], (in_channels, half, 2, 2), jnp.float32),
        "up_b": scale * jax.random.normal(k[1], (half,), jnp.float32),
        # Conv2d(in_channels, out_channels, 3, padding=1)
        "c1_w": scale * jax.random.normal(k[2], (out_channels, in_channels, 3, 3), jnp.float32),
        "c1_b": scale * jax.random.normal(k[3], (out_channels,), jnp.float32),
        # Conv2d(out_channels, out_channels, 3, padding=1)
        "c2_w": scale * jax.random.normal(k[4], (out_channels, out_channels, 3, 3), jnp.float32),
        "c2_b": scale * jax.random.normal(k[5], (out_channels,), jnp.float32),
    }


if __name__ == "__main__":
    B = 2
    in_channels = 8
    out_channels = 4
    H1 = W1 = 8          # low-res feature map fed to the up-conv
    H2 = W2 = 16         # skip-connection feature map

    key = jax.random.PRNGKey(0)
    kx1, kx2, kp = jax.random.split(key, 3)
    x1 = jax.random.normal(kx1, (B, in_channels, H1, W1), jnp.float32)
    x2 = jax.random.normal(kx2, (B, in_channels // 2, H2, W2), jnp.float32)
    params = init_params(kp, in_channels, out_channels)

    out = jax.jit(up_forward)(params, x1, x2)
    out = jax.block_until_ready(out)
    assert out.shape == (B, out_channels, H2, W2), out.shape
    out_f = out.astype(jnp.float32)
    assert bool(jnp.all(jnp.isfinite(out_f)))

    ref = up_forward_reference(params, x1, x2)
    abs_err = jnp.abs(out_f - ref)
    tol = 5e-2 + 5e-2 * jnp.abs(ref)          # abs + relative (bf16 path)
    assert bool(jnp.all(abs_err <= tol)), (
        f"max abs err {float(jnp.max(abs_err))}, "
        f"max |ref| {float(jnp.max(jnp.abs(ref)))}")

    print("KERNEL_OK")
</pallas_src>

<mosaic_0001>
module attributes {stable_mosaic.version = 11 : i64} {
  func.func @_fused_up_kernel(%arg0: i32, %arg1: memref<1x8x8x8xbf16, #tpu.memory_space<vmem>>, %arg2: memref<1x16x16x4xbf16, #tpu.memory_space<vmem>>, %arg3: memref<8x16xbf16, #tpu.memory_space<vmem>>, %arg4: memref<1x16xf32, #tpu.memory_space<vmem>>, %arg5: memref<3x12x4xbf16, #tpu.memory_space<vmem>>, %arg6: memref<3x12x4xbf16, #tpu.memory_space<vmem>>, %arg7: memref<1x4xf32, #tpu.memory_space<vmem>>, %arg8: memref<3x12x4xbf16, #tpu.memory_space<vmem>>, %arg9: memref<1x4xf32, #tpu.memory_space<vmem>>, %arg10: memref<1x16x16x4xbf16, #tpu.memory_space<vmem>>, %arg11: memref<18x18x4xbf16, #tpu.memory_space<vmem>>, %arg12: memref<18x18x4xbf16, #tpu.memory_space<vmem>>, %arg13: memref<18x18x4xbf16, #tpu.memory_space<vmem>>) attributes {dimension_semantics = [#tpu.dimension_semantics<parallel>], iteration_bounds = array<i64: 2>, scalar_prefetch = 0 : i64, scratch_operands = 3 : i64, tpu.core_type = #tpu.core_type<tc>, window_params = [{transform_indices = @transform_0, window_bounds = array<i64: 1, 8, 8, 8>}, {transform_indices = @transform_1, window_bounds = array<i64: 1, 16, 16, 4>}, {pipeline_mode = #tpu.pipeline_mode<synchronous>, transform_indices = @transform_2, window_bounds = array<i64: 8, 16>}, {pipeline_mode = #tpu.pipeline_mode<synchronous>, transform_indices = @transform_3, window_bounds = array<i64: 1, 16>}, {pipeline_mode = #tpu.pipeline_mode<synchronous>, transform_indices = @transform_4, window_bounds = array<i64: 3, 12, 4>}, {pipeline_mode = #tpu.pipeline_mode<synchronous>, transform_indices = @transform_5, window_bounds = array<i64: 3, 12, 4>}, {pipeline_mode = #tpu.pipeline_mode<synchronous>, transform_indices = @transform_6, window_bounds = array<i64: 1, 4>}, {pipeline_mode = #tpu.pipeline_mode<synchronous>, transform_indices = @transform_7, window_bounds = array<i64: 3, 12, 4>}, {pipeline_mode = #tpu.pipeline_mode<synchronous>, transform_indices = @transform_8, window_bounds = array<i64: 1, 4>}, {transform_indices = @transform_9, window_bounds = array<i64: 1, 16, 16, 4>}]} {
    %cst = arith.constant 0.000000e+00 : bf16
    %0 = vector.broadcast %cst : bf16 to vector<1x18x4xbf16>
    %c0 = arith.constant 0 : index
    %c0_0 = arith.constant 0 : index
    %c0_1 = arith.constant 0 : index
    %1 = vector.load %arg12[%c0, %c0_0, %c0_1] : memref<18x18x4xbf16, #tpu.memory_space<vmem>>, vector<1x18x4xbf16>
    tpu.vector_store %arg12[%c0, %c0_0, %c0_1], %0 {strides = array<i32>} : memref<18x18x4xbf16, #tpu.memory_space<vmem>>, vector<1x18x4xbf16>,
    %cst_2 = arith.constant 0.000000e+00 : bf16
    %2 = vector.broadcast %cst_2 : bf16 to vector<1x18x4xbf16>
    %c17 = arith.constant 17 : index
    %c0_3 = arith.constant 0 : index
    %c0_4 = arith.constant 0 : index
    %3 = vector.load %arg12[%c17, %c0_3, %c0_4] : memref<18x18x4xbf16, #tpu.memory_space<vmem>>, vector<1x18x4xbf16>
    tpu.vector_store %arg12[%c17, %c0_3, %c0_4], %2 {strides = array<i32>} : memref<18x18x4xbf16, #tpu.memory_space<vmem>>, vector<1x18x4xbf16>,
    %cst_5 = arith.constant 0.000000e+00 : bf16
    %4 = vector.broadcast %cst_5 : bf16 to vector<18x1x4xbf16>
    %c0_6 = arith.constant 0 : index
    %c0_7 = arith.constant 0 : index
    %c0_8 = arith.constant 0 : index
    %5 = vector.load %arg12[%c0_6, %c0_7, %c0_8] : memref<18x18x4xbf16, #tpu.memory_space<vmem>>, vector<18x1x4xbf16>
    tpu.vector_store %arg12[%c0_6, %c0_7, %c0_8], %4 {strides = array<i32>} : memref<18x18x4xbf16, #tpu.memory_space<vmem>>, vector<18x1x4xbf16>,
    %cst_9 = arith.constant 0.000000e+00 : bf16
    %6 = vector.broadcast %cst_9 : bf16 to vector<18x1x4xbf16>
    %c0_10 = arith.constant 0 : index
    %c17_11 = arith.constant 17 : index
    %c0_12 = arith.constant 0 : index
    %7 = vector.load %arg12[%c0_10, %c17_11, %c0_12] : memref<18x18x4xbf16, #tpu.memory_space<vmem>>, vector<18x1x4xbf16>
    tpu.vector_store %arg12[%c0_10, %c17_11, %c0_12], %6 {strides = array<i32>} : memref<18x18x4xbf16, #tpu.memory_space<vmem>>, vector<18x1x4xbf16>,
    %cst_13 = arith.constant 0.000000e+00 : bf16
    %8 = vector.broadcast %cst_13 : bf16 to vector<1x18x4xbf16>
    %c0_14 = arith.constant 0 : index
    %c0_15 = arith.constant 0 : index
    %c0_16 = arith.constant 0 : index
    %9 = vector.load %arg13[%c0_14, %c0_15, %c0_16] : memref<18x18x4xbf16, #tpu.memory_space<vmem>>, vector<1x18x4xbf16>
    tpu.vector_store %arg13[%c0_14, %c0_15, %c0_16], %8 {strides = array<i32>} : memref<18x18x4xbf16, #tpu.memory_space<vmem>>, vector<1x18x4xbf16>,
    %cst_17 = arith.constant 0.000000e+00 : bf16
    %10 = vector.broadcast %cst_17 : bf16 to vector<1x18x4xbf16>
    %c17_18 = arith.constant 17 : index
    %c0_19 = arith.constant 0 : index
    %c0_20 = arith.constant 0 : index
    %11 = vector.load %arg13[%c17_18, %c0_19, %c0_20] : memref<18x18x4xbf16, #tpu.memory_space<vmem>>, vector<1x18x4xbf16>
    tpu.vector_store %arg13[%c17_18, %c0_19, %c0_20], %10 {strides = array<i32>} : memref<18x18x4xbf16, #tpu.memory_space<vmem>>, vector<1x18x4xbf16>,
    %cst_21 = arith.constant 0.000000e+00 : bf16
    %12 = vector.broadcast %cst_21 : bf16 to vector<18x1x4xbf16>
    %c0_22 = arith.constant 0 : index
    %c0_23 = arith.constant 0 : index
    %c0_24 = arith.constant 0 : index
    %13 = vector.load %arg13[%c0_22, %c0_23, %c0_24] : memref<18x18x4xbf16, #tpu.memory_space<vmem>>, vector<18x1x4xbf16>
    tpu.vector_store %arg13[%c0_22, %c0_23, %c0_24], %12 {strides = array<i32>} : memref<18x18x4xbf16, #tpu.memory_space<vmem>>, vector<18x1x4xbf16>,
    %cst_25 = arith.constant 0.000000e+00 : bf16
    %14 = vector.broadcast %cst_25 : bf16 to vector<18x1x4xbf16>
    %c0_26 = arith.constant 0 : index
    %c17_27 = arith.constant 17 : index
    %c0_28 = arith.constant 0 : index
    %15 = vector.load %arg13[%c0_26, %c17_27, %c0_28] : memref<18x18x4xbf16, #tpu.memory_space<vmem>>, vector<18x1x4xbf16>
    tpu.vector_store %arg13[%c0_26, %c17_27, %c0_28], %14 {strides = array<i32>} : memref<18x18x4xbf16, #tpu.memory_space<vmem>>, vector<18x1x4xbf16>,
    %cst_29 = arith.constant 0.000000e+00 : bf16
    %16 = vector.broadcast %cst_29 : bf16 to vector<1x18x4xbf16>
    %c0_30 = arith.constant 0 : index
    %c0_31 = arith.constant 0 : index
    %c0_32 = arith.constant 0 : index
    %17 = vector.load %arg11[%c0_30, %c0_31, %c0_32] : memref<18x18x4xbf16, #tpu.memory_space<vmem>>, vector<1x18x4xbf16>
    tpu.vector_store %arg11[%c0_30, %c0_31, %c0_32], %16 {strides = array<i32>} : memref<18x18x4xbf16, #tpu.memory_space<vmem>>, vector<1x18x4xbf16>,
    %cst_33 = arith.constant 0.000000e+00 : bf16
    %18 = vector.broadcast %cst_33 : bf16 to vector<1x18x4xbf16>
    %c17_34 = arith.constant 17 : index
    %c0_35 = arith.constant 0 : index
    %c0_36 = arith.constant 0 : index
    %19 = vector.load %arg11[%c17_34, %c0_35, %c0_36] : memref<18x18x4xbf16, #tpu.memory_space<vmem>>, vector<1x18x4xbf16>
    tpu.vector_store %arg11[%c17_34, %c0_35, %c0_36], %18 {strides = array<i32>} : memref<18x18x4xbf16, #tpu.memory_space<vmem>>, vector<1x18x4xbf16>,
    %cst_37 = arith.constant 0.000000e+00 : bf16
    %20 = vector.broadcast %cst_37 : bf16 to vector<18x1x4xbf16>
    %c0_38 = arith.constant 0 : index
    %c0_39 = arith.constant 0 : index
    %c0_40 = arith.constant 0 : index
    %21 = vector.load %arg11[%c0_38, %c0_39, %c0_40] : memref<18x18x4xbf16, #tpu.memory_space<vmem>>, vector<18x1x4xbf16>
    tpu.vector_store %arg11[%c0_38, %c0_39, %c0_40], %20 {strides = array<i32>} : memref<18x18x4xbf16, #tpu.memory_space<vmem>>, vector<18x1x4xbf16>,
    %cst_41 = arith.constant 0.000000e+00 : bf16
    %22 = vector.broadcast %cst_41 : bf16 to vector<18x1x4xbf16>
    %c0_42 = arith.constant 0 : index
    %c17_43 = arith.constant 17 : index
    %c0_44 = arith.constant 0 : index
    %23 = vector.load %arg11[%c0_42, %c17_43, %c0_44] : memref<18x18x4xbf16, #tpu.memory_space<vmem>>, vector<18x1x4xbf16>
    tpu.vector_store %arg11[%c0_42, %c17_43, %c0_44], %22 {strides = array<i32>} : memref<18x18x4xbf16, #tpu.memory_space<vmem>>, vector<18x1x4xbf16>,
    %c0_45 = arith.constant 0 : index
    %c0_46 = arith.constant 0 : index
    %c0_47 = arith.constant 0 : index
    %c0_48 = arith.constant 0 : index
    %24 = vector.load %arg2[%c0_45, %c0_46, %c0_47, %c0_48] : memref<1x16x16x4xbf16, #tpu.memory_space<vmem>>, vector<1x16x16x4xbf16>
    %25 = vector.shape_cast %24 : vector<1x16x16x4xbf16> to vector<16x16x4xbf16>
    %c1 = arith.constant 1 : index
    %c1_49 = arith.constant 1 : index
    %c0_50 = arith.constant 0 : index
    %26 = vector.load %arg12[%c1, %c1_49, %c0_50] : memref<18x18x4xbf16, #tpu.memory_space<vmem>>, vector<16x16x4xbf16>
    tpu.vector_store %arg12[%c1, %c1_49, %c0_50], %25 {strides = array<i32>} : memref<18x18x4xbf16, #tpu.memory_space<vmem>>, vector<16x16x4xbf16>,
    %c0_51 = arith.constant 0 : index
    %c0_52 = arith.constant 0 : index
    %c0_53 = arith.constant 0 : index
    %c0_54 = arith.constant 0 : index
    %27 = vector.load %arg1[%c0_51, %c0_52, %c0_53, %c0_54] : memref<1x8x8x8xbf16, #tpu.memory_space<vmem>>, vector<1x8x8x8xbf16>
    %28 = vector.shape_cast %27 : vector<1x8x8x8xbf16> to vector<8x8x8xbf16>
    %29 = vector.shape_cast %28 : vector<8x8x8xbf16> to vector<64x8xbf16>
    %c0_55 = arith.constant 0 : index
    %c0_56 = arith.constant 0 : index
    %30 = vector.load %arg3[%c0_55, %c0_56] : memref<8x16xbf16, #tpu.memory_space<vmem>>, vector<8x16xbf16>
    %cst_57 = arith.constant dense<0.000000e+00> : vector<64x16xf32>
    %31 = tpu.matmul %29, %30, %cst_57 {dimension_numbers = #tpu.dot_dimension_numbers<[1], [0], [0], [1], [0, 0, 1, 1], [], []>} : vector<64x8xbf16>, vector<8x16xbf16>, vector<64x16xf32> -> vector<64x16xf32>
    %c0_58 = arith.constant 0 : index
    %c0_59 = arith.constant 0 : index
    %32 = vector.load %arg4[%c0_58, %c0_59] : memref<1x16xf32, #tpu.memory_space<vmem>>, vector<1x16xf32>
    %33 = vector.shape_cast %32 : vector<1x16xf32> to vector<16xf32>
    %34 = vector.shape_cast %33 : vector<16xf32> to vector<1x16xf32>
    %35 = vector.broadcast %34 : vector<1x16xf32> to vector<64x16xf32>
    %36 = arith.addf %31, %35 : vector<64x16xf32>
    %37 = vector.extract_strided_slice %36 {offsets = [0, 0], sizes = [64, 4], strides = [1, 1]} : vector<64x16xf32> to vector<64x4xf32>
    %38 = vector.shape_cast %37 : vector<64x4xf32> to vector<8x8x4xf32>
    %39 = vector.extract_strided_slice %36 {offsets = [0, 4], sizes = [64, 4], strides = [1, 1]} : vector<64x16xf32> to vector<64x4xf32>
    %40 = vector.shape_cast %39 : vector<64x4xf32> to vector<8x8x4xf32>
    %41 = vector.extract_strided_slice %36 {offsets = [0, 8], sizes = [64, 4], strides = [1, 1]} : vector<64x16xf32> to vector<64x4xf32>
    %42 = vector.shape_cast %41 : vector<64x4xf32> to vector<8x8x4xf32>
    %43 = vector.extract_strided_slice %36 {offsets = [0, 12], sizes = [64, 4], strides = [1, 1]} : vector<64x16xf32> to vector<64x4xf32>
    %44 = vector.shape_cast %43 : vector<64x4xf32> to vector<8x8x4xf32>
    %45 = vector.shape_cast %38 : vector<8x8x4xf32> to vector<8x8x1x4xf32>
    %46 = vector.shape_cast %40 : vector<8x8x4xf32> to vector<8x8x1x4xf32>
    %47 = tpu.concatenate %45, %46 in 2 : vector<8x8x1x4xf32>, vector<8x8x1x4xf32> -> vector<8x8x2x4xf32>
    %48 = vector.shape_cast %47 : vector<8x8x2x4xf32> to vector<8x16x4xf32>
    %49 = vector.shape_cast %42 : vector<8x8x4xf32> to vector<8x8x1x4xf32>
    %50 = vector.shape_cast %44 : vector<8x8x4xf32> to vector<8x8x1x4xf32>
    %51 = tpu.concatenate %49, %50 in 2 : vector<8x8x1x4xf32>, vector<8x8x1x4xf32> -> vector<8x8x2x4xf32>
    %52 = vector.shape_cast %51 : vector<8x8x2x4xf32> to vector<8x16x4xf32>
    %53 = vector.shape_cast %48 : vector<8x16x4xf32> to vector<8x1x16x4xf32>
    %54 = vector.shape_cast %52 : vector<8x16x4xf32> to vector<8x1x16x4xf32>
    %55 = tpu.concatenate %53, %54 in 1 : vector<8x1x16x4xf32>, vector<8x1x16x4xf32> -> vector<8x2x16x4xf32>
    %56 = vector.shape_cast %55 : vector<8x2x16x4xf32> to vector<16x16x4xf32>
    %57 = arith.truncf %56 : vector<16x16x4xf32> to vector<16x16x4xbf16>
    %c1_60 = arith.constant 1 : index
    %c1_61 = arith.constant 1 : index
    %c0_62 = arith.constant 0 : index
    %58 = vector.load %arg11[%c1_60, %c1_61, %c0_62] : memref<18x18x4xbf16, #tpu.memory_space<vmem>>, vector<16x16x4xbf16>
    tpu.vector_store %arg11[%c1_60, %c1_61, %c0_62], %57 {strides = array<i32>} : memref<18x18x4xbf16, #tpu.memory_space<vmem>>, vector<16x16x4xbf16>,
    %c0_63 = arith.constant 0 : index
    %c0_64 = arith.constant 0 : index
    %c0_65 = arith.constant 0 : index
    %59 = vector.load %arg12[%c0_63, %c0_64, %c0_65] : memref<18x18x4xbf16, #tpu.memory_space<vmem>>, vector<16x16x4xbf16>
    %c0_66 = arith.constant 0 : index
    %c1_67 = arith.constant 1 : index
    %c0_68 = arith.constant 0 : index
    %60 = vector.load %arg12[%c0_66, %c1_67, %c0_68] : memref<18x18x4xbf16, #tpu.memory_space<vmem>>, vector<16x16x4xbf16>
    %c0_69 = arith.constant 0 : index
    %c2 = arith.constant 2 : index
    %c0_70 = arith.constant 0 : index
    %61 = vector.load %arg12[%c0_69, %c2, %c0_70] : memref<18x18x4xbf16, #tpu.memory_space<vmem>>, vector<16x16x4xbf16>
    %62 = tpu.concatenate %59, %60, %61 in 2 : vector<16x16x4xbf16>, vector<16x16x4xbf16>, vector<16x16x4xbf16> -> vector<16x16x12xbf16>
    %63 = vector.shape_cast %62 : vector<16x16x12xbf16> to vector<256x12xbf16>
    %c0_71 = arith.constant 0 : index
    %c0_72 = arith.constant 0 : index
    %c0_73 = arith.constant 0 : index
    %64 = vector.load %arg5[%c0_71, %c0_72, %c0_73] : memref<3x12x4xbf16, #tpu.memory_space<vmem>>, vector<1x12x4xbf16>
    %65 = vector.shape_cast %64 : vector<1x12x4xbf16> to vector<12x4xbf16>
    %cst_74 = arith.constant dense<0.000000e+00> : vector<256x4xf32>
    %66 = tpu.matmul %63, %65, %cst_74 {dimension_numbers = #tpu.dot_dimension_numbers<[1], [0], [0], [1], [0, 0, 1, 1], [], []>} : vector<256x12xbf16>, vector<12x4xbf16>, vector<256x4xf32> -> vector<256x4xf32>
    %c1_75 = arith.constant 1 : index
    %c0_76 = arith.constant 0 : index
    %c0_77 = arith.constant 0 : index
    %67 = vector.load %arg12[%c1_75, %c0_76, %c0_77] : memref<18x18x4xbf16, #tpu.memory_space<vmem>>, vector<16x16x4xbf16>
    %c1_78 = arith.constant 1 : index
    %c1_79 = arith.constant 1 : index
    %c0_80 = arith.constant 0 : index
    %68 = vector.load %arg12[%c1_78, %c1_79, %c0_80] : memref<18x18x4xbf16, #tpu.memory_space<vmem>>, vector<16x16x4xbf16>
    %c1_81 = arith.constant 1 : index
    %c2_82 = arith.constant 2 : index
    %c0_83 = arith.constant 0 : index
    %69 = vector.load %arg12[%c1_81, %c2_82, %c0_83] : memref<18x18x4xbf16, #tpu.memory_space<vmem>>, vector<16x16x4xbf16>
    %70 = tpu.concatenate %67, %68, %69 in 2 : vector<16x16x4xbf16>, vector<16x16x4xbf16>, vector<16x16x4xbf16> -> vector<16x16x12xbf16>
    %71 = vector.shape_cast %70 : vector<16x16x12xbf16> to vector<256x12xbf16>
    %c1_84 = arith.constant 1 : index
    %c0_85 = arith.constant 0 : index
    %c0_86 = arith.constant 0 : index
    %72 = vector.load %arg5[%c1_84, %c0_85, %c0_86] : memref<3x12x4xbf16, #tpu.memory_space<vmem>>, vector<1x12x4xbf16>
    %73 = vector.shape_cast %72 : vector<1x12x4xbf16> to vector<12x4xbf16>
    %cst_87 = arith.constant dense<0.000000e+00> : vector<256x4xf32>
    %74 = tpu.matmul %71, %73, %cst_87 {dimension_numbers = #tpu.dot_dimension_numbers<[1], [0], [0], [1], [0, 0, 1, 1], [], []>} : vector<256x12xbf16>, vector<12x4xbf16>, vector<256x4xf32> -> vector<256x4xf32>
    %75 = arith.addf %66, %74 : vector<256x4xf32>
    %c2_88 = arith.constant 2 : index
    %c0_89 = arith.constant 0 : index
    %c0_90 = arith.constant 0 : index
    %76 = vector.load %arg12[%c2_88, %c0_89, %c0_90] : memref<18x18x4xbf16, #tpu.memory_space<vmem>>, vector<16x16x4xbf16>
    %c2_91 = arith.constant 2 : index
    %c1_92 = arith.constant 1 : index
    %c0_93 = arith.constant 0 : index
    %77 = vector.load %arg12[%c2_91, %c1_92, %c0_93] : memref<18x18x4xbf16, #tpu.memory_space<vmem>>, vector<16x16x4xbf16>
    %c2_94 = arith.constant 2 : index
    %c2_95 = arith.constant 2 : index
    %c0_96 = arith.constant 0 : index
    %78 = vector.load %arg12[%c2_94, %c2_95, %c0_96] : memref<18x18x4xbf16, #tpu.memory_space<vmem>>, vector<16x16x4xbf16>
    %79 = tpu.concatenate %76, %77, %78 in 2 : vector<16x16x4xbf16>, vector<16x16x4xbf16>, vector<16x16x4xbf16> -> vector<16x16x12xbf16>
    %80 = vector.shape_cast %79 : vector<16x16x12xbf16> to vector<256x12xbf16>
    %c2_97 = arith.constant 2 : index
    %c0_98 = arith.constant 0 : index
    %c0_99 = arith.constant 0 : index
    %81 = vector.load %arg5[%c2_97, %c0_98, %c0_99] : memref<3x12x4xbf16, #tpu.memory_space<vmem>>, vector<1x12x4xbf16>
    %82 = vector.shape_cast %81 : vector<1x12x4xbf16> to vector<12x4xbf16>
    %cst_100 = arith.constant dense<0.000000e+00> : vector<256x4xf32>
    %83 = tpu.matmul %80, %82, %cst_100 {dimension_numbers = #tpu.dot_dimension_numbers<[1], [0], [0], [1], [0, 0, 1, 1], [], []>} : vector<256x12xbf16>, vector<12x4xbf16>, vector<256x4xf32> -> vector<256x4xf32>
    %84 = arith.addf %75, %83 : vector<256x4xf32>
    %c0_101 = arith.constant 0 : index
    %c0_102 = arith.constant 0 : index
    %c0_103 = arith.constant 0 : index
    %85 = vector.load %arg11[%c0_101, %c0_102, %c0_103] : memref<18x18x4xbf16, #tpu.memory_space<vmem>>, vector<16x16x4xbf16>
    %c0_104 = arith.constant 0 : index
    %c1_105 = arith.constant 1 : index
    %c0_106 = arith.constant 0 : index
    %86 = vector.load %arg11[%c0_104, %c1_105, %c0_106] : memref<18x18x4xbf16, #tpu.memory_space<vmem>>, vector<16x16x4xbf16>
    %c0_107 = arith.constant 0 : index
    %c2_108 = arith.constant 2 : index
    %c0_109 = arith.constant 0 : index
    %87 = vector.load %arg11[%c0_107, %c2_108, %c0_109] : memref<18x18x4xbf16, #tpu.memory_space<vmem>>, vector<16x16x4xbf16>
    %88 = tpu.concatenate %85, %86, %87 in 2 : vector<16x16x4xbf16>, vector<16x16x4xbf16>, vector<16x16x4xbf16> -> vector<16x16x12xbf16>
    %89 = vector.shape_cast %88 : vector<16x16x12xbf16> to vector<256x12xbf16>
    %c0_110 = arith.constant 0 : index
    %c0_111 = arith.constant 0 : index
    %c0_112 = arith.constant 0 : index
    %90 = vector.load %arg6[%c0_110, %c0_111, %c0_112] : memref<3x12x4xbf16, #tpu.memory_space<vmem>>, vector<1x12x4xbf16>
    %91 = vector.shape_cast %90 : vector<1x12x4xbf16> to vector<12x4xbf16>
    %cst_113 = arith.constant dense<0.000000e+00> : vector<256x4xf32>
    %92 = tpu.matmul %89, %91, %cst_113 {dimension_numbers = #tpu.dot_dimension_numbers<[1], [0], [0], [1], [0, 0, 1, 1], [], []>} : vector<256x12xbf16>, vector<12x4xbf16>, vector<256x4xf32> -> vector<256x4xf32>
    %c1_114 = arith.constant 1 : index
    %c0_115 = arith.constant 0 : index
    %c0_116 = arith.constant 0 : index
    %93 = vector.load %arg11[%c1_114, %c0_115, %c0_116] : memref<18x18x4xbf16, #tpu.memory_space<vmem>>, vector<16x16x4xbf16>
    %c1_117 = arith.constant 1 : index
    %c1_118 = arith.constant 1 : index
    %c0_119 = arith.constant 0 : index
    %94 = vector.load %arg11[%c1_117, %c1_118, %c0_119] : memref<18x18x4xbf16, #tpu.memory_space<vmem>>, vector<16x16x4xbf16>
    %c1_120 = arith.constant 1 : index
    %c2_121 = arith.constant 2 : index
    %c0_122 = arith.constant 0 : index
    %95 = vector.load %arg11[%c1_120, %c2_121, %c0_122] : memref<18x18x4xbf16, #tpu.memory_space<vmem>>, vector<16x16x4xbf16>
    %96 = tpu.concatenate %93, %94, %95 in 2 : vector<16x16x4xbf16>, vector<16x16x4xbf16>, vector<16x16x4xbf16> -> vector<16x16x12xbf16>
    %97 = vector.shape_cast %96 : vector<16x16x12xbf16> to vector<256x12xbf16>
    %c1_123 = arith.constant 1 : index
    %c0_124 = arith.constant 0 : index
    %c0_125 = arith.constant 0 : index
    %98 = vector.load %arg6[%c1_123, %c0_124, %c0_125] : memref<3x12x4xbf16, #tpu.memory_space<vmem>>, vector<1x12x4xbf16>
    %99 = vector.shape_cast %98 : vector<1x12x4xbf16> to vector<12x4xbf16>
    %cst_126 = arith.constant dense<0.000000e+00> : vector<256x4xf32>
    %100 = tpu.matmul %97, %99, %cst_126 {dimension_numbers = #tpu.dot_dimension_numbers<[1], [0], [0], [1], [0, 0, 1, 1], [], []>} : vector<256x12xbf16>, vector<12x4xbf16>, vector<256x4xf32> -> vector<256x4xf32>
    %101 = arith.addf %92, %100 : vector<256x4xf32>
    %c2_127 = arith.constant 2 : index
    %c0_128 = arith.constant 0 : index
    %c0_129 = arith.constant 0 : index
    %102 = vector.load %arg11[%c2_127, %c0_128, %c0_129] : memref<18x18x4xbf16, #tpu.memory_space<vmem>>, vector<16x16x4xbf16>
    %c2_130 = arith.constant 2 : index
    %c1_131 = arith.constant 1 : index
    %c0_132 = arith.constant 0 : index
    %103 = vector.load %arg11[%c2_130, %c1_131, %c0_132] : memref<18x18x4xbf16, #tpu.memory_space<vmem>>, vector<16x16x4xbf16>
    %c2_133 = arith.constant 2 : index
    %c2_134 = arith.constant 2 : index
    %c0_135 = arith.constant 0 : index
    %104 = vector.load %arg11[%c2_133, %c2_134, %c0_135] : memref<18x18x4xbf16, #tpu.memory_space<vmem>>, vector<16x16x4xbf16>
    %105 = tpu.concatenate %102, %103, %104 in 2 : vector<16x16x4xbf16>, vector<16x16x4xbf16>, vector<16x16x4xbf16> -> vector<16x16x12xbf16>
    %106 = vector.shape_cast %105 : vector<16x16x12xbf16> to vector<256x12xbf16>
    %c2_136 = arith.constant 2 : index
    %c0_137 = arith.constant 0 : index
    %c0_138 = arith.constant 0 : index
    %107 = vector.load %arg6[%c2_136, %c0_137, %c0_138] : memref<3x12x4xbf16, #tpu.memory_space<vmem>>, vector<1x12x4xbf16>
    %108 = vector.shape_cast %107 : vector<1x12x4xbf16> to vector<12x4xbf16>
    %cst_139 = arith.constant dense<0.000000e+00> : vector<256x4xf32>
    %109 = tpu.matmul %106, %108, %cst_139 {dimension_numbers = #tpu.dot_dimension_numbers<[1], [0], [0], [1], [0, 0, 1, 1], [], []>} : vector<256x12xbf16>, vector<12x4xbf16>, vector<256x4xf32> -> vector<256x4xf32>
    %110 = arith.addf %101, %109 : vector<256x4xf32>
    %111 = arith.addf %84, %110 : vector<256x4xf32>
    %c0_140 = arith.constant 0 : index
    %c0_141 = arith.constant 0 : index
    %112 = vector.load %arg7[%c0_140, %c0_141] : memref<1x4xf32, #tpu.memory_space<vmem>>, vector<1x4xf32>
    %113 = vector.shape_cast %112 : vector<1x4xf32> to vector<4xf32>
    %114 = vector.shape_cast %113 : vector<4xf32> to vector<1x4xf32>
    %115 = vector.broadcast %114 : vector<1x4xf32> to vector<256x4xf32>
    %116 = arith.addf %111, %115 : vector<256x4xf32>
    %cst_142 = arith.constant 0.000000e+00 : f32
    %117 = vector.broadcast %cst_142 : f32 to vector<256x4xf32>
    %118 = arith.maximumf %116, %117 : vector<256x4xf32>
    %119 = vector.shape_cast %118 : vector<256x4xf32> to vector<16x16x4xf32>
    %120 = arith.truncf %119 : vector<16x16x4xf32> to vector<16x16x4xbf16>
    %c1_143 = arith.constant 1 : index
    %c1_144 = arith.constant 1 : index
    %c0_145 = arith.constant 0 : index
    %121 = vector.load %arg13[%c1_143, %c1_144, %c0_145] : memref<18x18x4xbf16, #tpu.memory_space<vmem>>, vector<16x16x4xbf16>
    tpu.vector_store %arg13[%c1_143, %c1_144, %c0_145], %120 {strides = array<i32>} : memref<18x18x4xbf16, #tpu.memory_space<vmem>>, vector<16x16x4xbf16>,
    %c0_146 = arith.constant 0 : index
    %c0_147 = arith.constant 0 : index
    %c0_148 = arith.constant 0 : index
    %122 = vector.load %arg13[%c0_146, %c0_147, %c0_148] : memref<18x18x4xbf16, #tpu.memory_space<vmem>>, vector<16x16x4xbf16>
    %c0_149 = arith.constant 0 : index
    %c1_150 = arith.constant 1 : index
    %c0_151 = arith.constant 0 : index
    %123 = vector.load %arg13[%c0_149, %c1_150, %c0_151] : memref<18x18x4xbf16, #tpu.memory_space<vmem>>, vector<16x16x4xbf16>
    %c0_152 = arith.constant 0 : index
    %c2_153 = arith.constant 2 : index
    %c0_154 = arith.constant 0 : index
    %124 = vector.load %arg13[%c0_152, %c2_153, %c0_154] : memref<18x18x4xbf16, #tpu.memory_space<vmem>>, vector<16x16x4xbf16>
    %125 = tpu.concatenate %122, %123, %124 in 2 : vector<16x16x4xbf16>, vector<16x16x4xbf16>, vector<16x16x4xbf16> -> vector<16x16x12xbf16>
    %126 = vector.shape_cast %125 : vector<16x16x12xbf16> to vector<256x12xbf16>
    %c0_155 = arith.constant 0 : index
    %c0_156 = arith.constant 0 : index
    %c0_157 = arith.constant 0 : index
    %127 = vector.load %arg8[%c0_155, %c0_156, %c0_157] : memref<3x12x4xbf16, #tpu.memory_space<vmem>>, vector<1x12x4xbf16>
    %128 = vector.shape_cast %127 : vector<1x12x4xbf16> to vector<12x4xbf16>
    %cst_158 = arith.constant dense<0.000000e+00> : vector<256x4xf32>
    %129 = tpu.matmul %126, %128, %cst_158 {dimension_numbers = #tpu.dot_dimension_numbers<[1], [0], [0], [1], [0, 0, 1, 1], [], []>} : vector<256x12xbf16>, vector<12x4xbf16>, vector<256x4xf32> -> vector<256x4xf32>
    %c1_159 = arith.constant 1 : index
    %c0_160 = arith.constant 0 : index
    %c0_161 = arith.constant 0 : index
    %130 = vector.load %arg13[%c1_159, %c0_160, %c0_161] : memref<18x18x4xbf16, #tpu.memory_space<vmem>>, vector<16x16x4xbf16>
    %c1_162 = arith.constant 1 : index
    %c1_163 = arith.constant 1 : index
    %c0_164 = arith.constant 0 : index
    %131 = vector.load %arg13[%c1_162, %c1_163, %c0_164] : memref<18x18x4xbf16, #tpu.memory_space<vmem>>, vector<16x16x4xbf16>
    %c1_165 = arith.constant 1 : index
    %c2_166 = arith.constant 2 : index
    %c0_167 = arith.constant 0 : index
    %132 = vector.load %arg13[%c1_165, %c2_166, %c0_167] : memref<18x18x4xbf16, #tpu.memory_space<vmem>>, vector<16x16x4xbf16>
    %133 = tpu.concatenate %130, %131, %132 in 2 : vector<16x16x4xbf16>, vector<16x16x4xbf16>, vector<16x16x4xbf16> -> vector<16x16x12xbf16>
    %134 = vector.shape_cast %133 : vector<16x16x12xbf16> to vector<256x12xbf16>
    %c1_168 = arith.constant 1 : index
    %c0_169 = arith.constant 0 : index
    %c0_170 = arith.constant 0 : index
    %135 = vector.load %arg8[%c1_168, %c0_169, %c0_170] : memref<3x12x4xbf16, #tpu.memory_space<vmem>>, vector<1x12x4xbf16>
    %136 = vector.shape_cast %135 : vector<1x12x4xbf16> to vector<12x4xbf16>
    %cst_171 = arith.constant dense<0.000000e+00> : vector<256x4xf32>
    %137 = tpu.matmul %134, %136, %cst_171 {dimension_numbers = #tpu.dot_dimension_numbers<[1], [0], [0], [1], [0, 0, 1, 1], [], []>} : vector<256x12xbf16>, vector<12x4xbf16>, vector<256x4xf32> -> vector<256x4xf32>
    %138 = arith.addf %129, %137 : vector<256x4xf32>
    %c2_172 = arith.constant 2 : index
    %c0_173 = arith.constant 0 : index
    %c0_174 = arith.constant 0 : index
    %139 = vector.load %arg13[%c2_172, %c0_173, %c0_174] : memref<18x18x4xbf16, #tpu.memory_space<vmem>>, vector<16x16x4xbf16>
    %c2_175 = arith.constant 2 : index
    %c1_176 = arith.constant 1 : index
    %c0_177 = arith.constant 0 : index
    %140 = vector.load %arg13[%c2_175, %c1_176, %c0_177] : memref<18x18x4xbf16, #tpu.memory_space<vmem>>, vector<16x16x4xbf16>
    %c2_178 = arith.constant 2 : index
    %c2_179 = arith.constant 2 : index
    %c0_180 = arith.constant 0 : index
    %141 = vector.load %arg13[%c2_178, %c2_179, %c0_180] : memref<18x18x4xbf16, #tpu.memory_space<vmem>>, vector<16x16x4xbf16>
    %142 = tpu.concatenate %139, %140, %141 in 2 : vector<16x16x4xbf16>, vector<16x16x4xbf16>, vector<16x16x4xbf16> -> vector<16x16x12xbf16>
    %143 = vector.shape_cast %142 : vector<16x16x12xbf16> to vector<256x12xbf16>
    %c2_181 = arith.constant 2 : index
    %c0_182 = arith.constant 0 : index
    %c0_183 = arith.constant 0 : index
    %144 = vector.load %arg8[%c2_181, %c0_182, %c0_183] : memref<3x12x4xbf16, #tpu.memory_space<vmem>>, vector<1x12x4xbf16>
    %145 = vector.shape_cast %144 : vector<1x12x4xbf16> to vector<12x4xbf16>
    %cst_184 = arith.constant dense<0.000000e+00> : vector<256x4xf32>
    %146 = tpu.matmul %143, %145, %cst_184 {dimension_numbers = #tpu.dot_dimension_numbers<[1], [0], [0], [1], [0, 0, 1, 1], [], []>} : vector<256x12xbf16>, vector<12x4xbf16>, vector<256x4xf32> -> vector<256x4xf32>
    %147 = arith.addf %138, %146 : vector<256x4xf32>
    %c0_185 = arith.constant 0 : index
    %c0_186 = arith.constant 0 : index
    %148 = vector.load %arg9[%c0_185, %c0_186] : memref<1x4xf32, #tpu.memory_space<vmem>>, vector<1x4xf32>
    %149 = vector.shape_cast %148 : vector<1x4xf32> to vector<4xf32>
    %150 = vector.shape_cast %149 : vector<4xf32> to vector<1x4xf32>
    %151 = vector.broadcast %150 : vector<1x4xf32> to vector<256x4xf32>
    %152 = arith.addf %147, %151 : vector<256x4xf32>
    %cst_187 = arith.constant 0.000000e+00 : f32
    %153 = vector.broadcast %cst_187 : f32 to vector<256x4xf32>
    %154 = arith.maximumf %152, %153 : vector<256x4xf32>
    %155 = vector.shape_cast %154 : vector<256x4xf32> to vector<16x16x4xf32>
    %156 = arith.truncf %155 : vector<16x16x4xf32> to vector<16x16x4xbf16>
    %c0_188 = arith.constant 0 : index
    %c0_189 = arith.constant 0 : index
    %c0_190 = arith.constant 0 : index
    %c0_191 = arith.constant 0 : index
    %157 = vector.load %arg10[%c0_188, %c0_189, %c0_190, %c0_191] : memref<1x16x16x4xbf16, #tpu.memory_space<vmem>>, vector<1x16x16x4xbf16>
    %158 = vector.shape_cast %157 : vector<1x16x16x4xbf16> to vector<16x16x4xbf16>
    %159 = vector.shape_cast %156 : vector<16x16x4xbf16> to vector<1x16x16x4xbf16>
    tpu.vector_store %arg10[%c0_188, %c0_189, %c0_190, %c0_191], %159 {strides = array<i32>} : memref<1x16x16x4xbf16, #tpu.memory_space<vmem>>, vector<1x16x16x4xbf16>,
    return
  }
  func.func @transform_0(%arg0: i32) -> (i32, i32, i32, i32) {
    %c0_i32 = arith.constant 0 : i32
    %c0_i32_0 = arith.constant 0 : i32
    %c0_i32_1 = arith.constant 0 : i32
    %c0_i32_2 = arith.constant 0 : i32
    return %arg0, %c0_i32, %c0_i32_0, %c0_i32_1 : i32, i32, i32, i32
  }
  func.func @transform_1(%arg0: i32) -> (i32, i32, i32, i32) {
    %c0_i32 = arith.constant 0 : i32
    %c0_i32_0 = arith.constant 0 : i32
    %c0_i32_1 = arith.constant 0 : i32
    %c0_i32_2 = arith.constant 0 : i32
    return %arg0, %c0_i32, %c0_i32_0, %c0_i32_1 : i32, i32, i32, i32
  }
  func.func @transform_2(%arg0: i32) -> (i32, i32) {
    %c0_i32 = arith.constant 0 : i32
    %c0_i32_0 = arith.constant 0 : i32
    %c0_i32_1 = arith.constant 0 : i32
    return %c0_i32, %c0_i32_0 : i32, i32
  }
  func.func @transform_3(%arg0: i32) -> (i32, i32) {
    %c0_i32 = arith.constant 0 : i32
    %c0_i32_0 = arith.constant 0 : i32
    %c0_i32_1 = arith.constant 0 : i32
    return %c0_i32, %c0_i32_0 : i32, i32
  }
  func.func @transform_4(%arg0: i32) -> (i32, i32, i32) {
    %c0_i32 = arith.constant 0 : i32
    %c0_i32_0 = arith.constant 0 : i32
    %c0_i32_1 = arith.constant 0 : i32
    %c0_i32_2 = arith.constant 0 : i32
    return %c0_i32, %c0_i32_0, %c0_i32_1 : i32, i32, i32
  }
  func.func @transform_5(%arg0: i32) -> (i32, i32, i32) {
    %c0_i32 = arith.constant 0 : i32
    %c0_i32_0 = arith.constant 0 : i32
    %c0_i32_1 = arith.constant 0 : i32
    %c0_i32_2 = arith.constant 0 : i32
    return %c0_i32, %c0_i32_0, %c0_i32_1 : i32, i32, i32
  }
  func.func @transform_6(%arg0: i32) -> (i32, i32) {
    %c0_i32 = arith.constant 0 : i32
    %c0_i32_0 = arith.constant 0 : i32
    %c0_i32_1 = arith.constant 0 : i32
    return %c0_i32, %c0_i32_0 : i32, i32
  }
  func.func @transform_7(%arg0: i32) -> (i32, i32, i32) {
    %c0_i32 = arith.constant 0 : i32
    %c0_i32_0 = arith.constant 0 : i32
    %c0_i32_1 = arith.constant 0 : i32
    %c0_i32_2 = arith.constant 0 : i32
    return %c0_i32, %c0_i32_0, %c0_i32_1 : i32, i32, i32
  }
  func.func @transform_8(%arg0: i32) -> (i32, i32) {
    %c0_i32 = arith.constant 0 : i32
    %c0_i32_0 = arith.constant 0 : i32
    %c0_i32_1 = arith.constant 0 : i32
    return %c0_i32, %c0_i32_0 : i32, i32
  }
  func.func @transform_9(%arg0: i32) -> (i32, i32, i32, i32) {
    %c0_i32 = arith.constant 0 : i32
    %c0_i32_0 = arith.constant 0 : i32
    %c0_i32_1 = arith.constant 0 : i32
    %c0_i32_2 = arith.constant 0 : i32
    return %arg0, %c0_i32, %c0_i32_0, %c0_i32_1 : i32, i32, i32, i32
  }
}

</mosaic_0001>

<llo_original>
// kernel: tile.9
$region0: #{tile.9}
  %s0 = inlined_call_operand.vmem [shape: f32[4,4], index: 0, kind: input, shape index: {}]
  %s1 = inlined_call_operand.vmem [shape: f32[1,16], index: 1, kind: output, shape index: {}]
  $region1: #{tile.9} parent=0
    #allocation0 [shape = 'u8[4096]{0}', space=vmem, size = 0x1000, scoped, tag = 'scoped mem for output reshape']
    #allocation1 [shape = 'u8[4096]{0}', space=vmem, size = 0x1000, scoped, tag = 'scoped mem for input reshape']
    %s3 = sshll.u32 1, 4
    %s4 = ssub.s32 %s3, 1
    %v5 = vld [vmem:[%s0] sm:%s4]
    %6 = vst [vmem:[#allocation1] sm:%s4] %v5
    %v7 = vld [vmem:[#allocation1] sm:$0x1]
    %vm8 = vcmask 31744
    %9 = vst.msk [vmem:[#allocation0] sm:$0x1] %vm8, %v7
    %s10 = scalar_lea.vmem [#allocation1], 3
    %v11 = vld [vmem:[%s10] sm:$0x1]
    %12 = vrot.lane.b32.xlu0 %v11, 12
    %v13 = vpop.permute.xlu0 %12
    %vm14 = vcmask 130144
    %15 = vst.msk [vmem:[#allocation0] sm:$0x1] %vm14, %v13
    %s16 = scalar_lea.vmem [#allocation1], 2
    %v17 = vld [vmem:[%s16] sm:$0x1]
    %18 = vrot.lane.b32.xlu0 %v17, 8
    %v19 = vpop.permute.xlu0 %18
    %vm20 = vcmask 97344
    %21 = vst.msk [vmem:[#allocation0] sm:$0x1] %vm20, %v19
    %s22 = scalar_lea.vmem [#allocation1], 1
    %v23 = vld [vmem:[%s22] sm:$0x1]
    %24 = vrot.lane.b32.xlu0 %v23, 4
    %v25 = vpop.permute.xlu0 %24
    %vm26 = vcmask 64544
    %27 = vst.msk [vmem:[#allocation0] sm:$0x1] %vm26, %v25
    %s29 = sshll.u32 1, 1
    %s30 = ssub.s32 %s29, 1
    %v32 = vld [vmem:[#allocation0] sm:%s30]
    %s33 = sshll.u32 1, 1
    %s34 = ssub.s32 %s33, 1
    %35 = vst [vmem:[%s1] sm:%s34] %v32

// kernel: tile.8
$region0: #{tile.8}
  #allocation2 [shape = 's32[1]{0}', space=sflag, size = 0x4, scoped, tag = 'scoped memory for tile.8']
  %s0 = inlined_call_operand.hbm [shape: f32[4], index: 0, kind: input, shape index: {}]
  %s1 = inlined_call_operand.vmem [shape: f32[4,4], index: 1, kind: output, shape index: {}]
  $region1: #{tile.8} parent=0
    #allocation0 [shape = 'u8[512]{0}', space=vmem, size = 0x400, scoped, tag = 'operand span for operand 0']
    #allocation1 [shape = 's32[1]{0}', space=sflag, size = 0x4, scoped, tag = 'scoped memory for tile.8']
    %2 = vsyncpa [#allocation1], 0
    // Predicated region
    $region2: #{tile.8} parent=1 // pred_check
      _
    $region3: #{tile.8} parent=1 // pred_check_branch
      %4 = sbr.rel (0) target = $region5
    $region4: #{tile.8} parent=1 // pred_region
      %s6 = ssub.s32 16, 16
      %7 = vsyncadd [#allocation1], %s6
      %s9 = sshll.u32 [#allocation0], 4
      %s10 = int_to_ptr.vmem [resolvable:$true] %s9
      %12 = dma.hbm_to_vmem [thread:$0]  %s0, 16, %s10, [#allocation1]
    $region5: #{tile.8} parent=1 // pred_fallthru
      _
    // Predicated region
    $region6: #{tile.8} parent=1 // pred_check
      _
    $region7: #{tile.8} parent=1 // pred_check_branch
      %14 = sbr.rel (0) target = $region9
    $region8: #{tile.8} parent=1 // pred_region
      %15 = dma.done [#allocation1], 16
    $region9: #{tile.8} parent=1 // pred_fallthru
      _
    %v16 = vld [vmem:[#allocation0] ss:$0 sm:$0xff]
    %17 = vst [vmem:[%s1] sm:$0xf] %v16
    %18 = vsyncpa [#allocation1], 1

// kernel: up_forward.1
$region0: #{up_forward.1}
  #allocation0 [shape = 'u32[]', space=smem, size = 0x4, offset = 0x4, fixed_abs, tag = 'smem constant byte address 0x4 - core index']
  #allocation1 [shape = 'u32[144,128]{1,0:T(1,128)}', space=vmem, size = 0x12000, scoped, tag = 'internal scratch']
  #allocation2 [shape = 'bf16[18,18,4]{2,1,0:T(8,128)(2,1)}', space=vmem, size = 0x1b000, scoped, tag = 'scratch operand']
  #allocation3 [shape = 'bf16[18,18,4]{2,1,0:T(8,128)(2,1)}', space=vmem, size = 0x1b000, scoped, tag = 'scratch operand']
  #allocation4 [shape = 'bf16[18,18,4]{2,1,0:T(8,128)(2,1)}', space=vmem, size = 0x1b000, scoped, tag = 'scratch operand']
  %s0 = inlined_call_operand.vmem [shape: bf16[2,8,8,8], index: 0, kind: input, shape index: {}]
  %s1 = inlined_call_operand.vmem [shape: bf16[2,16,16,4], index: 1, kind: input, shape index: {}]
  %s2 = inlined_call_operand.vmem [shape: bf16[8,16], index: 2, kind: input, shape index: {}]
  %s3 = inlined_call_operand.vmem [shape: f32[1,16], index: 3, kind: input, shape index: {}]
  %s4 = inlined_call_operand.vmem [shape: bf16[3,12,4], index: 4, kind: input, shape index: {}]
  %s5 = inlined_call_operand.vmem [shape: bf16[3,12,4], index: 5, kind: input, shape index: {}]
  %s6 = inlined_call_operand.vmem [shape: f32[1,4], index: 6, kind: input, shape index: {}]
  %s7 = inlined_call_operand.vmem [shape: bf16[3,12,4], index: 7, kind: input, shape index: {}]
  %s8 = inlined_call_operand.vmem [shape: f32[1,4], index: 8, kind: input, shape index: {}]
  %s9 = inlined_call_operand.vmem [shape: bf16[2,16,16,4], index: 9, kind: output, shape index: {}]
  %s10 = sld [smem:[#allocation0]]
  $region69: #{up_forward.1} parent=0
    _
  %s12 = ssub.s32 1, %s10
  %s13 = scalar_select 0, %s12, %s10
  loop: start=0, step=1, limit=4
  $region2: #{up_forward.1} parent=0 // loop_pre_header
    _
  $region3: #{up_forward.1} parent=0 // loop_header
    %s15 = sphi 0, %s19
    %p16 = scmp.ge.s32.totalorder %s15, 4
    %s25 = sphi 0, %s27
    %s28 = sphi 0, %s25
    %s29 = sphi 0, %s28
    %s45 = sphi 0, %s29
    %s51 = sphi 0, %s53
    %s54 = sphi 0, %s51
    %s55 = sphi 0, %s54
    %s71 = sphi 0, %s55
    %s75 = sphi 0, %s75
    %s77 = sphi 0, %s75
    %s78 = sphi 0, %s77
    %s92 = sphi 0, %s78
    %s96 = sphi 0, %s96
    %s98 = sphi 0, %s96
    %s99 = sphi 0, %s98
    %s113 = sphi 0, %s99
    %s117 = sphi 0, %s117
    %s119 = sphi 0, %s117
    %s120 = sphi 0, %s119
    %s134 = sphi 0, %s120
    %s138 = sphi 0, %s138
    %s140 = sphi 0, %s138
    %s141 = sphi 0, %s140
    %s155 = sphi 0, %s141
    %s159 = sphi 0, %s159
    %s161 = sphi 0, %s159
    %s162 = sphi 0, %s161
    %s176 = sphi 0, %s162
    %s180 = sphi 0, %s180
    %s182 = sphi 0, %s180
    %s183 = sphi 0, %s182
    %s197 = sphi 0, %s183
    %s201 = sphi 0, %s201
    %s203 = sphi 0, %s201
    %s204 = sphi 0, %s203
    %s218 = sphi 0, %s204
    %s224 = sphi 0, %s226
    %s227 = sphi 0, %s224
    %s228 = sphi 0, %s227
    %s244 = sphi 0, %s228
  $region4: #{up_forward.1} parent=0 // loop_header_branch
    %18 = sbr.rel (%p16) target = $region8
  $region5: #{up_forward.1} parent=0 // loop_body
    %s20 = ssub.s32 %s15, 1
    %s21 = ssub.s32 %s15, 2
    %s22 = sadd.s32 %s15, 1
    %s23 = ssub.s32 %s15, %s22
    %p24 = scmp.eq.s32.totalorder %s23, 0
    %s26 = sadd.s32 %s25, 1
    %s27 = scalar_select %p24, %s25, %s26
    %p30 = pneg %p24
    %p31 = scmp.eq.s32.totalorder %s15, 1
    %p32 = por %p30, %p31
    %p33 = scmp.ne.s32.totalorder %s25, %s28
    %p34 = scmp.eq.s32.totalorder %s15, 0
    %p35 = por %p33, %p34
    %p36 = scmp.ne.s32.totalorder %s25, %s28
    %p37 = scmp.eq.s32.totalorder %s20, 1
    %p38 = por %p36, %p37
    %p39 = scmp.ne.s32.totalorder %s28, %s29
    %p40 = scmp.eq.s32.totalorder %s20, 0
    %p41 = por %p39, %p40
    %p42 = scmp.ne.s32.totalorder %s28, %s29
    %p43 = scmp.eq.s32.totalorder %s21, 1
    %p44 = por %p42, %p43
    %p46 = scmp.ne.s32.totalorder %s29, %s45
    %p47 = scmp.eq.s32.totalorder %s21, 0
    %p48 = por %p46, %p47
    %s49 = ssub.s32 %s15, %s22
    %p50 = scmp.eq.s32.totalorder %s49, 0
    %s52 = sadd.s32 %s51, 1
    %s53 = scalar_select %p50, %s51, %s52
    %p56 = pneg %p50
    %p57 = scmp.eq.s32.totalorder %s15, 1
    %p58 = por %p56, %p57
    %p59 = scmp.ne.s32.totalorder %s51, %s54
    %p60 = scmp.eq.s32.totalorder %s15, 0
    %p61 = por %p59, %p60
    %p62 = scmp.ne.s32.totalorder %s51, %s54
    %p63 = scmp.eq.s32.totalorder %s20, 1
    %p64 = por %p62, %p63
    %p65 = scmp.ne.s32.totalorder %s54, %s55
    %p66 = scmp.eq.s32.totalorder %s20, 0
    %p67 = por %p65, %p66
    %p68 = scmp.ne.s32.totalorder %s54, %s55
    %p69 = scmp.eq.s32.totalorder %s21, 1
    %p70 = por %p68, %p69
    %p72 = scmp.ne.s32.totalorder %s55, %s71
    %p73 = scmp.eq.s32.totalorder %s21, 0
    %p74 = por %p72, %p73
    %s76 = sadd.s32 %s75, 1
    %p79 = scmp.eq.s32.totalorder %s15, 1
    %p80 = scmp.ne.s32.totalorder %s75, %s77
    %p81 = scmp.eq.s32.totalorder %s15, 0
    %p82 = por %p80, %p81
    %p83 = scmp.ne.s32.totalorder %s75, %s77
    %p84 = scmp.eq.s32.totalorder %s20, 1
    %p85 = por %p83, %p84
    %p86 = scmp.ne.s32.totalorder %s77, %s78
    %p87 = scmp.eq.s32.totalorder %s20, 0
    %p88 = por %p86, %p87
    %p89 = scmp.ne.s32.totalorder %s77, %s78
    %p90 = scmp.eq.s32.totalorder %s21, 1
    %p91 = por %p89, %p90
    %p93 = scmp.ne.s32.totalorder %s78, %s92
    %p94 = scmp.eq.s32.totalorder %s21, 0
    %p95 = por %p93, %p94
    %s97 = sadd.s32 %s96, 1
    %p100 = scmp.eq.s32.totalorder %s15, 1
    %p101 = scmp.ne.s32.totalorder %s96, %s98
    %p102 = scmp.eq.s32.totalorder %s15, 0
    %p103 = por %p101, %p102
    %p104 = scmp.ne.s32.totalorder %s96, %s98
    %p105 = scmp.eq.s32.totalorder %s20, 1
    %p106 = por %p104, %p105
    %p107 = scmp.ne.s32.totalorder %s98, %s99
    %p108 = scmp.eq.s32.totalorder %s20, 0
    %p109 = por %p107, %p108
    %p110 = scmp.ne.s32.totalorder %s98, %s99
    %p111 = scmp.eq.s32.totalorder %s21, 1
    %p112 = por %p110, %p111
    %p114 = scmp.ne.s32.totalorder %s99, %s113
    %p115 = scmp.eq.s32.totalorder %s21, 0
    %p116 = por %p114, %p115
    %s118 = sadd.s32 %s117, 1
    %p121 = scmp.eq.s32.totalorder %s15, 1
    %p122 = scmp.ne.s32.totalorder %s117, %s119
    %p123 = scmp.eq.s32.totalorder %s15, 0
    %p124 = por %p122, %p123
    %p125 = scmp.ne.s32.totalorder %s117, %s119
    %p126 = scmp.eq.s32.totalorder %s20, 1
    %p127 = por %p125, %p126
    %p128 = scmp.ne.s32.totalorder %s119, %s120
    %p129 = scmp.eq.s32.totalorder %s20, 0
    %p130 = por %p128, %p129
    %p131 = scmp.ne.s32.totalorder %s119, %s120
    %p132 = scmp.eq.s32.totalorder %s21, 1
    %p133 = por %p131, %p132
    %p135 = scmp.ne.s32.totalorder %s120, %s134
    %p136 = scmp.eq.s32.totalorder %s21, 0
    %p137 = por %p135, %p136
    %s139 = sadd.s32 %s138, 1
    %p142 = scmp.eq.s32.totalorder %s15, 1
    %p143 = scmp.ne.s32.totalorder %s138, %s140
    %p144 = scmp.eq.s32.totalorder %s15, 0
    %p145 = por %p143, %p144
    %p146 = scmp.ne.s32.totalorder %s138, %s140
    %p147 = scmp.eq.s32.totalorder %s20, 1
    %p148 = por %p146, %p147
    %p149 = scmp.ne.s32.totalorder %s140, %s141
    %p150 = scmp.eq.s32.totalorder %s20, 0
    %p151 = por %p149, %p150
    %p152 = scmp.ne.s32.totalorder %s140, %s141
    %p153 = scmp.eq.s32.totalorder %s21, 1
    %p154 = por %p152, %p153
    %p156 = scmp.ne.s32.totalorder %s141, %s155
    %p157 = scmp.eq.s32.totalorder %s21, 0
    %p158 = por %p156, %p157
    %s160 = sadd.s32 %s159, 1
    %p163 = scmp.eq.s32.totalorder %s15, 1
    %p164 = scmp.ne.s32.totalorder %s159, %s161
    %p165 = scmp.eq.s32.totalorder %s15, 0
    %p166 = por %p164, %p165
    %p167 = scmp.ne.s32.totalorder %s159, %s161
    %p168 = scmp.eq.s32.totalorder %s20, 1
    %p169 = por %p167, %p168
    %p170 = scmp.ne.s32.totalorder %s161, %s162
    %p171 = scmp.eq.s32.totalorder %s20, 0
    %p172 = por %p170, %p171
    %p173 = scmp.ne.s32.totalorder %s161, %s162
    %p174 = scmp.eq.s32.totalorder %s21, 1
    %p175 = por %p173, %p174
    %p177 = scmp.ne.s32.totalorder %s162, %s176
    %p178 = scmp.eq.s32.totalorder %s21, 0
    %p179 = por %p177, %p178
    %s181 = sadd.s32 %s180, 1
    %p184 = scmp.eq.s32.totalorder %s15, 1
    %p185 = scmp.ne.s32.totalorder %s180, %s182
    %p186 = scmp.eq.s32.totalorder %s15, 0
    %p187 = por %p185, %p186
    %p188 = scmp.ne.s32.totalorder %s180, %s182
    %p189 = scmp.eq.s32.totalorder %s20, 1
    %p190 = por %p188, %p189
    %p191 = scmp.ne.s32.totalorder %s182, %s183
    %p192 = scmp.eq.s32.totalorder %s20, 0
    %p193 = por %p191, %p192
    %p194 = scmp.ne.s32.totalorder %s182, %s183
    %p195 = scmp.eq.s32.totalorder %s21, 1
    %p196 = por %p194, %p195
    %p198 = scmp.ne.s32.totalorder %s183, %s197
    %p199 = scmp.eq.s32.totalorder %s21, 0
    %p200 = por %p198, %p199
    %s202 = sadd.s32 %s201, 1
    %p205 = scmp.eq.s32.totalorder %s15, 1
    %p206 = scmp.ne.s32.totalorder %s201, %s203
    %p207 = scmp.eq.s32.totalorder %s15, 0
    %p208 = por %p206, %p207
    %p209 = scmp.ne.s32.totalorder %s201, %s203
    %p210 = scmp.eq.s32.totalorder %s20, 1
    %p211 = por %p209, %p210
    %p212 = scmp.ne.s32.totalorder %s203, %s204
    %p213 = scmp.eq.s32.totalorder %s20, 0
    %p214 = por %p212, %p213
    %p215 = scmp.ne.s32.totalorder %s203, %s204
    %p216 = scmp.eq.s32.totalorder %s21, 1
    %p217 = por %p215, %p216
    %p219 = scmp.ne.s32.totalorder %s204, %s218
    %p220 = scmp.eq.s32.totalorder %s21, 0
    %p221 = por %p219, %p220
    %s222 = ssub.s32 %s15, %s22
    %p223 = scmp.eq.s32.totalorder %s222, 0
    %s225 = sadd.s32 %s224, 1
    %s226 = scalar_select %p223, %s224, %s225
    %p229 = pneg %p223
    %p230 = scmp.eq.s32.totalorder %s15, 1
    %p231 = por %p229, %p230
    %p232 = scmp.ne.s32.totalorder %s224, %s227
    %p233 = scmp.eq.s32.totalorder %s15, 0
    %p234 = por %p232, %p233
    %p235 = scmp.ne.s32.totalorder %s224, %s227
    %p236 = scmp.eq.s32.totalorder %s20, 1
    %p237 = por %p235, %p236
    %p238 = scmp.ne.s32.totalorder %s227, %s228
    %p239 = scmp.eq.s32.totalorder %s20, 0
    %p240 = por %p238, %p239
    %p241 = scmp.ne.s32.totalorder %s227, %s228
    %p242 = scmp.eq.s32.totalorder %s21, 1
    %p243 = por %p241, %p242
    %p245 = scmp.ne.s32.totalorder %s228, %s244
    %p246 = scmp.eq.s32.totalorder %s21, 0
    %p247 = por %p245, %p246
    %p248 = scmp.le.s32.totalorder 1, %s15
    %p249 = scmp.lt.s32.totalorder %s15, 3
    %p250 = pnand %p248, %p249
    %p251 = pneg %p250
    // Predicated region
    $region9: #{up_forward.1} parent=5 // pred_check
      _
    $region10: #{up_forward.1} parent=5 // pred_check_branch
      %253 = sbr.rel (%p250) target = $region12
    $region11: #{up_forward.1} parent=5 // pred_region
      %s254 = ssub.s32 %s15, 1
      // Predicated region
      $region13: #{up_forward.1} parent=11 // pred_check
        %p255 = pneg %p88
      $region14: #{up_forward.1} parent=11 // pred_check_branch
        %257 = sbr.rel (%p255) target = $region16
      $region15: #{up_forward.1} parent=11 // pred_region
        _
      $region16: #{up_forward.1} parent=11 // pred_fallthru
        _
      // Predicated region
      $region17: #{up_forward.1} parent=11 // pred_check
        %p258 = pneg %p109
      $region18: #{up_forward.1} parent=11 // pred_check_branch
        %260 = sbr.rel (%p258) target = $region20
      $region19: #{up_forward.1} parent=11 // pred_region
        _
      $region20: #{up_forward.1} parent=11 // pred_fallthru
        _
      // Predicated region
      $region21: #{up_forward.1} parent=11 // pred_check
        %p261 = pneg %p130
      $region22: #{up_forward.1} parent=11 // pred_check_branch
        %263 = sbr.rel (%p261) target = $region24
      $region23: #{up_forward.1} parent=11 // pred_region
        _
      $region24: #{up_forward.1} parent=11 // pred_fallthru
        _
      // Predicated region
      $region25: #{up_forward.1} parent=11 // pred_check
        %p264 = pneg %p151
      $region26: #{up_forward.1} parent=11 // pred_check_branch
        %266 = sbr.rel (%p264) target = $region28
      $region27: #{up_forward.1} parent=11 // pred_region
        _
      $region28: #{up_forward.1} parent=11 // pred_fallthru
        _
      // Predicated region
      $region29: #{up_forward.1} parent=11 // pred_check
        %p267 = pneg %p172
      $region30: #{up_forward.1} parent=11 // pred_check_branch
        %269 = sbr.rel (%p267) target = $region32
      $region31: #{up_forward.1} parent=11 // pred_region
        _
      $region32: #{up_forward.1} parent=11 // pred_fallthru
        _
      // Predicated region
      $region33: #{up_forward.1} parent=11 // pred_check
        %p270 = pneg %p193
      $region34: #{up_forward.1} parent=11 // pred_check_branch
        %272 = sbr.rel (%p270) target = $region36
      $region35: #{up_forward.1} parent=11 // pred_region
        _
      $region36: #{up_forward.1} parent=11 // pred_fallthru
        _
      // Predicated region
      $region37: #{up_forward.1} parent=11 // pred_check
        %p273 = pneg %p214
      $region38: #{up_forward.1} parent=11 // pred_check_branch
        %275 = sbr.rel (%p273) target = $region40
      $region39: #{up_forward.1} parent=11 // pred_region
        _
      $region40: #{up_forward.1} parent=11 // pred_fallthru
        _
    $region12: #{up_forward.1} parent=5 // pred_fallthru
      _
    %p276 = scmp.lt.s32.totalorder %s15, 2
    // Predicated region
    $region41: #{up_forward.1} parent=5 // pred_check
      %p277 = pneg %p276
    $region42: #{up_forward.1} parent=5 // pred_check_branch
      %279 = sbr.rel (%p277) target = $region44
    $region43: #{up_forward.1} parent=5 // pred_region
      // Predicated region
      $region45: #{up_forward.1} parent=43 // pred_check
        %p280 = pneg %p35
      $region46: #{up_forward.1} parent=43 // pred_check_branch
        %282 = sbr.rel (%p280) target = $region48
      $region47: #{up_forward.1} parent=43 // pred_region
        %p283 = scmp.lt.s32.totalorder %s15, 1
        %s284 = scalar_select %p283, %s15, 1
        %s285 = smul.addr %s284, 8
        %s286 = smul.addr %s285, 4
        %s287 = scalar_lea.vmem %s0, %s286
      $region48: #{up_forward.1} parent=43 // pred_fallthru
        _
      // Predicated region
      $region49: #{up_forward.1} parent=43 // pred_check
        %p288 = pneg %p61
      $region50: #{up_forward.1} parent=43 // pred_check_branch
        %290 = sbr.rel (%p288) target = $region52
      $region51: #{up_forward.1} parent=43 // pred_region
        %p291 = scmp.lt.s32.totalorder %s15, 1
        %s292 = scalar_select %p291, %s15, 1
        %s293 = smul.addr %s292, 32
        %s294 = smul.addr %s293, 4
        %s295 = scalar_lea.vmem %s1, %s294
      $region52: #{up_forward.1} parent=43 // pred_fallthru
        _
    $region44: #{up_forward.1} parent=5 // pred_fallthru
      _
    %p296 = scmp.le.s32.totalorder 1, %s15
    %p297 = scmp.lt.s32.totalorder %s15, 3
    %p298 = pnand %p296, %p297
    %p299 = pneg %p298
    // Predicated region
    $region53: #{up_forward.1} parent=5 // pred_check
      _
    $region54: #{up_forward.1} parent=5 // pred_check_branch
      %301 = sbr.rel (%p298) target = $region56
    $region55: #{up_forward.1} parent=5 // pred_region
      %s302 = ssub.s32 %s15, 1
      %p303 = scmp.lt.s32.totalorder %s20, 1
      %s304 = scalar_select %p303, %s20, 1
      %s305 = smul.addr %s304, 8
      %s306 = smul.addr %s305, 4
      %s307 = scalar_lea.vmem %s0, %s306
      %p308 = pneg %p41
      %p309 = pneg %p38
      %p310 = scmp.lt.s32.totalorder %s20, 1
      %s311 = scalar_select %p310, %s20, 1
      %s312 = smul.addr %s311, 32
      %s313 = smul.addr %s312, 4
      %s314 = scalar_lea.vmem %s1, %s313
      %p315 = pneg %p67
      %p316 = pneg %p64
      %p317 = pneg %p88
      %p318 = pneg %p85
      %p319 = pneg %p109
      %p320 = pneg %p106
      %p321 = pneg %p130
      %p322 = pneg %p127
      %p323 = pneg %p151
      %p324 = pneg %p148
      %p325 = pneg %p172
      %p326 = pneg %p169
      %p327 = pneg %p193
      %p328 = pneg %p190
      %p329 = pneg %p214
      %p330 = pneg %p211
      %p331 = pneg %p240
      %p332 = pneg %p237
      %p333 = scmp.lt.s32.totalorder %s20, 1
      %s334 = scalar_select %p333, %s20, 1
      %s335 = smul.addr %s334, 32
      %s336 = smul.addr %s335, 4
      %s337 = scalar_lea.vmem %s9, %s336
      %p338 = scmp.lt.s32.totalorder %s20, 1
      %s339 = scalar_select %p338, %s20, 1
      %s340 = smul.addr %s339, 8
      %s341 = smul.addr %s340, 4
      %s342 = scalar_lea.vmem %s0, %s341
      %p343 = scmp.lt.s32.totalorder %s20, 1
      %s344 = scalar_select %p343, %s20, 1
      %s345 = smul.addr %s344, 32
      %s346 = smul.addr %s345, 4
      %s347 = scalar_lea.vmem %s1, %s346
      %p348 = scmp.lt.s32.totalorder %s20, 1
      %s349 = scalar_select %p348, %s20, 1
      %s350 = smul.addr %s349, 32
      %s351 = smul.addr %s350, 4
      %s352 = scalar_lea.vmem %s9, %s351
      %vm354 = vcmask 27648
      %355 = vst.msk [vmem:[#allocation3] sm:$0xf] %vm354, 0
      %356 = vst.msk [vmem:[#allocation3 + $0x4] sm:$0xf] %vm354, 0
      %vm357 = vcmask 24576
      %358 = vst.msk [vmem:[#allocation3 + $0x8] sm:$0x1] %vm357, 0
      %s359 = scalar_lea.vmem [#allocation3], 204
      %360 = vst.msk [vmem:[%s359] sm:$0xf] %vm354, 0
      %361 = vst.msk [vmem:[%s359 + $0x4] sm:$0xf] %vm354, 0
      %362 = vst.msk [vmem:[%s359 + $0x8] sm:$0x1] %vm357, 0
      %vm363 = vcmask 24576
      %vm364 = vsmask.f32 256
      %vm365 = vmand %vm363, %vm364
      %v366 = vld [vmem:[#allocation3] sm:$0x1]
      %v367 = vsel %vm365, 0, %v366
      %368 = vst [vmem:[#allocation3] sm:$0x1] %v367
      %v369 = vld [vmem:[#allocation3 + $0xc] sm:$0x1]
      %v370 = vsel %vm365, 0, %v369
      %371 = vst [vmem:[#allocation3 + $0xc] sm:$0x1] %v370
      %v372 = vld [vmem:[#allocation3 + $0x18] sm:$0x1]
      %v373 = vsel %vm365, 0, %v372
      %374 = vst [vmem:[#allocation3 + $0x18] sm:$0x1] %v373
      %v375 = vld [vmem:[#allocation3 + $0x24] sm:$0x1]
      %v376 = vsel %vm365, 0, %v375
      %377 = vst [vmem:[#allocation3 + $0x24] sm:$0x1] %v376
      %v378 = vld [vmem:[#allocation3 + $0x30] sm:$0x1]
      %v379 = vsel %vm365, 0, %v378
      %380 = vst [vmem:[#allocation3 + $0x30] sm:$0x1] %v379
      %v381 = vld [vmem:[#allocation3 + $0x3c] sm:$0x1]
      %v382 = vsel %vm365, 0, %v381
      %383 = vst [vmem:[#allocation3 + $0x3c] sm:$0x1] %v382
      %v384 = vld [vmem:[#allocation3 + $0x48] sm:$0x1]
      %v385 = vsel %vm365, 0, %v384
      %386 = vst [vmem:[#allocation3 + $0x48] sm:$0x1] %v385
      %v387 = vld [vmem:[#allocation3 + $0x54] sm:$0x1]
      %v388 = vsel %vm365, 0, %v387
      %389 = vst [vmem:[#allocation3 + $0x54] sm:$0x1] %v388
      %v390 = vld [vmem:[#allocation3 + $0x60] sm:$0x1]
      %v391 = vsel %vm365, 0, %v390
      %392 = vst [vmem:[#allocation3 + $0x60] sm:$0x1] %v391
      %v393 = vld [vmem:[#allocation3 + $0x6c] sm:$0x1]
      %v394 = vsel %vm365, 0, %v393
      %395 = vst [vmem:[#allocation3 + $0x6c] sm:$0x1] %v394
      %v396 = vld [vmem:[#allocation3 + $0x78] sm:$0x1]
      %v397 = vsel %vm365, 0, %v396
      %398 = vst [vmem:[#allocation3 + $0x78] sm:$0x1] %v397
      %v399 = vld [vmem:[#allocation3 + $0x84] sm:$0x1]
      %v400 = vsel %vm365, 0, %v399
      %401 = vst [vmem:[#allocation3 + $0x84] sm:$0x1] %v400
      %v402 = vld [vmem:[#allocation3 + $0x90] sm:$0x1]
      %v403 = vsel %vm365, 0, %v402
      %404 = vst [vmem:[#allocation3 + $0x90] sm:$0x1] %v403
      %v405 = vld [vmem:[#allocation3 + $0x9c] sm:$0x1]
      %v406 = vsel %vm365, 0, %v405
      %407 = vst [vmem:[#allocation3 + $0x9c] sm:$0x1] %v406
      %v408 = vld [vmem:[#allocation3 + $0xa8] sm:$0x1]
      %v409 = vsel %vm365, 0, %v408
      %410 = vst [vmem:[#allocation3 + $0xa8] sm:$0x1] %v409
      %v411 = vld [vmem:[#allocation3 + $0xb4] sm:$0x1]
      %v412 = vsel %vm365, 0, %v411
      %413 = vst [vmem:[#allocation3 + $0xb4] sm:$0x1] %v412
      %v414 = vld [vmem:[#allocation3 + $0xc0] sm:$0x1]
      %v415 = vsel %vm365, 0, %v414
      %416 = vst [vmem:[#allocation3 + $0xc0] sm:$0x1] %v415
      %v417 = vld [vmem:[#allocation3 + $0xcc] sm:$0x1]
      %v418 = vsel %vm365, 0, %v417
      %419 = vst [vmem:[#allocation3 + $0xcc] sm:$0x1] %v418
      %vm420 = vsmask.f32 7938
      %vm421 = vmand %vm363, %vm420
      %v422 = vld [vmem:[#allocation3 + $0x8] sm:$0x1]
      %v423 = vsel %vm421, 0, %v422
      %424 = vst [vmem:[#allocation3 + $0x8] sm:$0x1] %v423
      %v425 = vld [vmem:[#allocation3 + $0x14] sm:$0x1]
      %v426 = vsel %vm421, 0, %v425
      %427 = vst [vmem:[#allocation3 + $0x14] sm:$0x1] %v426
      %v428 = vld [vmem:[#allocation3 + $0x20] sm:$0x1]
      %v429 = vsel %vm421, 0, %v428
      %430 = vst [vmem:[#allocation3 + $0x20] sm:$0x1] %v429
      %v431 = vld [vmem:[#allocation3 + $0x2c] sm:$0x1]
      %v432 = vsel %vm421, 0, %v431
      %433 = vst [vmem:[#allocation3 + $0x2c] sm:$0x1] %v432
      %v434 = vld [vmem:[#allocation3 + $0x38] sm:$0x1]
      %v435 = vsel %vm421, 0, %v434
      %436 = vst [vmem:[#allocation3 + $0x38] sm:$0x1] %v435
      %v437 = vld [vmem:[#allocation3 + $0x44] sm:$0x1]
      %v438 = vsel %vm421, 0, %v437
      %439 = vst [vmem:[#allocation3 + $0x44] sm:$0x1] %v438
      %v440 = vld [vmem:[#allocation3 + $0x50] sm:$0x1]
      %v441 = vsel %vm421, 0, %v440
      %442 = vst [vmem:[#allocation3 + $0x50] sm:$0x1] %v441
      %v443 = vld [vmem:[#allocation3 + $0x5c] sm:$0x1]
      %v444 = vsel %vm421, 0, %v443
      %445 = vst [vmem:[#allocation3 + $0x5c] sm:$0x1] %v444
      %v446 = vld [vmem:[#allocation3 + $0x68] sm:$0x1]
      %v447 = vsel %vm421, 0, %v446
      %448 = vst [vmem:[#allocation3 + $0x68] sm:$0x1] %v447
      %v449 = vld [vmem:[#allocation3 + $0x74] sm:$0x1]
      %v450 = vsel %vm421, 0, %v449
      %451 = vst [vmem:[#allocation3 + $0x74] sm:$0x1] %v450
      %v452 = vld [vmem:[#allocation3 + $0x80] sm:$0x1]
      %v453 = vsel %vm421, 0, %v452
      %454 = vst [vmem:[#allocation3 + $0x80] sm:$0x1] %v453
      %v455 = vld [vmem:[#allocation3 + $0x8c] sm:$0x1]
      %v456 = vsel %vm421, 0, %v455
      %457 = vst [vmem:[#allocation3 + $0x8c] sm:$0x1] %v456
      %v458 = vld [vmem:[#allocation3 + $0x98] sm:$0x1]
      %v459 = vsel %vm421, 0, %v458
      %460 = vst [vmem:[#allocation3 + $0x98] sm:$0x1] %v459
      %v461 = vld [vmem:[#allocation3 + $0xa4] sm:$0x1]
      %v462 = vsel %vm421, 0, %v461
      %463 = vst [vmem:[#allocation3 + $0xa4] sm:$0x1] %v462
      %v464 = vld [vmem:[#allocation3 + $0xb0] sm:$0x1]
      %v465 = vsel %vm421, 0, %v464
      %466 = vst [vmem:[#allocation3 + $0xb0] sm:$0x1] %v465
      %v467 = vld [vmem:[#allocation3 + $0xbc] sm:$0x1]
      %v468 = vsel %vm421, 0, %v467
      %469 = vst [vmem:[#allocation3 + $0xbc] sm:$0x1] %v468
      %v470 = vld [vmem:[#allocation3 + $0xc8] sm:$0x1]
      %v471 = vsel %vm421, 0, %v470
      %472 = vst [vmem:[#allocation3 + $0xc8] sm:$0x1] %v471
      %v473 = vld [vmem:[#allocation3 + $0xd4] sm:$0x1]
      %v474 = vsel %vm421, 0, %v473
      %475 = vst [vmem:[#allocation3 + $0xd4] sm:$0x1] %v474
      %476 = vst.msk [vmem:[#allocation4] sm:$0xf] %vm354, 0
      %477 = vst.msk [vmem:[#allocation4 + $0x4] sm:$0xf] %vm354, 0
      %478 = vst.msk [vmem:[#allocation4 + $0x8] sm:$0x1] %vm357, 0
      %s479 = scalar_lea.vmem [#allocation4], 204
      %480 = vst.msk [vmem:[%s479] sm:$0xf] %vm354, 0
      %481 = vst.msk [vmem:[%s479 + $0x4] sm:$0xf] %vm354, 0
      %482 = vst.msk [vmem:[%s479 + $0x8] sm:$0x1] %vm357, 0
      %v483 = vld [vmem:[#allocation4] sm:$0x1]
      %v484 = vsel %vm365, 0, %v483
      %485 = vst [vmem:[#allocation4] sm:$0x1] %v484
      %v486 = vld [vmem:[#allocation4 + $0xc] sm:$0x1]
      %v487 = vsel %vm365, 0, %v486
      %488 = vst [vmem:[#allocation4 + $0xc] sm:$0x1] %v487
      %v489 = vld [vmem:[#allocation4 + $0x18] sm:$0x1]
      %v490 = vsel %vm365, 0, %v489
      %491 = vst [vmem:[#allocation4 + $0x18] sm:$0x1] %v490
      %v492 = vld [vmem:[#allocation4 + $0x24] sm:$0x1]
      %v493 = vsel %vm365, 0, %v492
      %494 = vst [vmem:[#allocation4 + $0x24] sm:$0x1] %v493
      %v495 = vld [vmem:[#allocation4 + $0x30] sm:$0x1]
      %v496 = vsel %vm365, 0, %v495
      %497 = vst [vmem:[#allocation4 + $0x30] sm:$0x1] %v496
      %v498 = vld [vmem:[#allocation4 + $0x3c] sm:$0x1]
      %v499 = vsel %vm365, 0, %v498
      %500 = vst [vmem:[#allocation4 + $0x3c] sm:$0x1] %v499
      %v501 = vld [vmem:[#allocation4 + $0x48] sm:$0x1]
      %v502 = vsel %vm365, 0, %v501
      %503 = vst [vmem:[#allocation4 + $0x48] sm:$0x1] %v502
      %v504 = vld [vmem:[#allocation4 + $0x54] sm:$0x1]
      %v505 = vsel %vm365, 0, %v504
      %506 = vst [vmem:[#allocation4 + $0x54] sm:$0x1] %v505
      %v507 = vld [vmem:[#allocation4 + $0x60] sm:$0x1]
      %v508 = vsel %vm365, 0, %v507
      %509 = vst [vmem:[#allocation4 + $0x60] sm:$0x1] %v508
      %v510 = vld [vmem:[#allocation4 + $0x6c] sm:$0x1]
      %v511 = vsel %vm365, 0, %v510
      %512 = vst [vmem:[#allocation4 + $0x6c] sm:$0x1] %v511
      %v513 = vld [vmem:[#allocation4 + $0x78] sm:$0x1]
      %v514 = vsel %vm365, 0, %v513
      %515 = vst [vmem:[#allocation4 + $0x78] sm:$0x1] %v514
      %v516 = vld [vmem:[#allocation4 + $0x84] sm:$0x1]
      %v517 = vsel %vm365, 0, %v516
      %518 = vst [vmem:[#allocation4 + $0x84] sm:$0x1] %v517
      %v519 = vld [vmem:[#allocation4 + $0x90] sm:$0x1]
      %v520 = vsel %vm365, 0, %v519
      %521 = vst [vmem:[#allocation4 + $0x90] sm:$0x1] %v520
      %v522 = vld [vmem:[#allocation4 + $0x9c] sm:$0x1]
      %v523 = vsel %vm365, 0, %v522
      %524 = vst [vmem:[#allocation4 + $0x9c] sm:$0x1] %v523
      %v525 = vld [vmem:[#allocation4 + $0xa8] sm:$0x1]
      %v526 = vsel %vm365, 0, %v525
      %527 = vst [vmem:[#allocation4 + $0xa8] sm:$0x1] %v526
      %v528 = vld [vmem:[#allocation4 + $0xb4] sm:$0x1]
      %v529 = vsel %vm365, 0, %v528
      %530 = vst [vmem:[#allocation4 + $0xb4] sm:$0x1] %v529
      %v531 = vld [vmem:[#allocation4 + $0xc0] sm:$0x1]
      %v532 = vsel %vm365, 0, %v531
      %533 = vst [vmem:[#allocation4 + $0xc0] sm:$0x1] %v532
      %v534 = vld [vmem:[#allocation4 + $0xcc] sm:$0x1]
      %v535 = vsel %vm365, 0, %v534
      %536 = vst [vmem:[#allocation4 + $0xcc] sm:$0x1] %v535
      %v537 = vld [vmem:[#allocation4 + $0x8] sm:$0x1]
      %v538 = vsel %vm421, 0, %v537
      %539 = vst [vmem:[#allocation4 + $0x8] sm:$0x1] %v538
      %v540 = vld [vmem:[#allocation4 + $0x14] sm:$0x1]
      %v541 = vsel %vm421, 0, %v540
      %542 = vst [vmem:[#allocation4 + $0x14] sm:$0x1] %v541
      %v543 = vld [vmem:[#allocation4 + $0x20] sm:$0x1]
      %v544 = vsel %vm421, 0, %v543
      %545 = vst [vmem:[#allocation4 + $0x20] sm:$0x1] %v544
      %v546 = vld [vmem:[#allocation4 + $0x2c] sm:$0x1]
      %v547 = vsel %vm421, 0, %v546
      %548 = vst [vmem:[#allocation4 + $0x2c] sm:$0x1] %v547
      %v549 = vld [vmem:[#allocation4 + $0x38] sm:$0x1]
      %v550 = vsel %vm421, 0, %v549
      %551 = vst [vmem:[#allocation4 + $0x38] sm:$0x1] %v550
      %v552 = vld [vmem:[#allocation4 + $0x44] sm:$0x1]
      %v553 = vsel %vm421, 0, %v552
      %554 = vst [vmem:[#allocation4 + $0x44] sm:$0x1] %v553
      %v555 = vld [vmem:[#allocation4 + $0x50] sm:$0x1]
      %v556 = vsel %vm421, 0, %v555
      %557 = vst [vmem:[#allocation4 + $0x50] sm:$0x1] %v556
      %v558 = vld [vmem:[#allocation4 + $0x5c] sm:$0x1]
      %v559 = vsel %vm421, 0, %v558
      %560 = vst [vmem:[#allocation4 + $0x5c] sm:$0x1] %v559
      %v561 = vld [vmem:[#allocation4 + $0x68] sm:$0x1]
      %v562 = vsel %vm421, 0, %v561
      %563 = vst [vmem:[#allocation4 + $0x68] sm:$0x1] %v562
      %v564 = vld [vmem:[#allocation4 + $0x74] sm:$0x1]
      %v565 = vsel %vm421, 0, %v564
      %566 = vst [vmem:[#allocation4 + $0x74] sm:$0x1] %v565
      %v567 = vld [vmem:[#allocation4 + $0x80] sm:$0x1]
      %v568 = vsel %vm421, 0, %v567
      %569 = vst [vmem:[#allocation4 + $0x80] sm:$0x1] %v568
      %v570 = vld [vmem:[#allocation4 + $0x8c] sm:$0x1]
      %v571 = vsel %vm421, 0, %v570
      %572 = vst [vmem:[#allocation4 + $0x8c] sm:$0x1] %v571
      %v573 = vld [vmem:[#allocation4 + $0x98] sm:$0x1]
      %v574 = vsel %vm421, 0, %v573
      %575 = vst [vmem:[#allocation4 + $0x98] sm:$0x1] %v574
      %v576 = vld [vmem:[#allocation4 + $0xa4] sm:$0x1]
      %v577 = vsel %vm421, 0, %v576
      %578 = vst [vmem:[#allocation4 + $0xa4] sm:$0x1] %v577
      %v579 = vld [vmem:[#allocation4 + $0xb0] sm:$0x1]
      %v580 = vsel %vm421, 0, %v579
      %581 = vst [vmem:[#allocation4 + $0xb0] sm:$0x1] %v580
      %v582 = vld [vmem:[#allocation4 + $0xbc] sm:$0x1]
      %v583 = vsel %vm421, 0, %v582
      %584 = vst [vmem:[#allocation4 + $0xbc] sm:$0x1] %v583
      %v585 = vld [vmem:[#allocation4 + $0xc8] sm:$0x1]
      %v586 = vsel %vm421, 0, %v585
      %587 = vst [vmem:[#allocation4 + $0xc8] sm:$0x1] %v586
      %v588 = vld [vmem:[#allocation4 + $0xd4] sm:$0x1]
      %v589 = vsel %vm421, 0, %v588
      %590 = vst [vmem:[#allocation4 + $0xd4] sm:$0x1] %v589
      %591 = vst.msk [vmem:[#allocation2] sm:$0xf] %vm354, 0
      %592 = vst.msk [vmem:[#allocation2 + $0x4] sm:$0xf] %vm354, 0
      %593 = vst.msk [vmem:[#allocation2 + $0x8] sm:$0x1] %vm357, 0
      %s594 = scalar_lea.vmem [#allocation2], 204
      %595 = vst.msk [vmem:[%s594] sm:$0xf] %vm354, 0
      %596 = vst.msk [vmem:[%s594 + $0x4] sm:$0xf] %vm354, 0
      %597 = vst.msk [vmem:[%s594 + $0x8] sm:$0x1] %vm357, 0
      %v598 = vld [vmem:[#allocation2] sm:$0x1]
      %v599 = vsel %vm365, 0, %v598
      %600 = vst [vmem:[#allocation2] sm:$0x1] %v599
      %v601 = vld [vmem:[#allocation2 + $0xc] sm:$0x1]
      %v602 = vsel %vm365, 0, %v601
      %603 = vst [vmem:[#allocation2 + $0xc] sm:$0x1] %v602
      %v604 = vld [vmem:[#allocation2 + $0x18] sm:$0x1]
      %v605 = vsel %vm365, 0, %v604
      %606 = vst [vmem:[#allocation2 + $0x18] sm:$0x1] %v605
      %v607 = vld [vmem:[#allocation2 + $0x24] sm:$0x1]
      %v608 = vsel %vm365, 0, %v607
      %609 = vst [vmem:[#allocation2 + $0x24] sm:$0x1] %v608
      %v610 = vld [vmem:[#allocation2 + $0x30] sm:$0x1]
      %v611 = vsel %vm365, 0, %v610
      %612 = vst [vmem:[#allocation2 + $0x30] sm:$0x1] %v611
      %v613 = vld [vmem:[#allocation2 + $0x3c] sm:$0x1]
      %v614 = vsel %vm365, 0, %v613
      %615 = vst [vmem:[#allocation2 + $0x3c] sm:$0x1] %v614
      %v616 = vld [vmem:[#allocation2 + $0x48] sm:$0x1]
      %v617 = vsel %vm365, 0, %v616
      %618 = vst [vmem:[#allocation2 + $0x48] sm:$0x1] %v617
      %v619 = vld [vmem:[#allocation2 + $0x54] sm:$0x1]
      %v620 = vsel %vm365, 0, %v619
      %621 = vst [vmem:[#allocation2 + $0x54] sm:$0x1] %v620
      %v622 = vld [vmem:[#allocation2 + $0x60] sm:$0x1]
      %v623 = vsel %vm365, 0, %v622
      %624 = vst [vmem:[#allocation2 + $0x60] sm:$0x1] %v623
      %v625 = vld [vmem:[#allocation2 + $0x6c] sm:$0x1]
      %v626 = vsel %vm365, 0, %v625
      %627 = vst [vmem:[#allocation2 + $0x6c] sm:$0x1] %v626
      %v628 = vld [vmem:[#allocation2 + $0x78] sm:$0x1]
      %v629 = vsel %vm365, 0, %v628
      %630 = vst [vmem:[#allocation2 + $0x78] sm:$0x1] %v629
      %v631 = vld [vmem:[#allocation2 + $0x84] sm:$0x1]
      %v632 = vsel %vm365, 0, %v631
      %633 = vst [vmem:[#allocation2 + $0x84] sm:$0x1] %v632
      %v634 = vld [vmem:[#allocation2 + $0x90] sm:$0x1]
      %v635 = vsel %vm365, 0, %v634
      %636 = vst [vmem:[#allocation2 + $0x90] sm:$0x1] %v635
      %v637 = vld [vmem:[#allocation2 + $0x9c] sm:$0x1]
      %v638 = vsel %vm365, 0, %v637
      %639 = vst [vmem:[#allocation2 + $0x9c] sm:$0x1] %v638
      %v640 = vld [vmem:[#allocation2 + $0xa8] sm:$0x1]
      %v641 = vsel %vm365, 0, %v640
      %642 = vst [vmem:[#allocation2 + $0xa8] sm:$0x1] %v641
      %v643 = vld [vmem:[#allocation2 + $0xb4] sm:$0x1]
      %v644 = vsel %vm365, 0, %v643
      %645 = vst [vmem:[#allocation2 + $0xb4] sm:$0x1] %v644
      %v646 = vld [vmem:[#allocation2 + $0xc0] sm:$0x1]
      %v647 = vsel %vm365, 0, %v646
      %648 = vst [vmem:[#allocation2 + $0xc0] sm:$0x1] %v647
      %v649 = vld [vmem:[#allocation2 + $0xcc] sm:$0x1]
      %v650 = vsel %vm365, 0, %v649
      %651 = vst [vmem:[#allocation2 + $0xcc] sm:$0x1] %v650
      %v652 = vld [vmem:[#allocation2 + $0x8] sm:$0x1]
      %v653 = vsel %vm421, 0, %v652
      %654 = vst [vmem:[#allocation2 + $0x8] sm:$0x1] %v653
      %v655 = vld [vmem:[#allocation2 + $0x14] sm:$0x1]
      %v656 = vsel %vm421, 0, %v655
      %657 = vst [vmem:[#allocation2 + $0x14] sm:$0x1] %v656
      %v658 = vld [vmem:[#allocation2 + $0x20] sm:$0x1]
      %v659 = vsel %vm421, 0, %v658
      %660 = vst [vmem:[#allocation2 + $0x20] sm:$0x1] %v659
      %v661 = vld [vmem:[#allocation2 + $0x2c] sm:$0x1]
      %v662 = vsel %vm421, 0, %v661
      %663 = vst [vmem:[#allocation2 + $0x2c] sm:$0x1] %v662
      %v664 = vld [vmem:[#allocation2 + $0x38] sm:$0x1]
      %v665 = vsel %vm421, 0, %v664
      %666 = vst [vmem:[#allocation2 + $0x38] sm:$0x1] %v665
      %v667 = vld [vmem:[#allocation2 + $0x44] sm:$0x1]
      %v668 = vsel %vm421, 0, %v667
      %669 = vst [vmem:[#allocation2 + $0x44] sm:$0x1] %v668
      %v670 = vld [vmem:[#allocation2 + $0x50] sm:$0x1]
      %v671 = vsel %vm421, 0, %v670
      %672 = vst [vmem:[#allocation2 + $0x50] sm:$0x1] %v671
      %v673 = vld [vmem:[#allocation2 + $0x5c] sm:$0x1]
      %v674 = vsel %vm421, 0, %v673
      %675 = vst [vmem:[#allocation2 + $0x5c] sm:$0x1] %v674
      %v676 = vld [vmem:[#allocation2 + $0x68] sm:$0x1]
      %v677 = vsel %vm421, 0, %v676
      %678 = vst [vmem:[#allocation2 + $0x68] sm:$0x1] %v677
      %v679 = vld [vmem:[#allocation2 + $0x74] sm:$0x1]
      %v680 = vsel %vm421, 0, %v679
      %681 = vst [vmem:[#allocation2 + $0x74] sm:$0x1] %v680
      %v682 = vld [vmem:[#allocation2 + $0x80] sm:$0x1]
      %v683 = vsel %vm421, 0, %v682
      %684 = vst [vmem:[#allocation2 + $0x80] sm:$0x1] %v683
      %v685 = vld [vmem:[#allocation2 + $0x8c] sm:$0x1]
      %v686 = vsel %vm421, 0, %v685
      %687 = vst [vmem:[#allocation2 + $0x8c] sm:$0x1] %v686
      %v688 = vld [vmem:[#allocation2 + $0x98] sm:$0x1]
      %v689 = vsel %vm421, 0, %v688
      %690 = vst [vmem:[#allocation2 + $0x98] sm:$0x1] %v689
      %v691 = vld [vmem:[#allocation2 + $0xa4] sm:$0x1]
      %v692 = vsel %vm421, 0, %v691
      %693 = vst [vmem:[#allocation2 + $0xa4] sm:$0x1] %v692
      %v694 = vld [vmem:[#allocation2 + $0xb0] sm:$0x1]
      %v695 = vsel %vm421, 0, %v694
      %696 = vst [vmem:[#allocation2 + $0xb0] sm:$0x1] %v695
      %v697 = vld [vmem:[#allocation2 + $0xbc] sm:$0x1]
      %v698 = vsel %vm421, 0, %v697
      %699 = vst [vmem:[#allocation2 + $0xbc] sm:$0x1] %v698
      %v700 = vld [vmem:[#allocation2 + $0xc8] sm:$0x1]
      %v701 = vsel %vm421, 0, %v700
      %702 = vst [vmem:[#allocation2 + $0xc8] sm:$0x1] %v701
      %v703 = vld [vmem:[#allocation2 + $0xd4] sm:$0x1]
      %v704 = vsel %vm421, 0, %v703
      %705 = vst [vmem:[#allocation2 + $0xd4] sm:$0x1] %v704
      %v706 = vld [vmem:[%s347] sm:$0xf]
      %v707 = vld [vmem:[%s347 + $0x4] sm:$0xf]
      %v708 = vld [vmem:[%s347 + $0x8] sm:$0xf]
      %v709 = vld [vmem:[%s347 + $0xc] sm:$0xf]
      %v710 = vld [vmem:[%s347 + $0x10] sm:$0xf]
      %v711 = vld [vmem:[%s347 + $0x14] sm:$0xf]
      %v712 = vld [vmem:[%s347 + $0x18] sm:$0xf]
      %v713 = vld [vmem:[%s347 + $0x1c] sm:$0xf]
      %v714 = vld [vmem:[%s347 + $0x20] sm:$0xf]
      %v715 = vld [vmem:[%s347 + $0x24] sm:$0xf]
      %v716 = vld [vmem:[%s347 + $0x28] sm:$0xf]
      %v717 = vld [vmem:[%s347 + $0x2c] sm:$0xf]
      %v718 = vld [vmem:[%s347 + $0x30] sm:$0xf]
      %v719 = vld [vmem:[%s347 + $0x34] sm:$0xf]
      %v720 = vld [vmem:[%s347 + $0x38] sm:$0xf]
      %v721 = vld [vmem:[%s347 + $0x3c] sm:$0xf]
      %v722 = vld [vmem:[%s347 + $0x40] sm:$0xf]
      %v723 = vld [vmem:[%s347 + $0x44] sm:$0xf]
      %v724 = vld [vmem:[%s347 + $0x48] sm:$0xf]
      %v725 = vld [vmem:[%s347 + $0x4c] sm:$0xf]
      %v726 = vld [vmem:[%s347 + $0x50] sm:$0xf]
      %v727 = vld [vmem:[%s347 + $0x54] sm:$0xf]
      %v728 = vld [vmem:[%s347 + $0x58] sm:$0xf]
      %v729 = vld [vmem:[%s347 + $0x5c] sm:$0xf]
      %v730 = vld [vmem:[%s347 + $0x60] sm:$0xf]
      %v731 = vld [vmem:[%s347 + $0x64] sm:$0xf]
      %v732 = vld [vmem:[%s347 + $0x68] sm:$0xf]
      %v733 = vld [vmem:[%s347 + $0x6c] sm:$0xf]
      %v734 = vld [vmem:[%s347 + $0x70] sm:$0xf]
      %v735 = vld [vmem:[%s347 + $0x74] sm:$0xf]
      %v736 = vld [vmem:[%s347 + $0x78] sm:$0xf]
      %v737 = vld [vmem:[%s347 + $0x7c] sm:$0xf]
      %vm738 = vsmask.f32 4368
      %vm739 = vmor %vm364, %vm738
      %v741 = vshrl.u32 %v706, 16
      %v743 = vrot.slane %v741, 7
      %v744 = vshll.u32 %v706, 16
      %v746 = vor.u32 %v743, %v744
      %v747 = vrot.slane %v743, 4
      %v749 = vshrl.u32 %v707, 16
      %v751 = vrot.slane %v749, 7
      %v752 = vshll.u32 %v707, 16
      %v754 = vor.u32 %v751, %v752
      %v755 = vsel %vm739, %v747, %v754
      %v756 = vrot.slane %v751, 4
      %v758 = vshrl.u32 %v708, 16
      %v760 = vrot.slane %v758, 7
      %v761 = vshll.u32 %v708, 16
      %v763 = vor.u32 %v760, %v761
      %v764 = vrot.slane %v760, 4
      %v766 = vshrl.u32 %v709, 16
      %v768 = vrot.slane %v766, 7
      %v769 = vshll.u32 %v709, 16
      %v771 = vor.u32 %v768, %v769
      %v772 = vsel %vm739, %v764, %v771
      %v773 = vrot.slane %v768, 4
      %v775 = vshrl.u32 %v710, 16
      %v777 = vrot.slane %v775, 7
      %v778 = vshll.u32 %v710, 16
      %v780 = vor.u32 %v777, %v778
      %v781 = vrot.slane %v777, 4
      %v783 = vshrl.u32 %v711, 16
      %v785 = vrot.slane %v783, 7
      %v786 = vshll.u32 %v711, 16
      %v788 = vor.u32 %v785, %v786
      %v789 = vsel %vm739, %v781, %v788
      %v790 = vrot.slane %v785, 4
      %v792 = vshrl.u32 %v712, 16
      %v794 = vrot.slane %v792, 7
      %v795 = vshll.u32 %v712, 16
      %v797 = vor.u32 %v794, %v795
      %v798 = vrot.slane %v794, 4
      %v800 = vshrl.u32 %v713, 16
      %v802 = vrot.slane %v800, 7
      %v803 = vshll.u32 %v713, 16
      %v805 = vor.u32 %v802, %v803
      %v806 = vsel %vm739, %v798, %v805
      %v807 = vrot.slane %v802, 4
      %v809 = vshrl.u32 %v714, 16
      %v811 = vrot.slane %v809, 7
      %v812 = vshll.u32 %v714, 16
      %v814 = vor.u32 %v811, %v812
      %v815 = vrot.slane %v811, 4
      %v817 = vshrl.u32 %v715, 16
      %v819 = vrot.slane %v817, 7
      %v820 = vshll.u32 %v715, 16
      %v822 = vor.u32 %v819, %v820
      %v823 = vsel %vm739, %v815, %v822
      %v824 = vrot.slane %v819, 4
      %v826 = vshrl.u32 %v716, 16
      %v828 = vrot.slane %v826, 7
      %v829 = vshll.u32 %v716, 16
      %v831 = vor.u32 %v828, %v829
      %v832 = vrot.slane %v828, 4
      %v834 = vshrl.u32 %v717, 16
      %v836 = vrot.slane %v834, 7
      %v837 = vshll.u32 %v717, 16
      %v839 = vor.u32 %v836, %v837
      %v840 = vsel %vm739, %v832, %v839
      %v841 = vrot.slane %v836, 4
      %v843 = vshrl.u32 %v718, 16
      %v845 = vrot.slane %v843, 7
      %v846 = vshll.u32 %v718, 16
      %v848 = vor.u32 %v845, %v846
      %v849 = vrot.slane %v845, 4
      %v851 = vshrl.u32 %v719, 16
      %v853 = vrot.slane %v851, 7
      %v854 = vshll.u32 %v719, 16
      %v856 = vor.u32 %v853, %v854
      %v857 = vsel %vm739, %v849, %v856
      %v858 = vrot.slane %v853, 4
      %v860 = vshrl.u32 %v720, 16
      %v862 = vrot.slane %v860, 7
      %v863 = vshll.u32 %v720, 16
      %v865 = vor.u32 %v862, %v863
      %v866 = vrot.slane %v862, 4
      %v868 = vshrl.u32 %v721, 16
      %v870 = vrot.slane %v868, 7
      %v871 = vshll.u32 %v721, 16
      %v873 = vor.u32 %v870, %v871
      %v874 = vsel %vm739, %v866, %v873
      %v875 = vrot.slane %v870, 4
      %v877 = vshrl.u32 %v722, 16
      %v879 = vrot.slane %v877, 7
      %v880 = vshll.u32 %v722, 16
      %v882 = vor.u32 %v879, %v880
      %v883 = vrot.slane %v879, 4
      %v885 = vshrl.u32 %v723, 16
      %v887 = vrot.slane %v885, 7
      %v888 = vshll.u32 %v723, 16
      %v890 = vor.u32 %v887, %v888
      %v891 = vsel %vm739, %v883, %v890
      %v892 = vrot.slane %v887, 4
      %v894 = vshrl.u32 %v724, 16
      %v896 = vrot.slane %v894, 7
      %v897 = vshll.u32 %v724, 16
      %v899 = vor.u32 %v896, %v897
      %v900 = vrot.slane %v896, 4
      %v902 = vshrl.u32 %v725, 16
      %v904 = vrot.slane %v902, 7
      %v905 = vshll.u32 %v725, 16
      %v907 = vor.u32 %v904, %v905
      %v908 = vsel %vm739, %v900, %v907
      %v909 = vrot.slane %v904, 4
      %v911 = vshrl.u32 %v726, 16
      %v913 = vrot.slane %v911, 7
      %v914 = vshll.u32 %v726, 16
      %v916 = vor.u32 %v913, %v914
      %v917 = vrot.slane %v913, 4
      %v919 = vshrl.u32 %v727, 16
      %v921 = vrot.slane %v919, 7
      %v922 = vshll.u32 %v727, 16
      %v924 = vor.u32 %v921, %v922
      %v925 = vsel %vm739, %v917, %v924
      %v926 = vrot.slane %v921, 4
      %v928 = vshrl.u32 %v728, 16
      %v930 = vrot.slane %v928, 7
      %v931 = vshll.u32 %v728, 16
      %v933 = vor.u32 %v930, %v931
      %v934 = vrot.slane %v930, 4
      %v936 = vshrl.u32 %v729, 16
      %v938 = vrot.slane %v936, 7
      %v939 = vshll.u32 %v729, 16
      %v941 = vor.u32 %v938, %v939
      %v942 = vsel %vm739, %v934, %v941
      %v943 = vrot.slane %v938, 4
      %v945 = vshrl.u32 %v730, 16
      %v947 = vrot.slane %v945, 7
      %v948 = vshll.u32 %v730, 16
      %v950 = vor.u32 %v947, %v948
      %v951 = vrot.slane %v947, 4
      %v953 = vshrl.u32 %v731, 16
      %v955 = vrot.slane %v953, 7
      %v956 = vshll.u32 %v731, 16
      %v958 = vor.u32 %v955, %v956
      %v959 = vsel %vm739, %v951, %v958
      %v960 = vrot.slane %v955, 4
      %v962 = vshrl.u32 %v732, 16
      %v964 = vrot.slane %v962, 7
      %v965 = vshll.u32 %v732, 16
      %v967 = vor.u32 %v964, %v965
      %v968 = vrot.slane %v964, 4
      %v970 = vshrl.u32 %v733, 16
      %v972 = vrot.slane %v970, 7
      %v973 = vshll.u32 %v733, 16
      %v975 = vor.u32 %v972, %v973
      %v976 = vsel %vm739, %v968, %v975
      %v977 = vrot.slane %v972, 4
      %v979 = vshrl.u32 %v734, 16
      %v981 = vrot.slane %v979, 7
      %v982 = vshll.u32 %v734, 16
      %v984 = vor.u32 %v981, %v982
      %v985 = vrot.slane %v981, 4
      %v987 = vshrl.u32 %v735, 16
      %v989 = vrot.slane %v987, 7
      %v990 = vshll.u32 %v735, 16
      %v992 = vor.u32 %v989, %v990
      %v993 = vsel %vm739, %v985, %v992
      %v994 = vrot.slane %v989, 4
      %v996 = vshrl.u32 %v736, 16
      %v998 = vrot.slane %v996, 7
      %v999 = vshll.u32 %v736, 16
      %v1001 = vor.u32 %v998, %v999
      %v1002 = vrot.slane %v998, 4
      %v1004 = vshrl.u32 %v737, 16
      %v1006 = vrot.slane %v1004, 7
      %v1007 = vshll.u32 %v737, 16
      %v1009 = vor.u32 %v1006, %v1007
      %v1010 = vsel %vm739, %v1002, %v1009
      %v1011 = vrot.slane %v1006, 4
      %s1060 = scalar_lea.vmem [#allocation3], 12
      %vm1061 = vcmask 27648
      %vm1062 = vmand %vm1061, %vm420
      %v1063 = vld [vmem:[%s1060] sm:$0xf]
      %v1064 = vsel %vm1062, %v746, %v1063
      %1065 = vst [vmem:[%s1060] sm:$0xf] %v1064
      %1066 = vst.msk [vmem:[%s1060 + $0x4] sm:$0xf] %vm354, %v755
      %v1067 = vld [vmem:[%s1060 + $0x8] sm:$0x1]
      %v1068 = vsel %vm365, %v756, %v1067
      %1069 = vst [vmem:[%s1060 + $0x8] sm:$0x1] %v1068
      %v1070 = vld [vmem:[%s1060 + $0xc] sm:$0xf]
      %v1071 = vsel %vm1062, %v763, %v1070
      %1072 = vst [vmem:[%s1060 + $0xc] sm:$0xf] %v1071
      %1073 = vst.msk [vmem:[%s1060 + $0x10] sm:$0xf] %vm354, %v772
      %v1074 = vld [vmem:[%s1060 + $0x14] sm:$0x1]
      %v1075 = vsel %vm365, %v773, %v1074
      %1076 = vst [vmem:[%s1060 + $0x14] sm:$0x1] %v1075
      %v1077 = vld [vmem:[%s1060 + $0x18] sm:$0xf]
      %v1078 = vsel %vm1062, %v780, %v1077
      %1079 = vst [vmem:[%s1060 + $0x18] sm:$0xf] %v1078
      %1080 = vst.msk [vmem:[%s1060 + $0x1c] sm:$0xf] %vm354, %v789
      %v1081 = vld [vmem:[%s1060 + $0x20] sm:$0x1]
      %v1082 = vsel %vm365, %v790, %v1081
      %1083 = vst [vmem:[%s1060 + $0x20] sm:$0x1] %v1082
      %v1084 = vld [vmem:[%s1060 + $0x24] sm:$0xf]
      %v1085 = vsel %vm1062, %v797, %v1084
      %1086 = vst [vmem:[%s1060 + $0x24] sm:$0xf] %v1085
      %1087 = vst.msk [vmem:[%s1060 + $0x28] sm:$0xf] %vm354, %v806
      %v1088 = vld [vmem:[%s1060 + $0x2c] sm:$0x1]
      %v1089 = vsel %vm365, %v807, %v1088
      %1090 = vst [vmem:[%s1060 + $0x2c] sm:$0x1] %v1089
      %v1091 = vld [vmem:[%s1060 + $0x30] sm:$0xf]
      %v1092 = vsel %vm1062, %v814, %v1091
      %1093 = vst [vmem:[%s1060 + $0x30] sm:$0xf] %v1092
      %1094 = vst.msk [vmem:[%s1060 + $0x34] sm:$0xf] %vm354, %v823
      %v1095 = vld [vmem:[%s1060 + $0x38] sm:$0x1]
      %v1096 = vsel %vm365, %v824, %v1095
      %1097 = vst [vmem:[%s1060 + $0x38] sm:$0x1] %v1096
      %v1098 = vld [vmem:[%s1060 + $0x3c] sm:$0xf]
      %v1099 = vsel %vm1062, %v831, %v1098
      %1100 = vst [vmem:[%s1060 + $0x3c] sm:$0xf] %v1099
      %1101 = vst.msk [vmem:[%s1060 + $0x40] sm:$0xf] %vm354, %v840
      %v1102 = vld [vmem:[%s1060 + $0x44] sm:$0x1]
      %v1103 = vsel %vm365, %v841, %v1102
      %1104 = vst [vmem:[%s1060 + $0x44] sm:$0x1] %v1103
      %v1105 = vld [vmem:[%s1060 + $0x48] sm:$0xf]
      %v1106 = vsel %vm1062, %v848, %v1105
      %1107 = vst [vmem:[%s1060 + $0x48] sm:$0xf] %v1106
      %1108 = vst.msk [vmem:[%s1060 + $0x4c] sm:$0xf] %vm354, %v857
      %v1109 = vld [vmem:[%s1060 + $0x50] sm:$0x1]
      %v1110 = vsel %vm365, %v858, %v1109
      %1111 = vst [vmem:[%s1060 + $0x50] sm:$0x1] %v1110
      %v1112 = vld [vmem:[%s1060 + $0x54] sm:$0xf]
      %v1113 = vsel %vm1062, %v865, %v1112
      %1114 = vst [vmem:[%s1060 + $0x54] sm:$0xf] %v1113
      %1115 = vst.msk [vmem:[%s1060 + $0x58] sm:$0xf] %vm354, %v874
      %v1116 = vld [vmem:[%s1060 + $0x5c] sm:$0x1]
      %v1117 = vsel %vm365, %v875, %v1116
      %1118 = vst [vmem:[%s1060 + $0x5c] sm:$0x1] %v1117
      %v1119 = vld [vmem:[%s1060 + $0x60] sm:$0xf]
      %v1120 = vsel %vm1062, %v882, %v1119
      %1121 = vst [vmem:[%s1060 + $0x60] sm:$0xf] %v1120
      %1122 = vst.msk [vmem:[%s1060 + $0x64] sm:$0xf] %vm354, %v891
      %v1123 = vld [vmem:[%s1060 + $0x68] sm:$0x1]
      %v1124 = vsel %vm365, %v892, %v1123
      %1125 = vst [vmem:[%s1060 + $0x68] sm:$0x1] %v1124
      %v1126 = vld [vmem:[%s1060 + $0x6c] sm:$0xf]
      %v1127 = vsel %vm1062, %v899, %v1126
      %1128 = vst [vmem:[%s1060 + $0x6c] sm:$0xf] %v1127
      %1129 = vst.msk [vmem:[%s1060 + $0x70] sm:$0xf] %vm354, %v908
      %v1130 = vld [vmem:[%s1060 + $0x74] sm:$0x1]
      %v1131 = vsel %vm365, %v909, %v1130
      %1132 = vst [vmem:[%s1060 + $0x74] sm:$0x1] %v1131
      %v1133 = vld [vmem:[%s1060 + $0x78] sm:$0xf]
      %v1134 = vsel %vm1062, %v916, %v1133
      %1135 = vst [vmem:[%s1060 + $0x78] sm:$0xf] %v1134
      %1136 = vst.msk [vmem:[%s1060 + $0x7c] sm:$0xf] %vm354, %v925
      %v1137 = vld [vmem:[%s1060 + $0x80] sm:$0x1]
      %v1138 = vsel %vm365, %v926, %v1137
      %1139 = vst [vmem:[%s1060 + $0x80] sm:$0x1] %v1138
      %v1140 = vld [vmem:[%s1060 + $0x84] sm:$0xf]
      %v1141 = vsel %vm1062, %v933, %v1140
      %1142 = vst [vmem:[%s1060 + $0x84] sm:$0xf] %v1141
      %1143 = vst.msk [vmem:[%s1060 + $0x88] sm:$0xf] %vm354, %v942
      %v1144 = vld [vmem:[%s1060 + $0x8c] sm:$0x1]
      %v1145 = vsel %vm365, %v943, %v1144
      %1146 = vst [vmem:[%s1060 + $0x8c] sm:$0x1] %v1145
      %v1147 = vld [vmem:[%s1060 + $0x90] sm:$0xf]
      %v1148 = vsel %vm1062, %v950, %v1147
      %1149 = vst [vmem:[%s1060 + $0x90] sm:$0xf] %v1148
      %1150 = vst.msk [vmem:[%s1060 + $0x94] sm:$0xf] %vm354, %v959
      %v1151 = vld [vmem:[%s1060 + $0x98] sm:$0x1]
      %v1152 = vsel %vm365, %v960, %v1151
      %1153 = vst [vmem:[%s1060 + $0x98] sm:$0x1] %v1152
      %v1154 = vld [vmem:[%s1060 + $0x9c] sm:$0xf]
      %v1155 = vsel %vm1062, %v967, %v1154
      %1156 = vst [vmem:[%s1060 + $0x9c] sm:$0xf] %v1155
      %1157 = vst.msk [vmem:[%s1060 + $0xa0] sm:$0xf] %vm354, %v976
      %v1158 = vld [vmem:[%s1060 + $0xa4] sm:$0x1]
      %v1159 = vsel %vm365, %v977, %v1158
      %1160 = vst [vmem:[%s1060 + $0xa4] sm:$0x1] %v1159
      %v1161 = vld [vmem:[%s1060 + $0xa8] sm:$0xf]
      %v1162 = vsel %vm1062, %v984, %v1161
      %1163 = vst [vmem:[%s1060 + $0xa8] sm:$0xf] %v1162
      %1164 = vst.msk [vmem:[%s1060 + $0xac] sm:$0xf] %vm354, %v993
      %v1165 = vld [vmem:[%s1060 + $0xb0] sm:$0x1]
      %v1166 = vsel %vm365, %v994, %v1165
      %1167 = vst [vmem:[%s1060 + $0xb0] sm:$0x1] %v1166
      %v1168 = vld [vmem:[%s1060 + $0xb4] sm:$0xf]
      %v1169 = vsel %vm1062, %v1001, %v1168
      %1170 = vst [vmem:[%s1060 + $0xb4] sm:$0xf] %v1169
      %1171 = vst.msk [vmem:[%s1060 + $0xb8] sm:$0xf] %vm354, %v1010
      %v1172 = vld [vmem:[%s1060 + $0xbc] sm:$0x1]
      %v1173 = vsel %vm365, %v1011, %v1172
      %1174 = vst [vmem:[%s1060 + $0xbc] sm:$0x1] %v1173
      %v1175 = vld [vmem:[%s342] sm:$0xf]
      %v1176 = vld [vmem:[%s342 + $0x4] sm:$0xf]
      %v1177 = vld [vmem:[%s342 + $0x8] sm:$0xf]
      %v1178 = vld [vmem:[%s342 + $0xc] sm:$0xf]
      %v1179 = vld [vmem:[%s342 + $0x10] sm:$0xf]
      %v1180 = vld [vmem:[%s342 + $0x14] sm:$0xf]
      %v1181 = vld [vmem:[%s342 + $0x18] sm:$0xf]
      %v1182 = vld [vmem:[%s342 + $0x1c] sm:$0xf]
      %v1183 = vld [vmem:[%s2] sm:$0xf]
      %v1184 = vld [vmem:[%s3] sm:$0x1]
      %v1186 = vlaneseq
      %v1187 = vshrl.u32 %v1186, 7
      %v1188 = vsub.s32 0, %v1187
      %v1189 = vrot.slane %v1184, %v1188
      %v1199 = vunpack.c.l.b16 %v1175
      %v1200 = vunpack.c.l.b16 %v1176
      %v1201 = vunpack.c.l.b16 %v1177
      %v1202 = vunpack.c.l.b16 %v1178
      %v1203 = vunpack.c.l.b16 %v1179
      %v1204 = vunpack.c.l.b16 %v1180
      %v1205 = vunpack.c.l.b16 %v1181
      %v1206 = vunpack.c.l.b16 %v1182
      %v1207 = vpack.c.b16 %v1200, %v1199
      %v1208 = vpack.c.b16 %v1202, %v1201
      %v1209 = vpack.c.b16 %v1204, %v1203
      %v1210 = vpack.c.b16 %v1206, %v1205
      %vm1211 = vcmask 64512
      %v1213 = vsel %vm1211, %v1207, 0
      %v1216 = vsel %vm1211, %v1208, 0
      %v1219 = vsel %vm1211, %v1209, 0
      %v1222 = vsel %vm1211, %v1210, 0
      %vm1224 = vcmask 1043456
      %v1226 = vsel %vm1224, %v1183, 0
      %1228 = vmatprep.subr.bf16.mxu0 0
      %1229 = vmatpush1.bf16.msra.mxu0 0
      %1230 = vmatprep.subr.bf16.mxu0 0
      %1231 = vmatpush1.bf16.msra.mxu0 0
      %1232 = vmatprep.subr.bf16.mxu0 0
      %1233 = vmatpush1.bf16.msra.mxu0 0
      %1234 = vmatprep.subr.bf16.mxu0 0
      %1235 = vmatpush1.bf16.msra.mxu0 0
      %1236 = vmatprep.subr.bf16.mxu0 0
      %1237 = vmatpush1.bf16.msra.mxu0 0
      %1238 = vmatprep.subr.bf16.mxu0 0
      %1239 = vmatpush1.bf16.msra.mxu0 0
      %1240 = vmatprep.subr.bf16.mxu0 0
      %1241 = vmatpush1.bf16.msra.mxu0 0
      %1242 = vmatprep.subr.bf16.mxu0 0
      %1243 = vmatpush1.bf16.msra.mxu0 %v1226
      %1244 = vmatprep.subr.bf16.mxu0 0
      %1245 = vmatpush2.bf16.msra.mxu0 0
      %1246 = vmatprep.subr.bf16.mxu0 0
      %1247 = vmatpush2.bf16.msra.mxu0 0
      %1248 = vmatprep.subr.bf16.mxu0 0
      %1249 = vmatpush2.bf16.msra.mxu0 0
      %1250 = vmatprep.subr.bf16.mxu0 0
      %1251 = vmatpush2.bf16.msra.mxu0 0
      %1252 = vmatprep.subr.bf16.mxu0 0
      %1253 = vmatpush2.bf16.msra.mxu0 0
      %1254 = vmatprep.subr.bf16.mxu0 0
      %1255 = vmatpush2.bf16.msra.mxu0 0
      %1256 = vmatprep.subr.bf16.mxu0 0
      %1257 = vmatpush2.bf16.msra.mxu0 0
      %1258 = vmatprep.subr.bf16.mxu0 0
      %1259 = vmatpush2.bf16.msra.mxu0 0
      %1260 = vmatprep.mubr.bf16.mxu0 0
      %1261 = vmatmul.mubr.bf16.gmra.mxu0 %v1213
      %v1262 = vpop.f32.mrf.mxu0
      %v1263 = vadd.f32 %v1189, %v1262
      %v1264 = vpop.f32.mrf.mxu0
      %v1265 = vpop.f32.mrf.mxu0
      %v1266 = vadd.f32 %v1189, %v1265
      %v1267 = vpop.f32.mrf.mxu0
      %1268 = vmatprep.mubr.bf16.mxu0 0
      %1269 = vmatmul.mubr.bf16.gmra.mxu0 %v1216
      %v1270 = vpop.f32.mrf.mxu0
      %v1271 = vadd.f32 %v1189, %v1270
      %v1272 = vpop.f32.mrf.mxu0
      %v1273 = vpop.f32.mrf.mxu0
      %v1274 = vadd.f32 %v1189, %v1273
      %v1275 = vpop.f32.mrf.mxu0
      %1276 = vmatprep.mubr.bf16.mxu0 0
      %1277 = vmatmul.mubr.bf16.gmra.mxu0 %v1219
      %v1278 = vpop.f32.mrf.mxu0
      %v1279 = vadd.f32 %v1189, %v1278
      %v1280 = vpop.f32.mrf.mxu0
      %v1281 = vpop.f32.mrf.mxu0
      %v1282 = vadd.f32 %v1189, %v1281
      %v1283 = vpop.f32.mrf.mxu0
      %1284 = vmatprep.mubr.bf16.mxu0 0
      %1285 = vmatmul.mubr.bf16.gmra.mxu0 %v1222
      %v1286 = vpop.f32.mrf.mxu0
      %v1287 = vadd.f32 %v1189, %v1286
      %v1288 = vpop.f32.mrf.mxu0
      %v1289 = vpop.f32.mrf.mxu0
      %v1290 = vadd.f32 %v1189, %v1289
      %v1291 = vpop.f32.mrf.mxu0
      %1292 = vdwg.mxu0
      %v1301 = vcombine.high %v1263, %v1263
      %v1303 = vunpack.c.l.s4 1966171168
      %v1304 = vunpack.c.0.s8 %v1303
      %v1305 = vlaneseq
      %v1306 = vshrl.u32 %v1305, 7
      %v1307 = vsub.s32 %v1304, %v1306
      %v1308 = vrot.slane %v1263, %v1307
      %v1310 = vunpack.c.l.s4 1966171168
      %v1311 = vunpack.c.0.s8 %v1310
      %v1312 = vlaneseq
      %v1313 = vshrl.u32 %v1312, 7
      %v1314 = vsub.s32 %v1311, %v1313
      %v1315 = vrot.slane %v1301, %v1314
      %v1316 = vcombine.high %v1308, %v1308
      %v1317 = vcombine.high %v1315, %v1315
      %v1319 = vunpack.c.l.s4 1966171168
      %v1320 = vunpack.c.0.s8 %v1319
      %v1321 = vlaneseq
      %v1322 = vshrl.u32 %v1321, 7
      %v1323 = vsub.s32 %v1320, %v1322
      %v1324 = vrot.slane %v1308, %v1323
      %v1326 = vunpack.c.l.s4 1966171168
      %v1327 = vunpack.c.0.s8 %v1326
      %v1328 = vlaneseq
      %v1329 = vshrl.u32 %v1328, 7
      %v1330 = vsub.s32 %v1327, %v1329
      %v1331 = vrot.slane %v1315, %v1330
      %v1333 = vunpack.c.l.s4 1966171168
      %v1334 = vunpack.c.0.s8 %v1333
      %v1335 = vlaneseq
      %v1336 = vshrl.u32 %v1335, 7
      %v1337 = vsub.s32 %v1334, %v1336
      %v1338 = vrot.slane %v1316, %v1337
      %v1340 = vunpack.c.l.s4 1966171168
      %v1341 = vunpack.c.0.s8 %v1340
      %v1342 = vlaneseq
      %v1343 = vshrl.u32 %v1342, 7
      %v1344 = vsub.s32 %v1341, %v1343
      %v1345 = vrot.slane %v1317, %v1344
      %v1346 = vcombine.high %v1324, %v1324
      %v1347 = vcombine.high %v1331, %v1331
      %v1348 = vcombine.high %v1338, %v1338
      %v1349 = vcombine.high %v1345, %v1345
      %v1350 = vcombine.high %v1266, %v1266
      %v1352 = vunpack.c.l.s4 1966171168
      %v1353 = vunpack.c.0.s8 %v1352
      %v1354 = vlaneseq
      %v1355 = vshrl.u32 %v1354, 7
      %v1356 = vsub.s32 %v1353, %v1355
      %v1357 = vrot.slane %v1266, %v1356
      %v1359 = vunpack.c.l.s4 1966171168
      %v1360 = vunpack.c.0.s8 %v1359
      %v1361 = vlaneseq
      %v1362 = vshrl.u32 %v1361, 7
      %v1363 = vsub.s32 %v1360, %v1362
      %v1364 = vrot.slane %v1350, %v1363
      %v1365 = vcombine.high %v1357, %v1357
      %v1366 = vcombine.high %v1364, %v1364
      %v1368 = vunpack.c.l.s4 1966171168
      %v1369 = vunpack.c.0.s8 %v1368
      %v1370 = vlaneseq
      %v1371 = vshrl.u32 %v1370, 7
      %v1372 = vsub.s32 %v1369, %v1371
      %v1373 = vrot.slane %v1357, %v1372
      %v1375 = vunpack.c.l.s4 1966171168
      %v1376 = vunpack.c.0.s8 %v1375
      %v1377 = vlaneseq
      %v1378 = vshrl.u32 %v1377, 7
      %v1379 = vsub.s32 %v1376, %v1378
      %v1380 = vrot.slane %v1364, %v1379
      %v1382 = vunpack.c.l.s4 1966171168
      %v1383 = vunpack.c.0.s8 %v1382
      %v1384 = vlaneseq
      %v1385 = vshrl.u32 %v1384, 7
      %v1386 = vsub.s32 %v1383, %v1385
      %v1387 = vrot.slane %v1365, %v1386
      %v1389 = vunpack.c.l.s4 1966171168
      %v1390 = vunpack.c.0.s8 %v1389
      %v1391 = vlaneseq
      %v1392 = vshrl.u32 %v1391, 7
      %v1393 = vsub.s32 %v1390, %v1392
      %v1394 = vrot.slane %v1366, %v1393
      %v1395 = vcombine.high %v1373, %v1373
      %v1396 = vcombine.high %v1380, %v1380
      %v1397 = vcombine.high %v1387, %v1387
      %v1398 = vcombine.high %v1394, %v1394
      %v1399 = vcombine.high %v1271, %v1271
      %v1401 = vunpack.c.l.s4 1966171168
      %v1402 = vunpack.c.0.s8 %v1401
      %v1403 = vlaneseq
      %v1404 = vshrl.u32 %v1403, 7
      %v1405 = vsub.s32 %v1402, %v1404
      %v1406 = vrot.slane %v1271, %v1405
      %v1408 = vunpack.c.l.s4 1966171168
      %v1409 = vunpack.c.0.s8 %v1408
      %v1410 = vlaneseq
      %v1411 = vshrl.u32 %v1410, 7
      %v1412 = vsub.s32 %v1409, %v1411
      %v1413 = vrot.slane %v1399, %v1412
      %v1414 = vcombine.high %v1406, %v1406
      %v1415 = vcombine.high %v1413, %v1413
      %v1417 = vunpack.c.l.s4 1966171168
      %v1418 = vunpack.c.0.s8 %v1417
      %v1419 = vlaneseq
      %v1420 = vshrl.u32 %v1419, 7
      %v1421 = vsub.s32 %v1418, %v1420
      %v1422 = vrot.slane %v1406, %v1421
      %v1424 = vunpack.c.l.s4 1966171168
      %v1425 = vunpack.c.0.s8 %v1424
      %v1426 = vlaneseq
      %v1427 = vshrl.u32 %v1426, 7
      %v1428 = vsub.s32 %v1425, %v1427
      %v1429 = vrot.slane %v1413, %v1428
      %v1431 = vunpack.c.l.s4 1966171168
      %v1432 = vunpack.c.0.s8 %v1431
      %v1433 = vlaneseq
      %v1434 = vshrl.u32 %v1433, 7
      %v1435 = vsub.s32 %v1432, %v1434
      %v1436 = vrot.slane %v1414, %v1435
      %v1438 = vunpack.c.l.s4 1966171168
      %v1439 = vunpack.c.0.s8 %v1438
      %v1440 = vlaneseq
      %v1441 = vshrl.u32 %v1440, 7
      %v1442 = vsub.s32 %v1439, %v1441
      %v1443 = vrot.slane %v1415, %v1442
      %v1444 = vcombine.high %v1422, %v1422
      %v1445 = vcombine.high %v1429, %v1429
      %v1446 = vcombine.high %v1436, %v1436
      %v1447 = vcombine.high %v1443, %v1443
      %v1448 = vcombine.high %v1274, %v1274
      %v1450 = vunpack.c.l.s4 1966171168
      %v1451 = vunpack.c.0.s8 %v1450
      %v1452 = vlaneseq
      %v1453 = vshrl.u32 %v1452, 7
      %v1454 = vsub.s32 %v1451, %v1453
      %v1455 = vrot.slane %v1274, %v1454
      %v1457 = vunpack.c.l.s4 1966171168
      %v1458 = vunpack.c.0.s8 %v1457
      %v1459 = vlaneseq
      %v1460 = vshrl.u32 %v1459, 7
      %v1461 = vsub.s32 %v1458, %v1460
      %v1462 = vrot.slane %v1448, %v1461
      %v1463 = vcombine.high %v1455, %v1455
      %v1464 = vcombine.high %v1462, %v1462
      %v1466 = vunpack.c.l.s4 1966171168
      %v1467 = vunpack.c.0.s8 %v1466
      %v1468 = vlaneseq
      %v1469 = vshrl.u32 %v1468, 7
      %v1470 = vsub.s32 %v1467, %v1469
      %v1471 = vrot.slane %v1455, %v1470
      %v1473 = vunpack.c.l.s4 1966171168
      %v1474 = vunpack.c.0.s8 %v1473
      %v1475 = vlaneseq
      %v1476 = vshrl.u32 %v1475, 7
      %v1477 = vsub.s32 %v1474, %v1476
      %v1478 = vrot.slane %v1462, %v1477
      %v1480 = vunpack.c.l.s4 1966171168
      %v1481 = vunpack.c.0.s8 %v1480
      %v1482 = vlaneseq
      %v1483 = vshrl.u32 %v1482, 7
      %v1484 = vsub.s32 %v1481, %v1483
      %v1485 = vrot.slane %v1463, %v1484
      %v1487 = vunpack.c.l.s4 1966171168
      %v1488 = vunpack.c.0.s8 %v1487
      %v1489 = vlaneseq
      %v1490 = vshrl.u32 %v1489, 7
      %v1491 = vsub.s32 %v1488, %v1490
      %v1492 = vrot.slane %v1464, %v1491
      %v1493 = vcombine.high %v1471, %v1471
      %v1494 = vcombine.high %v1478, %v1478
      %v1495 = vcombine.high %v1485, %v1485
      %v1496 = vcombine.high %v1492, %v1492
      %v1497 = vcombine.high %v1279, %v1279
      %v1499 = vunpack.c.l.s4 1966171168
      %v1500 = vunpack.c.0.s8 %v1499
      %v1501 = vlaneseq
      %v1502 = vshrl.u32 %v1501, 7
      %v1503 = vsub.s32 %v1500, %v1502
      %v1504 = vrot.slane %v1279, %v1503
      %v1506 = vunpack.c.l.s4 1966171168
      %v1507 = vunpack.c.0.s8 %v1506
      %v1508 = vlaneseq
      %v1509 = vshrl.u32 %v1508, 7
      %v1510 = vsub.s32 %v1507, %v1509
      %v1511 = vrot.slane %v1497, %v1510
      %v1512 = vcombine.high %v1504, %v1504
      %v1513 = vcombine.high %v1511, %v1511
      %v1515 = vunpack.c.l.s4 1966171168
      %v1516 = vunpack.c.0.s8 %v1515
      %v1517 = vlaneseq
      %v1518 = vshrl.u32 %v1517, 7
      %v1519 = vsub.s32 %v1516, %v1518
      %v1520 = vrot.slane %v1504, %v1519
      %v1522 = vunpack.c.l.s4 1966171168
      %v1523 = vunpack.c.0.s8 %v1522
      %v1524 = vlaneseq
      %v1525 = vshrl.u32 %v1524, 7
      %v1526 = vsub.s32 %v1523, %v1525
      %v1527 = vrot.slane %v1511, %v1526
      %v1529 = vunpack.c.l.s4 1966171168
      %v1530 = vunpack.c.0.s8 %v1529
      %v1531 = vlaneseq
      %v1532 = vshrl.u32 %v1531, 7
      %v1533 = vsub.s32 %v1530, %v1532
      %v1534 = vrot.slane %v1512, %v1533
      %v1536 = vunpack.c.l.s4 1966171168
      %v1537 = vunpack.c.0.s8 %v1536
      %v1538 = vlaneseq
      %v1539 = vshrl.u32 %v1538, 7
      %v1540 = vsub.s32 %v1537, %v1539
      %v1541 = vrot.slane %v1513, %v1540
      %v1542 = vcombine.high %v1520, %v1520
      %v1543 = vcombine.high %v1527, %v1527
      %v1544 = vcombine.high %v1534, %v1534
      %v1545 = vcombine.high %v1541, %v1541
      %v1546 = vcombine.high %v1282, %v1282
      %v1548 = vunpack.c.l.s4 1966171168
      %v1549 = vunpack.c.0.s8 %v1548
      %v1550 = vlaneseq
      %v1551 = vshrl.u32 %v1550, 7
      %v1552 = vsub.s32 %v1549, %v1551
      %v1553 = vrot.slane %v1282, %v1552
      %v1555 = vunpack.c.l.s4 1966171168
      %v1556 = vunpack.c.0.s8 %v1555
      %v1557 = vlaneseq
      %v1558 = vshrl.u32 %v1557, 7
      %v1559 = vsub.s32 %v1556, %v1558
      %v1560 = vrot.slane %v1546, %v1559
      %v1561 = vcombine.high %v1553, %v1553
      %v1562 = vcombine.high %v1560, %v1560
      %v1564 = vunpack.c.l.s4 1966171168
      %v1565 = vunpack.c.0.s8 %v1564
      %v1566 = vlaneseq
      %v1567 = vshrl.u32 %v1566, 7
      %v1568 = vsub.s32 %v1565, %v1567
      %v1569 = vrot.slane %v1553, %v1568
      %v1571 = vunpack.c.l.s4 1966171168
      %v1572 = vunpack.c.0.s8 %v1571
      %v1573 = vlaneseq
      %v1574 = vshrl.u32 %v1573, 7
      %v1575 = vsub.s32 %v1572, %v1574
      %v1576 = vrot.slane %v1560, %v1575
      %v1578 = vunpack.c.l.s4 1966171168
      %v1579 = vunpack.c.0.s8 %v1578
      %v1580 = vlaneseq
      %v1581 = vshrl.u32 %v1580, 7
      %v1582 = vsub.s32 %v1579, %v1581
      %v1583 = vrot.slane %v1561, %v1582
      %v1585 = vunpack.c.l.s4 1966171168
      %v1586 = vunpack.c.0.s8 %v1585
      %v1587 = vlaneseq
      %v1588 = vshrl.u32 %v1587, 7
      %v1589 = vsub.s32 %v1586, %v1588
      %v1590 = vrot.slane %v1562, %v1589
      %v1591 = vcombine.high %v1569, %v1569
      %v1592 = vcombine.high %v1576, %v1576
      %v1593 = vcombine.high %v1583, %v1583
      %v1594 = vcombine.high %v1590, %v1590
      %v1595 = vcombine.high %v1287, %v1287
      %v1597 = vunpack.c.l.s4 1966171168
      %v1598 = vunpack.c.0.s8 %v1597
      %v1599 = vlaneseq
      %v1600 = vshrl.u32 %v1599, 7
      %v1601 = vsub.s32 %v1598, %v1600
      %v1602 = vrot.slane %v1287, %v1601
      %v1604 = vunpack.c.l.s4 1966171168
      %v1605 = vunpack.c.0.s8 %v1604
      %v1606 = vlaneseq
      %v1607 = vshrl.u32 %v1606, 7
      %v1608 = vsub.s32 %v1605, %v1607
      %v1609 = vrot.slane %v1595, %v1608
      %v1610 = vcombine.high %v1602, %v1602
      %v1611 = vcombine.high %v1609, %v1609
      %v1613 = vunpack.c.l.s4 1966171168
      %v1614 = vunpack.c.0.s8 %v1613
      %v1615 = vlaneseq
      %v1616 = vshrl.u32 %v1615, 7
      %v1617 = vsub.s32 %v1614, %v1616
      %v1618 = vrot.slane %v1602, %v1617
      %v1620 = vunpack.c.l.s4 1966171168
      %v1621 = vunpack.c.0.s8 %v1620
      %v1622 = vlaneseq
      %v1623 = vshrl.u32 %v1622, 7
      %v1624 = vsub.s32 %v1621, %v1623
      %v1625 = vrot.slane %v1609, %v1624
      %v1627 = vunpack.c.l.s4 1966171168
      %v1628 = vunpack.c.0.s8 %v1627
      %v1629 = vlaneseq
      %v1630 = vshrl.u32 %v1629, 7
      %v1631 = vsub.s32 %v1628, %v1630
      %v1632 = vrot.slane %v1610, %v1631
      %v1634 = vunpack.c.l.s4 1966171168
      %v1635 = vunpack.c.0.s8 %v1634
      %v1636 = vlaneseq
      %v1637 = vshrl.u32 %v1636, 7
      %v1638 = vsub.s32 %v1635, %v1637
      %v1639 = vrot.slane %v1611, %v1638
      %v1640 = vcombine.high %v1618, %v1618
      %v1641 = vcombine.high %v1625, %v1625
      %v1642 = vcombine.high %v1632, %v1632
      %v1643 = vcombine.high %v1639, %v1639
      %v1644 = vcombine.high %v1290, %v1290
      %v1646 = vunpack.c.l.s4 1966171168
      %v1647 = vunpack.c.0.s8 %v1646
      %v1648 = vlaneseq
      %v1649 = vshrl.u32 %v1648, 7
      %v1650 = vsub.s32 %v1647, %v1649
      %v1651 = vrot.slane %v1290, %v1650
      %v1653 = vunpack.c.l.s4 1966171168
      %v1654 = vunpack.c.0.s8 %v1653
      %v1655 = vlaneseq
      %v1656 = vshrl.u32 %v1655, 7
      %v1657 = vsub.s32 %v1654, %v1656
      %v1658 = vrot.slane %v1644, %v1657
      %v1659 = vcombine.high %v1651, %v1651
      %v1660 = vcombine.high %v1658, %v1658
      %v1662 = vunpack.c.l.s4 1966171168
      %v1663 = vunpack.c.0.s8 %v1662
      %v1664 = vlaneseq
      %v1665 = vshrl.u32 %v1664, 7
      %v1666 = vsub.s32 %v1663, %v1665
      %v1667 = vrot.slane %v1651, %v1666
      %v1669 = vunpack.c.l.s4 1966171168
      %v1670 = vunpack.c.0.s8 %v1669
      %v1671 = vlaneseq
      %v1672 = vshrl.u32 %v1671, 7
      %v1673 = vsub.s32 %v1670, %v1672
      %v1674 = vrot.slane %v1658, %v1673
      %v1676 = vunpack.c.l.s4 1966171168
      %v1677 = vunpack.c.0.s8 %v1676
      %v1678 = vlaneseq
      %v1679 = vshrl.u32 %v1678, 7
      %v1680 = vsub.s32 %v1677, %v1679
      %v1681 = vrot.slane %v1659, %v1680
      %v1683 = vunpack.c.l.s4 1966171168
      %v1684 = vunpack.c.0.s8 %v1683
      %v1685 = vlaneseq
      %v1686 = vshrl.u32 %v1685, 7
      %v1687 = vsub.s32 %v1684, %v1686
      %v1688 = vrot.slane %v1660, %v1687
      %v1689 = vcombine.high %v1667, %v1667
      %v1690 = vcombine.high %v1674, %v1674
      %v1691 = vcombine.high %v1681, %v1681
      %v1692 = vcombine.high %v1688, %v1688
      %v1757 = vlaneseq
      %v1758 = vshrl.u32 %v1757, 7
      %v1759 = vsub.s32 0, %v1758
      %v1760 = vrot.slane %v1324, %v1759
      %v1761 = vlaneseq
      %v1762 = vshrl.u32 %v1761, 7
      %v1763 = vsub.s32 0, %v1762
      %v1764 = vrot.slane %v1338, %v1763
      %v1765 = vlaneseq
      %v1766 = vshrl.u32 %v1765, 7
      %v1767 = vsub.s32 0, %v1766
      %v1768 = vrot.slane %v1346, %v1767
      %v1769 = vlaneseq
      %v1770 = vshrl.u32 %v1769, 7
      %v1771 = vsub.s32 0, %v1770
      %v1772 = vrot.slane %v1348, %v1771
      %v1773 = vlaneseq
      %v1774 = vshrl.u32 %v1773, 7
      %v1775 = vsub.s32 0, %v1774
      %v1776 = vrot.slane %v1331, %v1775
      %v1777 = vlaneseq
      %v1778 = vshrl.u32 %v1777, 7
      %v1779 = vsub.s32 0, %v1778
      %v1780 = vrot.slane %v1345, %v1779
      %v1781 = vlaneseq
      %v1782 = vshrl.u32 %v1781, 7
      %v1783 = vsub.s32 0, %v1782
      %v1784 = vrot.slane %v1347, %v1783
      %v1785 = vlaneseq
      %v1786 = vshrl.u32 %v1785, 7
      %v1787 = vsub.s32 0, %v1786
      %v1788 = vrot.slane %v1349, %v1787
      %v1789 = vlaneseq
      %v1790 = vshrl.u32 %v1789, 7
      %v1791 = vsub.s32 0, %v1790
      %v1792 = vrot.slane %v1373, %v1791
      %v1793 = vlaneseq
      %v1794 = vshrl.u32 %v1793, 7
      %v1795 = vsub.s32 0, %v1794
      %v1796 = vrot.slane %v1387, %v1795
      %v1797 = vlaneseq
      %v1798 = vshrl.u32 %v1797, 7
      %v1799 = vsub.s32 0, %v1798
      %v1800 = vrot.slane %v1395, %v1799
      %v1801 = vlaneseq
      %v1802 = vshrl.u32 %v1801, 7
      %v1803 = vsub.s32 0, %v1802
      %v1804 = vrot.slane %v1397, %v1803
      %v1805 = vlaneseq
      %v1806 = vshrl.u32 %v1805, 7
      %v1807 = vsub.s32 0, %v1806
      %v1808 = vrot.slane %v1380, %v1807
      %v1809 = vlaneseq
      %v1810 = vshrl.u32 %v1809, 7
      %v1811 = vsub.s32 0, %v1810
      %v1812 = vrot.slane %v1394, %v1811
      %v1813 = vlaneseq
      %v1814 = vshrl.u32 %v1813, 7
      %v1815 = vsub.s32 0, %v1814
      %v1816 = vrot.slane %v1396, %v1815
      %v1817 = vlaneseq
      %v1818 = vshrl.u32 %v1817, 7
      %v1819 = vsub.s32 0, %v1818
      %v1820 = vrot.slane %v1398, %v1819
      %v1821 = vlaneseq
      %v1822 = vshrl.u32 %v1821, 7
      %v1823 = vsub.s32 0, %v1822
      %v1824 = vrot.slane %v1422, %v1823
      %v1825 = vlaneseq
      %v1826 = vshrl.u32 %v1825, 7
      %v1827 = vsub.s32 0, %v1826
      %v1828 = vrot.slane %v1436, %v1827
      %v1829 = vlaneseq
      %v1830 = vshrl.u32 %v1829, 7
      %v1831 = vsub.s32 0, %v1830
      %v1832 = vrot.slane %v1444, %v1831
      %v1833 = vlaneseq
      %v1834 = vshrl.u32 %v1833, 7
      %v1835 = vsub.s32 0, %v1834
      %v1836 = vrot.slane %v1446, %v1835
      %v1837 = vlaneseq
      %v1838 = vshrl.u32 %v1837, 7
      %v1839 = vsub.s32 0, %v1838
      %v1840 = vrot.slane %v1429, %v1839
      %v1841 = vlaneseq
      %v1842 = vshrl.u32 %v1841, 7
      %v1843 = vsub.s32 0, %v1842
      %v1844 = vrot.slane %v1443, %v1843
      %v1845 = vlaneseq
      %v1846 = vshrl.u32 %v1845, 7
      %v1847 = vsub.s32 0, %v1846
      %v1848 = vrot.slane %v1445, %v1847
      %v1849 = vlaneseq
      %v1850 = vshrl.u32 %v1849, 7
      %v1851 = vsub.s32 0, %v1850
      %v1852 = vrot.slane %v1447, %v1851
      %v1853 = vlaneseq
      %v1854 = vshrl.u32 %v1853, 7
      %v1855 = vsub.s32 0, %v1854
      %v1856 = vrot.slane %v1471, %v1855
      %v1857 = vlaneseq
      %v1858 = vshrl.u32 %v1857, 7
      %v1859 = vsub.s32 0, %v1858
      %v1860 = vrot.slane %v1485, %v1859
      %v1861 = vlaneseq
      %v1862 = vshrl.u32 %v1861, 7
      %v1863 = vsub.s32 0, %v1862
      %v1864 = vrot.slane %v1493, %v1863
      %v1865 = vlaneseq
      %v1866 = vshrl.u32 %v1865, 7
      %v1867 = vsub.s32 0, %v1866
      %v1868 = vrot.slane %v1495, %v1867
      %v1869 = vlaneseq
      %v1870 = vshrl.u32 %v1869, 7
      %v1871 = vsub.s32 0, %v1870
      %v1872 = vrot.slane %v1478, %v1871
      %v1873 = vlaneseq
      %v1874 = vshrl.u32 %v1873, 7
      %v1875 = vsub.s32 0, %v1874
      %v1876 = vrot.slane %v1492, %v1875
      %v1877 = vlaneseq
      %v1878 = vshrl.u32 %v1877, 7
      %v1879 = vsub.s32 0, %v1878
      %v1880 = vrot.slane %v1494, %v1879
      %v1881 = vlaneseq
      %v1882 = vshrl.u32 %v1881, 7
      %v1883 = vsub.s32 0, %v1882
      %v1884 = vrot.slane %v1496, %v1883
      %v1885 = vlaneseq
      %v1886 = vshrl.u32 %v1885, 7
      %v1887 = vsub.s32 0, %v1886
      %v1888 = vrot.slane %v1520, %v1887
      %v1889 = vlaneseq
      %v1890 = vshrl.u32 %v1889, 7
      %v1891 = vsub.s32 0, %v1890
      %v1892 = vrot.slane %v1534, %v1891
      %v1893 = vlaneseq
      %v1894 = vshrl.u32 %v1893, 7
      %v1895 = vsub.s32 0, %v1894
      %v1896 = vrot.slane %v1542, %v1895
      %v1897 = vlaneseq
      %v1898 = vshrl.u32 %v1897, 7
      %v1899 = vsub.s32 0, %v1898
      %v1900 = vrot.slane %v1544, %v1899
      %v1901 = vlaneseq
      %v1902 = vshrl.u32 %v1901, 7
      %v1903 = vsub.s32 0, %v1902
      %v1904 = vrot.slane %v1527, %v1903
      %v1905 = vlaneseq
      %v1906 = vshrl.u32 %v1905, 7
      %v1907 = vsub.s32 0, %v1906
      %v1908 = vrot.slane %v1541, %v1907
      %v1909 = vlaneseq
      %v1910 = vshrl.u32 %v1909, 7
      %v1911 = vsub.s32 0, %v1910
      %v1912 = vrot.slane %v1543, %v1911
      %v1913 = vlaneseq
      %v1914 = vshrl.u32 %v1913, 7
      %v1915 = vsub.s32 0, %v1914
      %v1916 = vrot.slane %v1545, %v1915
      %v1917 = vlaneseq
      %v1918 = vshrl.u32 %v1917, 7
      %v1919 = vsub.s32 0, %v1918
      %v1920 = vrot.slane %v1569, %v1919
      %v1921 = vlaneseq
      %v1922 = vshrl.u32 %v1921, 7
      %v1923 = vsub.s32 0, %v1922
      %v1924 = vrot.slane %v1583, %v1923
      %v1925 = vlaneseq
      %v1926 = vshrl.u32 %v1925, 7
      %v1927 = vsub.s32 0, %v1926
      %v1928 = vrot.slane %v1591, %v1927
      %v1929 = vlaneseq
      %v1930 = vshrl.u32 %v1929, 7
      %v1931 = vsub.s32 0, %v1930
      %v1932 = vrot.slane %v1593, %v1931
      %v1933 = vlaneseq
      %v1934 = vshrl.u32 %v1933, 7
      %v1935 = vsub.s32 0, %v1934
      %v1936 = vrot.slane %v1576, %v1935
      %v1937 = vlaneseq
      %v1938 = vshrl.u32 %v1937, 7
      %v1939 = vsub.s32 0, %v1938
      %v1940 = vrot.slane %v1590, %v1939
      %v1941 = vlaneseq
      %v1942 = vshrl.u32 %v1941, 7
      %v1943 = vsub.s32 0, %v1942
      %v1944 = vrot.slane %v1592, %v1943
      %v1945 = vlaneseq
      %v1946 = vshrl.u32 %v1945, 7
      %v1947 = vsub.s32 0, %v1946
      %v1948 = vrot.slane %v1594, %v1947
      %v1949 = vlaneseq
      %v1950 = vshrl.u32 %v1949, 7
      %v1951 = vsub.s32 0, %v1950
      %v1952 = vrot.slane %v1618, %v1951
      %v1953 = vlaneseq
      %v1954 = vshrl.u32 %v1953, 7
      %v1955 = vsub.s32 0, %v1954
      %v1956 = vrot.slane %v1632, %v1955
      %v1957 = vlaneseq
      %v1958 = vshrl.u32 %v1957, 7
      %v1959 = vsub.s32 0, %v1958
      %v1960 = vrot.slane %v1640, %v1959
      %v1961 = vlaneseq
      %v1962 = vshrl.u32 %v1961, 7
      %v1963 = vsub.s32 0, %v1962
      %v1964 = vrot.slane %v1642, %v1963
      %v1965 = vlaneseq
      %v1966 = vshrl.u32 %v1965, 7
      %v1967 = vsub.s32 0, %v1966
      %v1968 = vrot.slane %v1625, %v1967
      %v1969 = vlaneseq
      %v1970 = vshrl.u32 %v1969, 7
      %v1971 = vsub.s32 0, %v1970
      %v1972 = vrot.slane %v1639, %v1971
      %v1973 = vlaneseq
      %v1974 = vshrl.u32 %v1973, 7
      %v1975 = vsub.s32 0, %v1974
      %v1976 = vrot.slane %v1641, %v1975
      %v1977 = vlaneseq
      %v1978 = vshrl.u32 %v1977, 7
      %v1979 = vsub.s32 0, %v1978
      %v1980 = vrot.slane %v1643, %v1979
      %v1981 = vlaneseq
      %v1982 = vshrl.u32 %v1981, 7
      %v1983 = vsub.s32 0, %v1982
      %v1984 = vrot.slane %v1667, %v1983
      %v1985 = vlaneseq
      %v1986 = vshrl.u32 %v1985, 7
      %v1987 = vsub.s32 0, %v1986
      %v1988 = vrot.slane %v1681, %v1987
      %v1989 = vlaneseq
      %v1990 = vshrl.u32 %v1989, 7
      %v1991 = vsub.s32 0, %v1990
      %v1992 = vrot.slane %v1689, %v1991
      %v1993 = vlaneseq
      %v1994 = vshrl.u32 %v1993, 7
      %v1995 = vsub.s32 0, %v1994
      %v1996 = vrot.slane %v1691, %v1995
      %v1997 = vlaneseq
      %v1998 = vshrl.u32 %v1997, 7
      %v1999 = vsub.s32 0, %v1998
      %v2000 = vrot.slane %v1674, %v1999
      %v2001 = vlaneseq
      %v2002 = vshrl.u32 %v2001, 7
      %v2003 = vsub.s32 0, %v2002
      %v2004 = vrot.slane %v1688, %v2003
      %v2005 = vlaneseq
      %v2006 = vshrl.u32 %v2005, 7
      %v2007 = vsub.s32 0, %v2006
      %v2008 = vrot.slane %v1690, %v2007
      %v2009 = vlaneseq
      %v2010 = vshrl.u32 %v2009, 7
      %v2011 = vsub.s32 0, %v2010
      %v2012 = vrot.slane %v1692, %v2011
      %2013 = vrot.lane.b32.xlu0 %v1760, 124
      %v2014 = vpop.permute.xlu0 %2013
      %2015 = vrot.lane.b32.xlu0 %v1764, 124
      %v2016 = vpop.permute.xlu0 %2015
      %2017 = vrot.lane.b32.xlu0 %v1768, 124
      %v2018 = vpop.permute.xlu0 %2017
      %2019 = vrot.lane.b32.xlu0 %v1772, 124
      %v2020 = vpop.permute.xlu0 %2019
      %2021 = vrot.lane.b32.xlu0 %v1776, 124
      %v2022 = vpop.permute.xlu0 %2021
      %2023 = vrot.lane.b32.xlu0 %v1780, 124
      %v2024 = vpop.permute.xlu0 %2023
      %2025 = vrot.lane.b32.xlu0 %v1784, 124
      %v2026 = vpop.permute.xlu0 %2025
      %2027 = vrot.lane.b32.xlu0 %v1788, 124
      %v2028 = vpop.permute.xlu0 %2027
      %2029 = vrot.lane.b32.xlu0 %v1792, 124
      %v2030 = vpop.permute.xlu0 %2029
      %2031 = vrot.lane.b32.xlu0 %v1796, 124
      %v2032 = vpop.permute.xlu0 %2031
      %2033 = vrot.lane.b32.xlu0 %v1800, 124
      %v2034 = vpop.permute.xlu0 %2033
      %2035 = vrot.lane.b32.xlu0 %v1804, 124
      %v2036 = vpop.permute.xlu0 %2035
      %2037 = vrot.lane.b32.xlu0 %v1808, 124
      %v2038 = vpop.permute.xlu0 %2037
      %2039 = vrot.lane.b32.xlu0 %v1812, 124
      %v2040 = vpop.permute.xlu0 %2039
      %2041 = vrot.lane.b32.xlu0 %v1816, 124
      %v2042 = vpop.permute.xlu0 %2041
      %2043 = vrot.lane.b32.xlu0 %v1820, 124
      %v2044 = vpop.permute.xlu0 %2043
      %2045 = vrot.lane.b32.xlu0 %v1824, 124
      %v2046 = vpop.permute.xlu0 %2045
      %2047 = vrot.lane.b32.xlu0 %v1828, 124
      %v2048 = vpop.permute.xlu0 %2047
      %2049 = vrot.lane.b32.xlu0 %v1832, 124
      %v2050 = vpop.permute.xlu0 %2049
      %2051 = vrot.lane.b32.xlu0 %v1836, 124
      %v2052 = vpop.permute.xlu0 %2051
      %2053 = vrot.lane.b32.xlu0 %v1840, 124
      %v2054 = vpop.permute.xlu0 %2053
      %2055 = vrot.lane.b32.xlu0 %v1844, 124
      %v2056 = vpop.permute.xlu0 %2055
      %2057 = vrot.lane.b32.xlu0 %v1848, 124
      %v2058 = vpop.permute.xlu0 %2057
      %2059 = vrot.lane.b32.xlu0 %v1852, 124
      %v2060 = vpop.permute.xlu0 %2059
      %2061 = vrot.lane.b32.xlu0 %v1856, 124
      %v2062 = vpop.permute.xlu0 %2061
      %2063 = vrot.lane.b32.xlu0 %v1860, 124
      %v2064 = vpop.permute.xlu0 %2063
      %2065 = vrot.lane.b32.xlu0 %v1864, 124
      %v2066 = vpop.permute.xlu0 %2065
      %2067 = vrot.lane.b32.xlu0 %v1868, 124
      %v2068 = vpop.permute.xlu0 %2067
      %2069 = vrot.lane.b32.xlu0 %v1872, 124
      %v2070 = vpop.permute.xlu0 %2069
      %2071 = vrot.lane.b32.xlu0 %v1876, 124
      %v2072 = vpop.permute.xlu0 %2071
      %2073 = vrot.lane.b32.xlu0 %v1880, 124
      %v2074 = vpop.permute.xlu0 %2073
      %2075 = vrot.lane.b32.xlu0 %v1884, 124
      %v2076 = vpop.permute.xlu0 %2075
      %2077 = vrot.lane.b32.xlu0 %v1888, 124
      %v2078 = vpop.permute.xlu0 %2077
      %2079 = vrot.lane.b32.xlu0 %v1892, 124
      %v2080 = vpop.permute.xlu0 %2079
      %2081 = vrot.lane.b32.xlu0 %v1896, 124
      %v2082 = vpop.permute.xlu0 %2081
      %2083 = vrot.lane.b32.xlu0 %v1900, 124
      %v2084 = vpop.permute.xlu0 %2083
      %2085 = vrot.lane.b32.xlu0 %v1904, 124
      %v2086 = vpop.permute.xlu0 %2085
      %2087 = vrot.lane.b32.xlu0 %v1908, 124
      %v2088 = vpop.permute.xlu0 %2087
      %2089 = vrot.lane.b32.xlu0 %v1912, 124
      %v2090 = vpop.permute.xlu0 %2089
      %2091 = vrot.lane.b32.xlu0 %v1916, 124
      %v2092 = vpop.permute.xlu0 %2091
      %2093 = vrot.lane.b32.xlu0 %v1920, 124
      %v2094 = vpop.permute.xlu0 %2093
      %2095 = vrot.lane.b32.xlu0 %v1924, 124
      %v2096 = vpop.permute.xlu0 %2095
      %2097 = vrot.lane.b32.xlu0 %v1928, 124
      %v2098 = vpop.permute.xlu0 %2097
      %2099 = vrot.lane.b32.xlu0 %v1932, 124
      %v2100 = vpop.permute.xlu0 %2099
      %2101 = vrot.lane.b32.xlu0 %v1936, 124
      %v2102 = vpop.permute.xlu0 %2101
      %2103 = vrot.lane.b32.xlu0 %v1940, 124
      %v2104 = vpop.permute.xlu0 %2103
      %2105 = vrot.lane.b32.xlu0 %v1944, 124
      %v2106 = vpop.permute.xlu0 %2105
      %2107 = vrot.lane.b32.xlu0 %v1948, 124
      %v2108 = vpop.permute.xlu0 %2107
      %2109 = vrot.lane.b32.xlu0 %v1952, 124
      %v2110 = vpop.permute.xlu0 %2109
      %2111 = vrot.lane.b32.xlu0 %v1956, 124
      %v2112 = vpop.permute.xlu0 %2111
      %2113 = vrot.lane.b32.xlu0 %v1960, 124
      %v2114 = vpop.permute.xlu0 %2113
      %2115 = vrot.lane.b32.xlu0 %v1964, 124
      %v2116 = vpop.permute.xlu0 %2115
      %2117 = vrot.lane.b32.xlu0 %v1968, 124
      %v2118 = vpop.permute.xlu0 %2117
      %2119 = vrot.lane.b32.xlu0 %v1972, 124
      %v2120 = vpop.permute.xlu0 %2119
      %2121 = vrot.lane.b32.xlu0 %v1976, 124
      %v2122 = vpop.permute.xlu0 %2121
      %2123 = vrot.lane.b32.xlu0 %v1980, 124
      %v2124 = vpop.permute.xlu0 %2123
      %2125 = vrot.lane.b32.xlu0 %v1984, 124
      %v2126 = vpop.permute.xlu0 %2125
      %2127 = vrot.lane.b32.xlu0 %v1988, 124
      %v2128 = vpop.permute.xlu0 %2127
      %2129 = vrot.lane.b32.xlu0 %v1992, 124
      %v2130 = vpop.permute.xlu0 %2129
      %2131 = vrot.lane.b32.xlu0 %v1996, 124
      %v2132 = vpop.permute.xlu0 %2131
      %2133 = vrot.lane.b32.xlu0 %v2000, 124
      %v2134 = vpop.permute.xlu0 %2133
      %2135 = vrot.lane.b32.xlu0 %v2004, 124
      %v2136 = vpop.permute.xlu0 %2135
      %2137 = vrot.lane.b32.xlu0 %v2008, 124
      %v2138 = vpop.permute.xlu0 %2137
      %2139 = vrot.lane.b32.xlu0 %v2012, 124
      %v2140 = vpop.permute.xlu0 %2139
      %vm2205 = vcmask 1040384
      %v2206 = vsel %vm2205, %v1324, %v2014
      %v2207 = vsel %vm2205, %v1338, %v2016
      %v2208 = vsel %vm2205, %v1346, %v2018
      %v2209 = vsel %vm2205, %v1348, %v2020
      %v2210 = vsel %vm2205, %v1331, %v2022
      %v2211 = vsel %vm2205, %v1345, %v2024
      %v2212 = vsel %vm2205, %v1347, %v2026
      %v2213 = vsel %vm2205, %v1349, %v2028
      %v2214 = vsel %vm2205, %v1373, %v2030
      %v2215 = vsel %vm2205, %v1387, %v2032
      %v2216 = vsel %vm2205, %v1395, %v2034
      %v2217 = vsel %vm2205, %v1397, %v2036
      %v2218 = vsel %vm2205, %v1380, %v2038
      %v2219 = vsel %vm2205, %v1394, %v2040
      %v2220 = vsel %vm2205, %v1396, %v2042
      %v2221 = vsel %vm2205, %v1398, %v2044
      %v2222 = vsel %vm2205, %v1422, %v2046
      %v2223 = vsel %vm2205, %v1436, %v2048
      %v2224 = vsel %vm2205, %v1444, %v2050
      %v2225 = vsel %vm2205, %v1446, %v2052
      %v2226 = vsel %vm2205, %v1429, %v2054
      %v2227 = vsel %vm2205, %v1443, %v2056
      %v2228 = vsel %vm2205, %v1445, %v2058
      %v2229 = vsel %vm2205, %v1447, %v2060
      %v2230 = vsel %vm2205, %v1471, %v2062
      %v2231 = vsel %vm2205, %v1485, %v2064
      %v2232 = vsel %vm2205, %v1493, %v2066
      %v2233 = vsel %vm2205, %v1495, %v2068
      %v2234 = vsel %vm2205, %v1478, %v2070
      %v2235 = vsel %vm2205, %v1492, %v2072
      %v2236 = vsel %vm2205, %v1494, %v2074
      %v2237 = vsel %vm2205, %v1496, %v2076
      %v2238 = vsel %vm2205, %v1520, %v2078
      %v2239 = vsel %vm2205, %v1534, %v2080
      %v2240 = vsel %vm2205, %v1542, %v2082
      %v2241 = vsel %vm2205, %v1544, %v2084
      %v2242 = vsel %vm2205, %v1527, %v2086
      %v2243 = vsel %vm2205, %v1541, %v2088
      %v2244 = vsel %vm2205, %v1543, %v2090
      %v2245 = vsel %vm2205, %v1545, %v2092
      %v2246 = vsel %vm2205, %v1569, %v2094
      %v2247 = vsel %vm2205, %v1583, %v2096
      %v2248 = vsel %vm2205, %v1591, %v2098
      %v2249 = vsel %vm2205, %v1593, %v2100
      %v2250 = vsel %vm2205, %v1576, %v2102
      %v2251 = vsel %vm2205, %v1590, %v2104
      %v2252 = vsel %vm2205, %v1592, %v2106
      %v2253 = vsel %vm2205, %v1594, %v2108
      %v2254 = vsel %vm2205, %v1618, %v2110
      %v2255 = vsel %vm2205, %v1632, %v2112
      %v2256 = vsel %vm2205, %v1640, %v2114
      %v2257 = vsel %vm2205, %v1642, %v2116
      %v2258 = vsel %vm2205, %v1625, %v2118
      %v2259 = vsel %vm2205, %v1639, %v2120
      %v2260 = vsel %vm2205, %v1641, %v2122
      %v2261 = vsel %vm2205, %v1643, %v2124
      %v2262 = vsel %vm2205, %v1667, %v2126
      %v2263 = vsel %vm2205, %v1681, %v2128
      %v2264 = vsel %vm2205, %v1689, %v2130
      %v2265 = vsel %vm2205, %v1691, %v2132
      %v2266 = vsel %vm2205, %v1674, %v2134
      %v2267 = vsel %vm2205, %v1688, %v2136
      %v2268 = vsel %vm2205, %v1690, %v2138
      %v2269 = vsel %vm2205, %v1692, %v2140
      %2334 = vrot.lane.b32.xlu0 %v2206, 120
      %v2335 = vpop.permute.xlu0 %2334
      %2336 = vrot.lane.b32.xlu0 %v2207, 120
      %v2337 = vpop.permute.xlu0 %2336
      %2338 = vrot.lane.b32.xlu0 %v2208, 120
      %v2339 = vpop.permute.xlu0 %2338
      %2340 = vrot.lane.b32.xlu0 %v2209, 120
      %v2341 = vpop.permute.xlu0 %2340
      %2342 = vrot.lane.b32.xlu0 %v2210, 120
      %v2343 = vpop.permute.xlu0 %2342
      %2344 = vrot.lane.b32.xlu0 %v2211, 120
      %v2345 = vpop.permute.xlu0 %2344
      %2346 = vrot.lane.b32.xlu0 %v2212, 120
      %v2347 = vpop.permute.xlu0 %2346
      %2348 = vrot.lane.b32.xlu0 %v2213, 120
      %v2349 = vpop.permute.xlu0 %2348
      %2350 = vrot.lane.b32.xlu0 %v2214, 120
      %v2351 = vpop.permute.xlu0 %2350
      %2352 = vrot.lane.b32.xlu0 %v2215, 120
      %v2353 = vpop.permute.xlu0 %2352
      %2354 = vrot.lane.b32.xlu0 %v2216, 120
      %v2355 = vpop.permute.xlu0 %2354
      %2356 = vrot.lane.b32.xlu0 %v2217, 120
      %v2357 = vpop.permute.xlu0 %2356
      %2358 = vrot.lane.b32.xlu0 %v2218, 120
      %v2359 = vpop.permute.xlu0 %2358
      %2360 = vrot.lane.b32.xlu0 %v2219, 120
      %v2361 = vpop.permute.xlu0 %2360
      %2362 = vrot.lane.b32.xlu0 %v2220, 120
      %v2363 = vpop.permute.xlu0 %2362
      %2364 = vrot.lane.b32.xlu0 %v2221, 120
      %v2365 = vpop.permute.xlu0 %2364
      %2366 = vrot.lane.b32.xlu0 %v2222, 120
      %v2367 = vpop.permute.xlu0 %2366
      %2368 = vrot.lane.b32.xlu0 %v2223, 120
      %v2369 = vpop.permute.xlu0 %2368
      %2370 = vrot.lane.b32.xlu0 %v2224, 120
      %v2371 = vpop.permute.xlu0 %2370
      %2372 = vrot.lane.b32.xlu0 %v2225, 120
      %v2373 = vpop.permute.xlu0 %2372
      %2374 = vrot.lane.b32.xlu0 %v2226, 120
      %v2375 = vpop.permute.xlu0 %2374
      %2376 = vrot.lane.b32.xlu0 %v2227, 120
      %v2377 = vpop.permute.xlu0 %2376
      %2378 = vrot.lane.b32.xlu0 %v2228, 120
      %v2379 = vpop.permute.xlu0 %2378
      %2380 = vrot.lane.b32.xlu0 %v2229, 120
      %v2381 = vpop.permute.xlu0 %2380
      %2382 = vrot.lane.b32.xlu0 %v2230, 120
      %v2383 = vpop.permute.xlu0 %2382
      %2384 = vrot.lane.b32.xlu0 %v2231, 120
      %v2385 = vpop.permute.xlu0 %2384
      %2386 = vrot.lane.b32.xlu0 %v2232, 120
      %v2387 = vpop.permute.xlu0 %2386
      %2388 = vrot.lane.b32.xlu0 %v2233, 120
      %v2389 = vpop.permute.xlu0 %2388
      %2390 = vrot.lane.b32.xlu0 %v2234, 120
      %v2391 = vpop.permute.xlu0 %2390
      %2392 = vrot.lane.b32.xlu0 %v2235, 120
      %v2393 = vpop.permute.xlu0 %2392
      %2394 = vrot.lane.b32.xlu0 %v2236, 120
      %v2395 = vpop.permute.xlu0 %2394
      %2396 = vrot.lane.b32.xlu0 %v2237, 120
      %v2397 = vpop.permute.xlu0 %2396
      %2398 = vrot.lane.b32.xlu0 %v2238, 120
      %v2399 = vpop.permute.xlu0 %2398
      %2400 = vrot.lane.b32.xlu0 %v2239, 120
      %v2401 = vpop.permute.xlu0 %2400
      %2402 = vrot.lane.b32.xlu0 %v2240, 120
      %v2403 = vpop.permute.xlu0 %2402
      %2404 = vrot.lane.b32.xlu0 %v2241, 120
      %v2405 = vpop.permute.xlu0 %2404
      %2406 = vrot.lane.b32.xlu0 %v2242, 120
      %v2407 = vpop.permute.xlu0 %2406
      %2408 = vrot.lane.b32.xlu0 %v2243, 120
      %v2409 = vpop.permute.xlu0 %2408
      %2410 = vrot.lane.b32.xlu0 %v2244, 120
      %v2411 = vpop.permute.xlu0 %2410
      %2412 = vrot.lane.b32.xlu0 %v2245, 120
      %v2413 = vpop.permute.xlu0 %2412
      %2414 = vrot.lane.b32.xlu0 %v2246, 120
      %v2415 = vpop.permute.xlu0 %2414
      %2416 = vrot.lane.b32.xlu0 %v2247, 120
      %v2417 = vpop.permute.xlu0 %2416
      %2418 = vrot.lane.b32.xlu0 %v2248, 120
      %v2419 = vpop.permute.xlu0 %2418
      %2420 = vrot.lane.b32.xlu0 %v2249, 120
      %v2421 = vpop.permute.xlu0 %2420
      %2422 = vrot.lane.b32.xlu0 %v2250, 120
      %v2423 = vpop.permute.xlu0 %2422
      %2424 = vrot.lane.b32.xlu0 %v2251, 120
      %v2425 = vpop.permute.xlu0 %2424
      %2426 = vrot.lane.b32.xlu0 %v2252, 120
      %v2427 = vpop.permute.xlu0 %2426
      %2428 = vrot.lane.b32.xlu0 %v2253, 120
      %v2429 = vpop.permute.xlu0 %2428
      %2430 = vrot.lane.b32.xlu0 %v2254, 120
      %v2431 = vpop.permute.xlu0 %2430
      %2432 = vrot.lane.b32.xlu0 %v2255, 120
      %v2433 = vpop.permute.xlu0 %2432
      %2434 = vrot.lane.b32.xlu0 %v2256, 120
      %v2435 = vpop.permute.xlu0 %2434
      %2436 = vrot.lane.b32.xlu0 %v2257, 120
      %v2437 = vpop.permute.xlu0 %2436
      %2438 = vrot.lane.b32.xlu0 %v2258, 120
      %v2439 = vpop.permute.xlu0 %2438
      %2440 = vrot.lane.b32.xlu0 %v2259, 120
      %v2441 = vpop.permute.xlu0 %2440
      %2442 = vrot.lane.b32.xlu0 %v2260, 120
      %v2443 = vpop.permute.xlu0 %2442
      %2444 = vrot.lane.b32.xlu0 %v2261, 120
      %v2445 = vpop.permute.xlu0 %2444
      %2446 = vrot.lane.b32.xlu0 %v2262, 120
      %v2447 = vpop.permute.xlu0 %2446
      %2448 = vrot.lane.b32.xlu0 %v2263, 120
      %v2449 = vpop.permute.xlu0 %2448
      %2450 = vrot.lane.b32.xlu0 %v2264, 120
      %v2451 = vpop.permute.xlu0 %2450
      %2452 = vrot.lane.b32.xlu0 %v2265, 120
      %v2453 = vpop.permute.xlu0 %2452
      %2454 = vrot.lane.b32.xlu0 %v2266, 120
      %v2455 = vpop.permute.xlu0 %2454
      %2456 = vrot.lane.b32.xlu0 %v2267, 120
      %v2457 = vpop.permute.xlu0 %2456
      %2458 = vrot.lane.b32.xlu0 %v2268, 120
      %v2459 = vpop.permute.xlu0 %2458
      %2460 = vrot.lane.b32.xlu0 %v2269, 120
      %v2461 = vpop.permute.xlu0 %2460
      %v2462 = vcombine.low %v2206, %v2207
      %v2463 = vcombine.low %v2208, %v2209
      %v2465 = vunpack.c.l.s4 1983009808
      %v2466 = vunpack.c.0.s8 %v2465
      %v2467 = vlaneseq
      %v2468 = vshrl.u32 %v2467, 7
      %v2469 = vsub.s32 %v2466, %v2468
      %v2470 = vrot.slane %v2462, %v2469
      %v2472 = vunpack.c.l.s4 1983009808
      %v2473 = vunpack.c.0.s8 %v2472
      %v2474 = vlaneseq
      %v2475 = vshrl.u32 %v2474, 7
      %v2476 = vsub.s32 %v2473, %v2475
      %v2477 = vrot.slane %v2463, %v2476
      %v2478 = vcombine.low %v2470, %v2477
      %v2479 = vcombine.low %v2210, %v2211
      %v2480 = vcombine.low %v2212, %v2213
      %v2482 = vunpack.c.l.s4 1983009808
      %v2483 = vunpack.c.0.s8 %v2482
      %v2484 = vlaneseq
      %v2485 = vshrl.u32 %v2484, 7
      %v2486 = vsub.s32 %v2483, %v2485
      %v2487 = vrot.slane %v2479, %v2486
      %v2489 = vunpack.c.l.s4 1983009808
      %v2490 = vunpack.c.0.s8 %v2489
      %v2491 = vlaneseq
      %v2492 = vshrl.u32 %v2491, 7
      %v2493 = vsub.s32 %v2490, %v2492
      %v2494 = vrot.slane %v2480, %v2493
      %v2495 = vcombine.low %v2487, %v2494
      %v2496 = vcombine.low %v2335, %v2337
      %v2497 = vcombine.low %v2339, %v2341
      %v2499 = vunpack.c.l.s4 1983009808
      %v2500 = vunpack.c.0.s8 %v2499
      %v2501 = vlaneseq
      %v2502 = vshrl.u32 %v2501, 7
      %v2503 = vsub.s32 %v2500, %v2502
      %v2504 = vrot.slane %v2496, %v2503
      %v2506 = vunpack.c.l.s4 1983009808
      %v2507 = vunpack.c.0.s8 %v2506
      %v2508 = vlaneseq
      %v2509 = vshrl.u32 %v2508, 7
      %v2510 = vsub.s32 %v2507, %v2509
      %v2511 = vrot.slane %v2497, %v2510
      %v2512 = vcombine.low %v2504, %v2511
      %v2513 = vcombine.low %v2343, %v2345
      %v2514 = vcombine.low %v2347, %v2349
      %v2516 = vunpack.c.l.s4 1983009808
      %v2517 = vunpack.c.0.s8 %v2516
      %v2518 = vlaneseq
      %v2519 = vshrl.u32 %v2518, 7
      %v2520 = vsub.s32 %v2517, %v2519
      %v2521 = vrot.slane %v2513, %v2520
      %v2523 = vunpack.c.l.s4 1983009808
      %v2524 = vunpack.c.0.s8 %v2523
      %v2525 = vlaneseq
      %v2526 = vshrl.u32 %v2525, 7
      %v2527 = vsub.s32 %v2524, %v2526
      %v2528 = vrot.slane %v2514, %v2527
      %v2529 = vcombine.low %v2521, %v2528
      %v2530 = vcombine.low %v2214, %v2215
      %v2531 = vcombine.low %v2216, %v2217
      %v2533 = vunpack.c.l.s4 1983009808
      %v2534 = vunpack.c.0.s8 %v2533
      %v2535 = vlaneseq
      %v2536 = vshrl.u32 %v2535, 7
      %v2537 = vsub.s32 %v2534, %v2536
      %v2538 = vrot.slane %v2530, %v2537
      %v2540 = vunpack.c.l.s4 1983009808
      %v2541 = vunpack.c.0.s8 %v2540
      %v2542 = vlaneseq
      %v2543 = vshrl.u32 %v2542, 7
      %v2544 = vsub.s32 %v2541, %v2543
      %v2545 = vrot.slane %v2531, %v2544
      %v2546 = vcombine.low %v2538, %v2545
      %v2547 = vcombine.low %v2218, %v2219
      %v2548 = vcombine.low %v2220, %v2221
      %v2550 = vunpack.c.l.s4 1983009808
      %v2551 = vunpack.c.0.s8 %v2550
      %v2552 = vlaneseq
      %v2553 = vshrl.u32 %v2552, 7
      %v2554 = vsub.s32 %v2551, %v2553
      %v2555 = vrot.slane %v2547, %v2554
      %v2557 = vunpack.c.l.s4 1983009808
      %v2558 = vunpack.c.0.s8 %v2557
      %v2559 = vlaneseq
      %v2560 = vshrl.u32 %v2559, 7
      %v2561 = vsub.s32 %v2558, %v2560
      %v2562 = vrot.slane %v2548, %v2561
      %v2563 = vcombine.low %v2555, %v2562
      %v2564 = vcombine.low %v2351, %v2353
      %v2565 = vcombine.low %v2355, %v2357
      %v2567 = vunpack.c.l.s4 1983009808
      %v2568 = vunpack.c.0.s8 %v2567
      %v2569 = vlaneseq
      %v2570 = vshrl.u32 %v2569, 7
      %v2571 = vsub.s32 %v2568, %v2570
      %v2572 = vrot.slane %v2564, %v2571
      %v2574 = vunpack.c.l.s4 1983009808
      %v2575 = vunpack.c.0.s8 %v2574
      %v2576 = vlaneseq
      %v2577 = vshrl.u32 %v2576, 7
      %v2578 = vsub.s32 %v2575, %v2577
      %v2579 = vrot.slane %v2565, %v2578
      %v2580 = vcombine.low %v2572, %v2579
      %v2581 = vcombine.low %v2359, %v2361
      %v2582 = vcombine.low %v2363, %v2365
      %v2584 = vunpack.c.l.s4 1983009808
      %v2585 = vunpack.c.0.s8 %v2584
      %v2586 = vlaneseq
      %v2587 = vshrl.u32 %v2586, 7
      %v2588 = vsub.s32 %v2585, %v2587
      %v2589 = vrot.slane %v2581, %v2588
      %v2591 = vunpack.c.l.s4 1983009808
      %v2592 = vunpack.c.0.s8 %v2591
      %v2593 = vlaneseq
      %v2594 = vshrl.u32 %v2593, 7
      %v2595 = vsub.s32 %v2592, %v2594
      %v2596 = vrot.slane %v2582, %v2595
      %v2597 = vcombine.low %v2589, %v2596
      %v2598 = vcombine.low %v2222, %v2223
      %v2599 = vcombine.low %v2224, %v2225
      %v2601 = vunpack.c.l.s4 1983009808
      %v2602 = vunpack.c.0.s8 %v2601
      %v2603 = vlaneseq
      %v2604 = vshrl.u32 %v2603, 7
      %v2605 = vsub.s32 %v2602, %v2604
      %v2606 = vrot.slane %v2598, %v2605
      %v2608 = vunpack.c.l.s4 1983009808
      %v2609 = vunpack.c.0.s8 %v2608
      %v2610 = vlaneseq
      %v2611 = vshrl.u32 %v2610, 7
      %v2612 = vsub.s32 %v2609, %v2611
      %v2613 = vrot.slane %v2599, %v2612
      %v2614 = vcombine.low %v2606, %v2613
      %v2615 = vcombine.low %v2226, %v2227
      %v2616 = vcombine.low %v2228, %v2229
      %v2618 = vunpack.c.l.s4 1983009808
      %v2619 = vunpack.c.0.s8 %v2618
      %v2620 = vlaneseq
      %v2621 = vshrl.u32 %v2620, 7
      %v2622 = vsub.s32 %v2619, %v2621
      %v2623 = vrot.slane %v2615, %v2622
      %v2625 = vunpack.c.l.s4 1983009808
      %v2626 = vunpack.c.0.s8 %v2625
      %v2627 = vlaneseq
      %v2628 = vshrl.u32 %v2627, 7
      %v2629 = vsub.s32 %v2626, %v2628
      %v2630 = vrot.slane %v2616, %v2629
      %v2631 = vcombine.low %v2623, %v2630
      %v2632 = vcombine.low %v2367, %v2369
      %v2633 = vcombine.low %v2371, %v2373
      %v2635 = vunpack.c.l.s4 1983009808
      %v2636 = vunpack.c.0.s8 %v2635
      %v2637 = vlaneseq
      %v2638 = vshrl.u32 %v2637, 7
      %v2639 = vsub.s32 %v2636, %v2638
      %v2640 = vrot.slane %v2632, %v2639
      %v2642 = vunpack.c.l.s4 1983009808
      %v2643 = vunpack.c.0.s8 %v2642
      %v2644 = vlaneseq
      %v2645 = vshrl.u32 %v2644, 7
      %v2646 = vsub.s32 %v2643, %v2645
      %v2647 = vrot.slane %v2633, %v2646
      %v2648 = vcombine.low %v2640, %v2647
      %v2649 = vcombine.low %v2375, %v2377
      %v2650 = vcombine.low %v2379, %v2381
      %v2652 = vunpack.c.l.s4 1983009808
      %v2653 = vunpack.c.0.s8 %v2652
      %v2654 = vlaneseq
      %v2655 = vshrl.u32 %v2654, 7
      %v2656 = vsub.s32 %v2653, %v2655
      %v2657 = vrot.slane %v2649, %v2656
      %v2659 = vunpack.c.l.s4 1983009808
      %v2660 = vunpack.c.0.s8 %v2659
      %v2661 = vlaneseq
      %v2662 = vshrl.u32 %v2661, 7
      %v2663 = vsub.s32 %v2660, %v2662
      %v2664 = vrot.slane %v2650, %v2663
      %v2665 = vcombine.low %v2657, %v2664
      %v2666 = vcombine.low %v2230, %v2231
      %v2667 = vcombine.low %v2232, %v2233
      %v2669 = vunpack.c.l.s4 1983009808
      %v2670 = vunpack.c.0.s8 %v2669
      %v2671 = vlaneseq
      %v2672 = vshrl.u32 %v2671, 7
      %v2673 = vsub.s32 %v2670, %v2672
      %v2674 = vrot.slane %v2666, %v2673
      %v2676 = vunpack.c.l.s4 1983009808
      %v2677 = vunpack.c.0.s8 %v2676
      %v2678 = vlaneseq
      %v2679 = vshrl.u32 %v2678, 7
      %v2680 = vsub.s32 %v2677, %v2679
      %v2681 = vrot.slane %v2667, %v2680
      %v2682 = vcombine.low %v2674, %v2681
      %v2683 = vcombine.low %v2234, %v2235
      %v2684 = vcombine.low %v2236, %v2237
      %v2686 = vunpack.c.l.s4 1983009808
      %v2687 = vunpack.c.0.s8 %v2686
      %v2688 = vlaneseq
      %v2689 = vshrl.u32 %v2688, 7
      %v2690 = vsub.s32 %v2687, %v2689
      %v2691 = vrot.slane %v2683, %v2690
      %v2693 = vunpack.c.l.s4 1983009808
      %v2694 = vunpack.c.0.s8 %v2693
      %v2695 = vlaneseq
      %v2696 = vshrl.u32 %v2695, 7
      %v2697 = vsub.s32 %v2694, %v2696
      %v2698 = vrot.slane %v2684, %v2697
      %v2699 = vcombine.low %v2691, %v2698
      %v2700 = vcombine.low %v2383, %v2385
      %v2701 = vcombine.low %v2387, %v2389
      %v2703 = vunpack.c.l.s4 1983009808
      %v2704 = vunpack.c.0.s8 %v2703
      %v2705 = vlaneseq
      %v2706 = vshrl.u32 %v2705, 7
      %v2707 = vsub.s32 %v2704, %v2706
      %v2708 = vrot.slane %v2700, %v2707
      %v2710 = vunpack.c.l.s4 1983009808
      %v2711 = vunpack.c.0.s8 %v2710
      %v2712 = vlaneseq
      %v2713 = vshrl.u32 %v2712, 7
      %v2714 = vsub.s32 %v2711, %v2713
      %v2715 = vrot.slane %v2701, %v2714
      %v2716 = vcombine.low %v2708, %v2715
      %v2717 = vcombine.low %v2391, %v2393
      %v2718 = vcombine.low %v2395, %v2397
      %v2720 = vunpack.c.l.s4 1983009808
      %v2721 = vunpack.c.0.s8 %v2720
      %v2722 = vlaneseq
      %v2723 = vshrl.u32 %v2722, 7
      %v2724 = vsub.s32 %v2721, %v2723
      %v2725 = vrot.slane %v2717, %v2724
      %v2727 = vunpack.c.l.s4 1983009808
      %v2728 = vunpack.c.0.s8 %v2727
      %v2729 = vlaneseq
      %v2730 = vshrl.u32 %v2729, 7
      %v2731 = vsub.s32 %v2728, %v2730
      %v2732 = vrot.slane %v2718, %v2731
      %v2733 = vcombine.low %v2725, %v2732
      %v2734 = vcombine.low %v2238, %v2239
      %v2735 = vcombine.low %v2240, %v2241
      %v2737 = vunpack.c.l.s4 1983009808
      %v2738 = vunpack.c.0.s8 %v2737
      %v2739 = vlaneseq
      %v2740 = vshrl.u32 %v2739, 7
      %v2741 = vsub.s32 %v2738, %v2740
      %v2742 = vrot.slane %v2734, %v2741
      %v2744 = vunpack.c.l.s4 1983009808
      %v2745 = vunpack.c.0.s8 %v2744
      %v2746 = vlaneseq
      %v2747 = vshrl.u32 %v2746, 7
      %v2748 = vsub.s32 %v2745, %v2747
      %v2749 = vrot.slane %v2735, %v2748
      %v2750 = vcombine.low %v2742, %v2749
      %v2751 = vcombine.low %v2242, %v2243
      %v2752 = vcombine.low %v2244, %v2245
      %v2754 = vunpack.c.l.s4 1983009808
      %v2755 = vunpack.c.0.s8 %v2754
      %v2756 = vlaneseq
      %v2757 = vshrl.u32 %v2756, 7
      %v2758 = vsub.s32 %v2755, %v2757
      %v2759 = vrot.slane %v2751, %v2758
      %v2761 = vunpack.c.l.s4 1983009808
      %v2762 = vunpack.c.0.s8 %v2761
      %v2763 = vlaneseq
      %v2764 = vshrl.u32 %v2763, 7
      %v2765 = vsub.s32 %v2762, %v2764
      %v2766 = vrot.slane %v2752, %v2765
      %v2767 = vcombine.low %v2759, %v2766
      %v2768 = vcombine.low %v2399, %v2401
      %v2769 = vcombine.low %v2403, %v2405
      %v2771 = vunpack.c.l.s4 1983009808
      %v2772 = vunpack.c.0.s8 %v2771
      %v2773 = vlaneseq
      %v2774 = vshrl.u32 %v2773, 7
      %v2775 = vsub.s32 %v2772, %v2774
      %v2776 = vrot.slane %v2768, %v2775
      %v2778 = vunpack.c.l.s4 1983009808
      %v2779 = vunpack.c.0.s8 %v2778
      %v2780 = vlaneseq
      %v2781 = vshrl.u32 %v2780, 7
      %v2782 = vsub.s32 %v2779, %v2781
      %v2783 = vrot.slane %v2769, %v2782
      %v2784 = vcombine.low %v2776, %v2783
      %v2785 = vcombine.low %v2407, %v2409
      %v2786 = vcombine.low %v2411, %v2413
      %v2788 = vunpack.c.l.s4 1983009808
      %v2789 = vunpack.c.0.s8 %v2788
      %v2790 = vlaneseq
      %v2791 = vshrl.u32 %v2790, 7
      %v2792 = vsub.s32 %v2789, %v2791
      %v2793 = vrot.slane %v2785, %v2792
      %v2795 = vunpack.c.l.s4 1983009808
      %v2796 = vunpack.c.0.s8 %v2795
      %v2797 = vlaneseq
      %v2798 = vshrl.u32 %v2797, 7
      %v2799 = vsub.s32 %v2796, %v2798
      %v2800 = vrot.slane %v2786, %v2799
      %v2801 = vcombine.low %v2793, %v2800
      %v2802 = vcombine.low %v2246, %v2247
      %v2803 = vcombine.low %v2248, %v2249
      %v2805 = vunpack.c.l.s4 1983009808
      %v2806 = vunpack.c.0.s8 %v2805
      %v2807 = vlaneseq
      %v2808 = vshrl.u32 %v2807, 7
      %v2809 = vsub.s32 %v2806, %v2808
      %v2810 = vrot.slane %v2802, %v2809
      %v2812 = vunpack.c.l.s4 1983009808
      %v2813 = vunpack.c.0.s8 %v2812
      %v2814 = vlaneseq
      %v2815 = vshrl.u32 %v2814, 7
      %v2816 = vsub.s32 %v2813, %v2815
      %v2817 = vrot.slane %v2803, %v2816
      %v2818 = vcombine.low %v2810, %v2817
      %v2819 = vcombine.low %v2250, %v2251
      %v2820 = vcombine.low %v2252, %v2253
      %v2822 = vunpack.c.l.s4 1983009808
      %v2823 = vunpack.c.0.s8 %v2822
      %v2824 = vlaneseq
      %v2825 = vshrl.u32 %v2824, 7
      %v2826 = vsub.s32 %v2823, %v2825
      %v2827 = vrot.slane %v2819, %v2826
      %v2829 = vunpack.c.l.s4 1983009808
      %v2830 = vunpack.c.0.s8 %v2829
      %v2831 = vlaneseq
      %v2832 = vshrl.u32 %v2831, 7
      %v2833 = vsub.s32 %v2830, %v2832
      %v2834 = vrot.slane %v2820, %v2833
      %v2835 = vcombine.low %v2827, %v2834
      %v2836 = vcombine.low %v2415, %v2417
      %v2837 = vcombine.low %v2419, %v2421
      %v2839 = vunpack.c.l.s4 1983009808
      %v2840 = vunpack.c.0.s8 %v2839
      %v2841 = vlaneseq
      %v2842 = vshrl.u32 %v2841, 7
      %v2843 = vsub.s32 %v2840, %v2842
      %v2844 = vrot.slane %v2836, %v2843
      %v2846 = vunpack.c.l.s4 1983009808
      %v2847 = vunpack.c.0.s8 %v2846
      %v2848 = vlaneseq
      %v2849 = vshrl.u32 %v2848, 7
      %v2850 = vsub.s32 %v2847, %v2849
      %v2851 = vrot.slane %v2837, %v2850
      %v2852 = vcombine.low %v2844, %v2851
      %v2853 = vcombine.low %v2423, %v2425
      %v2854 = vcombine.low %v2427, %v2429
      %v2856 = vunpack.c.l.s4 1983009808
      %v2857 = vunpack.c.0.s8 %v2856
      %v2858 = vlaneseq
      %v2859 = vshrl.u32 %v2858, 7
      %v2860 = vsub.s32 %v2857, %v2859
      %v2861 = vrot.slane %v2853, %v2860
      %v2863 = vunpack.c.l.s4 1983009808
      %v2864 = vunpack.c.0.s8 %v2863
      %v2865 = vlaneseq
      %v2866 = vshrl.u32 %v2865, 7
      %v2867 = vsub.s32 %v2864, %v2866
      %v2868 = vrot.slane %v2854, %v2867
      %v2869 = vcombine.low %v2861, %v2868
      %v2870 = vcombine.low %v2254, %v2255
      %v2871 = vcombine.low %v2256, %v2257
      %v2873 = vunpack.c.l.s4 1983009808
      %v2874 = vunpack.c.0.s8 %v2873
      %v2875 = vlaneseq
      %v2876 = vshrl.u32 %v2875, 7
      %v2877 = vsub.s32 %v2874, %v2876
      %v2878 = vrot.slane %v2870, %v2877
      %v2880 = vunpack.c.l.s4 1983009808
      %v2881 = vunpack.c.0.s8 %v2880
      %v2882 = vlaneseq
      %v2883 = vshrl.u32 %v2882, 7
      %v2884 = vsub.s32 %v2881, %v2883
      %v2885 = vrot.slane %v2871, %v2884
      %v2886 = vcombine.low %v2878, %v2885
      %v2887 = vcombine.low %v2258, %v2259
      %v2888 = vcombine.low %v2260, %v2261
      %v2890 = vunpack.c.l.s4 1983009808
      %v2891 = vunpack.c.0.s8 %v2890
      %v2892 = vlaneseq
      %v2893 = vshrl.u32 %v2892, 7
      %v2894 = vsub.s32 %v2891, %v2893
      %v2895 = vrot.slane %v2887, %v2894
      %v2897 = vunpack.c.l.s4 1983009808
      %v2898 = vunpack.c.0.s8 %v2897
      %v2899 = vlaneseq
      %v2900 = vshrl.u32 %v2899, 7
      %v2901 = vsub.s32 %v2898, %v2900
      %v2902 = vrot.slane %v2888, %v2901
      %v2903 = vcombine.low %v2895, %v2902
      %v2904 = vcombine.low %v2431, %v2433
      %v2905 = vcombine.low %v2435, %v2437
      %v2907 = vunpack.c.l.s4 1983009808
      %v2908 = vunpack.c.0.s8 %v2907
      %v2909 = vlaneseq
      %v2910 = vshrl.u32 %v2909, 7
      %v2911 = vsub.s32 %v2908, %v2910
      %v2912 = vrot.slane %v2904, %v2911
      %v2914 = vunpack.c.l.s4 1983009808
      %v2915 = vunpack.c.0.s8 %v2914
      %v2916 = vlaneseq
      %v2917 = vshrl.u32 %v2916, 7
      %v2918 = vsub.s32 %v2915, %v2917
      %v2919 = vrot.slane %v2905, %v2918
      %v2920 = vcombine.low %v2912, %v2919
      %v2921 = vcombine.low %v2439, %v2441
      %v2922 = vcombine.low %v2443, %v2445
      %v2924 = vunpack.c.l.s4 1983009808
      %v2925 = vunpack.c.0.s8 %v2924
      %v2926 = vlaneseq
      %v2927 = vshrl.u32 %v2926, 7
      %v2928 = vsub.s32 %v2925, %v2927
      %v2929 = vrot.slane %v2921, %v2928
      %v2931 = vunpack.c.l.s4 1983009808
      %v2932 = vunpack.c.0.s8 %v2931
      %v2933 = vlaneseq
      %v2934 = vshrl.u32 %v2933, 7
      %v2935 = vsub.s32 %v2932, %v2934
      %v2936 = vrot.slane %v2922, %v2935
      %v2937 = vcombine.low %v2929, %v2936
      %v2938 = vcombine.low %v2262, %v2263
      %v2939 = vcombine.low %v2264, %v2265
      %v2941 = vunpack.c.l.s4 1983009808
      %v2942 = vunpack.c.0.s8 %v2941
      %v2943 = vlaneseq
      %v2944 = vshrl.u32 %v2943, 7
      %v2945 = vsub.s32 %v2942, %v2944
      %v2946 = vrot.slane %v2938, %v2945
      %v2948 = vunpack.c.l.s4 1983009808
      %v2949 = vunpack.c.0.s8 %v2948
      %v2950 = vlaneseq
      %v2951 = vshrl.u32 %v2950, 7
      %v2952 = vsub.s32 %v2949, %v2951
      %v2953 = vrot.slane %v2939, %v2952
      %v2954 = vcombine.low %v2946, %v2953
      %v2955 = vcombine.low %v2266, %v2267
      %v2956 = vcombine.low %v2268, %v2269
      %v2958 = vunpack.c.l.s4 1983009808
      %v2959 = vunpack.c.0.s8 %v2958
      %v2960 = vlaneseq
      %v2961 = vshrl.u32 %v2960, 7
      %v2962 = vsub.s32 %v2959, %v2961
      %v2963 = vrot.slane %v2955, %v2962
      %v2965 = vunpack.c.l.s4 1983009808
      %v2966 = vunpack.c.0.s8 %v2965
      %v2967 = vlaneseq
      %v2968 = vshrl.u32 %v2967, 7
      %v2969 = vsub.s32 %v2966, %v2968
      %v2970 = vrot.slane %v2956, %v2969
      %v2971 = vcombine.low %v2963, %v2970
      %v2972 = vcombine.low %v2447, %v2449
      %v2973 = vcombine.low %v2451, %v2453
      %v2975 = vunpack.c.l.s4 1983009808
      %v2976 = vunpack.c.0.s8 %v2975
      %v2977 = vlaneseq
      %v2978 = vshrl.u32 %v2977, 7
      %v2979 = vsub.s32 %v2976, %v2978
      %v2980 = vrot.slane %v2972, %v2979
      %v2982 = vunpack.c.l.s4 1983009808
      %v2983 = vunpack.c.0.s8 %v2982
      %v2984 = vlaneseq
      %v2985 = vshrl.u32 %v2984, 7
      %v2986 = vsub.s32 %v2983, %v2985
      %v2987 = vrot.slane %v2973, %v2986
      %v2988 = vcombine.low %v2980, %v2987
      %v2989 = vcombine.low %v2455, %v2457
      %v2990 = vcombine.low %v2459, %v2461
      %v2992 = vunpack.c.l.s4 1983009808
      %v2993 = vunpack.c.0.s8 %v2992
      %v2994 = vlaneseq
      %v2995 = vshrl.u32 %v2994, 7
      %v2996 = vsub.s32 %v2993, %v2995
      %v2997 = vrot.slane %v2989, %v2996
      %v2999 = vunpack.c.l.s4 1983009808
      %v3000 = vunpack.c.0.s8 %v2999
      %v3001 = vlaneseq
      %v3002 = vshrl.u32 %v3001, 7
      %v3003 = vsub.s32 %v3000, %v3002
      %v3004 = vrot.slane %v2990, %v3003
      %v3005 = vcombine.low %v2997, %v3004
      %v3038 = vpack.c.bf16 %v2495, %v2478
      %v3039 = vpack.c.bf16 %v2529, %v2512
      %v3040 = vpack.c.bf16 %v2563, %v2546
      %v3041 = vpack.c.bf16 %v2597, %v2580
      %v3042 = vpack.c.bf16 %v2631, %v2614
      %v3043 = vpack.c.bf16 %v2665, %v2648
      %v3044 = vpack.c.bf16 %v2699, %v2682
      %v3045 = vpack.c.bf16 %v2733, %v2716
      %v3046 = vpack.c.bf16 %v2767, %v2750
      %v3047 = vpack.c.bf16 %v2801, %v2784
      %v3048 = vpack.c.bf16 %v2835, %v2818
      %v3049 = vpack.c.bf16 %v2869, %v2852
      %v3050 = vpack.c.bf16 %v2903, %v2886
      %v3051 = vpack.c.bf16 %v2937, %v2920
      %v3052 = vpack.c.bf16 %v2971, %v2954
      %v3053 = vpack.c.bf16 %v3005, %v2988
      %v3070 = vunpack.c.l.b16 %v3038
      %v3071 = vunpack.c.h.b16 %v3038
      %v3072 = vunpack.c.l.b16 %v3039
      %v3073 = vunpack.c.h.b16 %v3039
      %v3074 = vunpack.c.l.b16 %v3040
      %v3075 = vunpack.c.h.b16 %v3040
      %v3076 = vunpack.c.l.b16 %v3041
      %v3077 = vunpack.c.h.b16 %v3041
      %v3078 = vunpack.c.l.b16 %v3042
      %v3079 = vunpack.c.h.b16 %v3042
      %v3080 = vunpack.c.l.b16 %v3043
      %v3081 = vunpack.c.h.b16 %v3043
      %v3082 = vunpack.c.l.b16 %v3044
      %v3083 = vunpack.c.h.b16 %v3044
      %v3084 = vunpack.c.l.b16 %v3045
      %v3085 = vunpack.c.h.b16 %v3045
      %v3086 = vunpack.c.l.b16 %v3046
      %v3087 = vunpack.c.h.b16 %v3046
      %v3088 = vunpack.c.l.b16 %v3047
      %v3089 = vunpack.c.h.b16 %v3047
      %v3090 = vunpack.c.l.b16 %v3048
      %v3091 = vunpack.c.h.b16 %v3048
      %v3092 = vunpack.c.l.b16 %v3049
      %v3093 = vunpack.c.h.b16 %v3049
      %v3094 = vunpack.c.l.b16 %v3050
      %v3095 = vunpack.c.h.b16 %v3050
      %v3096 = vunpack.c.l.b16 %v3051
      %v3097 = vunpack.c.h.b16 %v3051
      %v3098 = vunpack.c.l.b16 %v3052
      %v3099 = vunpack.c.h.b16 %v3052
      %v3100 = vunpack.c.l.b16 %v3053
      %v3101 = vunpack.c.h.b16 %v3053
      %v3102 = vpack.c.b16 %v3070, %v3070
      %v3103 = vpack.c.b16 %v3071, %v3071
      %v3104 = vpack.c.b16 %v3072, %v3072
      %v3105 = vpack.c.b16 %v3073, %v3073
      %v3106 = vpack.c.b16 %v3074, %v3074
      %v3107 = vpack.c.b16 %v3075, %v3075
      %v3108 = vpack.c.b16 %v3076, %v3076
      %v3109 = vpack.c.b16 %v3077, %v3077
      %v3110 = vpack.c.b16 %v3078, %v3078
      %v3111 = vpack.c.b16 %v3079, %v3079
      %v3112 = vpack.c.b16 %v3080, %v3080
      %v3113 = vpack.c.b16 %v3081, %v3081
      %v3114 = vpack.c.b16 %v3082, %v3082
      %v3115 = vpack.c.b16 %v3083, %v3083
      %v3116 = vpack.c.b16 %v3084, %v3084
      %v3117 = vpack.c.b16 %v3085, %v3085
      %v3118 = vpack.c.b16 %v3086, %v3086
      %v3119 = vpack.c.b16 %v3087, %v3087
      %v3120 = vpack.c.b16 %v3088, %v3088
      %v3121 = vpack.c.b16 %v3089, %v3089
      %v3122 = vpack.c.b16 %v3090, %v3090
      %v3123 = vpack.c.b16 %v3091, %v3091
      %v3124 = vpack.c.b16 %v3092, %v3092
      %v3125 = vpack.c.b16 %v3093, %v3093
      %v3126 = vpack.c.b16 %v3094, %v3094
      %v3127 = vpack.c.b16 %v3095, %v3095
      %v3128 = vpack.c.b16 %v3096, %v3096
      %v3129 = vpack.c.b16 %v3097, %v3097
      %v3130 = vpack.c.b16 %v3098, %v3098
      %v3131 = vpack.c.b16 %v3099, %v3099
      %v3132 = vpack.c.b16 %v3100, %v3100
      %v3133 = vpack.c.b16 %v3101, %v3101
      %v3135 = vshrl.u32 %v3102, 16
      %v3137 = vrot.slane %v3135, 7
      %v3138 = vshll.u32 %v3102, 16
      %v3140 = vor.u32 %v3137, %v3138
      %v3141 = vrot.slane %v3137, 4
      %v3143 = vshrl.u32 %v3103, 16
      %v3145 = vrot.slane %v3143, 7
      %v3146 = vshll.u32 %v3103, 16
      %v3148 = vor.u32 %v3145, %v3146
      %v3149 = vsel %vm739, %v3141, %v3148
      %v3150 = vrot.slane %v3145, 4
      %v3152 = vshrl.u32 %v3104, 16
      %v3154 = vrot.slane %v3152, 7
      %v3155 = vshll.u32 %v3104, 16
      %v3157 = vor.u32 %v3154, %v3155
      %v3158 = vrot.slane %v3154, 4
      %v3160 = vshrl.u32 %v3105, 16
      %v3162 = vrot.slane %v3160, 7
      %v3163 = vshll.u32 %v3105, 16
      %v3165 = vor.u32 %v3162, %v3163
      %v3166 = vsel %vm739, %v3158, %v3165
      %v3167 = vrot.slane %v3162, 4
      %v3169 = vshrl.u32 %v3106, 16
      %v3171 = vrot.slane %v3169, 7
      %v3172 = vshll.u32 %v3106, 16
      %v3174 = vor.u32 %v3171, %v3172
      %v3175 = vrot.slane %v3171, 4
      %v3177 = vshrl.u32 %v3107, 16
      %v3179 = vrot.slane %v3177, 7
      %v3180 = vshll.u32 %v3107, 16
      %v3182 = vor.u32 %v3179, %v3180
      %v3183 = vsel %vm739, %v3175, %v3182
      %v3184 = vrot.slane %v3179, 4
      %v3186 = vshrl.u32 %v3108, 16
      %v3188 = vrot.slane %v3186, 7
      %v3189 = vshll.u32 %v3108, 16
      %v3191 = vor.u32 %v3188, %v3189
      %v3192 = vrot.slane %v3188, 4
      %v3194 = vshrl.u32 %v3109, 16
      %v3196 = vrot.slane %v3194, 7
      %v3197 = vshll.u32 %v3109, 16
      %v3199 = vor.u32 %v3196, %v3197
      %v3200 = vsel %vm739, %v3192, %v3199
      %v3201 = vrot.slane %v3196, 4
      %v3203 = vshrl.u32 %v3110, 16
      %v3205 = vrot.slane %v3203, 7
      %v3206 = vshll.u32 %v3110, 16
      %v3208 = vor.u32 %v3205, %v3206
      %v3209 = vrot.slane %v3205, 4
      %v3211 = vshrl.u32 %v3111, 16
      %v3213 = vrot.slane %v3211, 7
      %v3214 = vshll.u32 %v3111, 16
      %v3216 = vor.u32 %v3213, %v3214
      %v3217 = vsel %vm739, %v3209, %v3216
      %v3218 = vrot.slane %v3213, 4
      %v3220 = vshrl.u32 %v3112, 16
      %v3222 = vrot.slane %v3220, 7
      %v3223 = vshll.u32 %v3112, 16
      %v3225 = vor.u32 %v3222, %v3223
      %v3226 = vrot.slane %v3222, 4
      %v3228 = vshrl.u32 %v3113, 16
      %v3230 = vrot.slane %v3228, 7
      %v3231 = vshll.u32 %v3113, 16
      %v3233 = vor.u32 %v3230, %v3231
      %v3234 = vsel %vm739, %v3226, %v3233
      %v3235 = vrot.slane %v3230, 4
      %v3237 = vshrl.u32 %v3114, 16
      %v3239 = vrot.slane %v3237, 7
      %v3240 = vshll.u32 %v3114, 16
      %v3242 = vor.u32 %v3239, %v3240
      %v3243 = vrot.slane %v3239, 4
      %v3245 = vshrl.u32 %v3115, 16
      %v3247 = vrot.slane %v3245, 7
      %v3248 = vshll.u32 %v3115, 16
      %v3250 = vor.u32 %v3247, %v3248
      %v3251 = vsel %vm739, %v3243, %v3250
      %v3252 = vrot.slane %v3247, 4
      %v3254 = vshrl.u32 %v3116, 16
      %v3256 = vrot.slane %v3254, 7
      %v3257 = vshll.u32 %v3116, 16
      %v3259 = vor.u32 %v3256, %v3257
      %v3260 = vrot.slane %v3256, 4
      %v3262 = vshrl.u32 %v3117, 16
      %v3264 = vrot.slane %v3262, 7
      %v3265 = vshll.u32 %v3117, 16
      %v3267 = vor.u32 %v3264, %v3265
      %v3268 = vsel %vm739, %v3260, %v3267
      %v3269 = vrot.slane %v3264, 4
      %v3271 = vshrl.u32 %v3118, 16
      %v3273 = vrot.slane %v3271, 7
      %v3274 = vshll.u32 %v3118, 16
      %v3276 = vor.u32 %v3273, %v3274
      %v3277 = vrot.slane %v3273, 4
      %v3279 = vshrl.u32 %v3119, 16
      %v3281 = vrot.slane %v3279, 7
      %v3282 = vshll.u32 %v3119, 16
      %v3284 = vor.u32 %v3281, %v3282
      %v3285 = vsel %vm739, %v3277, %v3284
      %v3286 = vrot.slane %v3281, 4
      %v3288 = vshrl.u32 %v3120, 16
      %v3290 = vrot.slane %v3288, 7
      %v3291 = vshll.u32 %v3120, 16
      %v3293 = vor.u32 %v3290, %v3291
      %v3294 = vrot.slane %v3290, 4
      %v3296 = vshrl.u32 %v3121, 16
      %v3298 = vrot.slane %v3296, 7
      %v3299 = vshll.u32 %v3121, 16
      %v3301 = vor.u32 %v3298, %v3299
      %v3302 = vsel %vm739, %v3294, %v3301
      %v3303 = vrot.slane %v3298, 4
      %v3305 = vshrl.u32 %v3122, 16
      %v3307 = vrot.slane %v3305, 7
      %v3308 = vshll.u32 %v3122, 16
      %v3310 = vor.u32 %v3307, %v3308
      %v3311 = vrot.slane %v3307, 4
      %v3313 = vshrl.u32 %v3123, 16
      %v3315 = vrot.slane %v3313, 7
      %v3316 = vshll.u32 %v3123, 16
      %v3318 = vor.u32 %v3315, %v3316
      %v3319 = vsel %vm739, %v3311, %v3318
      %v3320 = vrot.slane %v3315, 4
      %v3322 = vshrl.u32 %v3124, 16
      %v3324 = vrot.slane %v3322, 7
      %v3325 = vshll.u32 %v3124, 16
      %v3327 = vor.u32 %v3324, %v3325
      %v3328 = vrot.slane %v3324, 4
      %v3330 = vshrl.u32 %v3125, 16
      %v3332 = vrot.slane %v3330, 7
      %v3333 = vshll.u32 %v3125, 16
      %v3335 = vor.u32 %v3332, %v3333
      %v3336 = vsel %vm739, %v3328, %v3335
      %v3337 = vrot.slane %v3332, 4
      %v3339 = vshrl.u32 %v3126, 16
      %v3341 = vrot.slane %v3339, 7
      %v3342 = vshll.u32 %v3126, 16
      %v3344 = vor.u32 %v3341, %v3342
      %v3345 = vrot.slane %v3341, 4
      %v3347 = vshrl.u32 %v3127, 16
      %v3349 = vrot.slane %v3347, 7
      %v3350 = vshll.u32 %v3127, 16
      %v3352 = vor.u32 %v3349, %v3350
      %v3353 = vsel %vm739, %v3345, %v3352
      %v3354 = vrot.slane %v3349, 4
      %v3356 = vshrl.u32 %v3128, 16
      %v3358 = vrot.slane %v3356, 7
      %v3359 = vshll.u32 %v3128, 16
      %v3361 = vor.u32 %v3358, %v3359
      %v3362 = vrot.slane %v3358, 4
      %v3364 = vshrl.u32 %v3129, 16
      %v3366 = vrot.slane %v3364, 7
      %v3367 = vshll.u32 %v3129, 16
      %v3369 = vor.u32 %v3366, %v3367
      %v3370 = vsel %vm739, %v3362, %v3369
      %v3371 = vrot.slane %v3366, 4
      %v3373 = vshrl.u32 %v3130, 16
      %v3375 = vrot.slane %v3373, 7
      %v3376 = vshll.u32 %v3130, 16
      %v3378 = vor.u32 %v3375, %v3376
      %v3379 = vrot.slane %v3375, 4
      %v3381 = vshrl.u32 %v3131, 16
      %v3383 = vrot.slane %v3381, 7
      %v3384 = vshll.u32 %v3131, 16
      %v3386 = vor.u32 %v3383, %v3384
      %v3387 = vsel %vm739, %v3379, %v3386
      %v3388 = vrot.slane %v3383, 4
      %v3390 = vshrl.u32 %v3132, 16
      %v3392 = vrot.slane %v3390, 7
      %v3393 = vshll.u32 %v3132, 16
      %v3395 = vor.u32 %v3392, %v3393
      %v3396 = vrot.slane %v3392, 4
      %v3398 = vshrl.u32 %v3133, 16
      %v3400 = vrot.slane %v3398, 7
      %v3401 = vshll.u32 %v3133, 16
      %v3403 = vor.u32 %v3400, %v3401
      %v3404 = vsel %vm739, %v3396, %v3403
      %v3405 = vrot.slane %v3400, 4
      %s3454 = scalar_lea.vmem [#allocation2], 12
      %v3455 = vld [vmem:[%s3454] sm:$0xf]
      %v3456 = vsel %vm1062, %v3140, %v3455
      %3457 = vst [vmem:[%s3454] sm:$0xf] %v3456
      %3458 = vst.msk [vmem:[%s3454 + $0x4] sm:$0xf] %vm354, %v3149
      %v3459 = vld [vmem:[%s3454 + $0x8] sm:$0x1]
      %v3460 = vsel %vm365, %v3150, %v3459
      %3461 = vst [vmem:[%s3454 + $0x8] sm:$0x1] %v3460
      %v3462 = vld [vmem:[%s3454 + $0xc] sm:$0xf]
      %v3463 = vsel %vm1062, %v3157, %v3462
      %3464 = vst [vmem:[%s3454 + $0xc] sm:$0xf] %v3463
      %3465 = vst.msk [vmem:[%s3454 + $0x10] sm:$0xf] %vm354, %v3166
      %v3466 = vld [vmem:[%s3454 + $0x14] sm:$0x1]
      %v3467 = vsel %vm365, %v3167, %v3466
      %3468 = vst [vmem:[%s3454 + $0x14] sm:$0x1] %v3467
      %v3469 = vld [vmem:[%s3454 + $0x18] sm:$0xf]
      %v3470 = vsel %vm1062, %v3174, %v3469
      %3471 = vst [vmem:[%s3454 + $0x18] sm:$0xf] %v3470
      %3472 = vst.msk [vmem:[%s3454 + $0x1c] sm:$0xf] %vm354, %v3183
      %v3473 = vld [vmem:[%s3454 + $0x20] sm:$0x1]
      %v3474 = vsel %vm365, %v3184, %v3473
      %3475 = vst [vmem:[%s3454 + $0x20] sm:$0x1] %v3474
      %v3476 = vld [vmem:[%s3454 + $0x24] sm:$0xf]
      %v3477 = vsel %vm1062, %v3191, %v3476
      %3478 = vst [vmem:[%s3454 + $0x24] sm:$0xf] %v3477
      %3479 = vst.msk [vmem:[%s3454 + $0x28] sm:$0xf] %vm354, %v3200
      %v3480 = vld [vmem:[%s3454 + $0x2c] sm:$0x1]
      %v3481 = vsel %vm365, %v3201, %v3480
      %3482 = vst [vmem:[%s3454 + $0x2c] sm:$0x1] %v3481
      %v3483 = vld [vmem:[%s3454 + $0x30] sm:$0xf]
      %v3484 = vsel %vm1062, %v3208, %v3483
      %3485 = vst [vmem:[%s3454 + $0x30] sm:$0xf] %v3484
      %3486 = vst.msk [vmem:[%s3454 + $0x34] sm:$0xf] %vm354, %v3217
      %v3487 = vld [vmem:[%s3454 + $0x38] sm:$0x1]
      %v3488 = vsel %vm365, %v3218, %v3487
      %3489 = vst [vmem:[%s3454 + $0x38] sm:$0x1] %v3488
      %v3490 = vld [vmem:[%s3454 + $0x3c] sm:$0xf]
      %v3491 = vsel %vm1062, %v3225, %v3490
      %3492 = vst [vmem:[%s3454 + $0x3c] sm:$0xf] %v3491
      %3493 = vst.msk [vmem:[%s3454 + $0x40] sm:$0xf] %vm354, %v3234
      %v3494 = vld [vmem:[%s3454 + $0x44] sm:$0x1]
      %v3495 = vsel %vm365, %v3235, %v3494
      %3496 = vst [vmem:[%s3454 + $0x44] sm:$0x1] %v3495
      %v3497 = vld [vmem:[%s3454 + $0x48] sm:$0xf]
      %v3498 = vsel %vm1062, %v3242, %v3497
      %3499 = vst [vmem:[%s3454 + $0x48] sm:$0xf] %v3498
      %3500 = vst.msk [vmem:[%s3454 + $0x4c] sm:$0xf] %vm354, %v3251
      %v3501 = vld [vmem:[%s3454 + $0x50] sm:$0x1]
      %v3502 = vsel %vm365, %v3252, %v3501
      %3503 = vst [vmem:[%s3454 + $0x50] sm:$0x1] %v3502
      %v3504 = vld [vmem:[%s3454 + $0x54] sm:$0xf]
      %v3505 = vsel %vm1062, %v3259, %v3504
      %3506 = vst [vmem:[%s3454 + $0x54] sm:$0xf] %v3505
      %3507 = vst.msk [vmem:[%s3454 + $0x58] sm:$0xf] %vm354, %v3268
      %v3508 = vld [vmem:[%s3454 + $0x5c] sm:$0x1]
      %v3509 = vsel %vm365, %v3269, %v3508
      %3510 = vst [vmem:[%s3454 + $0x5c] sm:$0x1] %v3509
      %v3511 = vld [vmem:[%s3454 + $0x60] sm:$0xf]
      %v3512 = vsel %vm1062, %v3276, %v3511
      %3513 = vst [vmem:[%s3454 + $0x60] sm:$0xf] %v3512
      %3514 = vst.msk [vmem:[%s3454 + $0x64] sm:$0xf] %vm354, %v3285
      %v3515 = vld [vmem:[%s3454 + $0x68] sm:$0x1]
      %v3516 = vsel %vm365, %v3286, %v3515
      %3517 = vst [vmem:[%s3454 + $0x68] sm:$0x1] %v3516
      %v3518 = vld [vmem:[%s3454 + $0x6c] sm:$0xf]
      %v3519 = vsel %vm1062, %v3293, %v3518
      %3520 = vst [vmem:[%s3454 + $0x6c] sm:$0xf] %v3519
      %3521 = vst.msk [vmem:[%s3454 + $0x70] sm:$0xf] %vm354, %v3302
      %v3522 = vld [vmem:[%s3454 + $0x74] sm:$0x1]
      %v3523 = vsel %vm365, %v3303, %v3522
      %3524 = vst [vmem:[%s3454 + $0x74] sm:$0x1] %v3523
      %v3525 = vld [vmem:[%s3454 + $0x78] sm:$0xf]
      %v3526 = vsel %vm1062, %v3310, %v3525
      %3527 = vst [vmem:[%s3454 + $0x78] sm:$0xf] %v3526
      %3528 = vst.msk [vmem:[%s3454 + $0x7c] sm:$0xf] %vm354, %v3319
      %v3529 = vld [vmem:[%s3454 + $0x80] sm:$0x1]
      %v3530 = vsel %vm365, %v3320, %v3529
      %3531 = vst [vmem:[%s3454 + $0x80] sm:$0x1] %v3530
      %v3532 = vld [vmem:[%s3454 + $0x84] sm:$0xf]
      %v3533 = vsel %vm1062, %v3327, %v3532
      %3534 = vst [vmem:[%s3454 + $0x84] sm:$0xf] %v3533
      %3535 = vst.msk [vmem:[%s3454 + $0x88] sm:$0xf] %vm354, %v3336
      %v3536 = vld [vmem:[%s3454 + $0x8c] sm:$0x1]
      %v3537 = vsel %vm365, %v3337, %v3536
      %3538 = vst [vmem:[%s3454 + $0x8c] sm:$0x1] %v3537
      %v3539 = vld [vmem:[%s3454 + $0x90] sm:$0xf]
      %v3540 = vsel %vm1062, %v3344, %v3539
      %3541 = vst [vmem:[%s3454 + $0x90] sm:$0xf] %v3540
      %3542 = vst.msk [vmem:[%s3454 + $0x94] sm:$0xf] %vm354, %v3353
      %v3543 = vld [vmem:[%s3454 + $0x98] sm:$0x1]
      %v3544 = vsel %vm365, %v3354, %v3543
      %3545 = vst [vmem:[%s3454 + $0x98] sm:$0x1] %v3544
      %v3546 = vld [vmem:[%s3454 + $0x9c] sm:$0xf]
      %v3547 = vsel %vm1062, %v3361, %v3546
      %3548 = vst [vmem:[%s3454 + $0x9c] sm:$0xf] %v3547
      %3549 = vst.msk [vmem:[%s3454 + $0xa0] sm:$0xf] %vm354, %v3370
      %v3550 = vld [vmem:[%s3454 + $0xa4] sm:$0x1]
      %v3551 = vsel %vm365, %v3371, %v3550
      %3552 = vst [vmem:[%s3454 + $0xa4] sm:$0x1] %v3551
      %v3553 = vld [vmem:[%s3454 + $0xa8] sm:$0xf]
      %v3554 = vsel %vm1062, %v3378, %v3553
      %3555 = vst [vmem:[%s3454 + $0xa8] sm:$0xf] %v3554
      %3556 = vst.msk [vmem:[%s3454 + $0xac] sm:$0xf] %vm354, %v3387
      %v3557 = vld [vmem:[%s3454 + $0xb0] sm:$0x1]
      %v3558 = vsel %vm365, %v3388, %v3557
      %3559 = vst [vmem:[%s3454 + $0xb0] sm:$0x1] %v3558
      %v3560 = vld [vmem:[%s3454 + $0xb4] sm:$0xf]
      %v3561 = vsel %vm1062, %v3395, %v3560
      %3562 = vst [vmem:[%s3454 + $0xb4] sm:$0xf] %v3561
      %3563 = vst.msk [vmem:[%s3454 + $0xb8] sm:$0xf] %vm354, %v3404
      %v3564 = vld [vmem:[%s3454 + $0xbc] sm:$0x1]
      %v3565 = vsel %vm365, %v3405, %v3564
      %3566 = vst [vmem:[%s3454 + $0xbc] sm:$0x1] %v3565
      %v3567 = vld [vmem:[#allocation3] sm:$0xf]
      %v3568 = vld [vmem:[#allocation3 + $0x4] sm:$0xf]
      %v3569 = vld [vmem:[#allocation3 + $0xc] sm:$0xf]
      %v3570 = vld [vmem:[#allocation3 + $0x10] sm:$0xf]
      %v3571 = vld [vmem:[#allocation3 + $0x18] sm:$0xf]
      %v3572 = vld [vmem:[#allocation3 + $0x1c] sm:$0xf]
      %v3573 = vld [vmem:[#allocation3 + $0x24] sm:$0xf]
      %v3574 = vld [vmem:[#allocation3 + $0x28] sm:$0xf]
      %v3575 = vld [vmem:[#allocation3 + $0x30] sm:$0xf]
      %v3576 = vld [vmem:[#allocation3 + $0x34] sm:$0xf]
      %v3577 = vld [vmem:[#allocation3 + $0x3c] sm:$0xf]
      %v3578 = vld [vmem:[#allocation3 + $0x40] sm:$0xf]
      %v3579 = vld [vmem:[#allocation3 + $0x48] sm:$0xf]
      %v3580 = vld [vmem:[#allocation3 + $0x4c] sm:$0xf]
      %v3581 = vld [vmem:[#allocation3 + $0x54] sm:$0xf]
      %v3582 = vld [vmem:[#allocation3 + $0x58] sm:$0xf]
      %v3583 = vld [vmem:[#allocation3 + $0x60] sm:$0xf]
      %v3584 = vld [vmem:[#allocation3 + $0x64] sm:$0xf]
      %v3585 = vld [vmem:[#allocation3 + $0x6c] sm:$0xf]
      %v3586 = vld [vmem:[#allocation3 + $0x70] sm:$0xf]
      %v3587 = vld [vmem:[#allocation3 + $0x78] sm:$0xf]
      %v3588 = vld [vmem:[#allocation3 + $0x7c] sm:$0xf]
      %v3589 = vld [vmem:[#allocation3 + $0x84] sm:$0xf]
      %v3590 = vld [vmem:[#allocation3 + $0x88] sm:$0xf]
      %v3591 = vld [vmem:[#allocation3 + $0x90] sm:$0xf]
      %v3592 = vld [vmem:[#allocation3 + $0x94] sm:$0xf]
      %v3593 = vld [vmem:[#allocation3 + $0x9c] sm:$0xf]
      %v3594 = vld [vmem:[#allocation3 + $0xa0] sm:$0xf]
      %v3595 = vld [vmem:[#allocation3 + $0xa8] sm:$0xf]
      %v3596 = vld [vmem:[#allocation3 + $0xac] sm:$0xf]
      %v3597 = vld [vmem:[#allocation3 + $0xb4] sm:$0xf]
      %v3598 = vld [vmem:[#allocation3 + $0xb8] sm:$0xf]
      %v3599 = vld [vmem:[#allocation3 + $0x8] sm:$0x1]
      %v3600 = vld [vmem:[#allocation3 + $0x14] sm:$0x1]
      %v3601 = vld [vmem:[#allocation3 + $0x20] sm:$0x1]
      %v3602 = vld [vmem:[#allocation3 + $0x2c] sm:$0x1]
      %v3603 = vld [vmem:[#allocation3 + $0x38] sm:$0x1]
      %v3604 = vld [vmem:[#allocation3 + $0x44] sm:$0x1]
      %v3605 = vld [vmem:[#allocation3 + $0x50] sm:$0x1]
      %v3606 = vld [vmem:[#allocation3 + $0x5c] sm:$0x1]
      %v3607 = vld [vmem:[#allocation3 + $0x68] sm:$0x1]
      %v3608 = vld [vmem:[#allocation3 + $0x74] sm:$0x1]
      %v3609 = vld [vmem:[#allocation3 + $0x80] sm:$0x1]
      %v3610 = vld [vmem:[#allocation3 + $0x8c] sm:$0x1]
      %v3611 = vld [vmem:[#allocation3 + $0x98] sm:$0x1]
      %v3612 = vld [vmem:[#allocation3 + $0xa4] sm:$0x1]
      %v3613 = vld [vmem:[#allocation3 + $0xb0] sm:$0x1]
      %v3614 = vld [vmem:[#allocation3 + $0xbc] sm:$0x1]
      %v3615 = vld [vmem:[#allocation3] sm:$0xe]
      %v3616 = vld [vmem:[#allocation3 + $0xc] sm:$0xe]
      %v3617 = vld [vmem:[#allocation3 + $0x18] sm:$0xe]
      %v3618 = vld [vmem:[#allocation3 + $0x24] sm:$0xe]
      %v3619 = vld [vmem:[#allocation3 + $0x30] sm:$0xe]
      %v3620 = vld [vmem:[#allocation3 + $0x3c] sm:$0xe]
      %v3621 = vld [vmem:[#allocation3 + $0x48] sm:$0xe]
      %v3622 = vld [vmem:[#allocation3 + $0x54] sm:$0xe]
      %v3623 = vld [vmem:[#allocation3 + $0x60] sm:$0xe]
      %v3624 = vld [vmem:[#allocation3 + $0x6c] sm:$0xe]
      %v3625 = vld [vmem:[#allocation3 + $0x78] sm:$0xe]
      %v3626 = vld [vmem:[#allocation3 + $0x84] sm:$0xe]
      %v3627 = vld [vmem:[#allocation3 + $0x90] sm:$0xe]
      %v3628 = vld [vmem:[#allocation3 + $0x9c] sm:$0xe]
      %v3629 = vld [vmem:[#allocation3 + $0xa8] sm:$0xe]
      %v3630 = vld [vmem:[#allocation3 + $0xb4] sm:$0xe]
      %v3663 = vunpack.c.l.b16 %v3567
      %v3664 = vunpack.c.l.b16 %v3568
      %v3665 = vunpack.c.l.b16 %v3569
      %v3666 = vunpack.c.l.b16 %v3570
      %v3667 = vunpack.c.l.b16 %v3571
      %v3668 = vunpack.c.l.b16 %v3572
      %v3669 = vunpack.c.l.b16 %v3573
      %v3670 = vunpack.c.l.b16 %v3574
      %v3671 = vunpack.c.l.b16 %v3575
      %v3672 = vunpack.c.l.b16 %v3576
      %v3673 = vunpack.c.l.b16 %v3577
      %v3674 = vunpack.c.l.b16 %v3578
      %v3675 = vunpack.c.l.b16 %v3579
      %v3676 = vunpack.c.l.b16 %v3580
      %v3677 = vunpack.c.l.b16 %v3581
      %v3678 = vunpack.c.l.b16 %v3582
      %v3679 = vunpack.c.l.b16 %v3583
      %v3680 = vunpack.c.l.b16 %v3584
      %v3681 = vunpack.c.l.b16 %v3585
      %v3682 = vunpack.c.l.b16 %v3586
      %v3683 = vunpack.c.l.b16 %v3587
      %v3684 = vunpack.c.l.b16 %v3588
      %v3685 = vunpack.c.l.b16 %v3589
      %v3686 = vunpack.c.l.b16 %v3590
      %v3687 = vunpack.c.l.b16 %v3591
      %v3688 = vunpack.c.l.b16 %v3592
      %v3689 = vunpack.c.l.b16 %v3593
      %v3690 = vunpack.c.l.b16 %v3594
      %v3691 = vunpack.c.l.b16 %v3595
      %v3692 = vunpack.c.l.b16 %v3596
      %v3693 = vunpack.c.l.b16 %v3597
      %v3694 = vunpack.c.l.b16 %v3598
      %v3695 = vpack.c.b16 %v3664, %v3663
      %v3696 = vpack.c.b16 %v3666, %v3665
      %v3697 = vpack.c.b16 %v3668, %v3667
      %v3698 = vpack.c.b16 %v3670, %v3669
      %v3699 = vpack.c.b16 %v3672, %v3671
      %v3700 = vpack.c.b16 %v3674, %v3673
      %v3701 = vpack.c.b16 %v3676, %v3675
      %v3702 = vpack.c.b16 %v3678, %v3677
      %v3703 = vpack.c.b16 %v3680, %v3679
      %v3704 = vpack.c.b16 %v3682, %v3681
      %v3705 = vpack.c.b16 %v3684, %v3683
      %v3706 = vpack.c.b16 %v3686, %v3685
      %v3707 = vpack.c.b16 %v3688, %v3687
      %v3708 = vpack.c.b16 %v3690, %v3689
      %v3709 = vpack.c.b16 %v3692, %v3691
      %v3710 = vpack.c.b16 %v3694, %v3693
      %v3727 = vunpack.c.l.b16 %v3599
      %v3728 = vunpack.c.l.b16 %v3600
      %v3729 = vunpack.c.l.b16 %v3601
      %v3730 = vunpack.c.l.b16 %v3602
      %v3731 = vunpack.c.l.b16 %v3603
      %v3732 = vunpack.c.l.b16 %v3604
      %v3733 = vunpack.c.l.b16 %v3605
      %v3734 = vunpack.c.l.b16 %v3606
      %v3735 = vunpack.c.l.b16 %v3607
      %v3736 = vunpack.c.l.b16 %v3608
      %v3737 = vunpack.c.l.b16 %v3609
      %v3738 = vunpack.c.l.b16 %v3610
      %v3739 = vunpack.c.l.b16 %v3611
      %v3740 = vunpack.c.l.b16 %v3612
      %v3741 = vunpack.c.l.b16 %v3613
      %v3742 = vunpack.c.l.b16 %v3614
      %v3743 = vpack.c.b16 %v3727, %v3727
      %v3744 = vpack.c.b16 %v3728, %v3728
      %v3745 = vpack.c.b16 %v3729, %v3729
      %v3746 = vpack.c.b16 %v3730, %v3730
      %v3747 = vpack.c.b16 %v3731, %v3731
      %v3748 = vpack.c.b16 %v3732, %v3732
      %v3749 = vpack.c.b16 %v3733, %v3733
      %v3750 = vpack.c.b16 %v3734, %v3734
      %v3751 = vpack.c.b16 %v3735, %v3735
      %v3752 = vpack.c.b16 %v3736, %v3736
      %v3753 = vpack.c.b16 %v3737, %v3737
      %v3754 = vpack.c.b16 %v3738, %v3738
      %v3755 = vpack.c.b16 %v3739, %v3739
      %v3756 = vpack.c.b16 %v3740, %v3740
      %v3757 = vpack.c.b16 %v3741, %v3741
      %v3758 = vpack.c.b16 %v3742, %v3742
      %vm3759 = vsmask.f32 7424
      %v3761 = vshrl.u32 %v3695, 16
      %v3763 = vshll.u32 %v3695, 16
      %v3765 = vrot.slane %v3763, 1
      %v3766 = vor.u32 %v3761, %v3765
      %v3768 = vshll.u32 %v3743, 16
      %v3770 = vrot.slane %v3768, 1
      %v3771 = vsel %vm3759, %v3766, %v3770
      %v3773 = vshrl.u32 %v3696, 16
      %v3775 = vshll.u32 %v3696, 16
      %v3777 = vrot.slane %v3775, 1
      %v3778 = vor.u32 %v3773, %v3777
      %v3780 = vshll.u32 %v3744, 16
      %v3782 = vrot.slane %v3780, 1
      %v3783 = vsel %vm3759, %v3778, %v3782
      %v3785 = vshrl.u32 %v3697, 16
      %v3787 = vshll.u32 %v3697, 16
      %v3789 = vrot.slane %v3787, 1
      %v3790 = vor.u32 %v3785, %v3789
      %v3792 = vshll.u32 %v3745, 16
      %v3794 = vrot.slane %v3792, 1
      %v3795 = vsel %vm3759, %v3790, %v3794
      %v3797 = vshrl.u32 %v3698, 16
      %v3799 = vshll.u32 %v3698, 16
      %v3801 = vrot.slane %v3799, 1
      %v3802 = vor.u32 %v3797, %v3801
      %v3804 = vshll.u32 %v3746, 16
      %v3806 = vrot.slane %v3804, 1
      %v3807 = vsel %vm3759, %v3802, %v3806
      %v3809 = vshrl.u32 %v3699, 16
      %v3811 = vshll.u32 %v3699, 16
      %v3813 = vrot.slane %v3811, 1
      %v3814 = vor.u32 %v3809, %v3813
      %v3816 = vshll.u32 %v3747, 16
      %v3818 = vrot.slane %v3816, 1
      %v3819 = vsel %vm3759, %v3814, %v3818
      %v3821 = vshrl.u32 %v3700, 16
      %v3823 = vshll.u32 %v3700, 16
      %v3825 = vrot.slane %v3823, 1
      %v3826 = vor.u32 %v3821, %v3825
      %v3828 = vshll.u32 %v3748, 16
      %v3830 = vrot.slane %v3828, 1
      %v3831 = vsel %vm3759, %v3826, %v3830
      %v3833 = vshrl.u32 %v3701, 16
      %v3835 = vshll.u32 %v3701, 16
      %v3837 = vrot.slane %v3835, 1
      %v3838 = vor.u32 %v3833, %v3837
      %v3840 = vshll.u32 %v3749, 16
      %v3842 = vrot.slane %v3840, 1
      %v3843 = vsel %vm3759, %v3838, %v3842
      %v3845 = vshrl.u32 %v3702, 16
      %v3847 = vshll.u32 %v3702, 16
      %v3849 = vrot.slane %v3847, 1
      %v3850 = vor.u32 %v3845, %v3849
      %v3852 = vshll.u32 %v3750, 16
      %v3854 = vrot.slane %v3852, 1
      %v3855 = vsel %vm3759, %v3850, %v3854
      %v3857 = vshrl.u32 %v3703, 16
      %v3859 = vshll.u32 %v3703, 16
      %v3861 = vrot.slane %v3859, 1
      %v3862 = vor.u32 %v3857, %v3861
      %v3864 = vshll.u32 %v3751, 16
      %v3866 = vrot.slane %v3864, 1
      %v3867 = vsel %vm3759, %v3862, %v3866
      %v3869 = vshrl.u32 %v3704, 16
      %v3871 = vshll.u32 %v3704, 16
      %v3873 = vrot.slane %v3871, 1
      %v3874 = vor.u32 %v3869, %v3873
      %v3876 = vshll.u32 %v3752, 16
      %v3878 = vrot.slane %v3876, 1
      %v3879 = vsel %vm3759, %v3874, %v3878
      %v3881 = vshrl.u32 %v3705, 16
      %v3883 = vshll.u32 %v3705, 16
      %v3885 = vrot.slane %v3883, 1
      %v3886 = vor.u32 %v3881, %v3885
      %v3888 = vshll.u32 %v3753, 16
      %v3890 = vrot.slane %v3888, 1
      %v3891 = vsel %vm3759, %v3886, %v3890
      %v3893 = vshrl.u32 %v3706, 16
      %v3895 = vshll.u32 %v3706, 16
      %v3897 = vrot.slane %v3895, 1
      %v3898 = vor.u32 %v3893, %v3897
      %v3900 = vshll.u32 %v3754, 16
      %v3902 = vrot.slane %v3900, 1
      %v3903 = vsel %vm3759, %v3898, %v3902
      %v3905 = vshrl.u32 %v3707, 16
      %v3907 = vshll.u32 %v3707, 16
      %v3909 = vrot.slane %v3907, 1
      %v3910 = vor.u32 %v3905, %v3909
      %v3912 = vshll.u32 %v3755, 16
      %v3914 = vrot.slane %v3912, 1
      %v3915 = vsel %vm3759, %v3910, %v3914
      %v3917 = vshrl.u32 %v3708, 16
      %v3919 = vshll.u32 %v3708, 16
      %v3921 = vrot.slane %v3919, 1
      %v3922 = vor.u32 %v3917, %v3921
      %v3924 = vshll.u32 %v3756, 16
      %v3926 = vrot.slane %v3924, 1
      %v3927 = vsel %vm3759, %v3922, %v3926
      %v3929 = vshrl.u32 %v3709, 16
      %v3931 = vshll.u32 %v3709, 16
      %v3933 = vrot.slane %v3931, 1
      %v3934 = vor.u32 %v3929, %v3933
      %v3936 = vshll.u32 %v3757, 16
      %v3938 = vrot.slane %v3936, 1
      %v3939 = vsel %vm3759, %v3934, %v3938
      %v3941 = vshrl.u32 %v3710, 16
      %v3943 = vshll.u32 %v3710, 16
      %v3945 = vrot.slane %v3943, 1
      %v3946 = vor.u32 %v3941, %v3945
      %v3948 = vshll.u32 %v3758, 16
      %v3950 = vrot.slane %v3948, 1
      %v3951 = vsel %vm3759, %v3946, %v3950
      %3952 = vrot.lane.b32.xlu0 %v3771, 4
      %v3953 = vpop.permute.xlu0 %3952
      %3954 = vrot.lane.b32.xlu0 %v3783, 4
      %v3955 = vpop.permute.xlu0 %3954
      %3956 = vrot.lane.b32.xlu0 %v3795, 4
      %v3957 = vpop.permute.xlu0 %3956
      %3958 = vrot.lane.b32.xlu0 %v3807, 4
      %v3959 = vpop.permute.xlu0 %3958
      %3960 = vrot.lane.b32.xlu0 %v3819, 4
      %v3961 = vpop.permute.xlu0 %3960
      %3962 = vrot.lane.b32.xlu0 %v3831, 4
      %v3963 = vpop.permute.xlu0 %3962
      %3964 = vrot.lane.b32.xlu0 %v3843, 4
      %v3965 = vpop.permute.xlu0 %3964
      %3966 = vrot.lane.b32.xlu0 %v3855, 4
      %v3967 = vpop.permute.xlu0 %3966
      %3968 = vrot.lane.b32.xlu0 %v3867, 4
      %v3969 = vpop.permute.xlu0 %3968
      %3970 = vrot.lane.b32.xlu0 %v3879, 4
      %v3971 = vpop.permute.xlu0 %3970
      %3972 = vrot.lane.b32.xlu0 %v3891, 4
      %v3973 = vpop.permute.xlu0 %3972
      %3974 = vrot.lane.b32.xlu0 %v3903, 4
      %v3975 = vpop.permute.xlu0 %3974
      %3976 = vrot.lane.b32.xlu0 %v3915, 4
      %v3977 = vpop.permute.xlu0 %3976
      %3978 = vrot.lane.b32.xlu0 %v3927, 4
      %v3979 = vpop.permute.xlu0 %3978
      %3980 = vrot.lane.b32.xlu0 %v3939, 4
      %v3981 = vpop.permute.xlu0 %3980
      %3982 = vrot.lane.b32.xlu0 %v3951, 4
      %v3983 = vpop.permute.xlu0 %3982
      %v4000 = vunpack.c.l.b16 %v3615
      %v4001 = vunpack.c.l.b16 %v3616
      %v4002 = vunpack.c.l.b16 %v3617
      %v4003 = vunpack.c.l.b16 %v3618
      %v4004 = vunpack.c.l.b16 %v3619
      %v4005 = vunpack.c.l.b16 %v3620
      %v4006 = vunpack.c.l.b16 %v3621
      %v4007 = vunpack.c.l.b16 %v3622
      %v4008 = vunpack.c.l.b16 %v3623
      %v4009 = vunpack.c.l.b16 %v3624
      %v4010 = vunpack.c.l.b16 %v3625
      %v4011 = vunpack.c.l.b16 %v3626
      %v4012 = vunpack.c.l.b16 %v3627
      %v4013 = vunpack.c.l.b16 %v3628
      %v4014 = vunpack.c.l.b16 %v3629
      %v4015 = vunpack.c.l.b16 %v3630
      %v4016 = vpack.c.b16 %v3664, %v4000
      %v4017 = vpack.c.b16 %v3666, %v4001
      %v4018 = vpack.c.b16 %v3668, %v4002
      %v4019 = vpack.c.b16 %v3670, %v4003
      %v4020 = vpack.c.b16 %v3672, %v4004
      %v4021 = vpack.c.b16 %v3674, %v4005
      %v4022 = vpack.c.b16 %v3676, %v4006
      %v4023 = vpack.c.b16 %v3678, %v4007
      %v4024 = vpack.c.b16 %v3680, %v4008
      %v4025 = vpack.c.b16 %v3682, %v4009
      %v4026 = vpack.c.b16 %v3684, %v4010
      %v4027 = vpack.c.b16 %v3686, %v4011
      %v4028 = vpack.c.b16 %v3688, %v4012
      %v4029 = vpack.c.b16 %v3690, %v4013
      %v4030 = vpack.c.b16 %v3692, %v4014
      %v4031 = vpack.c.b16 %v3694, %v4015
      %vm4032 = vcmask 1046528
      %v4033 = vrot.slane %v4016, 1
      %v4034 = vrot.slane %v3743, 1
      %v4035 = vsel %vm4032, %v4033, %v4034
      %v4036 = vrot.slane %v4017, 1
      %v4037 = vrot.slane %v3744, 1
      %v4038 = vsel %vm4032, %v4036, %v4037
      %v4039 = vrot.slane %v4018, 1
      %v4040 = vrot.slane %v3745, 1
      %v4041 = vsel %vm4032, %v4039, %v4040
      %v4042 = vrot.slane %v4019, 1
      %v4043 = vrot.slane %v3746, 1
      %v4044 = vsel %vm4032, %v4042, %v4043
      %v4045 = vrot.slane %v4020, 1
      %v4046 = vrot.slane %v3747, 1
      %v4047 = vsel %vm4032, %v4045, %v4046
      %v4048 = vrot.slane %v4021, 1
      %v4049 = vrot.slane %v3748, 1
      %v4050 = vsel %vm4032, %v4048, %v4049
      %v4051 = vrot.slane %v4022, 1
      %v4052 = vrot.slane %v3749, 1
      %v4053 = vsel %vm4032, %v4051, %v4052
      %v4054 = vrot.slane %v4023, 1
      %v4055 = vrot.slane %v3750, 1
      %v4056 = vsel %vm4032, %v4054, %v4055
      %v4057 = vrot.slane %v4024, 1
      %v4058 = vrot.slane %v3751, 1
      %v4059 = vsel %vm4032, %v4057, %v4058
      %v4060 = vrot.slane %v4025, 1
      %v4061 = vrot.slane %v3752, 1
      %v4062 = vsel %vm4032, %v4060, %v4061
      %v4063 = vrot.slane %v4026, 1
      %v4064 = vrot.slane %v3753, 1
      %v4065 = vsel %vm4032, %v4063, %v4064
      %v4066 = vrot.slane %v4027, 1
      %v4067 = vrot.slane %v3754, 1
      %v4068 = vsel %vm4032, %v4066, %v4067
      %v4069 = vrot.slane %v4028, 1
      %v4070 = vrot.slane %v3755, 1
      %v4071 = vsel %vm4032, %v4069, %v4070
      %v4072 = vrot.slane %v4029, 1
      %v4073 = vrot.slane %v3756, 1
      %v4074 = vsel %vm4032, %v4072, %v4073
      %v4075 = vrot.slane %v4030, 1
      %v4076 = vrot.slane %v3757, 1
      %v4077 = vsel %vm4032, %v4075, %v4076
      %v4078 = vrot.slane %v4031, 1
      %v4079 = vrot.slane %v3758, 1
      %v4080 = vsel %vm4032, %v4078, %v4079
      %4081 = vrot.lane.b32.xlu0 %v4035, 8
      %v4082 = vpop.permute.xlu0 %4081
      %4083 = vrot.lane.b32.xlu0 %v4038, 8
      %v4084 = vpop.permute.xlu0 %4083
      %4085 = vrot.lane.b32.xlu0 %v4041, 8
      %v4086 = vpop.permute.xlu0 %4085
      %4087 = vrot.lane.b32.xlu0 %v4044, 8
      %v4088 = vpop.permute.xlu0 %4087
      %4089 = vrot.lane.b32.xlu0 %v4047, 8
      %v4090 = vpop.permute.xlu0 %4089
      %4091 = vrot.lane.b32.xlu0 %v4050, 8
      %v4092 = vpop.permute.xlu0 %4091
      %4093 = vrot.lane.b32.xlu0 %v4053, 8
      %v4094 = vpop.permute.xlu0 %4093
      %4095 = vrot.lane.b32.xlu0 %v4056, 8
      %v4096 = vpop.permute.xlu0 %4095
      %4097 = vrot.lane.b32.xlu0 %v4059, 8
      %v4098 = vpop.permute.xlu0 %4097
      %4099 = vrot.lane.b32.xlu0 %v4062, 8
      %v4100 = vpop.permute.xlu0 %4099
      %4101 = vrot.lane.b32.xlu0 %v4065, 8
      %v4102 = vpop.permute.xlu0 %4101
      %4103 = vrot.lane.b32.xlu0 %v4068, 8
      %v4104 = vpop.permute.xlu0 %4103
      %4105 = vrot.lane.b32.xlu0 %v4071, 8
      %v4106 = vpop.permute.xlu0 %4105
      %4107 = vrot.lane.b32.xlu0 %v4074, 8
      %v4108 = vpop.permute.xlu0 %4107
      %4109 = vrot.lane.b32.xlu0 %v4077, 8
      %v4110 = vpop.permute.xlu0 %4109
      %4111 = vrot.lane.b32.xlu0 %v4080, 8
      %v4112 = vpop.permute.xlu0 %4111
      %vm4113 = vcmask 31744
      %v4115 = vsel %vm4113, %v3695, %v3953
      %v4117 = vsel %vm4113, %v3696, %v3955
      %v4119 = vsel %vm4113, %v3697, %v3957
      %v4121 = vsel %vm4113, %v3698, %v3959
      %v4123 = vsel %vm4113, %v3699, %v3961
      %v4125 = vsel %vm4113, %v3700, %v3963
      %v4127 = vsel %vm4113, %v3701, %v3965
      %v4129 = vsel %vm4113, %v3702, %v3967
      %v4131 = vsel %vm4113, %v3703, %v3969
      %v4133 = vsel %vm4113, %v3704, %v3971
      %v4135 = vsel %vm4113, %v3705, %v3973
      %v4137 = vsel %vm4113, %v3706, %v3975
      %v4139 = vsel %vm4113, %v3707, %v3977
      %v4141 = vsel %vm4113, %v3708, %v3979
      %v4143 = vsel %vm4113, %v3709, %v3981
      %v4145 = vsel %vm4113, %v3710, %v3983
      %v4147 = vsel %vm1211, %v4115, %v4082
      %v4149 = vsel %vm1211, %v4117, %v4084
      %v4151 = vsel %vm1211, %v4119, %v4086
      %v4153 = vsel %vm1211, %v4121, %v4088
      %v4155 = vsel %vm1211, %v4123, %v4090
      %v4157 = vsel %vm1211, %v4125, %v4092
      %v4159 = vsel %vm1211, %v4127, %v4094
      %v4161 = vsel %vm1211, %v4129, %v4096
      %v4163 = vsel %vm1211, %v4131, %v4098
      %v4165 = vsel %vm1211, %v4133, %v4100
      %v4167 = vsel %vm1211, %v4135, %v4102
      %v4169 = vsel %vm1211, %v4137, %v4104
      %v4171 = vsel %vm1211, %v4139, %v4106
      %v4173 = vsel %vm1211, %v4141, %v4108
      %v4175 = vsel %vm1211, %v4143, %v4110
      %v4177 = vsel %vm1211, %v4145, %v4112
      %v4178 = vld [vmem:[%s4] sm:$0xf]
      %v4179 = vld [vmem:[%s4 + $0x4] sm:$0x3]
      %v4180 = vld [vmem:[%s1060] sm:$0xf]
      %v4181 = vld [vmem:[%s1060 + $0x4] sm:$0xf]
      %v4182 = vld [vmem:[%s1060 + $0xc] sm:$0xf]
      %v4183 = vld [vmem:[%s1060 + $0x10] sm:$0xf]
      %v4184 = vld [vmem:[%s1060 + $0x18] sm:$0xf]
      %v4185 = vld [vmem:[%s1060 + $0x1c] sm:$0xf]
      %v4186 = vld [vmem:[%s1060 + $0x24] sm:$0xf]
      %v4187 = vld [vmem:[%s1060 + $0x28] sm:$0xf]
      %v4188 = vld [vmem:[%s1060 + $0x30] sm:$0xf]
      %v4189 = vld [vmem:[%s1060 + $0x34] sm:$0xf]
      %v4190 = vld [vmem:[%s1060 + $0x3c] sm:$0xf]
      %v4191 = vld [vmem:[%s1060 + $0x40] sm:$0xf]
      %v4192 = vld [vmem:[%s1060 + $0x48] sm:$0xf]
      %v4193 = vld [vmem:[%s1060 + $0x4c] sm:$0xf]
      %v4194 = vld [vmem:[%s1060 + $0x54] sm:$0xf]
      %v4195 = vld [vmem:[%s1060 + $0x58] sm:$0xf]
      %v4196 = vld [vmem:[%s1060 + $0x60] sm:$0xf]
      %v4197 = vld [vmem:[%s1060 + $0x64] sm:$0xf]
      %v4198 = vld [vmem:[%s1060 + $0x6c] sm:$0xf]
      %v4199 = vld [vmem:[%s1060 + $0x70] sm:$0xf]
      %v4200 = vld [vmem:[%s1060 + $0x78] sm:$0xf]
      %v4201 = vld [vmem:[%s1060 + $0x7c] sm:$0xf]
      %v4202 = vld [vmem:[%s1060 + $0x84] sm:$0xf]
      %v4203 = vld [vmem:[%s1060 + $0x88] sm:$0xf]
      %v4204 = vld [vmem:[%s1060 + $0x90] sm:$0xf]
      %v4205 = vld [vmem:[%s1060 + $0x94] sm:$0xf]
      %v4206 = vld [vmem:[%s1060 + $0x9c] sm:$0xf]
      %v4207 = vld [vmem:[%s1060 + $0xa0] sm:$0xf]
      %v4208 = vld [vmem:[%s1060 + $0xa8] sm:$0xf]
      %v4209 = vld [vmem:[%s1060 + $0xac] sm:$0xf]
      %v4210 = vld [vmem:[%s1060 + $0xb4] sm:$0xf]
      %v4211 = vld [vmem:[%s1060 + $0xb8] sm:$0xf]
      %v4212 = vld [vmem:[%s1060 + $0x8] sm:$0x1]
      %v4213 = vld [vmem:[%s1060 + $0x14] sm:$0x1]
      %v4214 = vld [vmem:[%s1060 + $0x20] sm:$0x1]
      %v4215 = vld [vmem:[%s1060 + $0x2c] sm:$0x1]
      %v4216 = vld [vmem:[%s1060 + $0x38] sm:$0x1]
      %v4217 = vld [vmem:[%s1060 + $0x44] sm:$0x1]
      %v4218 = vld [vmem:[%s1060 + $0x50] sm:$0x1]
      %v4219 = vld [vmem:[%s1060 + $0x5c] sm:$0x1]
      %v4220 = vld [vmem:[%s1060 + $0x68] sm:$0x1]
      %v4221 = vld [vmem:[%s1060 + $0x74] sm:$0x1]
      %v4222 = vld [vmem:[%s1060 + $0x80] sm:$0x1]
      %v4223 = vld [vmem:[%s1060 + $0x8c] sm:$0x1]
      %v4224 = vld [vmem:[%s1060 + $0x98] sm:$0x1]
      %v4225 = vld [vmem:[%s1060 + $0xa4] sm:$0x1]
      %v4226 = vld [vmem:[%s1060 + $0xb0] sm:$0x1]
      %v4227 = vld [vmem:[%s1060 + $0xbc] sm:$0x1]
      %v4228 = vld [vmem:[%s1060] sm:$0xe]
      %v4229 = vld [vmem:[%s1060 + $0xc] sm:$0xe]
      %v4230 = vld [vmem:[%s1060 + $0x18] sm:$0xe]
      %v4231 = vld [vmem:[%s1060 + $0x24] sm:$0xe]
      %v4232 = vld [vmem:[%s1060 + $0x30] sm:$0xe]
      %v4233 = vld [vmem:[%s1060 + $0x3c] sm:$0xe]
      %v4234 = vld [vmem:[%s1060 + $0x48] sm:$0xe]
      %v4235 = vld [vmem:[%s1060 + $0x54] sm:$0xe]
      %v4236 = vld [vmem:[%s1060 + $0x60] sm:$0xe]
      %v4237 = vld [vmem:[%s1060 + $0x6c] sm:$0xe]
      %v4238 = vld [vmem:[%s1060 + $0x78] sm:$0xe]
      %v4239 = vld [vmem:[%s1060 + $0x84] sm:$0xe]
      %v4240 = vld [vmem:[%s1060 + $0x90] sm:$0xe]
      %v4241 = vld [vmem:[%s1060 + $0x9c] sm:$0xe]
      %v4242 = vld [vmem:[%s1060 + $0xa8] sm:$0xe]
      %v4243 = vld [vmem:[%s1060 + $0xb4] sm:$0xe]
      %v4276 = vunpack.c.l.b16 %v4180
      %v4277 = vunpack.c.l.b16 %v4181
      %v4278 = vunpack.c.l.b16 %v4182
      %v4279 = vunpack.c.l.b16 %v4183
      %v4280 = vunpack.c.l.b16 %v4184
      %v4281 = vunpack.c.l.b16 %v4185
      %v4282 = vunpack.c.l.b16 %v4186
      %v4283 = vunpack.c.l.b16 %v4187
      %v4284 = vunpack.c.l.b16 %v4188
      %v4285 = vunpack.c.l.b16 %v4189
      %v4286 = vunpack.c.l.b16 %v4190
      %v4287 = vunpack.c.l.b16 %v4191
      %v4288 = vunpack.c.l.b16 %v4192
      %v4289 = vunpack.c.l.b16 %v4193
      %v4290 = vunpack.c.l.b16 %v4194
      %v4291 = vunpack.c.l.b16 %v4195
      %v4292 = vunpack.c.l.b16 %v4196
      %v4293 = vunpack.c.l.b16 %v4197
      %v4294 = vunpack.c.l.b16 %v4198
      %v4295 = vunpack.c.l.b16 %v4199
      %v4296 = vunpack.c.l.b16 %v4200
      %v4297 = vunpack.c.l.b16 %v4201
      %v4298 = vunpack.c.l.b16 %v4202
      %v4299 = vunpack.c.l.b16 %v4203
      %v4300 = vunpack.c.l.b16 %v4204
      %v4301 = vunpack.c.l.b16 %v4205
      %v4302 = vunpack.c.l.b16 %v4206
      %v4303 = vunpack.c.l.b16 %v4207
      %v4304 = vunpack.c.l.b16 %v4208
      %v4305 = vunpack.c.l.b16 %v4209
      %v4306 = vunpack.c.l.b16 %v4210
      %v4307 = vunpack.c.l.b16 %v4211
      %v4308 = vpack.c.b16 %v4277, %v4276
      %v4309 = vpack.c.b16 %v4279, %v4278
      %v4310 = vpack.c.b16 %v4281, %v4280
      %v4311 = vpack.c.b16 %v4283, %v4282
      %v4312 = vpack.c.b16 %v4285, %v4284
      %v4313 = vpack.c.b16 %v4287, %v4286
      %v4314 = vpack.c.b16 %v4289, %v4288
      %v4315 = vpack.c.b16 %v4291, %v4290
      %v4316 = vpack.c.b16 %v4293, %v4292
      %v4317 = vpack.c.b16 %v4295, %v4294
      %v4318 = vpack.c.b16 %v4297, %v4296
      %v4319 = vpack.c.b16 %v4299, %v4298
      %v4320 = vpack.c.b16 %v4301, %v4300
      %v4321 = vpack.c.b16 %v4303, %v4302
      %v4322 = vpack.c.b16 %v4305, %v4304
      %v4323 = vpack.c.b16 %v4307, %v4306
      %v4340 = vunpack.c.l.b16 %v4212
      %v4341 = vunpack.c.l.b16 %v4213
      %v4342 = vunpack.c.l.b16 %v4214
      %v4343 = vunpack.c.l.b16 %v4215
      %v4344 = vunpack.c.l.b16 %v4216
      %v4345 = vunpack.c.l.b16 %v4217
      %v4346 = vunpack.c.l.b16 %v4218
      %v4347 = vunpack.c.l.b16 %v4219
      %v4348 = vunpack.c.l.b16 %v4220
      %v4349 = vunpack.c.l.b16 %v4221
      %v4350 = vunpack.c.l.b16 %v4222
      %v4351 = vunpack.c.l.b16 %v4223
      %v4352 = vunpack.c.l.b16 %v4224
      %v4353 = vunpack.c.l.b16 %v4225
      %v4354 = vunpack.c.l.b16 %v4226
      %v4355 = vunpack.c.l.b16 %v4227
      %v4356 = vpack.c.b16 %v4340, %v4340
      %v4357 = vpack.c.b16 %v4341, %v4341
      %v4358 = vpack.c.b16 %v4342, %v4342
      %v4359 = vpack.c.b16 %v4343, %v4343
      %v4360 = vpack.c.b16 %v4344, %v4344
      %v4361 = vpack.c.b16 %v4345, %v4345
      %v4362 = vpack.c.b16 %v4346, %v4346
      %v4363 = vpack.c.b16 %v4347, %v4347
      %v4364 = vpack.c.b16 %v4348, %v4348
      %v4365 = vpack.c.b16 %v4349, %v4349
      %v4366 = vpack.c.b16 %v4350, %v4350
      %v4367 = vpack.c.b16 %v4351, %v4351
      %v4368 = vpack.c.b16 %v4352, %v4352
      %v4369 = vpack.c.b16 %v4353, %v4353
      %v4370 = vpack.c.b16 %v4354, %v4354
      %v4371 = vpack.c.b16 %v4355, %v4355
      %v4373 = vshrl.u32 %v4308, 16
      %v4375 = vshll.u32 %v4308, 16
      %v4377 = vrot.slane %v4375, 1
      %v4378 = vor.u32 %v4373, %v4377
      %v4380 = vshll.u32 %v4356, 16
      %v4382 = vrot.slane %v4380, 1
      %v4383 = vsel %vm3759, %v4378, %v4382
      %v4385 = vshrl.u32 %v4309, 16
      %v4387 = vshll.u32 %v4309, 16
      %v4389 = vrot.slane %v4387, 1
      %v4390 = vor.u32 %v4385, %v4389
      %v4392 = vshll.u32 %v4357, 16
      %v4394 = vrot.slane %v4392, 1
      %v4395 = vsel %vm3759, %v4390, %v4394
      %v4397 = vshrl.u32 %v4310, 16
      %v4399 = vshll.u32 %v4310, 16
      %v4401 = vrot.slane %v4399, 1
      %v4402 = vor.u32 %v4397, %v4401
      %v4404 = vshll.u32 %v4358, 16
      %v4406 = vrot.slane %v4404, 1
      %v4407 = vsel %vm3759, %v4402, %v4406
      %v4409 = vshrl.u32 %v4311, 16
      %v4411 = vshll.u32 %v4311, 16
      %v4413 = vrot.slane %v4411, 1
      %v4414 = vor.u32 %v4409, %v4413
      %v4416 = vshll.u32 %v4359, 16
      %v4418 = vrot.slane %v4416, 1
      %v4419 = vsel %vm3759, %v4414, %v4418
      %v4421 = vshrl.u32 %v4312, 16
      %v4423 = vshll.u32 %v4312, 16
      %v4425 = vrot.slane %v4423, 1
      %v4426 = vor.u32 %v4421, %v4425
      %v4428 = vshll.u32 %v4360, 16
      %v4430 = vrot.slane %v4428, 1
      %v4431 = vsel %vm3759, %v4426, %v4430
      %v4433 = vshrl.u32 %v4313, 16
      %v4435 = vshll.u32 %v4313, 16
      %v4437 = vrot.slane %v4435, 1
      %v4438 = vor.u32 %v4433, %v4437
      %v4440 = vshll.u32 %v4361, 16
      %v4442 = vrot.slane %v4440, 1
      %v4443 = vsel %vm3759, %v4438, %v4442
      %v4445 = vshrl.u32 %v4314, 16
      %v4447 = vshll.u32 %v4314, 16
      %v4449 = vrot.slane %v4447, 1
      %v4450 = vor.u32 %v4445, %v4449
      %v4452 = vshll.u32 %v4362, 16
      %v4454 = vrot.slane %v4452, 1
      %v4455 = vsel %vm3759, %v4450, %v4454
      %v4457 = vshrl.u32 %v4315, 16
      %v4459 = vshll.u32 %v4315, 16
      %v4461 = vrot.slane %v4459, 1
      %v4462 = vor.u32 %v4457, %v4461
      %v4464 = vshll.u32 %v4363, 16
      %v4466 = vrot.slane %v4464, 1
      %v4467 = vsel %vm3759, %v4462, %v4466
      %v4469 = vshrl.u32 %v4316, 16
      %v4471 = vshll.u32 %v4316, 16
      %v4473 = vrot.slane %v4471, 1
      %v4474 = vor.u32 %v4469, %v4473
      %v4476 = vshll.u32 %v4364, 16
      %v4478 = vrot.slane %v4476, 1
      %v4479 = vsel %vm3759, %v4474, %v4478
      %v4481 = vshrl.u32 %v4317, 16
      %v4483 = vshll.u32 %v4317, 16
      %v4485 = vrot.slane %v4483, 1
      %v4486 = vor.u32 %v4481, %v4485
      %v4488 = vshll.u32 %v4365, 16
      %v4490 = vrot.slane %v4488, 1
      %v4491 = vsel %vm3759, %v4486, %v4490
      %v4493 = vshrl.u32 %v4318, 16
      %v4495 = vshll.u32 %v4318, 16
      %v4497 = vrot.slane %v4495, 1
      %v4498 = vor.u32 %v4493, %v4497
      %v4500 = vshll.u32 %v4366, 16
      %v4502 = vrot.slane %v4500, 1
      %v4503 = vsel %vm3759, %v4498, %v4502
      %v4505 = vshrl.u32 %v4319, 16
      %v4507 = vshll.u32 %v4319, 16
      %v4509 = vrot.slane %v4507, 1
      %v4510 = vor.u32 %v4505, %v4509
      %v4512 = vshll.u32 %v4367, 16
      %v4514 = vrot.slane %v4512, 1
      %v4515 = vsel %vm3759, %v4510, %v4514
      %v4517 = vshrl.u32 %v4320, 16
      %v4519 = vshll.u32 %v4320, 16
      %v4521 = vrot.slane %v4519, 1
      %v4522 = vor.u32 %v4517, %v4521
      %v4524 = vshll.u32 %v4368, 16
      %v4526 = vrot.slane %v4524, 1
      %v4527 = vsel %vm3759, %v4522, %v4526
      %v4529 = vshrl.u32 %v4321, 16
      %v4531 = vshll.u32 %v4321, 16
      %v4533 = vrot.slane %v4531, 1
      %v4534 = vor.u32 %v4529, %v4533
      %v4536 = vshll.u32 %v4369, 16
      %v4538 = vrot.slane %v4536, 1
      %v4539 = vsel %vm3759, %v4534, %v4538
      %v4541 = vshrl.u32 %v4322, 16
      %v4543 = vshll.u32 %v4322, 16
      %v4545 = vrot.slane %v4543, 1
      %v4546 = vor.u32 %v4541, %v4545
      %v4548 = vshll.u32 %v4370, 16
      %v4550 = vrot.slane %v4548, 1
      %v4551 = vsel %vm3759, %v4546, %v4550
      %v4553 = vshrl.u32 %v4323, 16
      %v4555 = vshll.u32 %v4323, 16
      %v4557 = vrot.slane %v4555, 1
      %v4558 = vor.u32 %v4553, %v4557
      %v4560 = vshll.u32 %v4371, 16
      %v4562 = vrot.slane %v4560, 1
      %v4563 = vsel %vm3759, %v4558, %v4562
      %4564 = vrot.lane.b32.xlu0 %v4383, 4
      %v4565 = vpop.permute.xlu0 %4564
      %4566 = vrot.lane.b32.xlu0 %v4395, 4
      %v4567 = vpop.permute.xlu0 %4566
      %4568 = vrot.lane.b32.xlu0 %v4407, 4
      %v4569 = vpop.permute.xlu0 %4568
      %4570 = vrot.lane.b32.xlu0 %v4419, 4
      %v4571 = vpop.permute.xlu0 %4570
      %4572 = vrot.lane.b32.xlu0 %v4431, 4
      %v4573 = vpop.permute.xlu0 %4572
      %4574 = vrot.lane.b32.xlu0 %v4443, 4
      %v4575 = vpop.permute.xlu0 %4574
      %4576 = vrot.lane.b32.xlu0 %v4455, 4
      %v4577 = vpop.permute.xlu0 %4576
      %4578 = vrot.lane.b32.xlu0 %v4467, 4
      %v4579 = vpop.permute.xlu0 %4578
      %4580 = vrot.lane.b32.xlu0 %v4479, 4
      %v4581 = vpop.permute.xlu0 %4580
      %4582 = vrot.lane.b32.xlu0 %v4491, 4
      %v4583 = vpop.permute.xlu0 %4582
      %4584 = vrot.lane.b32.xlu0 %v4503, 4
      %v4585 = vpop.permute.xlu0 %4584
      %4586 = vrot.lane.b32.xlu0 %v4515, 4
      %v4587 = vpop.permute.xlu0 %4586
      %4588 = vrot.lane.b32.xlu0 %v4527, 4
      %v4589 = vpop.permute.xlu0 %4588
      %4590 = vrot.lane.b32.xlu0 %v4539, 4
      %v4591 = vpop.permute.xlu0 %4590
      %4592 = vrot.lane.b32.xlu0 %v4551, 4
      %v4593 = vpop.permute.xlu0 %4592
      %4594 = vrot.lane.b32.xlu0 %v4563, 4
      %v4595 = vpop.permute.xlu0 %4594
      %v4612 = vunpack.c.l.b16 %v4228
      %v4613 = vunpack.c.l.b16 %v4229
      %v4614 = vunpack.c.l.b16 %v4230
      %v4615 = vunpack.c.l.b16 %v4231
      %v4616 = vunpack.c.l.b16 %v4232
      %v4617 = vunpack.c.l.b16 %v4233
      %v4618 = vunpack.c.l.b16 %v4234
      %v4619 = vunpack.c.l.b16 %v4235
      %v4620 = vunpack.c.l.b16 %v4236
      %v4621 = vunpack.c.l.b16 %v4237
      %v4622 = vunpack.c.l.b16 %v4238
      %v4623 = vunpack.c.l.b16 %v4239
      %v4624 = vunpack.c.l.b16 %v4240
      %v4625 = vunpack.c.l.b16 %v4241
      %v4626 = vunpack.c.l.b16 %v4242
      %v4627 = vunpack.c.l.b16 %v4243
      %v4628 = vpack.c.b16 %v4277, %v4612
      %v4629 = vpack.c.b16 %v4279, %v4613
      %v4630 = vpack.c.b16 %v4281, %v4614
      %v4631 = vpack.c.b16 %v4283, %v4615
      %v4632 = vpack.c.b16 %v4285, %v4616
      %v4633 = vpack.c.b16 %v4287, %v4617
      %v4634 = vpack.c.b16 %v4289, %v4618
      %v4635 = vpack.c.b16 %v4291, %v4619
      %v4636 = vpack.c.b16 %v4293, %v4620
      %v4637 = vpack.c.b16 %v4295, %v4621
      %v4638 = vpack.c.b16 %v4297, %v4622
      %v4639 = vpack.c.b16 %v4299, %v4623
      %v4640 = vpack.c.b16 %v4301, %v4624
      %v4641 = vpack.c.b16 %v4303, %v4625
      %v4642 = vpack.c.b16 %v4305, %v4626
      %v4643 = vpack.c.b16 %v4307, %v4627
      %v4644 = vrot.slane %v4628, 1
      %v4645 = vrot.slane %v4356, 1
      %v4646 = vsel %vm4032, %v4644, %v4645
      %v4647 = vrot.slane %v4629, 1
      %v4648 = vrot.slane %v4357, 1
      %v4649 = vsel %vm4032, %v4647, %v4648
      %v4650 = vrot.slane %v4630, 1
      %v4651 = vrot.slane %v4358, 1
      %v4652 = vsel %vm4032, %v4650, %v4651
      %v4653 = vrot.slane %v4631, 1
      %v4654 = vrot.slane %v4359, 1
      %v4655 = vsel %vm4032, %v4653, %v4654
      %v4656 = vrot.slane %v4632, 1
      %v4657 = vrot.slane %v4360, 1
      %v4658 = vsel %vm4032, %v4656, %v4657
      %v4659 = vrot.slane %v4633, 1
      %v4660 = vrot.slane %v4361, 1
      %v4661 = vsel %vm4032, %v4659, %v4660
      %v4662 = vrot.slane %v4634, 1
      %v4663 = vrot.slane %v4362, 1
      %v4664 = vsel %vm4032, %v4662, %v4663
      %v4665 = vrot.slane %v4635, 1
      %v4666 = vrot.slane %v4363, 1
      %v4667 = vsel %vm4032, %v4665, %v4666
      %v4668 = vrot.slane %v4636, 1
      %v4669 = vrot.slane %v4364, 1
      %v4670 = vsel %vm4032, %v4668, %v4669
      %v4671 = vrot.slane %v4637, 1
      %v4672 = vrot.slane %v4365, 1
      %v4673 = vsel %vm4032, %v4671, %v4672
      %v4674 = vrot.slane %v4638, 1
      %v4675 = vrot.slane %v4366, 1
      %v4676 = vsel %vm4032, %v4674, %v4675
      %v4677 = vrot.slane %v4639, 1
      %v4678 = vrot.slane %v4367, 1
      %v4679 = vsel %vm4032, %v4677, %v4678
      %v4680 = vrot.slane %v4640, 1
      %v4681 = vrot.slane %v4368, 1
      %v4682 = vsel %vm4032, %v4680, %v4681
      %v4683 = vrot.slane %v4641, 1
      %v4684 = vrot.slane %v4369, 1
      %v4685 = vsel %vm4032, %v4683, %v4684
      %v4686 = vrot.slane %v4642, 1
      %v4687 = vrot.slane %v4370, 1
      %v4688 = vsel %vm4032, %v4686, %v4687
      %v4689 = vrot.slane %v4643, 1
      %v4690 = vrot.slane %v4371, 1
      %v4691 = vsel %vm4032, %v4689, %v4690
      %4692 = vrot.lane.b32.xlu0 %v4646, 8
      %v4693 = vpop.permute.xlu0 %4692
      %4694 = vrot.lane.b32.xlu0 %v4649, 8
      %v4695 = vpop.permute.xlu0 %4694
      %4696 = vrot.lane.b32.xlu0 %v4652, 8
      %v4697 = vpop.permute.xlu0 %4696
      %4698 = vrot.lane.b32.xlu0 %v4655, 8
      %v4699 = vpop.permute.xlu0 %4698
      %4700 = vrot.lane.b32.xlu0 %v4658, 8
      %v4701 = vpop.permute.xlu0 %4700
      %4702 = vrot.lane.b32.xlu0 %v4661, 8
      %v4703 = vpop.permute.xlu0 %4702
      %4704 = vrot.lane.b32.xlu0 %v4664, 8
      %v4705 = vpop.permute.xlu0 %4704
      %4706 = vrot.lane.b32.xlu0 %v4667, 8
      %v4707 = vpop.permute.xlu0 %4706
      %4708 = vrot.lane.b32.xlu0 %v4670, 8
      %v4709 = vpop.permute.xlu0 %4708
      %4710 = vrot.lane.b32.xlu0 %v4673, 8
      %v4711 = vpop.permute.xlu0 %4710
      %4712 = vrot.lane.b32.xlu0 %v4676, 8
      %v4713 = vpop.permute.xlu0 %4712
      %4714 = vrot.lane.b32.xlu0 %v4679, 8
      %v4715 = vpop.permute.xlu0 %4714
      %4716 = vrot.lane.b32.xlu0 %v4682, 8
      %v4717 = vpop.permute.xlu0 %4716
      %4718 = vrot.lane.b32.xlu0 %v4685, 8
      %v4719 = vpop.permute.xlu0 %4718
      %4720 = vrot.lane.b32.xlu0 %v4688, 8
      %v4721 = vpop.permute.xlu0 %4720
      %4722 = vrot.lane.b32.xlu0 %v4691, 8
      %v4723 = vpop.permute.xlu0 %4722
      %v4725 = vsel %vm4113, %v4308, %v4565
      %v4727 = vsel %vm4113, %v4309, %v4567
      %v4729 = vsel %vm4113, %v4310, %v4569
      %v4731 = vsel %vm4113, %v4311, %v4571
      %v4733 = vsel %vm4113, %v4312, %v4573
      %v4735 = vsel %vm4113, %v4313, %v4575
      %v4737 = vsel %vm4113, %v4314, %v4577
      %v4739 = vsel %vm4113, %v4315, %v4579
      %v4741 = vsel %vm4113, %v4316, %v4581
      %v4743 = vsel %vm4113, %v4317, %v4583
      %v4745 = vsel %vm4113, %v4318, %v4585
      %v4747 = vsel %vm4113, %v4319, %v4587
      %v4749 = vsel %vm4113, %v4320, %v4589
      %v4751 = vsel %vm4113, %v4321, %v4591
      %v4753 = vsel %vm4113, %v4322, %v4593
      %v4755 = vsel %vm4113, %v4323, %v4595
      %v4757 = vsel %vm1211, %v4725, %v4693
      %v4759 = vsel %vm1211, %v4727, %v4695
      %v4761 = vsel %vm1211, %v4729, %v4697
      %v4763 = vsel %vm1211, %v4731, %v4699
      %v4765 = vsel %vm1211, %v4733, %v4701
      %v4767 = vsel %vm1211, %v4735, %v4703
      %v4769 = vsel %vm1211, %v4737, %v4705
      %v4771 = vsel %vm1211, %v4739, %v4707
      %v4773 = vsel %vm1211, %v4741, %v4709
      %v4775 = vsel %vm1211, %v4743, %v4711
      %v4777 = vsel %vm1211, %v4745, %v4713
      %v4779 = vsel %vm1211, %v4747, %v4715
      %v4781 = vsel %vm1211, %v4749, %v4717
      %v4783 = vsel %vm1211, %v4751, %v4719
      %v4785 = vsel %vm1211, %v4753, %v4721
      %v4787 = vsel %vm1211, %v4755, %v4723
      %s4788 = scalar_lea.vmem %s4, 8
      %v4789 = vld [vmem:[%s4788] sm:$0xf]
      %v4790 = vld [vmem:[%s4788 + $0x4] sm:$0x3]
      %v4793 = vunpack.c.l.b16 %v4789
      %v4794 = vunpack.c.l.b16 %v4790
      %v4795 = vpack.c.b16 %v4794, %v4793
      %vm4796 = vcmask 97280
      %v4797 = vsel %vm4796, %v4757, 0
      %v4799 = vsel %vm4796, %v4759, 0
      %v4801 = vsel %vm4796, %v4761, 0
      %v4803 = vsel %vm4796, %v4763, 0
      %v4805 = vsel %vm4796, %v4765, 0
      %v4807 = vsel %vm4796, %v4767, 0
      %v4809 = vsel %vm4796, %v4769, 0
      %v4811 = vsel %vm4796, %v4771, 0
      %v4813 = vsel %vm4796, %v4773, 0
      %v4815 = vsel %vm4796, %v4775, 0
      %v4817 = vsel %vm4796, %v4777, 0
      %v4819 = vsel %vm4796, %v4779, 0
      %v4821 = vsel %vm4796, %v4781, 0
      %v4823 = vsel %vm4796, %v4783, 0
      %v4825 = vsel %vm4796, %v4785, 0
      %v4827 = vsel %vm4796, %v4787, 0
      %vm4829 = vcmask 1045504
      %v4831 = vsel %vm4829, %v4795, 0
      %4833 = vmatprep.subr.bf16.mxu0 0
      %4834 = vmatpush1.bf16.msra.mxu0 0
      %4835 = vmatprep.subr.bf16.mxu0 0
      %4836 = vmatpush1.bf16.msra.mxu0 0
      %4837 = vmatprep.subr.bf16.mxu0 0
      %4838 = vmatpush1.bf16.msra.mxu0 0
      %4839 = vmatprep.subr.bf16.mxu0 0
      %4840 = vmatpush1.bf16.msra.mxu0 0
      %4841 = vmatprep.subr.bf16.mxu0 0
      %4842 = vmatpush1.bf16.msra.mxu0 0
      %4843 = vmatprep.subr.bf16.mxu0 0
      %4844 = vmatpush1.bf16.msra.mxu0 0
      %4845 = vmatprep.subr.bf16.mxu0 0
      %4846 = vmatpush1.bf16.msra.mxu0 0
      %4847 = vmatprep.subr.bf16.mxu0 0
      %4848 = vmatpush1.bf16.msra.mxu0 %v4831
      %4849 = vmatprep.subr.bf16.mxu0 0
      %4850 = vmatpush2.bf16.msra.mxu0 0
      %4851 = vmatprep.subr.bf16.mxu0 0
      %4852 = vmatpush2.bf16.msra.mxu0 0
      %4853 = vmatprep.subr.bf16.mxu0 0
      %4854 = vmatpush2.bf16.msra.mxu0 0
      %4855 = vmatprep.subr.bf16.mxu0 0
      %4856 = vmatpush2.bf16.msra.mxu0 0
      %4857 = vmatprep.subr.bf16.mxu0 0
      %4858 = vmatpush2.bf16.msra.mxu0 0
      %4859 = vmatprep.subr.bf16.mxu0 0
      %4860 = vmatpush2.bf16.msra.mxu0 0
      %4861 = vmatprep.subr.bf16.mxu0 0
      %4862 = vmatpush2.bf16.msra.mxu0 0
      %4863 = vmatprep.subr.bf16.mxu0 0
      %4864 = vmatpush2.bf16.msra.mxu0 0
      %4865 = vmatprep.mubr.bf16.mxu0 0
      %4866 = vmatmul.mubr.bf16.gmra.mxu0 %v4797
      %v4867 = vpop.f32.mrf.mxu0
      %v4868 = vadd.f32 0.0, %v4867
      %v4869 = vpop.f32.mrf.mxu0
      %v4870 = vpop.f32.mrf.mxu0
      %v4871 = vadd.f32 0.0, %v4870
      %v4872 = vpop.f32.mrf.mxu0
      %4873 = vmatprep.mubr.bf16.mxu0 0
      %4874 = vmatmul.mubr.bf16.gmra.mxu0 %v4799
      %v4875 = vpop.f32.mrf.mxu0
      %v4876 = vadd.f32 0.0, %v4875
      %v4877 = vpop.f32.mrf.mxu0
      %v4878 = vpop.f32.mrf.mxu0
      %v4879 = vadd.f32 0.0, %v4878
      %v4880 = vpop.f32.mrf.mxu0
      %4881 = vmatprep.mubr.bf16.mxu0 0
      %4882 = vmatmul.mubr.bf16.gmra.mxu0 %v4801
      %v4883 = vpop.f32.mrf.mxu0
      %v4884 = vadd.f32 0.0, %v4883
      %v4885 = vpop.f32.mrf.mxu0
      %v4886 = vpop.f32.mrf.mxu0
      %v4887 = vadd.f32 0.0, %v4886
      %v4888 = vpop.f32.mrf.mxu0
      %4889 = vmatprep.mubr.bf16.mxu0 0
      %4890 = vmatmul.mubr.bf16.gmra.mxu0 %v4803
      %v4891 = vpop.f32.mrf.mxu0
      %v4892 = vadd.f32 0.0, %v4891
      %v4893 = vpop.f32.mrf.mxu0
      %v4894 = vpop.f32.mrf.mxu0
      %v4895 = vadd.f32 0.0, %v4894
      %v4896 = vpop.f32.mrf.mxu0
      %4897 = vmatprep.mubr.bf16.mxu0 0
      %4898 = vmatmul.mubr.bf16.gmra.mxu0 %v4805
      %v4899 = vpop.f32.mrf.mxu0
      %v4900 = vadd.f32 0.0, %v4899
      %v4901 = vpop.f32.mrf.mxu0
      %v4902 = vpop.f32.mrf.mxu0
      %v4903 = vadd.f32 0.0, %v4902
      %v4904 = vpop.f32.mrf.mxu0
      %4905 = vmatprep.mubr.bf16.mxu0 0
      %4906 = vmatmul.mubr.bf16.gmra.mxu0 %v4807
      %v4907 = vpop.f32.mrf.mxu0
      %v4908 = vadd.f32 0.0, %v4907
      %v4909 = vpop.f32.mrf.mxu0
      %v4910 = vpop.f32.mrf.mxu0
      %v4911 = vadd.f32 0.0, %v4910
      %v4912 = vpop.f32.mrf.mxu0
      %4913 = vmatprep.mubr.bf16.mxu0 0
      %4914 = vmatmul.mubr.bf16.gmra.mxu0 %v4809
      %v4915 = vpop.f32.mrf.mxu0
      %v4916 = vadd.f32 0.0, %v4915
      %v4917 = vpop.f32.mrf.mxu0
      %v4918 = vpop.f32.mrf.mxu0
      %v4919 = vadd.f32 0.0, %v4918
      %v4920 = vpop.f32.mrf.mxu0
      %4921 = vmatprep.mubr.bf16.mxu0 0
      %4922 = vmatmul.mubr.bf16.gmra.mxu0 %v4811
      %v4923 = vpop.f32.mrf.mxu0
      %v4924 = vadd.f32 0.0, %v4923
      %v4925 = vpop.f32.mrf.mxu0
      %v4926 = vpop.f32.mrf.mxu0
      %v4927 = vadd.f32 0.0, %v4926
      %v4928 = vpop.f32.mrf.mxu0
      %4929 = vmatprep.mubr.bf16.mxu0 0
      %4930 = vmatmul.mubr.bf16.gmra.mxu0 %v4813
      %v4931 = vpop.f32.mrf.mxu0
      %v4932 = vadd.f32 0.0, %v4931
      %v4933 = vpop.f32.mrf.mxu0
      %v4934 = vpop.f32.mrf.mxu0
      %v4935 = vadd.f32 0.0, %v4934
      %v4936 = vpop.f32.mrf.mxu0
      %4937 = vmatprep.mubr.bf16.mxu0 0
      %4938 = vmatmul.mubr.bf16.gmra.mxu0 %v4815
      %v4939 = vpop.f32.mrf.mxu0
      %v4940 = vadd.f32 0.0, %v4939
      %v4941 = vpop.f32.mrf.mxu0
      %v4942 = vpop.f32.mrf.mxu0
      %v4943 = vadd.f32 0.0, %v4942
      %v4944 = vpop.f32.mrf.mxu0
      %4945 = vmatprep.mubr.bf16.mxu0 0
      %4946 = vmatmul.mubr.bf16.gmra.mxu0 %v4817
      %v4947 = vpop.f32.mrf.mxu0
      %v4948 = vadd.f32 0.0, %v4947
      %v4949 = vpop.f32.mrf.mxu0
      %v4950 = vpop.f32.mrf.mxu0
      %v4951 = vadd.f32 0.0, %v4950
      %v4952 = vpop.f32.mrf.mxu0
      %4953 = vmatprep.mubr.bf16.mxu0 0
      %4954 = vmatmul.mubr.bf16.gmra.mxu0 %v4819
      %v4955 = vpop.f32.mrf.mxu0
      %v4956 = vadd.f32 0.0, %v4955
      %v4957 = vpop.f32.mrf.mxu0
      %v4958 = vpop.f32.mrf.mxu0
      %v4959 = vadd.f32 0.0, %v4958
      %v4960 = vpop.f32.mrf.mxu0
      %4961 = vmatprep.mubr.bf16.mxu0 0
      %4962 = vmatmul.mubr.bf16.gmra.mxu0 %v4821
      %v4963 = vpop.f32.mrf.mxu0
      %v4964 = vadd.f32 0.0, %v4963
      %v4965 = vpop.f32.mrf.mxu0
      %v4966 = vpop.f32.mrf.mxu0
      %v4967 = vadd.f32 0.0, %v4966
      %v4968 = vpop.f32.mrf.mxu0
      %4969 = vmatprep.mubr.bf16.mxu0 0
      %4970 = vmatmul.mubr.bf16.gmra.mxu0 %v4823
      %v4971 = vpop.f32.mrf.mxu0
      %v4972 = vadd.f32 0.0, %v4971
      %v4973 = vpop.f32.mrf.mxu0
      %v4974 = vpop.f32.mrf.mxu0
      %v4975 = vadd.f32 0.0, %v4974
      %v4976 = vpop.f32.mrf.mxu0
      %4977 = vmatprep.mubr.bf16.mxu0 0
      %4978 = vmatmul.mubr.bf16.gmra.mxu0 %v4825
      %v4979 = vpop.f32.mrf.mxu0
      %v4980 = vadd.f32 0.0, %v4979
      %v4981 = vpop.f32.mrf.mxu0
      %v4982 = vpop.f32.mrf.mxu0
      %v4983 = vadd.f32 0.0, %v4982
      %v4984 = vpop.f32.mrf.mxu0
      %4985 = vmatprep.mubr.bf16.mxu0 0
      %4986 = vmatmul.mubr.bf16.gmra.mxu0 %v4827
      %v4987 = vpop.f32.mrf.mxu0
      %v4988 = vadd.f32 0.0, %v4987
      %v4989 = vpop.f32.mrf.mxu0
      %v4990 = vpop.f32.mrf.mxu0
      %v4991 = vadd.f32 0.0, %v4990
      %v4992 = vpop.f32.mrf.mxu0
      %4993 = vdwg.mxu0
      %v4996 = vunpack.c.l.b16 %v4178
      %v4997 = vunpack.c.l.b16 %v4179
      %v4998 = vpack.c.b16 %v4997, %v4996
      %v4999 = vsel %vm4796, %v4147, 0
      %v5001 = vsel %vm4796, %v4149, 0
      %v5003 = vsel %vm4796, %v4151, 0
      %v5005 = vsel %vm4796, %v4153, 0
      %v5007 = vsel %vm4796, %v4155, 0
      %v5009 = vsel %vm4796, %v4157, 0
      %v5011 = vsel %vm4796, %v4159, 0
      %v5013 = vsel %vm4796, %v4161, 0
      %v5015 = vsel %vm4796, %v4163, 0
      %v5017 = vsel %vm4796, %v4165, 0
      %v5019 = vsel %vm4796, %v4167, 0
      %v5021 = vsel %vm4796, %v4169, 0
      %v5023 = vsel %vm4796, %v4171, 0
      %v5025 = vsel %vm4796, %v4173, 0
      %v5027 = vsel %vm4796, %v4175, 0
      %v5029 = vsel %vm4796, %v4177, 0
      %v5032 = vsel %vm4829, %v4998, 0
      %5034 = vmatprep.subr.bf16.mxu0 0
      %5035 = vmatpush1.bf16.msra.mxu0 0
      %5036 = vmatprep.subr.bf16.mxu0 0
      %5037 = vmatpush1.bf16.msra.mxu0 0
      %5038 = vmatprep.subr.bf16.mxu0 0
      %5039 = vmatpush1.bf16.msra.mxu0 0
      %5040 = vmatprep.subr.bf16.mxu0 0
      %5041 = vmatpush1.bf16.msra.mxu0 0
      %5042 = vmatprep.subr.bf16.mxu0 0
      %5043 = vmatpush1.bf16.msra.mxu0 0
      %5044 = vmatprep.subr.bf16.mxu0 0
      %5045 = vmatpush1.bf16.msra.mxu0 0
      %5046 = vmatprep.subr.bf16.mxu0 0
      %5047 = vmatpush1.bf16.msra.mxu0 0
      %5048 = vmatprep.subr.bf16.mxu0 0
      %5049 = vmatpush1.bf16.msra.mxu0 %v5032
      %5050 = vmatprep.subr.bf16.mxu0 0
      %5051 = vmatpush2.bf16.msra.mxu0 0
      %5052 = vmatprep.subr.bf16.mxu0 0
      %5053 = vmatpush2.bf16.msra.mxu0 0
      %5054 = vmatprep.subr.bf16.mxu0 0
      %5055 = vmatpush2.bf16.msra.mxu0 0
      %5056 = vmatprep.subr.bf16.mxu0 0
      %5057 = vmatpush2.bf16.msra.mxu0 0
      %5058 = vmatprep.subr.bf16.mxu0 0
      %5059 = vmatpush2.bf16.msra.mxu0 0
      %5060 = vmatprep.subr.bf16.mxu0 0
      %5061 = vmatpush2.bf16.msra.mxu0 0
      %5062 = vmatprep.subr.bf16.mxu0 0
      %5063 = vmatpush2.bf16.msra.mxu0 0
      %5064 = vmatprep.subr.bf16.mxu0 0
      %5065 = vmatpush2.bf16.msra.mxu0 0
      %5066 = vmatprep.mubr.bf16.mxu0 0
      %5067 = vmatmul.mubr.bf16.gmra.mxu0 %v4999
      %v5068 = vpop.f32.mrf.mxu0
      %v5069 = vadd.f32 %v4868, %v5068
      %v5070 = vpop.f32.mrf.mxu0
      %v5071 = vpop.f32.mrf.mxu0
      %v5072 = vadd.f32 %v4871, %v5071
      %v5073 = vpop.f32.mrf.mxu0
      %5074 = vmatprep.mubr.bf16.mxu0 0
      %5075 = vmatmul.mubr.bf16.gmra.mxu0 %v5001
      %v5076 = vpop.f32.mrf.mxu0
      %v5077 = vadd.f32 %v4876, %v5076
      %v5078 = vpop.f32.mrf.mxu0
      %v5079 = vpop.f32.mrf.mxu0
      %v5080 = vadd.f32 %v4879, %v5079
      %v5081 = vpop.f32.mrf.mxu0
      %5082 = vmatprep.mubr.bf16.mxu0 0
      %5083 = vmatmul.mubr.bf16.gmra.mxu0 %v5003
      %v5084 = vpop.f32.mrf.mxu0
      %v5085 = vadd.f32 %v4884, %v5084
      %v5086 = vpop.f32.mrf.mxu0
      %v5087 = vpop.f32.mrf.mxu0
      %v5088 = vadd.f32 %v4887, %v5087
      %v5089 = vpop.f32.mrf.mxu0
      %5090 = vmatprep.mubr.bf16.mxu0 0
      %5091 = vmatmul.mubr.bf16.gmra.mxu0 %v5005
      %v5092 = vpop.f32.mrf.mxu0
      %v5093 = vadd.f32 %v4892, %v5092
      %v5094 = vpop.f32.mrf.mxu0
      %v5095 = vpop.f32.mrf.mxu0
      %v5096 = vadd.f32 %v4895, %v5095
      %v5097 = vpop.f32.mrf.mxu0
      %5098 = vmatprep.mubr.bf16.mxu0 0
      %5099 = vmatmul.mubr.bf16.gmra.mxu0 %v5007
      %v5100 = vpop.f32.mrf.mxu0
      %v5101 = vadd.f32 %v4900, %v5100
      %v5102 = vpop.f32.mrf.mxu0
      %v5103 = vpop.f32.mrf.mxu0
      %v5104 = vadd.f32 %v4903, %v5103
      %v5105 = vpop.f32.mrf.mxu0
      %5106 = vmatprep.mubr.bf16.mxu0 0
      %5107 = vmatmul.mubr.bf16.gmra.mxu0 %v5009
      %v5108 = vpop.f32.mrf.mxu0
      %v5109 = vadd.f32 %v4908, %v5108
      %v5110 = vpop.f32.mrf.mxu0
      %v5111 = vpop.f32.mrf.mxu0
      %v5112 = vadd.f32 %v4911, %v5111
      %v5113 = vpop.f32.mrf.mxu0
      %5114 = vmatprep.mubr.bf16.mxu0 0
      %5115 = vmatmul.mubr.bf16.gmra.mxu0 %v5011
      %v5116 = vpop.f32.mrf.mxu0
      %v5117 = vadd.f32 %v4916, %v5116
      %v5118 = vpop.f32.mrf.mxu0
      %v5119 = vpop.f32.mrf.mxu0
      %v5120 = vadd.f32 %v4919, %v5119
      %v5121 = vpop.f32.mrf.mxu0
      %5122 = vmatprep.mubr.bf16.mxu0 0
      %5123 = vmatmul.mubr.bf16.gmra.mxu0 %v5013
      %v5124 = vpop.f32.mrf.mxu0
      %v5125 = vadd.f32 %v4924, %v5124
      %v5126 = vpop.f32.mrf.mxu0
      %v5127 = vpop.f32.mrf.mxu0
      %v5128 = vadd.f32 %v4927, %v5127
      %v5129 = vpop.f32.mrf.mxu0
      %5130 = vmatprep.mubr.bf16.mxu0 0
      %5131 = vmatmul.mubr.bf16.gmra.mxu0 %v5015
      %v5132 = vpop.f32.mrf.mxu0
      %v5133 = vadd.f32 %v4932, %v5132
      %v5134 = vpop.f32.mrf.mxu0
      %v5135 = vpop.f32.mrf.mxu0
      %v5136 = vadd.f32 %v4935, %v5135
      %v5137 = vpop.f32.mrf.mxu0
      %5138 = vmatprep.mubr.bf16.mxu0 0
      %5139 = vmatmul.mubr.bf16.gmra.mxu0 %v5017
      %v5140 = vpop.f32.mrf.mxu0
      %v5141 = vadd.f32 %v4940, %v5140
      %v5142 = vpop.f32.mrf.mxu0
      %v5143 = vpop.f32.mrf.mxu0
      %v5144 = vadd.f32 %v4943, %v5143
      %v5145 = vpop.f32.mrf.mxu0
      %5146 = vmatprep.mubr.bf16.mxu0 0
      %5147 = vmatmul.mubr.bf16.gmra.mxu0 %v5019
      %v5148 = vpop.f32.mrf.mxu0
      %v5149 = vadd.f32 %v4948, %v5148
      %v5150 = vpop.f32.mrf.mxu0
      %v5151 = vpop.f32.mrf.mxu0
      %v5152 = vadd.f32 %v4951, %v5151
      %v5153 = vpop.f32.mrf.mxu0
      %5154 = vmatprep.mubr.bf16.mxu0 0
      %5155 = vmatmul.mubr.bf16.gmra.mxu0 %v5021
      %v5156 = vpop.f32.mrf.mxu0
      %v5157 = vadd.f32 %v4956, %v5156
      %v5158 = vpop.f32.mrf.mxu0
      %v5159 = vpop.f32.mrf.mxu0
      %v5160 = vadd.f32 %v4959, %v5159
      %v5161 = vpop.f32.mrf.mxu0
      %5162 = vmatprep.mubr.bf16.mxu0 0
      %5163 = vmatmul.mubr.bf16.gmra.mxu0 %v5023
      %v5164 = vpop.f32.mrf.mxu0
      %v5165 = vadd.f32 %v4964, %v5164
      %v5166 = vpop.f32.mrf.mxu0
      %v5167 = vpop.f32.mrf.mxu0
      %v5168 = vadd.f32 %v4967, %v5167
      %v5169 = vpop.f32.mrf.mxu0
      %5170 = vmatprep.mubr.bf16.mxu0 0
      %5171 = vmatmul.mubr.bf16.gmra.mxu0 %v5025
      %v5172 = vpop.f32.mrf.mxu0
      %v5173 = vadd.f32 %v4972, %v5172
      %v5174 = vpop.f32.mrf.mxu0
      %v5175 = vpop.f32.mrf.mxu0
      %v5176 = vadd.f32 %v4975, %v5175
      %v5177 = vpop.f32.mrf.mxu0
      %5178 = vmatprep.mubr.bf16.mxu0 0
      %5179 = vmatmul.mubr.bf16.gmra.mxu0 %v5027
      %v5180 = vpop.f32.mrf.mxu0
      %v5181 = vadd.f32 %v4980, %v5180
      %v5182 = vpop.f32.mrf.mxu0
      %v5183 = vpop.f32.mrf.mxu0
      %v5184 = vadd.f32 %v4983, %v5183
      %v5185 = vpop.f32.mrf.mxu0
      %5186 = vmatprep.mubr.bf16.mxu0 0
      %5187 = vmatmul.mubr.bf16.gmra.mxu0 %v5029
      %v5188 = vpop.f32.mrf.mxu0
      %v5189 = vadd.f32 %v4988, %v5188
      %v5190 = vpop.f32.mrf.mxu0
      %v5191 = vpop.f32.mrf.mxu0
      %v5192 = vadd.f32 %v4991, %v5191
      %v5193 = vpop.f32.mrf.mxu0
      %5194 = vdwg.mxu0
      %s5195 = scalar_lea.vmem [#allocation3], 24
      %v5196 = vld [vmem:[%s5195] sm:$0xf]
      %v5197 = vld [vmem:[%s5195 + $0x4] sm:$0xf]
      %v5198 = vld [vmem:[%s5195 + $0xc] sm:$0xf]
      %v5199 = vld [vmem:[%s5195 + $0x10] sm:$0xf]
      %v5200 = vld [vmem:[%s5195 + $0x18] sm:$0xf]
      %v5201 = vld [vmem:[%s5195 + $0x1c] sm:$0xf]
      %v5202 = vld [vmem:[%s5195 + $0x24] sm:$0xf]
      %v5203 = vld [vmem:[%s5195 + $0x28] sm:$0xf]
      %v5204 = vld [vmem:[%s5195 + $0x30] sm:$0xf]
      %v5205 = vld [vmem:[%s5195 + $0x34] sm:$0xf]
      %v5206 = vld [vmem:[%s5195 + $0x3c] sm:$0xf]
      %v5207 = vld [vmem:[%s5195 + $0x40] sm:$0xf]
      %v5208 = vld [vmem:[%s5195 + $0x48] sm:$0xf]
      %v5209 = vld [vmem:[%s5195 + $0x4c] sm:$0xf]
      %v5210 = vld [vmem:[%s5195 + $0x54] sm:$0xf]
      %v5211 = vld [vmem:[%s5195 + $0x58] sm:$0xf]
      %v5212 = vld [vmem:[%s5195 + $0x60] sm:$0xf]
      %v5213 = vld [vmem:[%s5195 + $0x64] sm:$0xf]
      %v5214 = vld [vmem:[%s5195 + $0x6c] sm:$0xf]
      %v5215 = vld [vmem:[%s5195 + $0x70] sm:$0xf]
      %v5216 = vld [vmem:[%s5195 + $0x78] sm:$0xf]
      %v5217 = vld [vmem:[%s5195 + $0x7c] sm:$0xf]
      %v5218 = vld [vmem:[%s5195 + $0x84] sm:$0xf]
      %v5219 = vld [vmem:[%s5195 + $0x88] sm:$0xf]
      %v5220 = vld [vmem:[%s5195 + $0x90] sm:$0xf]
      %v5221 = vld [vmem:[%s5195 + $0x94] sm:$0xf]
      %v5222 = vld [vmem:[%s5195 + $0x9c] sm:$0xf]
      %v5223 = vld [vmem:[%s5195 + $0xa0] sm:$0xf]
      %v5224 = vld [vmem:[%s5195 + $0xa8] sm:$0xf]
      %v5225 = vld [vmem:[%s5195 + $0xac] sm:$0xf]
      %v5226 = vld [vmem:[%s5195 + $0xb4] sm:$0xf]
      %v5227 = vld [vmem:[%s5195 + $0xb8] sm:$0xf]
      %v5228 = vld [vmem:[%s5195 + $0x8] sm:$0x1]
      %v5229 = vld [vmem:[%s5195 + $0x14] sm:$0x1]
      %v5230 = vld [vmem:[%s5195 + $0x20] sm:$0x1]
      %v5231 = vld [vmem:[%s5195 + $0x2c] sm:$0x1]
      %v5232 = vld [vmem:[%s5195 + $0x38] sm:$0x1]
      %v5233 = vld [vmem:[%s5195 + $0x44] sm:$0x1]
      %v5234 = vld [vmem:[%s5195 + $0x50] sm:$0x1]
      %v5235 = vld [vmem:[%s5195 + $0x5c] sm:$0x1]
      %v5236 = vld [vmem:[%s5195 + $0x68] sm:$0x1]
      %v5237 = vld [vmem:[%s5195 + $0x74] sm:$0x1]
      %v5238 = vld [vmem:[%s5195 + $0x80] sm:$0x1]
      %v5239 = vld [vmem:[%s5195 + $0x8c] sm:$0x1]
      %v5240 = vld [vmem:[%s5195 + $0x98] sm:$0x1]
      %v5241 = vld [vmem:[%s5195 + $0xa4] sm:$0x1]
      %v5242 = vld [vmem:[%s5195 + $0xb0] sm:$0x1]
      %v5243 = vld [vmem:[%s5195 + $0xbc] sm:$0x1]
      %v5244 = vld [vmem:[%s5195] sm:$0xe]
      %v5245 = vld [vmem:[%s5195 + $0xc] sm:$0xe]
      %v5246 = vld [vmem:[%s5195 + $0x18] sm:$0xe]
      %v5247 = vld [vmem:[%s5195 + $0x24] sm:$0xe]
      %v5248 = vld [vmem:[%s5195 + $0x30] sm:$0xe]
      %v5249 = vld [vmem:[%s5195 + $0x3c] sm:$0xe]
      %v5250 = vld [vmem:[%s5195 + $0x48] sm:$0xe]
      %v5251 = vld [vmem:[%s5195 + $0x54] sm:$0xe]
      %v5252 = vld [vmem:[%s5195 + $0x60] sm:$0xe]
      %v5253 = vld [vmem:[%s5195 + $0x6c] sm:$0xe]
      %v5254 = vld [vmem:[%s5195 + $0x78] sm:$0xe]
      %v5255 = vld [vmem:[%s5195 + $0x84] sm:$0xe]
      %v5256 = vld [vmem:[%s5195 + $0x90] sm:$0xe]
      %v5257 = vld [vmem:[%s5195 + $0x9c] sm:$0xe]
      %v5258 = vld [vmem:[%s5195 + $0xa8] sm:$0xe]
      %v5259 = vld [vmem:[%s5195 + $0xb4] sm:$0xe]
      %v5292 = vunpack.c.l.b16 %v5196
      %v5293 = vunpack.c.l.b16 %v5197
      %v5294 = vunpack.c.l.b16 %v5198
      %v5295 = vunpack.c.l.b16 %v5199
      %v5296 = vunpack.c.l.b16 %v5200
      %v5297 = vunpack.c.l.b16 %v5201
      %v5298 = vunpack.c.l.b16 %v5202
      %v5299 = vunpack.c.l.b16 %v5203
      %v5300 = vunpack.c.l.b16 %v5204
      %v5301 = vunpack.c.l.b16 %v5205
      %v5302 = vunpack.c.l.b16 %v5206
      %v5303 = vunpack.c.l.b16 %v5207
      %v5304 = vunpack.c.l.b16 %v5208
      %v5305 = vunpack.c.l.b16 %v5209
      %v5306 = vunpack.c.l.b16 %v5210
      %v5307 = vunpack.c.l.b16 %v5211
      %v5308 = vunpack.c.l.b16 %v5212
      %v5309 = vunpack.c.l.b16 %v5213
      %v5310 = vunpack.c.l.b16 %v5214
      %v5311 = vunpack.c.l.b16 %v5215
      %v5312 = vunpack.c.l.b16 %v5216
      %v5313 = vunpack.c.l.b16 %v5217
      %v5314 = vunpack.c.l.b16 %v5218
      %v5315 = vunpack.c.l.b16 %v5219
      %v5316 = vunpack.c.l.b16 %v5220
      %v5317 = vunpack.c.l.b16 %v5221
      %v5318 = vunpack.c.l.b16 %v5222
      %v5319 = vunpack.c.l.b16 %v5223
      %v5320 = vunpack.c.l.b16 %v5224
      %v5321 = vunpack.c.l.b16 %v5225
      %v5322 = vunpack.c.l.b16 %v5226
      %v5323 = vunpack.c.l.b16 %v5227
      %v5324 = vpack.c.b16 %v5293, %v5292
      %v5325 = vpack.c.b16 %v5295, %v5294
      %v5326 = vpack.c.b16 %v5297, %v5296
      %v5327 = vpack.c.b16 %v5299, %v5298
      %v5328 = vpack.c.b16 %v5301, %v5300
      %v5329 = vpack.c.b16 %v5303, %v5302
      %v5330 = vpack.c.b16 %v5305, %v5304
      %v5331 = vpack.c.b16 %v5307, %v5306
      %v5332 = vpack.c.b16 %v5309, %v5308
      %v5333 = vpack.c.b16 %v5311, %v5310
      %v5334 = vpack.c.b16 %v5313, %v5312
      %v5335 = vpack.c.b16 %v5315, %v5314
      %v5336 = vpack.c.b16 %v5317, %v5316
      %v5337 = vpack.c.b16 %v5319, %v5318
      %v5338 = vpack.c.b16 %v5321, %v5320
      %v5339 = vpack.c.b16 %v5323, %v5322
      %v5356 = vunpack.c.l.b16 %v5228
      %v5357 = vunpack.c.l.b16 %v5229
      %v5358 = vunpack.c.l.b16 %v5230
      %v5359 = vunpack.c.l.b16 %v5231
      %v5360 = vunpack.c.l.b16 %v5232
      %v5361 = vunpack.c.l.b16 %v5233
      %v5362 = vunpack.c.l.b16 %v5234
      %v5363 = vunpack.c.l.b16 %v5235
      %v5364 = vunpack.c.l.b16 %v5236
      %v5365 = vunpack.c.l.b16 %v5237
      %v5366 = vunpack.c.l.b16 %v5238
      %v5367 = vunpack.c.l.b16 %v5239
      %v5368 = vunpack.c.l.b16 %v5240
      %v5369 = vunpack.c.l.b16 %v5241
      %v5370 = vunpack.c.l.b16 %v5242
      %v5371 = vunpack.c.l.b16 %v5243
      %v5372 = vpack.c.b16 %v5356, %v5356
      %v5373 = vpack.c.b16 %v5357, %v5357
      %v5374 = vpack.c.b16 %v5358, %v5358
      %v5375 = vpack.c.b16 %v5359, %v5359
      %v5376 = vpack.c.b16 %v5360, %v5360
      %v5377 = vpack.c.b16 %v5361, %v5361
      %v5378 = vpack.c.b16 %v5362, %v5362
      %v5379 = vpack.c.b16 %v5363, %v5363
      %v5380 = vpack.c.b16 %v5364, %v5364
      %v5381 = vpack.c.b16 %v5365, %v5365
      %v5382 = vpack.c.b16 %v5366, %v5366
      %v5383 = vpack.c.b16 %v5367, %v5367
      %v5384 = vpack.c.b16 %v5368, %v5368
      %v5385 = vpack.c.b16 %v5369, %v5369
      %v5386 = vpack.c.b16 %v5370, %v5370
      %v5387 = vpack.c.b16 %v5371, %v5371
      %v5389 = vshrl.u32 %v5324, 16
      %v5391 = vshll.u32 %v5324, 16
      %v5393 = vrot.slane %v5391, 1
      %v5394 = vor.u32 %v5389, %v5393
      %v5396 = vshll.u32 %v5372, 16
      %v5398 = vrot.slane %v5396, 1
      %v5399 = vsel %vm3759, %v5394, %v5398
      %v5401 = vshrl.u32 %v5325, 16
      %v5403 = vshll.u32 %v5325, 16
      %v5405 = vrot.slane %v5403, 1
      %v5406 = vor.u32 %v5401, %v5405
      %v5408 = vshll.u32 %v5373, 16
      %v5410 = vrot.slane %v5408, 1
      %v5411 = vsel %vm3759, %v5406, %v5410
      %v5413 = vshrl.u32 %v5326, 16
      %v5415 = vshll.u32 %v5326, 16
      %v5417 = vrot.slane %v5415, 1
      %v5418 = vor.u32 %v5413, %v5417
      %v5420 = vshll.u32 %v5374, 16
      %v5422 = vrot.slane %v5420, 1
      %v5423 = vsel %vm3759, %v5418, %v5422
      %v5425 = vshrl.u32 %v5327, 16
      %v5427 = vshll.u32 %v5327, 16
      %v5429 = vrot.slane %v5427, 1
      %v5430 = vor.u32 %v5425, %v5429
      %v5432 = vshll.u32 %v5375, 16
      %v5434 = vrot.slane %v5432, 1
      %v5435 = vsel %vm3759, %v5430, %v5434
      %v5437 = vshrl.u32 %v5328, 16
      %v5439 = vshll.u32 %v5328, 16
      %v5441 = vrot.slane %v5439, 1
      %v5442 = vor.u32 %v5437, %v5441
      %v5444 = vshll.u32 %v5376, 16
      %v5446 = vrot.slane %v5444, 1
      %v5447 = vsel %vm3759, %v5442, %v5446
      %v5449 = vshrl.u32 %v5329, 16
      %v5451 = vshll.u32 %v5329, 16
      %v5453 = vrot.slane %v5451, 1
      %v5454 = vor.u32 %v5449, %v5453
      %v5456 = vshll.u32 %v5377, 16
      %v5458 = vrot.slane %v5456, 1
      %v5459 = vsel %vm3759, %v5454, %v5458
      %v5461 = vshrl.u32 %v5330, 16
      %v5463 = vshll.u32 %v5330, 16
      %v5465 = vrot.slane %v5463, 1
      %v5466 = vor.u32 %v5461, %v5465
      %v5468 = vshll.u32 %v5378, 16
      %v5470 = vrot.slane %v5468, 1
      %v5471 = vsel %vm3759, %v5466, %v5470
      %v5473 = vshrl.u32 %v5331, 16
      %v5475 = vshll.u32 %v5331, 16
      %v5477 = vrot.slane %v5475, 1
      %v5478 = vor.u32 %v5473, %v5477
      %v5480 = vshll.u32 %v5379, 16
      %v5482 = vrot.slane %v5480, 1
      %v5483 = vsel %vm3759, %v5478, %v5482
      %v5485 = vshrl.u32 %v5332, 16
      %v5487 = vshll.u32 %v5332, 16
      %v5489 = vrot.slane %v5487, 1
      %v5490 = vor.u32 %v5485, %v5489
      %v5492 = vshll.u32 %v5380, 16
      %v5494 = vrot.slane %v5492, 1
      %v5495 = vsel %vm3759, %v5490, %v5494
      %v5497 = vshrl.u32 %v5333, 16
      %v5499 = vshll.u32 %v5333, 16
      %v5501 = vrot.slane %v5499, 1
      %v5502 = vor.u32 %v5497, %v5501
      %v5504 = vshll.u32 %v5381, 16
      %v5506 = vrot.slane %v5504, 1
      %v5507 = vsel %vm3759, %v5502, %v5506
      %v5509 = vshrl.u32 %v5334, 16
      %v5511 = vshll.u32 %v5334, 16
      %v5513 = vrot.slane %v5511, 1
      %v5514 = vor.u32 %v5509, %v5513
      %v5516 = vshll.u32 %v5382, 16
      %v5518 = vrot.slane %v5516, 1
      %v5519 = vsel %vm3759, %v5514, %v5518
      %v5521 = vshrl.u32 %v5335, 16
      %v5523 = vshll.u32 %v5335, 16
      %v5525 = vrot.slane %v5523, 1
      %v5526 = vor.u32 %v5521, %v5525
      %v5528 = vshll.u32 %v5383, 16
      %v5530 = vrot.slane %v5528, 1
      %v5531 = vsel %vm3759, %v5526, %v5530
      %v5533 = vshrl.u32 %v5336, 16
      %v5535 = vshll.u32 %v5336, 16
      %v5537 = vrot.slane %v5535, 1
      %v5538 = vor.u32 %v5533, %v5537
      %v5540 = vshll.u32 %v5384, 16
      %v5542 = vrot.slane %v5540, 1
      %v5543 = vsel %vm3759, %v5538, %v5542
      %v5545 = vshrl.u32 %v5337, 16
      %v5547 = vshll.u32 %v5337, 16
      %v5549 = vrot.slane %v5547, 1
      %v5550 = vor.u32 %v5545, %v5549
      %v5552 = vshll.u32 %v5385, 16
      %v5554 = vrot.slane %v5552, 1
      %v5555 = vsel %vm3759, %v5550, %v5554
      %v5557 = vshrl.u32 %v5338, 16
      %v5559 = vshll.u32 %v5338, 16
      %v5561 = vrot.slane %v5559, 1
      %v5562 = vor.u32 %v5557, %v5561
      %v5564 = vshll.u32 %v5386, 16
      %v5566 = vrot.slane %v5564, 1
      %v5567 = vsel %vm3759, %v5562, %v5566
      %v5569 = vshrl.u32 %v5339, 16
      %v5571 = vshll.u32 %v5339, 16
      %v5573 = vrot.slane %v5571, 1
      %v5574 = vor.u32 %v5569, %v5573
      %v5576 = vshll.u32 %v5387, 16
      %v5578 = vrot.slane %v5576, 1
      %v5579 = vsel %vm3759, %v5574, %v5578
      %5580 = vrot.lane.b32.xlu0 %v5399, 4
      %v5581 = vpop.permute.xlu0 %5580
      %5582 = vrot.lane.b32.xlu0 %v5411, 4
      %v5583 = vpop.permute.xlu0 %5582
      %5584 = vrot.lane.b32.xlu0 %v5423, 4
      %v5585 = vpop.permute.xlu0 %5584
      %5586 = vrot.lane.b32.xlu0 %v5435, 4
      %v5587 = vpop.permute.xlu0 %5586
      %5588 = vrot.lane.b32.xlu0 %v5447, 4
      %v5589 = vpop.permute.xlu0 %5588
      %5590 = vrot.lane.b32.xlu0 %v5459, 4
      %v5591 = vpop.permute.xlu0 %5590
      %5592 = vrot.lane.b32.xlu0 %v5471, 4
      %v5593 = vpop.permute.xlu0 %5592
      %5594 = vrot.lane.b32.xlu0 %v5483, 4
      %v5595 = vpop.permute.xlu0 %5594
      %5596 = vrot.lane.b32.xlu0 %v5495, 4
      %v5597 = vpop.permute.xlu0 %5596
      %5598 = vrot.lane.b32.xlu0 %v5507, 4
      %v5599 = vpop.permute.xlu0 %5598
      %5600 = vrot.lane.b32.xlu0 %v5519, 4
      %v5601 = vpop.permute.xlu0 %5600
      %5602 = vrot.lane.b32.xlu0 %v5531, 4
      %v5603 = vpop.permute.xlu0 %5602
      %5604 = vrot.lane.b32.xlu0 %v5543, 4
      %v5605 = vpop.permute.xlu0 %5604
      %5606 = vrot.lane.b32.xlu0 %v5555, 4
      %v5607 = vpop.permute.xlu0 %5606
      %5608 = vrot.lane.b32.xlu0 %v5567, 4
      %v5609 = vpop.permute.xlu0 %5608
      %5610 = vrot.lane.b32.xlu0 %v5579, 4
      %v5611 = vpop.permute.xlu0 %5610
      %v5628 = vunpack.c.l.b16 %v5244
      %v5629 = vunpack.c.l.b16 %v5245
      %v5630 = vunpack.c.l.b16 %v5246
      %v5631 = vunpack.c.l.b16 %v5247
      %v5632 = vunpack.c.l.b16 %v5248
      %v5633 = vunpack.c.l.b16 %v5249
      %v5634 = vunpack.c.l.b16 %v5250
      %v5635 = vunpack.c.l.b16 %v5251
      %v5636 = vunpack.c.l.b16 %v5252
      %v5637 = vunpack.c.l.b16 %v5253
      %v5638 = vunpack.c.l.b16 %v5254
      %v5639 = vunpack.c.l.b16 %v5255
      %v5640 = vunpack.c.l.b16 %v5256
      %v5641 = vunpack.c.l.b16 %v5257
      %v5642 = vunpack.c.l.b16 %v5258
      %v5643 = vunpack.c.l.b16 %v5259
      %v5644 = vpack.c.b16 %v5293, %v5628
      %v5645 = vpack.c.b16 %v5295, %v5629
      %v5646 = vpack.c.b16 %v5297, %v5630
      %v5647 = vpack.c.b16 %v5299, %v5631
      %v5648 = vpack.c.b16 %v5301, %v5632
      %v5649 = vpack.c.b16 %v5303, %v5633
      %v5650 = vpack.c.b16 %v5305, %v5634
      %v5651 = vpack.c.b16 %v5307, %v5635
      %v5652 = vpack.c.b16 %v5309, %v5636
      %v5653 = vpack.c.b16 %v5311, %v5637
      %v5654 = vpack.c.b16 %v5313, %v5638
      %v5655 = vpack.c.b16 %v5315, %v5639
      %v5656 = vpack.c.b16 %v5317, %v5640
      %v5657 = vpack.c.b16 %v5319, %v5641
      %v5658 = vpack.c.b16 %v5321, %v5642
      %v5659 = vpack.c.b16 %v5323, %v5643
      %v5660 = vrot.slane %v5644, 1
      %v5661 = vrot.slane %v5372, 1
      %v5662 = vsel %vm4032, %v5660, %v5661
      %v5663 = vrot.slane %v5645, 1
      %v5664 = vrot.slane %v5373, 1
      %v5665 = vsel %vm4032, %v5663, %v5664
      %v5666 = vrot.slane %v5646, 1
      %v5667 = vrot.slane %v5374, 1
      %v5668 = vsel %vm4032, %v5666, %v5667
      %v5669 = vrot.slane %v5647, 1
      %v5670 = vrot.slane %v5375, 1
      %v5671 = vsel %vm4032, %v5669, %v5670
      %v5672 = vrot.slane %v5648, 1
      %v5673 = vrot.slane %v5376, 1
      %v5674 = vsel %vm4032, %v5672, %v5673
      %v5675 = vrot.slane %v5649, 1
      %v5676 = vrot.slane %v5377, 1
      %v5677 = vsel %vm4032, %v5675, %v5676
      %v5678 = vrot.slane %v5650, 1
      %v5679 = vrot.slane %v5378, 1
      %v5680 = vsel %vm4032, %v5678, %v5679
      %v5681 = vrot.slane %v5651, 1
      %v5682 = vrot.slane %v5379, 1
      %v5683 = vsel %vm4032, %v5681, %v5682
      %v5684 = vrot.slane %v5652, 1
      %v5685 = vrot.slane %v5380, 1
      %v5686 = vsel %vm4032, %v5684, %v5685
      %v5687 = vrot.slane %v5653, 1
      %v5688 = vrot.slane %v5381, 1
      %v5689 = vsel %vm4032, %v5687, %v5688
      %v5690 = vrot.slane %v5654, 1
      %v5691 = vrot.slane %v5382, 1
      %v5692 = vsel %vm4032, %v5690, %v5691
      %v5693 = vrot.slane %v5655, 1
      %v5694 = vrot.slane %v5383, 1
      %v5695 = vsel %vm4032, %v5693, %v5694
      %v5696 = vrot.slane %v5656, 1
      %v5697 = vrot.slane %v5384, 1
      %v5698 = vsel %vm4032, %v5696, %v5697
      %v5699 = vrot.slane %v5657, 1
      %v5700 = vrot.slane %v5385, 1
      %v5701 = vsel %vm4032, %v5699, %v5700
      %v5702 = vrot.slane %v5658, 1
      %v5703 = vrot.slane %v5386, 1
      %v5704 = vsel %vm4032, %v5702, %v5703
      %v5705 = vrot.slane %v5659, 1
      %v5706 = vrot.slane %v5387, 1
      %v5707 = vsel %vm4032, %v5705, %v5706
      %5708 = vrot.lane.b32.xlu0 %v5662, 8
      %v5709 = vpop.permute.xlu0 %5708
      %5710 = vrot.lane.b32.xlu0 %v5665, 8
      %v5711 = vpop.permute.xlu0 %5710
      %5712 = vrot.lane.b32.xlu0 %v5668, 8
      %v5713 = vpop.permute.xlu0 %5712
      %5714 = vrot.lane.b32.xlu0 %v5671, 8
      %v5715 = vpop.permute.xlu0 %5714
      %5716 = vrot.lane.b32.xlu0 %v5674, 8
      %v5717 = vpop.permute.xlu0 %5716
      %5718 = vrot.lane.b32.xlu0 %v5677, 8
      %v5719 = vpop.permute.xlu0 %5718
      %5720 = vrot.lane.b32.xlu0 %v5680, 8
      %v5721 = vpop.permute.xlu0 %5720
      %5722 = vrot.lane.b32.xlu0 %v5683, 8
      %v5723 = vpop.permute.xlu0 %5722
      %5724 = vrot.lane.b32.xlu0 %v5686, 8
      %v5725 = vpop.permute.xlu0 %5724
      %5726 = vrot.lane.b32.xlu0 %v5689, 8
      %v5727 = vpop.permute.xlu0 %5726
      %5728 = vrot.lane.b32.xlu0 %v5692, 8
      %v5729 = vpop.permute.xlu0 %5728
      %5730 = vrot.lane.b32.xlu0 %v5695, 8
      %v5731 = vpop.permute.xlu0 %5730
      %5732 = vrot.lane.b32.xlu0 %v5698, 8
      %v5733 = vpop.permute.xlu0 %5732
      %5734 = vrot.lane.b32.xlu0 %v5701, 8
      %v5735 = vpop.permute.xlu0 %5734
      %5736 = vrot.lane.b32.xlu0 %v5704, 8
      %v5737 = vpop.permute.xlu0 %5736
      %5738 = vrot.lane.b32.xlu0 %v5707, 8
      %v5739 = vpop.permute.xlu0 %5738
      %v5741 = vsel %vm4113, %v5324, %v5581
      %v5743 = vsel %vm4113, %v5325, %v5583
      %v5745 = vsel %vm4113, %v5326, %v5585
      %v5747 = vsel %vm4113, %v5327, %v5587
      %v5749 = vsel %vm4113, %v5328, %v5589
      %v5751 = vsel %vm4113, %v5329, %v5591
      %v5753 = vsel %vm4113, %v5330, %v5593
      %v5755 = vsel %vm4113, %v5331, %v5595
      %v5757 = vsel %vm4113, %v5332, %v5597
      %v5759 = vsel %vm4113, %v5333, %v5599
      %v5761 = vsel %vm4113, %v5334, %v5601
      %v5763 = vsel %vm4113, %v5335, %v5603
      %v5765 = vsel %vm4113, %v5336, %v5605
      %v5767 = vsel %vm4113, %v5337, %v5607
      %v5769 = vsel %vm4113, %v5338, %v5609
      %v5771 = vsel %vm4113, %v5339, %v5611
      %v5773 = vsel %vm1211, %v5741, %v5709
      %v5775 = vsel %vm1211, %v5743, %v5711
      %v5777 = vsel %vm1211, %v5745, %v5713
      %v5779 = vsel %vm1211, %v5747, %v5715
      %v5781 = vsel %vm1211, %v5749, %v5717
      %v5783 = vsel %vm1211, %v5751, %v5719
      %v5785 = vsel %vm1211, %v5753, %v5721
      %v5787 = vsel %vm1211, %v5755, %v5723
      %v5789 = vsel %vm1211, %v5757, %v5725
      %v5791 = vsel %vm1211, %v5759, %v5727
      %v5793 = vsel %vm1211, %v5761, %v5729
      %v5795 = vsel %vm1211, %v5763, %v5731
      %v5797 = vsel %vm1211, %v5765, %v5733
      %v5799 = vsel %vm1211, %v5767, %v5735
      %v5801 = vsel %vm1211, %v5769, %v5737
      %v5803 = vsel %vm1211, %v5771, %v5739
      %s5804 = scalar_lea.vmem %s4, 16
      %v5805 = vld [vmem:[%s5804] sm:$0xf]
      %v5806 = vld [vmem:[%s5804 + $0x4] sm:$0x3]
      %v5809 = vunpack.c.l.b16 %v5805
      %v5810 = vunpack.c.l.b16 %v5806
      %v5811 = vpack.c.b16 %v5810, %v5809
      %v5812 = vsel %vm4796, %v5773, 0
      %v5814 = vsel %vm4796, %v5775, 0
      %v5816 = vsel %vm4796, %v5777, 0
      %v5818 = vsel %vm4796, %v5779, 0
      %v5820 = vsel %vm4796, %v5781, 0
      %v5822 = vsel %vm4796, %v5783, 0
      %v5824 = vsel %vm4796, %v5785, 0
      %v5826 = vsel %vm4796, %v5787, 0
      %v5828 = vsel %vm4796, %v5789, 0
      %v5830 = vsel %vm4796, %v5791, 0
      %v5832 = vsel %vm4796, %v5793, 0
      %v5834 = vsel %vm4796, %v5795, 0
      %v5836 = vsel %vm4796, %v5797, 0
      %v5838 = vsel %vm4796, %v5799, 0
      %v5840 = vsel %vm4796, %v5801, 0
      %v5842 = vsel %vm4796, %v5803, 0
      %v5845 = vsel %vm4829, %v5811, 0
      %5847 = vmatprep.subr.bf16.mxu0 0
      %5848 = vmatpush1.bf16.msra.mxu0 0
      %5849 = vmatprep.subr.bf16.mxu0 0
      %5850 = vmatpush1.bf16.msra.mxu0 0
      %5851 = vmatprep.subr.bf16.mxu0 0
      %5852 = vmatpush1.bf16.msra.mxu0 0
      %5853 = vmatprep.subr.bf16.mxu0 0
      %5854 = vmatpush1.bf16.msra.mxu0 0
      %5855 = vmatprep.subr.bf16.mxu0 0
      %5856 = vmatpush1.bf16.msra.mxu0 0
      %5857 = vmatprep.subr.bf16.mxu0 0
      %5858 = vmatpush1.bf16.msra.mxu0 0
      %5859 = vmatprep.subr.bf16.mxu0 0
      %5860 = vmatpush1.bf16.msra.mxu0 0
      %5861 = vmatprep.subr.bf16.mxu0 0
      %5862 = vmatpush1.bf16.msra.mxu0 %v5845
      %5863 = vmatprep.subr.bf16.mxu0 0
      %5864 = vmatpush2.bf16.msra.mxu0 0
      %5865 = vmatprep.subr.bf16.mxu0 0
      %5866 = vmatpush2.bf16.msra.mxu0 0
      %5867 = vmatprep.subr.bf16.mxu0 0
      %5868 = vmatpush2.bf16.msra.mxu0 0
      %5869 = vmatprep.subr.bf16.mxu0 0
      %5870 = vmatpush2.bf16.msra.mxu0 0
      %5871 = vmatprep.subr.bf16.mxu0 0
      %5872 = vmatpush2.bf16.msra.mxu0 0
      %5873 = vmatprep.subr.bf16.mxu0 0
      %5874 = vmatpush2.bf16.msra.mxu0 0
      %5875 = vmatprep.subr.bf16.mxu0 0
      %5876 = vmatpush2.bf16.msra.mxu0 0
      %5877 = vmatprep.subr.bf16.mxu0 0
      %5878 = vmatpush2.bf16.msra.mxu0 0
      %5879 = vmatprep.mubr.bf16.mxu0 0
      %5880 = vmatmul.mubr.bf16.gmra.mxu0 %v5812
      %v5881 = vpop.f32.mrf.mxu0
      %v5882 = vadd.f32 0.0, %v5881
      %v5883 = vpop.f32.mrf.mxu0
      %v5884 = vpop.f32.mrf.mxu0
      %v5885 = vadd.f32 0.0, %v5884
      %v5886 = vpop.f32.mrf.mxu0
      %5887 = vmatprep.mubr.bf16.mxu0 0
      %5888 = vmatmul.mubr.bf16.gmra.mxu0 %v5814
      %v5889 = vpop.f32.mrf.mxu0
      %v5890 = vadd.f32 0.0, %v5889
      %v5891 = vpop.f32.mrf.mxu0
      %v5892 = vpop.f32.mrf.mxu0
      %v5893 = vadd.f32 0.0, %v5892
      %v5894 = vpop.f32.mrf.mxu0
      %5895 = vmatprep.mubr.bf16.mxu0 0
      %5896 = vmatmul.mubr.bf16.gmra.mxu0 %v5816
      %v5897 = vpop.f32.mrf.mxu0
      %v5898 = vadd.f32 0.0, %v5897
      %v5899 = vpop.f32.mrf.mxu0
      %v5900 = vpop.f32.mrf.mxu0
      %v5901 = vadd.f32 0.0, %v5900
      %v5902 = vpop.f32.mrf.mxu0
      %5903 = vmatprep.mubr.bf16.mxu0 0
      %5904 = vmatmul.mubr.bf16.gmra.mxu0 %v5818
      %v5905 = vpop.f32.mrf.mxu0
      %v5906 = vadd.f32 0.0, %v5905
      %v5907 = vpop.f32.mrf.mxu0
      %v5908 = vpop.f32.mrf.mxu0
      %v5909 = vadd.f32 0.0, %v5908
      %v5910 = vpop.f32.mrf.mxu0
      %5911 = vmatprep.mubr.bf16.mxu0 0
      %5912 = vmatmul.mubr.bf16.gmra.mxu0 %v5820
      %v5913 = vpop.f32.mrf.mxu0
      %v5914 = vadd.f32 0.0, %v5913
      %v5915 = vpop.f32.mrf.mxu0
      %v5916 = vpop.f32.mrf.mxu0
      %v5917 = vadd.f32 0.0, %v5916
      %v5918 = vpop.f32.mrf.mxu0
      %5919 = vmatprep.mubr.bf16.mxu0 0
      %5920 = vmatmul.mubr.bf16.gmra.mxu0 %v5822
      %v5921 = vpop.f32.mrf.mxu0
      %v5922 = vadd.f32 0.0, %v5921
      %v5923 = vpop.f32.mrf.mxu0
      %v5924 = vpop.f32.mrf.mxu0
      %v5925 = vadd.f32 0.0, %v5924
      %v5926 = vpop.f32.mrf.mxu0
      %5927 = vmatprep.mubr.bf16.mxu0 0
      %5928 = vmatmul.mubr.bf16.gmra.mxu0 %v5824
      %v5929 = vpop.f32.mrf.mxu0
      %v5930 = vadd.f32 0.0, %v5929
      %v5931 = vpop.f32.mrf.mxu0
      %v5932 = vpop.f32.mrf.mxu0
      %v5933 = vadd.f32 0.0, %v5932
      %v5934 = vpop.f32.mrf.mxu0
      %5935 = vmatprep.mubr.bf16.mxu0 0
      %5936 = vmatmul.mubr.bf16.gmra.mxu0 %v5826
      %v5937 = vpop.f32.mrf.mxu0
      %v5938 = vadd.f32 0.0, %v5937
      %v5939 = vpop.f32.mrf.mxu0
      %v5940 = vpop.f32.mrf.mxu0
      %v5941 = vadd.f32 0.0, %v5940
      %v5942 = vpop.f32.mrf.mxu0
      %5943 = vmatprep.mubr.bf16.mxu0 0
      %5944 = vmatmul.mubr.bf16.gmra.mxu0 %v5828
      %v5945 = vpop.f32.mrf.mxu0
      %v5946 = vadd.f32 0.0, %v5945
      %v5947 = vpop.f32.mrf.mxu0
      %v5948 = vpop.f32.mrf.mxu0
      %v5949 = vadd.f32 0.0, %v5948
      %v5950 = vpop.f32.mrf.mxu0
      %5951 = vmatprep.mubr.bf16.mxu0 0
      %5952 = vmatmul.mubr.bf16.gmra.mxu0 %v5830
      %v5953 = vpop.f32.mrf.mxu0
      %v5954 = vadd.f32 0.0, %v5953
      %v5955 = vpop.f32.mrf.mxu0
      %v5956 = vpop.f32.mrf.mxu0
      %v5957 = vadd.f32 0.0, %v5956
      %v5958 = vpop.f32.mrf.mxu0
      %5959 = vmatprep.mubr.bf16.mxu0 0
      %5960 = vmatmul.mubr.bf16.gmra.mxu0 %v5832
      %v5961 = vpop.f32.mrf.mxu0
      %v5962 = vadd.f32 0.0, %v5961
      %v5963 = vpop.f32.mrf.mxu0
      %v5964 = vpop.f32.mrf.mxu0
      %v5965 = vadd.f32 0.0, %v5964
      %v5966 = vpop.f32.mrf.mxu0
      %5967 = vmatprep.mubr.bf16.mxu0 0
      %5968 = vmatmul.mubr.bf16.gmra.mxu0 %v5834
      %v5969 = vpop.f32.mrf.mxu0
      %v5970 = vadd.f32 0.0, %v5969
      %v5971 = vpop.f32.mrf.mxu0
      %v5972 = vpop.f32.mrf.mxu0
      %v5973 = vadd.f32 0.0, %v5972
      %v5974 = vpop.f32.mrf.mxu0
      %5975 = vmatprep.mubr.bf16.mxu0 0
      %5976 = vmatmul.mubr.bf16.gmra.mxu0 %v5836
      %v5977 = vpop.f32.mrf.mxu0
      %v5978 = vadd.f32 0.0, %v5977
      %v5979 = vpop.f32.mrf.mxu0
      %v5980 = vpop.f32.mrf.mxu0
      %v5981 = vadd.f32 0.0, %v5980
      %v5982 = vpop.f32.mrf.mxu0
      %5983 = vmatprep.mubr.bf16.mxu0 0
      %5984 = vmatmul.mubr.bf16.gmra.mxu0 %v5838
      %v5985 = vpop.f32.mrf.mxu0
      %v5986 = vadd.f32 0.0, %v5985
      %v5987 = vpop.f32.mrf.mxu0
      %v5988 = vpop.f32.mrf.mxu0
      %v5989 = vadd.f32 0.0, %v5988
      %v5990 = vpop.f32.mrf.mxu0
      %5991 = vmatprep.mubr.bf16.mxu0 0
      %5992 = vmatmul.mubr.bf16.gmra.mxu0 %v5840
      %v5993 = vpop.f32.mrf.mxu0
      %v5994 = vadd.f32 0.0, %v5993
      %v5995 = vpop.f32.mrf.mxu0
      %v5996 = vpop.f32.mrf.mxu0
      %v5997 = vadd.f32 0.0, %v5996
      %v5998 = vpop.f32.mrf.mxu0
      %5999 = vmatprep.mubr.bf16.mxu0 0
      %6000 = vmatmul.mubr.bf16.gmra.mxu0 %v5842
      %v6001 = vpop.f32.mrf.mxu0
      %v6002 = vadd.f32 0.0, %v6001
      %v6003 = vpop.f32.mrf.mxu0
      %v6004 = vpop.f32.mrf.mxu0
      %v6005 = vadd.f32 0.0, %v6004
      %v6006 = vpop.f32.mrf.mxu0
      %6007 = vdwg.mxu0
      %v6008 = vadd.f32 %v5069, %v5882
      %v6009 = vadd.f32 %v5072, %v5885
      %v6010 = vadd.f32 %v5077, %v5890
      %v6011 = vadd.f32 %v5080, %v5893
      %v6012 = vadd.f32 %v5085, %v5898
      %v6013 = vadd.f32 %v5088, %v5901
      %v6014 = vadd.f32 %v5093, %v5906
      %v6015 = vadd.f32 %v5096, %v5909
      %v6016 = vadd.f32 %v5101, %v5914
      %v6017 = vadd.f32 %v5104, %v5917
      %v6018 = vadd.f32 %v5109, %v5922
      %v6019 = vadd.f32 %v5112, %v5925
      %v6020 = vadd.f32 %v5117, %v5930
      %v6021 = vadd.f32 %v5120, %v5933
      %v6022 = vadd.f32 %v5125, %v5938
      %v6023 = vadd.f32 %v5128, %v5941
      %v6024 = vadd.f32 %v5133, %v5946
      %v6025 = vadd.f32 %v5136, %v5949
      %v6026 = vadd.f32 %v5141, %v5954
      %v6027 = vadd.f32 %v5144, %v5957
      %v6028 = vadd.f32 %v5149, %v5962
      %v6029 = vadd.f32 %v5152, %v5965
      %v6030 = vadd.f32 %v5157, %v5970
      %v6031 = vadd.f32 %v5160, %v5973
      %v6032 = vadd.f32 %v5165, %v5978
      %v6033 = vadd.f32 %v5168, %v5981
      %v6034 = vadd.f32 %v5173, %v5986
      %v6035 = vadd.f32 %v5176, %v5989
      %v6036 = vadd.f32 %v5181, %v5994
      %v6037 = vadd.f32 %v5184, %v5997
      %v6038 = vadd.f32 %v5189, %v6002
      %v6039 = vadd.f32 %v5192, %v6005
      %v6040 = vld [vmem:[#allocation2] sm:$0xf]
      %v6041 = vld [vmem:[#allocation2 + $0x4] sm:$0xf]
      %v6042 = vld [vmem:[#allocation2 + $0xc] sm:$0xf]
      %v6043 = vld [vmem:[#allocation2 + $0x10] sm:$0xf]
      %v6044 = vld [vmem:[#allocation2 + $0x18] sm:$0xf]
      %v6045 = vld [vmem:[#allocation2 + $0x1c] sm:$0xf]
      %v6046 = vld [vmem:[#allocation2 + $0x24] sm:$0xf]
      %v6047 = vld [vmem:[#allocation2 + $0x28] sm:$0xf]
      %v6048 = vld [vmem:[#allocation2 + $0x30] sm:$0xf]
      %v6049 = vld [vmem:[#allocation2 + $0x34] sm:$0xf]
      %v6050 = vld [vmem:[#allocation2 + $0x3c] sm:$0xf]
      %v6051 = vld [vmem:[#allocation2 + $0x40] sm:$0xf]
      %v6052 = vld [vmem:[#allocation2 + $0x48] sm:$0xf]
      %v6053 = vld [vmem:[#allocation2 + $0x4c] sm:$0xf]
      %v6054 = vld [vmem:[#allocation2 + $0x54] sm:$0xf]
      %v6055 = vld [vmem:[#allocation2 + $0x58] sm:$0xf]
      %v6056 = vld [vmem:[#allocation2 + $0x60] sm:$0xf]
      %v6057 = vld [vmem:[#allocation2 + $0x64] sm:$0xf]
      %v6058 = vld [vmem:[#allocation2 + $0x6c] sm:$0xf]
      %v6059 = vld [vmem:[#allocation2 + $0x70] sm:$0xf]
      %v6060 = vld [vmem:[#allocation2 + $0x78] sm:$0xf]
      %v6061 = vld [vmem:[#allocation2 + $0x7c] sm:$0xf]
      %v6062 = vld [vmem:[#allocation2 + $0x84] sm:$0xf]
      %v6063 = vld [vmem:[#allocation2 + $0x88] sm:$0xf]
      %v6064 = vld [vmem:[#allocation2 + $0x90] sm:$0xf]
      %v6065 = vld [vmem:[#allocation2 + $0x94] sm:$0xf]
      %v6066 = vld [vmem:[#allocation2 + $0x9c] sm:$0xf]
      %v6067 = vld [vmem:[#allocation2 + $0xa0] sm:$0xf]
      %v6068 = vld [vmem:[#allocation2 + $0xa8] sm:$0xf]
      %v6069 = vld [vmem:[#allocation2 + $0xac] sm:$0xf]
      %v6070 = vld [vmem:[#allocation2 + $0xb4] sm:$0xf]
      %v6071 = vld [vmem:[#allocation2 + $0xb8] sm:$0xf]
      %v6072 = vld [vmem:[#allocation2 + $0x8] sm:$0x1]
      %v6073 = vld [vmem:[#allocation2 + $0x14] sm:$0x1]
      %v6074 = vld [vmem:[#allocation2 + $0x20] sm:$0x1]
      %v6075 = vld [vmem:[#allocation2 + $0x2c] sm:$0x1]
      %v6076 = vld [vmem:[#allocation2 + $0x38] sm:$0x1]
      %v6077 = vld [vmem:[#allocation2 + $0x44] sm:$0x1]
      %v6078 = vld [vmem:[#allocation2 + $0x50] sm:$0x1]
      %v6079 = vld [vmem:[#allocation2 + $0x5c] sm:$0x1]
      %v6080 = vld [vmem:[#allocation2 + $0x68] sm:$0x1]
      %v6081 = vld [vmem:[#allocation2 + $0x74] sm:$0x1]
      %v6082 = vld [vmem:[#allocation2 + $0x80] sm:$0x1]
      %v6083 = vld [vmem:[#allocation2 + $0x8c] sm:$0x1]
      %v6084 = vld [vmem:[#allocation2 + $0x98] sm:$0x1]
      %v6085 = vld [vmem:[#allocation2 + $0xa4] sm:$0x1]
      %v6086 = vld [vmem:[#allocation2 + $0xb0] sm:$0x1]
      %v6087 = vld [vmem:[#allocation2 + $0xbc] sm:$0x1]
      %v6088 = vld [vmem:[#allocation2] sm:$0xe]
      %v6089 = vld [vmem:[#allocation2 + $0xc] sm:$0xe]
      %v6090 = vld [vmem:[#allocation2 + $0x18] sm:$0xe]
      %v6091 = vld [vmem:[#allocation2 + $0x24] sm:$0xe]
      %v6092 = vld [vmem:[#allocation2 + $0x30] sm:$0xe]
      %v6093 = vld [vmem:[#allocation2 + $0x3c] sm:$0xe]
      %v6094 = vld [vmem:[#allocation2 + $0x48] sm:$0xe]
      %v6095 = vld [vmem:[#allocation2 + $0x54] sm:$0xe]
      %v6096 = vld [vmem:[#allocation2 + $0x60] sm:$0xe]
      %v6097 = vld [vmem:[#allocation2 + $0x6c] sm:$0xe]
      %v6098 = vld [vmem:[#allocation2 + $0x78] sm:$0xe]
      %v6099 = vld [vmem:[#allocation2 + $0x84] sm:$0xe]
      %v6100 = vld [vmem:[#allocation2 + $0x90] sm:$0xe]
      %v6101 = vld [vmem:[#allocation2 + $0x9c] sm:$0xe]
      %v6102 = vld [vmem:[#allocation2 + $0xa8] sm:$0xe]
      %v6103 = vld [vmem:[#allocation2 + $0xb4] sm:$0xe]
      %v6136 = vunpack.c.l.b16 %v6040
      %v6137 = vunpack.c.l.b16 %v6041
      %v6138 = vunpack.c.l.b16 %v6042
      %v6139 = vunpack.c.l.b16 %v6043
      %v6140 = vunpack.c.l.b16 %v6044
      %v6141 = vunpack.c.l.b16 %v6045
      %v6142 = vunpack.c.l.b16 %v6046
      %v6143 = vunpack.c.l.b16 %v6047
      %v6144 = vunpack.c.l.b16 %v6048
      %v6145 = vunpack.c.l.b16 %v6049
      %v6146 = vunpack.c.l.b16 %v6050
      %v6147 = vunpack.c.l.b16 %v6051
      %v6148 = vunpack.c.l.b16 %v6052
      %v6149 = vunpack.c.l.b16 %v6053
      %v6150 = vunpack.c.l.b16 %v6054
      %v6151 = vunpack.c.l.b16 %v6055
      %v6152 = vunpack.c.l.b16 %v6056
      %v6153 = vunpack.c.l.b16 %v6057
      %v6154 = vunpack.c.l.b16 %v6058
      %v6155 = vunpack.c.l.b16 %v6059
      %v6156 = vunpack.c.l.b16 %v6060
      %v6157 = vunpack.c.l.b16 %v6061
      %v6158 = vunpack.c.l.b16 %v6062
      %v6159 = vunpack.c.l.b16 %v6063
      %v6160 = vunpack.c.l.b16 %v6064
      %v6161 = vunpack.c.l.b16 %v6065
      %v6162 = vunpack.c.l.b16 %v6066
      %v6163 = vunpack.c.l.b16 %v6067
      %v6164 = vunpack.c.l.b16 %v6068
      %v6165 = vunpack.c.l.b16 %v6069
      %v6166 = vunpack.c.l.b16 %v6070
      %v6167 = vunpack.c.l.b16 %v6071
      %v6168 = vpack.c.b16 %v6137, %v6136
      %v6169 = vpack.c.b16 %v6139, %v6138
      %v6170 = vpack.c.b16 %v6141, %v6140
      %v6171 = vpack.c.b16 %v6143, %v6142
      %v6172 = vpack.c.b16 %v6145, %v6144
      %v6173 = vpack.c.b16 %v6147, %v6146
      %v6174 = vpack.c.b16 %v6149, %v6148
      %v6175 = vpack.c.b16 %v6151, %v6150
      %v6176 = vpack.c.b16 %v6153, %v6152
      %v6177 = vpack.c.b16 %v6155, %v6154
      %v6178 = vpack.c.b16 %v6157, %v6156
      %v6179 = vpack.c.b16 %v6159, %v6158
      %v6180 = vpack.c.b16 %v6161, %v6160
      %v6181 = vpack.c.b16 %v6163, %v6162
      %v6182 = vpack.c.b16 %v6165, %v6164
      %v6183 = vpack.c.b16 %v6167, %v6166
      %v6200 = vunpack.c.l.b16 %v6072
      %v6201 = vunpack.c.l.b16 %v6073
      %v6202 = vunpack.c.l.b16 %v6074
      %v6203 = vunpack.c.l.b16 %v6075
      %v6204 = vunpack.c.l.b16 %v6076
      %v6205 = vunpack.c.l.b16 %v6077
      %v6206 = vunpack.c.l.b16 %v6078
      %v6207 = vunpack.c.l.b16 %v6079
      %v6208 = vunpack.c.l.b16 %v6080
      %v6209 = vunpack.c.l.b16 %v6081
      %v6210 = vunpack.c.l.b16 %v6082
      %v6211 = vunpack.c.l.b16 %v6083
      %v6212 = vunpack.c.l.b16 %v6084
      %v6213 = vunpack.c.l.b16 %v6085
      %v6214 = vunpack.c.l.b16 %v6086
      %v6215 = vunpack.c.l.b16 %v6087
      %v6216 = vpack.c.b16 %v6200, %v6200
      %v6217 = vpack.c.b16 %v6201, %v6201
      %v6218 = vpack.c.b16 %v6202, %v6202
      %v6219 = vpack.c.b16 %v6203, %v6203
      %v6220 = vpack.c.b16 %v6204, %v6204
      %v6221 = vpack.c.b16 %v6205, %v6205
      %v6222 = vpack.c.b16 %v6206, %v6206
      %v6223 = vpack.c.b16 %v6207, %v6207
      %v6224 = vpack.c.b16 %v6208, %v6208
      %v6225 = vpack.c.b16 %v6209, %v6209
      %v6226 = vpack.c.b16 %v6210, %v6210
      %v6227 = vpack.c.b16 %v6211, %v6211
      %v6228 = vpack.c.b16 %v6212, %v6212
      %v6229 = vpack.c.b16 %v6213, %v6213
      %v6230 = vpack.c.b16 %v6214, %v6214
      %v6231 = vpack.c.b16 %v6215, %v6215
      %v6233 = vshrl.u32 %v6168, 16
      %v6235 = vshll.u32 %v6168, 16
      %v6237 = vrot.slane %v6235, 1
      %v6238 = vor.u32 %v6233, %v6237
      %v6240 = vshll.u32 %v6216, 16
      %v6242 = vrot.slane %v6240, 1
      %v6243 = vsel %vm3759, %v6238, %v6242
      %v6245 = vshrl.u32 %v6169, 16
      %v6247 = vshll.u32 %v6169, 16
      %v6249 = vrot.slane %v6247, 1
      %v6250 = vor.u32 %v6245, %v6249
      %v6252 = vshll.u32 %v6217, 16
      %v6254 = vrot.slane %v6252, 1
      %v6255 = vsel %vm3759, %v6250, %v6254
      %v6257 = vshrl.u32 %v6170, 16
      %v6259 = vshll.u32 %v6170, 16
      %v6261 = vrot.slane %v6259, 1
      %v6262 = vor.u32 %v6257, %v6261
      %v6264 = vshll.u32 %v6218, 16
      %v6266 = vrot.slane %v6264, 1
      %v6267 = vsel %vm3759, %v6262, %v6266
      %v6269 = vshrl.u32 %v6171, 16
      %v6271 = vshll.u32 %v6171, 16
      %v6273 = vrot.slane %v6271, 1
      %v6274 = vor.u32 %v6269, %v6273
      %v6276 = vshll.u32 %v6219, 16
      %v6278 = vrot.slane %v6276, 1
      %v6279 = vsel %vm3759, %v6274, %v6278
      %v6281 = vshrl.u32 %v6172, 16
      %v6283 = vshll.u32 %v6172, 16
      %v6285 = vrot.slane %v6283, 1
      %v6286 = vor.u32 %v6281, %v6285
      %v6288 = vshll.u32 %v6220, 16
      %v6290 = vrot.slane %v6288, 1
      %v6291 = vsel %vm3759, %v6286, %v6290
      %v6293 = vshrl.u32 %v6173, 16
      %v6295 = vshll.u32 %v6173, 16
      %v6297 = vrot.slane %v6295, 1
      %v6298 = vor.u32 %v6293, %v6297
      %v6300 = vshll.u32 %v6221, 16
      %v6302 = vrot.slane %v6300, 1
      %v6303 = vsel %vm3759, %v6298, %v6302
      %v6305 = vshrl.u32 %v6174, 16
      %v6307 = vshll.u32 %v6174, 16
      %v6309 = vrot.slane %v6307, 1
      %v6310 = vor.u32 %v6305, %v6309
      %v6312 = vshll.u32 %v6222, 16
      %v6314 = vrot.slane %v6312, 1
      %v6315 = vsel %vm3759, %v6310, %v6314
      %v6317 = vshrl.u32 %v6175, 16
      %v6319 = vshll.u32 %v6175, 16
      %v6321 = vrot.slane %v6319, 1
      %v6322 = vor.u32 %v6317, %v6321
      %v6324 = vshll.u32 %v6223, 16
      %v6326 = vrot.slane %v6324, 1
      %v6327 = vsel %vm3759, %v6322, %v6326
      %v6329 = vshrl.u32 %v6176, 16
      %v6331 = vshll.u32 %v6176, 16
      %v6333 = vrot.slane %v6331, 1
      %v6334 = vor.u32 %v6329, %v6333
      %v6336 = vshll.u32 %v6224, 16
      %v6338 = vrot.slane %v6336, 1
      %v6339 = vsel %vm3759, %v6334, %v6338
      %v6341 = vshrl.u32 %v6177, 16
      %v6343 = vshll.u32 %v6177, 16
      %v6345 = vrot.slane %v6343, 1
      %v6346 = vor.u32 %v6341, %v6345
      %v6348 = vshll.u32 %v6225, 16
      %v6350 = vrot.slane %v6348, 1
      %v6351 = vsel %vm3759, %v6346, %v6350
      %v6353 = vshrl.u32 %v6178, 16
      %v6355 = vshll.u32 %v6178, 16
      %v6357 = vrot.slane %v6355, 1
      %v6358 = vor.u32 %v6353, %v6357
      %v6360 = vshll.u32 %v6226, 16
      %v6362 = vrot.slane %v6360, 1
      %v6363 = vsel %vm3759, %v6358, %v6362
      %v6365 = vshrl.u32 %v6179, 16
      %v6367 = vshll.u32 %v6179, 16
      %v6369 = vrot.slane %v6367, 1
      %v6370 = vor.u32 %v6365, %v6369
      %v6372 = vshll.u32 %v6227, 16
      %v6374 = vrot.slane %v6372, 1
      %v6375 = vsel %vm3759, %v6370, %v6374
      %v6377 = vshrl.u32 %v6180, 16
      %v6379 = vshll.u32 %v6180, 16
      %v6381 = vrot.slane %v6379, 1
      %v6382 = vor.u32 %v6377, %v6381
      %v6384 = vshll.u32 %v6228, 16
      %v6386 = vrot.slane %v6384, 1
      %v6387 = vsel %vm3759, %v6382, %v6386
      %v6389 = vshrl.u32 %v6181, 16
      %v6391 = vshll.u32 %v6181, 16
      %v6393 = vrot.slane %v6391, 1
      %v6394 = vor.u32 %v6389, %v6393
      %v6396 = vshll.u32 %v6229, 16
      %v6398 = vrot.slane %v6396, 1
      %v6399 = vsel %vm3759, %v6394, %v6398
      %v6401 = vshrl.u32 %v6182, 16
      %v6403 = vshll.u32 %v6182, 16
      %v6405 = vrot.slane %v6403, 1
      %v6406 = vor.u32 %v6401, %v6405
      %v6408 = vshll.u32 %v6230, 16
      %v6410 = vrot.slane %v6408, 1
      %v6411 = vsel %vm3759, %v6406, %v6410
      %v6413 = vshrl.u32 %v6183, 16
      %v6415 = vshll.u32 %v6183, 16
      %v6417 = vrot.slane %v6415, 1
      %v6418 = vor.u32 %v6413, %v6417
      %v6420 = vshll.u32 %v6231, 16
      %v6422 = vrot.slane %v6420, 1
      %v6423 = vsel %vm3759, %v6418, %v6422
      %6424 = vrot.lane.b32.xlu0 %v6243, 4
      %v6425 = vpop.permute.xlu0 %6424
      %6426 = vrot.lane.b32.xlu0 %v6255, 4
      %v6427 = vpop.permute.xlu0 %6426
      %6428 = vrot.lane.b32.xlu0 %v6267, 4
      %v6429 = vpop.permute.xlu0 %6428
      %6430 = vrot.lane.b32.xlu0 %v6279, 4
      %v6431 = vpop.permute.xlu0 %6430
      %6432 = vrot.lane.b32.xlu0 %v6291, 4
      %v6433 = vpop.permute.xlu0 %6432
      %6434 = vrot.lane.b32.xlu0 %v6303, 4
      %v6435 = vpop.permute.xlu0 %6434
      %6436 = vrot.lane.b32.xlu0 %v6315, 4
      %v6437 = vpop.permute.xlu0 %6436
      %6438 = vrot.lane.b32.xlu0 %v6327, 4
      %v6439 = vpop.permute.xlu0 %6438
      %6440 = vrot.lane.b32.xlu0 %v6339, 4
      %v6441 = vpop.permute.xlu0 %6440
      %6442 = vrot.lane.b32.xlu0 %v6351, 4
      %v6443 = vpop.permute.xlu0 %6442
      %6444 = vrot.lane.b32.xlu0 %v6363, 4
      %v6445 = vpop.permute.xlu0 %6444
      %6446 = vrot.lane.b32.xlu0 %v6375, 4
      %v6447 = vpop.permute.xlu0 %6446
      %6448 = vrot.lane.b32.xlu0 %v6387, 4
      %v6449 = vpop.permute.xlu0 %6448
      %6450 = vrot.lane.b32.xlu0 %v6399, 4
      %v6451 = vpop.permute.xlu0 %6450
      %6452 = vrot.lane.b32.xlu0 %v6411, 4
      %v6453 = vpop.permute.xlu0 %6452
      %6454 = vrot.lane.b32.xlu0 %v6423, 4
      %v6455 = vpop.permute.xlu0 %6454
      %v6472 = vunpack.c.l.b16 %v6088
      %v6473 = vunpack.c.l.b16 %v6089
      %v6474 = vunpack.c.l.b16 %v6090
      %v6475 = vunpack.c.l.b16 %v6091
      %v6476 = vunpack.c.l.b16 %v6092
      %v6477 = vunpack.c.l.b16 %v6093
      %v6478 = vunpack.c.l.b16 %v6094
      %v6479 = vunpack.c.l.b16 %v6095
      %v6480 = vunpack.c.l.b16 %v6096
      %v6481 = vunpack.c.l.b16 %v6097
      %v6482 = vunpack.c.l.b16 %v6098
      %v6483 = vunpack.c.l.b16 %v6099
      %v6484 = vunpack.c.l.b16 %v6100
      %v6485 = vunpack.c.l.b16 %v6101
      %v6486 = vunpack.c.l.b16 %v6102
      %v6487 = vunpack.c.l.b16 %v6103
      %v6488 = vpack.c.b16 %v6137, %v6472
      %v6489 = vpack.c.b16 %v6139, %v6473
      %v6490 = vpack.c.b16 %v6141, %v6474
      %v6491 = vpack.c.b16 %v6143, %v6475
      %v6492 = vpack.c.b16 %v6145, %v6476
      %v6493 = vpack.c.b16 %v6147, %v6477
      %v6494 = vpack.c.b16 %v6149, %v6478
      %v6495 = vpack.c.b16 %v6151, %v6479
      %v6496 = vpack.c.b16 %v6153, %v6480
      %v6497 = vpack.c.b16 %v6155, %v6481
      %v6498 = vpack.c.b16 %v6157, %v6482
      %v6499 = vpack.c.b16 %v6159, %v6483
      %v6500 = vpack.c.b16 %v6161, %v6484
      %v6501 = vpack.c.b16 %v6163, %v6485
      %v6502 = vpack.c.b16 %v6165, %v6486
      %v6503 = vpack.c.b16 %v6167, %v6487
      %v6504 = vrot.slane %v6488, 1
      %v6505 = vrot.slane %v6216, 1
      %v6506 = vsel %vm4032, %v6504, %v6505
      %v6507 = vrot.slane %v6489, 1
      %v6508 = vrot.slane %v6217, 1
      %v6509 = vsel %vm4032, %v6507, %v6508
      %v6510 = vrot.slane %v6490, 1
      %v6511 = vrot.slane %v6218, 1
      %v6512 = vsel %vm4032, %v6510, %v6511
      %v6513 = vrot.slane %v6491, 1
      %v6514 = vrot.slane %v6219, 1
      %v6515 = vsel %vm4032, %v6513, %v6514
      %v6516 = vrot.slane %v6492, 1
      %v6517 = vrot.slane %v6220, 1
      %v6518 = vsel %vm4032, %v6516, %v6517
      %v6519 = vrot.slane %v6493, 1
      %v6520 = vrot.slane %v6221, 1
      %v6521 = vsel %vm4032, %v6519, %v6520
      %v6522 = vrot.slane %v6494, 1
      %v6523 = vrot.slane %v6222, 1
      %v6524 = vsel %vm4032, %v6522, %v6523
      %v6525 = vrot.slane %v6495, 1
      %v6526 = vrot.slane %v6223, 1
      %v6527 = vsel %vm4032, %v6525, %v6526
      %v6528 = vrot.slane %v6496, 1
      %v6529 = vrot.slane %v6224, 1
      %v6530 = vsel %vm4032, %v6528, %v6529
      %v6531 = vrot.slane %v6497, 1
      %v6532 = vrot.slane %v6225, 1
      %v6533 = vsel %vm4032, %v6531, %v6532
      %v6534 = vrot.slane %v6498, 1
      %v6535 = vrot.slane %v6226, 1
      %v6536 = vsel %vm4032, %v6534, %v6535
      %v6537 = vrot.slane %v6499, 1
      %v6538 = vrot.slane %v6227, 1
      %v6539 = vsel %vm4032, %v6537, %v6538
      %v6540 = vrot.slane %v6500, 1
      %v6541 = vrot.slane %v6228, 1
      %v6542 = vsel %vm4032, %v6540, %v6541
      %v6543 = vrot.slane %v6501, 1
      %v6544 = vrot.slane %v6229, 1
      %v6545 = vsel %vm4032, %v6543, %v6544
      %v6546 = vrot.slane %v6502, 1
      %v6547 = vrot.slane %v6230, 1
      %v6548 = vsel %vm4032, %v6546, %v6547
      %v6549 = vrot.slane %v6503, 1
      %v6550 = vrot.slane %v6231, 1
      %v6551 = vsel %vm4032, %v6549, %v6550
      %6552 = vrot.lane.b32.xlu0 %v6506, 8
      %v6553 = vpop.permute.xlu0 %6552
      %6554 = vrot.lane.b32.xlu0 %v6509, 8
      %v6555 = vpop.permute.xlu0 %6554
      %6556 = vrot.lane.b32.xlu0 %v6512, 8
      %v6557 = vpop.permute.xlu0 %6556
      %6558 = vrot.lane.b32.xlu0 %v6515, 8
      %v6559 = vpop.permute.xlu0 %6558
      %6560 = vrot.lane.b32.xlu0 %v6518, 8
      %v6561 = vpop.permute.xlu0 %6560
      %6562 = vrot.lane.b32.xlu0 %v6521, 8
      %v6563 = vpop.permute.xlu0 %6562
      %6564 = vrot.lane.b32.xlu0 %v6524, 8
      %v6565 = vpop.permute.xlu0 %6564
      %6566 = vrot.lane.b32.xlu0 %v6527, 8
      %v6567 = vpop.permute.xlu0 %6566
      %6568 = vrot.lane.b32.xlu0 %v6530, 8
      %v6569 = vpop.permute.xlu0 %6568
      %6570 = vrot.lane.b32.xlu0 %v6533, 8
      %v6571 = vpop.permute.xlu0 %6570
      %6572 = vrot.lane.b32.xlu0 %v6536, 8
      %v6573 = vpop.permute.xlu0 %6572
      %6574 = vrot.lane.b32.xlu0 %v6539, 8
      %v6575 = vpop.permute.xlu0 %6574
      %6576 = vrot.lane.b32.xlu0 %v6542, 8
      %v6577 = vpop.permute.xlu0 %6576
      %6578 = vrot.lane.b32.xlu0 %v6545, 8
      %v6579 = vpop.permute.xlu0 %6578
      %6580 = vrot.lane.b32.xlu0 %v6548, 8
      %v6581 = vpop.permute.xlu0 %6580
      %6582 = vrot.lane.b32.xlu0 %v6551, 8
      %v6583 = vpop.permute.xlu0 %6582
      %v6585 = vsel %vm4113, %v6168, %v6425
      %v6587 = vsel %vm4113, %v6169, %v6427
      %v6589 = vsel %vm4113, %v6170, %v6429
      %v6591 = vsel %vm4113, %v6171, %v6431
      %v6593 = vsel %vm4113, %v6172, %v6433
      %v6595 = vsel %vm4113, %v6173, %v6435
      %v6597 = vsel %vm4113, %v6174, %v6437
      %v6599 = vsel %vm4113, %v6175, %v6439
      %v6601 = vsel %vm4113, %v6176, %v6441
      %v6603 = vsel %vm4113, %v6177, %v6443
      %v6605 = vsel %vm4113, %v6178, %v6445
      %v6607 = vsel %vm4113, %v6179, %v6447
      %v6609 = vsel %vm4113, %v6180, %v6449
      %v6611 = vsel %vm4113, %v6181, %v6451
      %v6613 = vsel %vm4113, %v6182, %v6453
      %v6615 = vsel %vm4113, %v6183, %v6455
      %v6617 = vsel %vm1211, %v6585, %v6553
      %v6619 = vsel %vm1211, %v6587, %v6555
      %v6621 = vsel %vm1211, %v6589, %v6557
      %v6623 = vsel %vm1211, %v6591, %v6559
      %v6625 = vsel %vm1211, %v6593, %v6561
      %v6627 = vsel %vm1211, %v6595, %v6563
      %v6629 = vsel %vm1211, %v6597, %v6565
      %v6631 = vsel %vm1211, %v6599, %v6567
      %v6633 = vsel %vm1211, %v6601, %v6569
      %v6635 = vsel %vm1211, %v6603, %v6571
      %v6637 = vsel %vm1211, %v6605, %v6573
      %v6639 = vsel %vm1211, %v6607, %v6575
      %v6641 = vsel %vm1211, %v6609, %v6577
      %v6643 = vsel %vm1211, %v6611, %v6579
      %v6645 = vsel %vm1211, %v6613, %v6581
      %v6647 = vsel %vm1211, %v6615, %v6583
      %v6648 = vld [vmem:[%s5] sm:$0xf]
      %v6649 = vld [vmem:[%s5 + $0x4] sm:$0x3]
      %v6650 = vld [vmem:[%s3454] sm:$0xf]
      %v6651 = vld [vmem:[%s3454 + $0x4] sm:$0xf]
      %v6652 = vld [vmem:[%s3454 + $0xc] sm:$0xf]
      %v6653 = vld [vmem:[%s3454 + $0x10] sm:$0xf]
      %v6654 = vld [vmem:[%s3454 + $0x18] sm:$0xf]
      %v6655 = vld [vmem:[%s3454 + $0x1c] sm:$0xf]
      %v6656 = vld [vmem:[%s3454 + $0x24] sm:$0xf]
      %v6657 = vld [vmem:[%s3454 + $0x28] sm:$0xf]
      %v6658 = vld [vmem:[%s3454 + $0x30] sm:$0xf]
      %v6659 = vld [vmem:[%s3454 + $0x34] sm:$0xf]
      %v6660 = vld [vmem:[%s3454 + $0x3c] sm:$0xf]
      %v6661 = vld [vmem:[%s3454 + $0x40] sm:$0xf]
      %v6662 = vld [vmem:[%s3454 + $0x48] sm:$0xf]
      %v6663 = vld [vmem:[%s3454 + $0x4c] sm:$0xf]
      %v6664 = vld [vmem:[%s3454 + $0x54] sm:$0xf]
      %v6665 = vld [vmem:[%s3454 + $0x58] sm:$0xf]
      %v6666 = vld [vmem:[%s3454 + $0x60] sm:$0xf]
      %v6667 = vld [vmem:[%s3454 + $0x64] sm:$0xf]
      %v6668 = vld [vmem:[%s3454 + $0x6c] sm:$0xf]
      %v6669 = vld [vmem:[%s3454 + $0x70] sm:$0xf]
      %v6670 = vld [vmem:[%s3454 + $0x78] sm:$0xf]
      %v6671 = vld [vmem:[%s3454 + $0x7c] sm:$0xf]
      %v6672 = vld [vmem:[%s3454 + $0x84] sm:$0xf]
      %v6673 = vld [vmem:[%s3454 + $0x88] sm:$0xf]
      %v6674 = vld [vmem:[%s3454 + $0x90] sm:$0xf]
      %v6675 = vld [vmem:[%s3454 + $0x94] sm:$0xf]
      %v6676 = vld [vmem:[%s3454 + $0x9c] sm:$0xf]
      %v6677 = vld [vmem:[%s3454 + $0xa0] sm:$0xf]
      %v6678 = vld [vmem:[%s3454 + $0xa8] sm:$0xf]
      %v6679 = vld [vmem:[%s3454 + $0xac] sm:$0xf]
      %v6680 = vld [vmem:[%s3454 + $0xb4] sm:$0xf]
      %v6681 = vld [vmem:[%s3454 + $0xb8] sm:$0xf]
      %v6682 = vld [vmem:[%s3454 + $0x8] sm:$0x1]
      %v6683 = vld [vmem:[%s3454 + $0x14] sm:$0x1]
      %v6684 = vld [vmem:[%s3454 + $0x20] sm:$0x1]
      %v6685 = vld [vmem:[%s3454 + $0x2c] sm:$0x1]
      %v6686 = vld [vmem:[%s3454 + $0x38] sm:$0x1]
      %v6687 = vld [vmem:[%s3454 + $0x44] sm:$0x1]
      %v6688 = vld [vmem:[%s3454 + $0x50] sm:$0x1]
      %v6689 = vld [vmem:[%s3454 + $0x5c] sm:$0x1]
      %v6690 = vld [vmem:[%s3454 + $0x68] sm:$0x1]
      %v6691 = vld [vmem:[%s3454 + $0x74] sm:$0x1]
      %v6692 = vld [vmem:[%s3454 + $0x80] sm:$0x1]
      %v6693 = vld [vmem:[%s3454 + $0x8c] sm:$0x1]
      %v6694 = vld [vmem:[%s3454 + $0x98] sm:$0x1]
      %v6695 = vld [vmem:[%s3454 + $0xa4] sm:$0x1]
      %v6696 = vld [vmem:[%s3454 + $0xb0] sm:$0x1]
      %v6697 = vld [vmem:[%s3454 + $0xbc] sm:$0x1]
      %v6698 = vld [vmem:[%s3454] sm:$0xe]
      %v6699 = vld [vmem:[%s3454 + $0xc] sm:$0xe]
      %v6700 = vld [vmem:[%s3454 + $0x18] sm:$0xe]
      %v6701 = vld [vmem:[%s3454 + $0x24] sm:$0xe]
      %v6702 = vld [vmem:[%s3454 + $0x30] sm:$0xe]
      %v6703 = vld [vmem:[%s3454 + $0x3c] sm:$0xe]
      %v6704 = vld [vmem:[%s3454 + $0x48] sm:$0xe]
      %v6705 = vld [vmem:[%s3454 + $0x54] sm:$0xe]
      %v6706 = vld [vmem:[%s3454 + $0x60] sm:$0xe]
      %v6707 = vld [vmem:[%s3454 + $0x6c] sm:$0xe]
      %v6708 = vld [vmem:[%s3454 + $0x78] sm:$0xe]
      %v6709 = vld [vmem:[%s3454 + $0x84] sm:$0xe]
      %v6710 = vld [vmem:[%s3454 + $0x90] sm:$0xe]
      %v6711 = vld [vmem:[%s3454 + $0x9c] sm:$0xe]
      %v6712 = vld [vmem:[%s3454 + $0xa8] sm:$0xe]
      %v6713 = vld [vmem:[%s3454 + $0xb4] sm:$0xe]
      %v6746 = vunpack.c.l.b16 %v6650
      %v6747 = vunpack.c.l.b16 %v6651
      %v6748 = vunpack.c.l.b16 %v6652
      %v6749 = vunpack.c.l.b16 %v6653
      %v6750 = vunpack.c.l.b16 %v6654
      %v6751 = vunpack.c.l.b16 %v6655
      %v6752 = vunpack.c.l.b16 %v6656
      %v6753 = vunpack.c.l.b16 %v6657
      %v6754 = vunpack.c.l.b16 %v6658
      %v6755 = vunpack.c.l.b16 %v6659
      %v6756 = vunpack.c.l.b16 %v6660
      %v6757 = vunpack.c.l.b16 %v6661
      %v6758 = vunpack.c.l.b16 %v6662
      %v6759 = vunpack.c.l.b16 %v6663
      %v6760 = vunpack.c.l.b16 %v6664
      %v6761 = vunpack.c.l.b16 %v6665
      %v6762 = vunpack.c.l.b16 %v6666
      %v6763 = vunpack.c.l.b16 %v6667
      %v6764 = vunpack.c.l.b16 %v6668
      %v6765 = vunpack.c.l.b16 %v6669
      %v6766 = vunpack.c.l.b16 %v6670
      %v6767 = vunpack.c.l.b16 %v6671
      %v6768 = vunpack.c.l.b16 %v6672
      %v6769 = vunpack.c.l.b16 %v6673
      %v6770 = vunpack.c.l.b16 %v6674
      %v6771 = vunpack.c.l.b16 %v6675
      %v6772 = vunpack.c.l.b16 %v6676
      %v6773 = vunpack.c.l.b16 %v6677
      %v6774 = vunpack.c.l.b16 %v6678
      %v6775 = vunpack.c.l.b16 %v6679
      %v6776 = vunpack.c.l.b16 %v6680
      %v6777 = vunpack.c.l.b16 %v6681
      %v6778 = vpack.c.b16 %v6747, %v6746
      %v6779 = vpack.c.b16 %v6749, %v6748
      %v6780 = vpack.c.b16 %v6751, %v6750
      %v6781 = vpack.c.b16 %v6753, %v6752
      %v6782 = vpack.c.b16 %v6755, %v6754
      %v6783 = vpack.c.b16 %v6757, %v6756
      %v6784 = vpack.c.b16 %v6759, %v6758
      %v6785 = vpack.c.b16 %v6761, %v6760
      %v6786 = vpack.c.b16 %v6763, %v6762
      %v6787 = vpack.c.b16 %v6765, %v6764
      %v6788 = vpack.c.b16 %v6767, %v6766
      %v6789 = vpack.c.b16 %v6769, %v6768
      %v6790 = vpack.c.b16 %v6771, %v6770
      %v6791 = vpack.c.b16 %v6773, %v6772
      %v6792 = vpack.c.b16 %v6775, %v6774
      %v6793 = vpack.c.b16 %v6777, %v6776
      %v6810 = vunpack.c.l.b16 %v6682
      %v6811 = vunpack.c.l.b16 %v6683
      %v6812 = vunpack.c.l.b16 %v6684
      %v6813 = vunpack.c.l.b16 %v6685
      %v6814 = vunpack.c.l.b16 %v6686
      %v6815 = vunpack.c.l.b16 %v6687
      %v6816 = vunpack.c.l.b16 %v6688
      %v6817 = vunpack.c.l.b16 %v6689
      %v6818 = vunpack.c.l.b16 %v6690
      %v6819 = vunpack.c.l.b16 %v6691
      %v6820 = vunpack.c.l.b16 %v6692
      %v6821 = vunpack.c.l.b16 %v6693
      %v6822 = vunpack.c.l.b16 %v6694
      %v6823 = vunpack.c.l.b16 %v6695
      %v6824 = vunpack.c.l.b16 %v6696
      %v6825 = vunpack.c.l.b16 %v6697
      %v6826 = vpack.c.b16 %v6810, %v6810
      %v6827 = vpack.c.b16 %v6811, %v6811
      %v6828 = vpack.c.b16 %v6812, %v6812
      %v6829 = vpack.c.b16 %v6813, %v6813
      %v6830 = vpack.c.b16 %v6814, %v6814
      %v6831 = vpack.c.b16 %v6815, %v6815
      %v6832 = vpack.c.b16 %v6816, %v6816
      %v6833 = vpack.c.b16 %v6817, %v6817
      %v6834 = vpack.c.b16 %v6818, %v6818
      %v6835 = vpack.c.b16 %v6819, %v6819
      %v6836 = vpack.c.b16 %v6820, %v6820
      %v6837 = vpack.c.b16 %v6821, %v6821
      %v6838 = vpack.c.b16 %v6822, %v6822
      %v6839 = vpack.c.b16 %v6823, %v6823
      %v6840 = vpack.c.b16 %v6824, %v6824
      %v6841 = vpack.c.b16 %v6825, %v6825
      %v6843 = vshrl.u32 %v6778, 16
      %v6845 = vshll.u32 %v6778, 16
      %v6847 = vrot.slane %v6845, 1
      %v6848 = vor.u32 %v6843, %v6847
      %v6850 = vshll.u32 %v6826, 16
      %v6852 = vrot.slane %v6850, 1
      %v6853 = vsel %vm3759, %v6848, %v6852
      %v6855 = vshrl.u32 %v6779, 16
      %v6857 = vshll.u32 %v6779, 16
      %v6859 = vrot.slane %v6857, 1
      %v6860 = vor.u32 %v6855, %v6859
      %v6862 = vshll.u32 %v6827, 16
      %v6864 = vrot.slane %v6862, 1
      %v6865 = vsel %vm3759, %v6860, %v6864
      %v6867 = vshrl.u32 %v6780, 16
      %v6869 = vshll.u32 %v6780, 16
      %v6871 = vrot.slane %v6869, 1
      %v6872 = vor.u32 %v6867, %v6871
      %v6874 = vshll.u32 %v6828, 16
      %v6876 = vrot.slane %v6874, 1
      %v6877 = vsel %vm3759, %v6872, %v6876
      %v6879 = vshrl.u32 %v6781, 16
      %v6881 = vshll.u32 %v6781, 16
      %v6883 = vrot.slane %v6881, 1
      %v6884 = vor.u32 %v6879, %v6883
      %v6886 = vshll.u32 %v6829, 16
      %v6888 = vrot.slane %v6886, 1
      %v6889 = vsel %vm3759, %v6884, %v6888
      %v6891 = vshrl.u32 %v6782, 16
      %v6893 = vshll.u32 %v6782, 16
      %v6895 = vrot.slane %v6893, 1
      %v6896 = vor.u32 %v6891, %v6895
      %v6898 = vshll.u32 %v6830, 16
      %v6900 = vrot.slane %v6898, 1
      %v6901 = vsel %vm3759, %v6896, %v6900
      %v6903 = vshrl.u32 %v6783, 16
      %v6905 = vshll.u32 %v6783, 16
      %v6907 = vrot.slane %v6905, 1
      %v6908 = vor.u32 %v6903, %v6907
      %v6910 = vshll.u32 %v6831, 16
      %v6912 = vrot.slane %v6910, 1
      %v6913 = vsel %vm3759, %v6908, %v6912
      %v6915 = vshrl.u32 %v6784, 16
      %v6917 = vshll.u32 %v6784, 16
      %v6919 = vrot.slane %v6917, 1
      %v6920 = vor.u32 %v6915, %v6919
      %v6922 = vshll.u32 %v6832, 16
      %v6924 = vrot.slane %v6922, 1
      %v6925 = vsel %vm3759, %v6920, %v6924
      %v6927 = vshrl.u32 %v6785, 16
      %v6929 = vshll.u32 %v6785, 16
      %v6931 = vrot.slane %v6929, 1
      %v6932 = vor.u32 %v6927, %v6931
      %v6934 = vshll.u32 %v6833, 16
      %v6936 = vrot.slane %v6934, 1
      %v6937 = vsel %vm3759, %v6932, %v6936
      %v6939 = vshrl.u32 %v6786, 16
      %v6941 = vshll.u32 %v6786, 16
      %v6943 = vrot.slane %v6941, 1
      %v6944 = vor.u32 %v6939, %v6943
      %v6946 = vshll.u32 %v6834, 16
      %v6948 = vrot.slane %v6946, 1
      %v6949 = vsel %vm3759, %v6944, %v6948
      %v6951 = vshrl.u32 %v6787, 16
      %v6953 = vshll.u32 %v6787, 16
      %v6955 = vrot.slane %v6953, 1
      %v6956 = vor.u32 %v6951, %v6955
      %v6958 = vshll.u32 %v6835, 16
      %v6960 = vrot.slane %v6958, 1
      %v6961 = vsel %vm3759, %v6956, %v6960
      %v6963 = vshrl.u32 %v6788, 16
      %v6965 = vshll.u32 %v6788, 16
      %v6967 = vrot.slane %v6965, 1
      %v6968 = vor.u32 %v6963, %v6967
      %v6970 = vshll.u32 %v6836, 16
      %v6972 = vrot.slane %v6970, 1
      %v6973 = vsel %vm3759, %v6968, %v6972
      %v6975 = vshrl.u32 %v6789, 16
      %v6977 = vshll.u32 %v6789, 16
      %v6979 = vrot.slane %v6977, 1
      %v6980 = vor.u32 %v6975, %v6979
      %v6982 = vshll.u32 %v6837, 16
      %v6984 = vrot.slane %v6982, 1
      %v6985 = vsel %vm3759, %v6980, %v6984
      %v6987 = vshrl.u32 %v6790, 16
      %v6989 = vshll.u32 %v6790, 16
      %v6991 = vrot.slane %v6989, 1
      %v6992 = vor.u32 %v6987, %v6991
      %v6994 = vshll.u32 %v6838, 16
      %v6996 = vrot.slane %v6994, 1
      %v6997 = vsel %vm3759, %v6992, %v6996
      %v6999 = vshrl.u32 %v6791, 16
      %v7001 = vshll.u32 %v6791, 16
      %v7003 = vrot.slane %v7001, 1
      %v7004 = vor.u32 %v6999, %v7003
      %v7006 = vshll.u32 %v6839, 16
      %v7008 = vrot.slane %v7006, 1
      %v7009 = vsel %vm3759, %v7004, %v7008
      %v7011 = vshrl.u32 %v6792, 16
      %v7013 = vshll.u32 %v6792, 16
      %v7015 = vrot.slane %v7013, 1
      %v7016 = vor.u32 %v7011, %v7015
      %v7018 = vshll.u32 %v6840, 16
      %v7020 = vrot.slane %v7018, 1
      %v7021 = vsel %vm3759, %v7016, %v7020
      %v7023 = vshrl.u32 %v6793, 16
      %v7025 = vshll.u32 %v6793, 16
      %v7027 = vrot.slane %v7025, 1
      %v7028 = vor.u32 %v7023, %v7027
      %v7030 = vshll.u32 %v6841, 16
      %v7032 = vrot.slane %v7030, 1
      %v7033 = vsel %vm3759, %v7028, %v7032
      %7034 = vrot.lane.b32.xlu0 %v6853, 4
      %v7035 = vpop.permute.xlu0 %7034
      %7036 = vrot.lane.b32.xlu0 %v6865, 4
      %v7037 = vpop.permute.xlu0 %7036
      %7038 = vrot.lane.b32.xlu0 %v6877, 4
      %v7039 = vpop.permute.xlu0 %7038
      %7040 = vrot.lane.b32.xlu0 %v6889, 4
      %v7041 = vpop.permute.xlu0 %7040
      %7042 = vrot.lane.b32.xlu0 %v6901, 4
      %v7043 = vpop.permute.xlu0 %7042
      %7044 = vrot.lane.b32.xlu0 %v6913, 4
      %v7045 = vpop.permute.xlu0 %7044
      %7046 = vrot.lane.b32.xlu0 %v6925, 4
      %v7047 = vpop.permute.xlu0 %7046
      %7048 = vrot.lane.b32.xlu0 %v6937, 4
      %v7049 = vpop.permute.xlu0 %7048
      %7050 = vrot.lane.b32.xlu0 %v6949, 4
      %v7051 = vpop.permute.xlu0 %7050
      %7052 = vrot.lane.b32.xlu0 %v6961, 4
      %v7053 = vpop.permute.xlu0 %7052
      %7054 = vrot.lane.b32.xlu0 %v6973, 4
      %v7055 = vpop.permute.xlu0 %7054
      %7056 = vrot.lane.b32.xlu0 %v6985, 4
      %v7057 = vpop.permute.xlu0 %7056
      %7058 = vrot.lane.b32.xlu0 %v6997, 4
      %v7059 = vpop.permute.xlu0 %7058
      %7060 = vrot.lane.b32.xlu0 %v7009, 4
      %v7061 = vpop.permute.xlu0 %7060
      %7062 = vrot.lane.b32.xlu0 %v7021, 4
      %v7063 = vpop.permute.xlu0 %7062
      %7064 = vrot.lane.b32.xlu0 %v7033, 4
      %v7065 = vpop.permute.xlu0 %7064
      %v7082 = vunpack.c.l.b16 %v6698
      %v7083 = vunpack.c.l.b16 %v6699
      %v7084 = vunpack.c.l.b16 %v6700
      %v7085 = vunpack.c.l.b16 %v6701
      %v7086 = vunpack.c.l.b16 %v6702
      %v7087 = vunpack.c.l.b16 %v6703
      %v7088 = vunpack.c.l.b16 %v6704
      %v7089 = vunpack.c.l.b16 %v6705
      %v7090 = vunpack.c.l.b16 %v6706
      %v7091 = vunpack.c.l.b16 %v6707
      %v7092 = vunpack.c.l.b16 %v6708
      %v7093 = vunpack.c.l.b16 %v6709
      %v7094 = vunpack.c.l.b16 %v6710
      %v7095 = vunpack.c.l.b16 %v6711
      %v7096 = vunpack.c.l.b16 %v6712
      %v7097 = vunpack.c.l.b16 %v6713
      %v7098 = vpack.c.b16 %v6747, %v7082
      %v7099 = vpack.c.b16 %v6749, %v7083
      %v7100 = vpack.c.b16 %v6751, %v7084
      %v7101 = vpack.c.b16 %v6753, %v7085
      %v7102 = vpack.c.b16 %v6755, %v7086
      %v7103 = vpack.c.b16 %v6757, %v7087
      %v7104 = vpack.c.b16 %v6759, %v7088
      %v7105 = vpack.c.b16 %v6761, %v7089
      %v7106 = vpack.c.b16 %v6763, %v7090
      %v7107 = vpack.c.b16 %v6765, %v7091
      %v7108 = vpack.c.b16 %v6767, %v7092
      %v7109 = vpack.c.b16 %v6769, %v7093
      %v7110 = vpack.c.b16 %v6771, %v7094
      %v7111 = vpack.c.b16 %v6773, %v7095
      %v7112 = vpack.c.b16 %v6775, %v7096
      %v7113 = vpack.c.b16 %v6777, %v7097
      %v7114 = vrot.slane %v7098, 1
      %v7115 = vrot.slane %v6826, 1
      %v7116 = vsel %vm4032, %v7114, %v7115
      %v7117 = vrot.slane %v7099, 1
      %v7118 = vrot.slane %v6827, 1
      %v7119 = vsel %vm4032, %v7117, %v7118
      %v7120 = vrot.slane %v7100, 1
      %v7121 = vrot.slane %v6828, 1
      %v7122 = vsel %vm4032, %v7120, %v7121
      %v7123 = vrot.slane %v7101, 1
      %v7124 = vrot.slane %v6829, 1
      %v7125 = vsel %vm4032, %v7123, %v7124
      %v7126 = vrot.slane %v7102, 1
      %v7127 = vrot.slane %v6830, 1
      %v7128 = vsel %vm4032, %v7126, %v7127
      %v7129 = vrot.slane %v7103, 1
      %v7130 = vrot.slane %v6831, 1
      %v7131 = vsel %vm4032, %v7129, %v7130
      %v7132 = vrot.slane %v7104, 1
      %v7133 = vrot.slane %v6832, 1
      %v7134 = vsel %vm4032, %v7132, %v7133
      %v7135 = vrot.slane %v7105, 1
      %v7136 = vrot.slane %v6833, 1
      %v7137 = vsel %vm4032, %v7135, %v7136
      %v7138 = vrot.slane %v7106, 1
      %v7139 = vrot.slane %v6834, 1
      %v7140 = vsel %vm4032, %v7138, %v7139
      %v7141 = vrot.slane %v7107, 1
      %v7142 = vrot.slane %v6835, 1
      %v7143 = vsel %vm4032, %v7141, %v7142
      %v7144 = vrot.slane %v7108, 1
      %v7145 = vrot.slane %v6836, 1
      %v7146 = vsel %vm4032, %v7144, %v7145
      %v7147 = vrot.slane %v7109, 1
      %v7148 = vrot.slane %v6837, 1
      %v7149 = vsel %vm4032, %v7147, %v7148
      %v7150 = vrot.slane %v7110, 1
      %v7151 = vrot.slane %v6838, 1
      %v7152 = vsel %vm4032, %v7150, %v7151
      %v7153 = vrot.slane %v7111, 1
      %v7154 = vrot.slane %v6839, 1
      %v7155 = vsel %vm4032, %v7153, %v7154
      %v7156 = vrot.slane %v7112, 1
      %v7157 = vrot.slane %v6840, 1
      %v7158 = vsel %vm4032, %v7156, %v7157
      %v7159 = vrot.slane %v7113, 1
      %v7160 = vrot.slane %v6841, 1
      %v7161 = vsel %vm4032, %v7159, %v7160
      %7162 = vrot.lane.b32.xlu0 %v7116, 8
      %v7163 = vpop.permute.xlu0 %7162
      %7164 = vrot.lane.b32.xlu0 %v7119, 8
      %v7165 = vpop.permute.xlu0 %7164
      %7166 = vrot.lane.b32.xlu0 %v7122, 8
      %v7167 = vpop.permute.xlu0 %7166
      %7168 = vrot.lane.b32.xlu0 %v7125, 8
      %v7169 = vpop.permute.xlu0 %7168
      %7170 = vrot.lane.b32.xlu0 %v7128, 8
      %v7171 = vpop.permute.xlu0 %7170
      %7172 = vrot.lane.b32.xlu0 %v7131, 8
      %v7173 = vpop.permute.xlu0 %7172
      %7174 = vrot.lane.b32.xlu0 %v7134, 8
      %v7175 = vpop.permute.xlu0 %7174
      %7176 = vrot.lane.b32.xlu0 %v7137, 8
      %v7177 = vpop.permute.xlu0 %7176
      %7178 = vrot.lane.b32.xlu0 %v7140, 8
      %v7179 = vpop.permute.xlu0 %7178
      %7180 = vrot.lane.b32.xlu0 %v7143, 8
      %v7181 = vpop.permute.xlu0 %7180
      %7182 = vrot.lane.b32.xlu0 %v7146, 8
      %v7183 = vpop.permute.xlu0 %7182
      %7184 = vrot.lane.b32.xlu0 %v7149, 8
      %v7185 = vpop.permute.xlu0 %7184
      %7186 = vrot.lane.b32.xlu0 %v7152, 8
      %v7187 = vpop.permute.xlu0 %7186
      %7188 = vrot.lane.b32.xlu0 %v7155, 8
      %v7189 = vpop.permute.xlu0 %7188
      %7190 = vrot.lane.b32.xlu0 %v7158, 8
      %v7191 = vpop.permute.xlu0 %7190
      %7192 = vrot.lane.b32.xlu0 %v7161, 8
      %v7193 = vpop.permute.xlu0 %7192
      %v7195 = vsel %vm4113, %v6778, %v7035
      %v7197 = vsel %vm4113, %v6779, %v7037
      %v7199 = vsel %vm4113, %v6780, %v7039
      %v7201 = vsel %vm4113, %v6781, %v7041
      %v7203 = vsel %vm4113, %v6782, %v7043
      %v7205 = vsel %vm4113, %v6783, %v7045
      %v7207 = vsel %vm4113, %v6784, %v7047
      %v7209 = vsel %vm4113, %v6785, %v7049
      %v7211 = vsel %vm4113, %v6786, %v7051
      %v7213 = vsel %vm4113, %v6787, %v7053
      %v7215 = vsel %vm4113, %v6788, %v7055
      %v7217 = vsel %vm4113, %v6789, %v7057
      %v7219 = vsel %vm4113, %v6790, %v7059
      %v7221 = vsel %vm4113, %v6791, %v7061
      %v7223 = vsel %vm4113, %v6792, %v7063
      %v7225 = vsel %vm4113, %v6793, %v7065
      %v7227 = vsel %vm1211, %v7195, %v7163
      %v7229 = vsel %vm1211, %v7197, %v7165
      %v7231 = vsel %vm1211, %v7199, %v7167
      %v7233 = vsel %vm1211, %v7201, %v7169
      %v7235 = vsel %vm1211, %v7203, %v7171
      %v7237 = vsel %vm1211, %v7205, %v7173
      %v7239 = vsel %vm1211, %v7207, %v7175
      %v7241 = vsel %vm1211, %v7209, %v7177
      %v7243 = vsel %vm1211, %v7211, %v7179
      %v7245 = vsel %vm1211, %v7213, %v7181
      %v7247 = vsel %vm1211, %v7215, %v7183
      %v7249 = vsel %vm1211, %v7217, %v7185
      %v7251 = vsel %vm1211, %v7219, %v7187
      %v7253 = vsel %vm1211, %v7221, %v7189
      %v7255 = vsel %vm1211, %v7223, %v7191
      %v7257 = vsel %vm1211, %v7225, %v7193
      %s7258 = scalar_lea.vmem %s5, 8
      %v7259 = vld [vmem:[%s7258] sm:$0xf]
      %v7260 = vld [vmem:[%s7258 + $0x4] sm:$0x3]
      %v7263 = vunpack.c.l.b16 %v7259
      %v7264 = vunpack.c.l.b16 %v7260
      %v7265 = vpack.c.b16 %v7264, %v7263
      %v7266 = vsel %vm4796, %v7227, 0
      %v7268 = vsel %vm4796, %v7229, 0
      %v7270 = vsel %vm4796, %v7231, 0
      %v7272 = vsel %vm4796, %v7233, 0
      %v7274 = vsel %vm4796, %v7235, 0
      %v7276 = vsel %vm4796, %v7237, 0
      %v7278 = vsel %vm4796, %v7239, 0
      %v7280 = vsel %vm4796, %v7241, 0
      %v7282 = vsel %vm4796, %v7243, 0
      %v7284 = vsel %vm4796, %v7245, 0
      %v7286 = vsel %vm4796, %v7247, 0
      %v7288 = vsel %vm4796, %v7249, 0
      %v7290 = vsel %vm4796, %v7251, 0
      %v7292 = vsel %vm4796, %v7253, 0
      %v7294 = vsel %vm4796, %v7255, 0
      %v7296 = vsel %vm4796, %v7257, 0
      %v7299 = vsel %vm4829, %v7265, 0
      %7301 = vmatprep.subr.bf16.mxu0 0
      %7302 = vmatpush1.bf16.msra.mxu0 0
      %7303 = vmatprep.subr.bf16.mxu0 0
      %7304 = vmatpush1.bf16.msra.mxu0 0
      %7305 = vmatprep.subr.bf16.mxu0 0
      %7306 = vmatpush1.bf16.msra.mxu0 0
      %7307 = vmatprep.subr.bf16.mxu0 0
      %7308 = vmatpush1.bf16.msra.mxu0 0
      %7309 = vmatprep.subr.bf16.mxu0 0
      %7310 = vmatpush1.bf16.msra.mxu0 0
      %7311 = vmatprep.subr.bf16.mxu0 0
      %7312 = vmatpush1.bf16.msra.mxu0 0
      %7313 = vmatprep.subr.bf16.mxu0 0
      %7314 = vmatpush1.bf16.msra.mxu0 0
      %7315 = vmatprep.subr.bf16.mxu0 0
      %7316 = vmatpush1.bf16.msra.mxu0 %v7299
      %7317 = vmatprep.subr.bf16.mxu0 0
      %7318 = vmatpush2.bf16.msra.mxu0 0
      %7319 = vmatprep.subr.bf16.mxu0 0
      %7320 = vmatpush2.bf16.msra.mxu0 0
      %7321 = vmatprep.subr.bf16.mxu0 0
      %7322 = vmatpush2.bf16.msra.mxu0 0
      %7323 = vmatprep.subr.bf16.mxu0 0
      %7324 = vmatpush2.bf16.msra.mxu0 0
      %7325 = vmatprep.subr.bf16.mxu0 0
      %7326 = vmatpush2.bf16.msra.mxu0 0
      %7327 = vmatprep.subr.bf16.mxu0 0
      %7328 = vmatpush2.bf16.msra.mxu0 0
      %7329 = vmatprep.subr.bf16.mxu0 0
      %7330 = vmatpush2.bf16.msra.mxu0 0
      %7331 = vmatprep.subr.bf16.mxu0 0
      %7332 = vmatpush2.bf16.msra.mxu0 0
      %7333 = vmatprep.mubr.bf16.mxu0 0
      %7334 = vmatmul.mubr.bf16.gmra.mxu0 %v7266
      %v7335 = vpop.f32.mrf.mxu0
      %v7336 = vadd.f32 0.0, %v7335
      %v7337 = vpop.f32.mrf.mxu0
      %v7338 = vpop.f32.mrf.mxu0
      %v7339 = vadd.f32 0.0, %v7338
      %v7340 = vpop.f32.mrf.mxu0
      %7341 = vmatprep.mubr.bf16.mxu0 0
      %7342 = vmatmul.mubr.bf16.gmra.mxu0 %v7268
      %v7343 = vpop.f32.mrf.mxu0
      %v7344 = vadd.f32 0.0, %v7343
      %v7345 = vpop.f32.mrf.mxu0
      %v7346 = vpop.f32.mrf.mxu0
      %v7347 = vadd.f32 0.0, %v7346
      %v7348 = vpop.f32.mrf.mxu0
      %7349 = vmatprep.mubr.bf16.mxu0 0
      %7350 = vmatmul.mubr.bf16.gmra.mxu0 %v7270
      %v7351 = vpop.f32.mrf.mxu0
      %v7352 = vadd.f32 0.0, %v7351
      %v7353 = vpop.f32.mrf.mxu0
      %v7354 = vpop.f32.mrf.mxu0
      %v7355 = vadd.f32 0.0, %v7354
      %v7356 = vpop.f32.mrf.mxu0
      %7357 = vmatprep.mubr.bf16.mxu0 0
      %7358 = vmatmul.mubr.bf16.gmra.mxu0 %v7272
      %v7359 = vpop.f32.mrf.mxu0
      %v7360 = vadd.f32 0.0, %v7359
      %v7361 = vpop.f32.mrf.mxu0
      %v7362 = vpop.f32.mrf.mxu0
      %v7363 = vadd.f32 0.0, %v7362
      %v7364 = vpop.f32.mrf.mxu0
      %7365 = vmatprep.mubr.bf16.mxu0 0
      %7366 = vmatmul.mubr.bf16.gmra.mxu0 %v7274
      %v7367 = vpop.f32.mrf.mxu0
      %v7368 = vadd.f32 0.0, %v7367
      %v7369 = vpop.f32.mrf.mxu0
      %v7370 = vpop.f32.mrf.mxu0
      %v7371 = vadd.f32 0.0, %v7370
      %v7372 = vpop.f32.mrf.mxu0
      %7373 = vmatprep.mubr.bf16.mxu0 0
      %7374 = vmatmul.mubr.bf16.gmra.mxu0 %v7276
      %v7375 = vpop.f32.mrf.mxu0
      %v7376 = vadd.f32 0.0, %v7375
      %v7377 = vpop.f32.mrf.mxu0
      %v7378 = vpop.f32.mrf.mxu0
      %v7379 = vadd.f32 0.0, %v7378
      %v7380 = vpop.f32.mrf.mxu0
      %7381 = vmatprep.mubr.bf16.mxu0 0
      %7382 = vmatmul.mubr.bf16.gmra.mxu0 %v7278
      %v7383 = vpop.f32.mrf.mxu0
      %v7384 = vadd.f32 0.0, %v7383
      %v7385 = vpop.f32.mrf.mxu0
      %v7386 = vpop.f32.mrf.mxu0
      %v7387 = vadd.f32 0.0, %v7386
      %v7388 = vpop.f32.mrf.mxu0
      %7389 = vmatprep.mubr.bf16.mxu0 0
      %7390 = vmatmul.mubr.bf16.gmra.mxu0 %v7280
      %v7391 = vpop.f32.mrf.mxu0
      %v7392 = vadd.f32 0.0, %v7391
      %v7393 = vpop.f32.mrf.mxu0
      %v7394 = vpop.f32.mrf.mxu0
      %v7395 = vadd.f32 0.0, %v7394
      %v7396 = vpop.f32.mrf.mxu0
      %7397 = vmatprep.mubr.bf16.mxu0 0
      %7398 = vmatmul.mubr.bf16.gmra.mxu0 %v7282
      %v7399 = vpop.f32.mrf.mxu0
      %v7400 = vadd.f32 0.0, %v7399
      %v7401 = vpop.f32.mrf.mxu0
      %v7402 = vpop.f32.mrf.mxu0
      %v7403 = vadd.f32 0.0, %v7402
      %v7404 = vpop.f32.mrf.mxu0
      %7405 = vmatprep.mubr.bf16.mxu0 0
      %7406 = vmatmul.mubr.bf16.gmra.mxu0 %v7284
      %v7407 = vpop.f32.mrf.mxu0
      %v7408 = vadd.f32 0.0, %v7407
      %v7409 = vpop.f32.mrf.mxu0
      %v7410 = vpop.f32.mrf.mxu0
      %v7411 = vadd.f32 0.0, %v7410
      %v7412 = vpop.f32.mrf.mxu0
      %7413 = vmatprep.mubr.bf16.mxu0 0
      %7414 = vmatmul.mubr.bf16.gmra.mxu0 %v7286
      %v7415 = vpop.f32.mrf.mxu0
      %v7416 = vadd.f32 0.0, %v7415
      %v7417 = vpop.f32.mrf.mxu0
      %v7418 = vpop.f32.mrf.mxu0
      %v7419 = vadd.f32 0.0, %v7418
      %v7420 = vpop.f32.mrf.mxu0
      %7421 = vmatprep.mubr.bf16.mxu0 0
      %7422 = vmatmul.mubr.bf16.gmra.mxu0 %v7288
      %v7423 = vpop.f32.mrf.mxu0
      %v7424 = vadd.f32 0.0, %v7423
      %v7425 = vpop.f32.mrf.mxu0
      %v7426 = vpop.f32.mrf.mxu0
      %v7427 = vadd.f32 0.0, %v7426
      %v7428 = vpop.f32.mrf.mxu0
      %7429 = vmatprep.mubr.bf16.mxu0 0
      %7430 = vmatmul.mubr.bf16.gmra.mxu0 %v7290
      %v7431 = vpop.f32.mrf.mxu0
      %v7432 = vadd.f32 0.0, %v7431
      %v7433 = vpop.f32.mrf.mxu0
      %v7434 = vpop.f32.mrf.mxu0
      %v7435 = vadd.f32 0.0, %v7434
      %v7436 = vpop.f32.mrf.mxu0
      %7437 = vmatprep.mubr.bf16.mxu0 0
      %7438 = vmatmul.mubr.bf16.gmra.mxu0 %v7292
      %v7439 = vpop.f32.mrf.mxu0
      %v7440 = vadd.f32 0.0, %v7439
      %v7441 = vpop.f32.mrf.mxu0
      %v7442 = vpop.f32.mrf.mxu0
      %v7443 = vadd.f32 0.0, %v7442
      %v7444 = vpop.f32.mrf.mxu0
      %7445 = vmatprep.mubr.bf16.mxu0 0
      %7446 = vmatmul.mubr.bf16.gmra.mxu0 %v7294
      %v7447 = vpop.f32.mrf.mxu0
      %v7448 = vadd.f32 0.0, %v7447
      %v7449 = vpop.f32.mrf.mxu0
      %v7450 = vpop.f32.mrf.mxu0
      %v7451 = vadd.f32 0.0, %v7450
      %v7452 = vpop.f32.mrf.mxu0
      %7453 = vmatprep.mubr.bf16.mxu0 0
      %7454 = vmatmul.mubr.bf16.gmra.mxu0 %v7296
      %v7455 = vpop.f32.mrf.mxu0
      %v7456 = vadd.f32 0.0, %v7455
      %v7457 = vpop.f32.mrf.mxu0
      %v7458 = vpop.f32.mrf.mxu0
      %v7459 = vadd.f32 0.0, %v7458
      %v7460 = vpop.f32.mrf.mxu0
      %7461 = vdwg.mxu0
      %v7464 = vunpack.c.l.b16 %v6648
      %v7465 = vunpack.c.l.b16 %v6649
      %v7466 = vpack.c.b16 %v7465, %v7464
      %v7467 = vsel %vm4796, %v6617, 0
      %v7469 = vsel %vm4796, %v6619, 0
      %v7471 = vsel %vm4796, %v6621, 0
      %v7473 = vsel %vm4796, %v6623, 0
      %v7475 = vsel %vm4796, %v6625, 0
      %v7477 = vsel %vm4796, %v6627, 0
      %v7479 = vsel %vm4796, %v6629, 0
      %v7481 = vsel %vm4796, %v6631, 0
      %v7483 = vsel %vm4796, %v6633, 0
      %v7485 = vsel %vm4796, %v6635, 0
      %v7487 = vsel %vm4796, %v6637, 0
      %v7489 = vsel %vm4796, %v6639, 0
      %v7491 = vsel %vm4796, %v6641, 0
      %v7493 = vsel %vm4796, %v6643, 0
      %v7495 = vsel %vm4796, %v6645, 0
      %v7497 = vsel %vm4796, %v6647, 0
      %v7500 = vsel %vm4829, %v7466, 0
      %7502 = vmatprep.subr.bf16.mxu0 0
      %7503 = vmatpush1.bf16.msra.mxu0 0
      %7504 = vmatprep.subr.bf16.mxu0 0
      %7505 = vmatpush1.bf16.msra.mxu0 0
      %7506 = vmatprep.subr.bf16.mxu0 0
      %7507 = vmatpush1.bf16.msra.mxu0 0
      %7508 = vmatprep.subr.bf16.mxu0 0
      %7509 = vmatpush1.bf16.msra.mxu0 0
      %7510 = vmatprep.subr.bf16.mxu0 0
      %7511 = vmatpush1.bf16.msra.mxu0 0
      %7512 = vmatprep.subr.bf16.mxu0 0
      %7513 = vmatpush1.bf16.msra.mxu0 0
      %7514 = vmatprep.subr.bf16.mxu0 0
      %7515 = vmatpush1.bf16.msra.mxu0 0
      %7516 = vmatprep.subr.bf16.mxu0 0
      %7517 = vmatpush1.bf16.msra.mxu0 %v7500
      %7518 = vmatprep.subr.bf16.mxu0 0
      %7519 = vmatpush2.bf16.msra.mxu0 0
      %7520 = vmatprep.subr.bf16.mxu0 0
      %7521 = vmatpush2.bf16.msra.mxu0 0
      %7522 = vmatprep.subr.bf16.mxu0 0
      %7523 = vmatpush2.bf16.msra.mxu0 0
      %7524 = vmatprep.subr.bf16.mxu0 0
      %7525 = vmatpush2.bf16.msra.mxu0 0
      %7526 = vmatprep.subr.bf16.mxu0 0
      %7527 = vmatpush2.bf16.msra.mxu0 0
      %7528 = vmatprep.subr.bf16.mxu0 0
      %7529 = vmatpush2.bf16.msra.mxu0 0
      %7530 = vmatprep.subr.bf16.mxu0 0
      %7531 = vmatpush2.bf16.msra.mxu0 0
      %7532 = vmatprep.subr.bf16.mxu0 0
      %7533 = vmatpush2.bf16.msra.mxu0 0
      %7534 = vmatprep.mubr.bf16.mxu0 0
      %7535 = vmatmul.mubr.bf16.gmra.mxu0 %v7467
      %v7536 = vpop.f32.mrf.mxu0
      %v7537 = vadd.f32 %v7336, %v7536
      %v7538 = vpop.f32.mrf.mxu0
      %v7539 = vpop.f32.mrf.mxu0
      %v7540 = vadd.f32 %v7339, %v7539
      %v7541 = vpop.f32.mrf.mxu0
      %7542 = vmatprep.mubr.bf16.mxu0 0
      %7543 = vmatmul.mubr.bf16.gmra.mxu0 %v7469
      %v7544 = vpop.f32.mrf.mxu0
      %v7545 = vadd.f32 %v7344, %v7544
      %v7546 = vpop.f32.mrf.mxu0
      %v7547 = vpop.f32.mrf.mxu0
      %v7548 = vadd.f32 %v7347, %v7547
      %v7549 = vpop.f32.mrf.mxu0
      %7550 = vmatprep.mubr.bf16.mxu0 0
      %7551 = vmatmul.mubr.bf16.gmra.mxu0 %v7471
      %v7552 = vpop.f32.mrf.mxu0
      %v7553 = vadd.f32 %v7352, %v7552
      %v7554 = vpop.f32.mrf.mxu0
      %v7555 = vpop.f32.mrf.mxu0
      %v7556 = vadd.f32 %v7355, %v7555
      %v7557 = vpop.f32.mrf.mxu0
      %7558 = vmatprep.mubr.bf16.mxu0 0
      %7559 = vmatmul.mubr.bf16.gmra.mxu0 %v7473
      %v7560 = vpop.f32.mrf.mxu0
      %v7561 = vadd.f32 %v7360, %v7560
      %v7562 = vpop.f32.mrf.mxu0
      %v7563 = vpop.f32.mrf.mxu0
      %v7564 = vadd.f32 %v7363, %v7563
      %v7565 = vpop.f32.mrf.mxu0
      %7566 = vmatprep.mubr.bf16.mxu0 0
      %7567 = vmatmul.mubr.bf16.gmra.mxu0 %v7475
      %v7568 = vpop.f32.mrf.mxu0
      %v7569 = vadd.f32 %v7368, %v7568
      %v7570 = vpop.f32.mrf.mxu0
      %v7571 = vpop.f32.mrf.mxu0
      %v7572 = vadd.f32 %v7371, %v7571
      %v7573 = vpop.f32.mrf.mxu0
      %7574 = vmatprep.mubr.bf16.mxu0 0
      %7575 = vmatmul.mubr.bf16.gmra.mxu0 %v7477
      %v7576 = vpop.f32.mrf.mxu0
      %v7577 = vadd.f32 %v7376, %v7576
      %v7578 = vpop.f32.mrf.mxu0
      %v7579 = vpop.f32.mrf.mxu0
      %v7580 = vadd.f32 %v7379, %v7579
      %v7581 = vpop.f32.mrf.mxu0
      %7582 = vmatprep.mubr.bf16.mxu0 0
      %7583 = vmatmul.mubr.bf16.gmra.mxu0 %v7479
      %v7584 = vpop.f32.mrf.mxu0
      %v7585 = vadd.f32 %v7384, %v7584
      %v7586 = vpop.f32.mrf.mxu0
      %v7587 = vpop.f32.mrf.mxu0
      %v7588 = vadd.f32 %v7387, %v7587
      %v7589 = vpop.f32.mrf.mxu0
      %7590 = vmatprep.mubr.bf16.mxu0 0
      %7591 = vmatmul.mubr.bf16.gmra.mxu0 %v7481
      %v7592 = vpop.f32.mrf.mxu0
      %v7593 = vadd.f32 %v7392, %v7592
      %v7594 = vpop.f32.mrf.mxu0
      %v7595 = vpop.f32.mrf.mxu0
      %v7596 = vadd.f32 %v7395, %v7595
      %v7597 = vpop.f32.mrf.mxu0
      %7598 = vmatprep.mubr.bf16.mxu0 0
      %7599 = vmatmul.mubr.bf16.gmra.mxu0 %v7483
      %v7600 = vpop.f32.mrf.mxu0
      %v7601 = vadd.f32 %v7400, %v7600
      %v7602 = vpop.f32.mrf.mxu0
      %v7603 = vpop.f32.mrf.mxu0
      %v7604 = vadd.f32 %v7403, %v7603
      %v7605 = vpop.f32.mrf.mxu0
      %7606 = vmatprep.mubr.bf16.mxu0 0
      %7607 = vmatmul.mubr.bf16.gmra.mxu0 %v7485
      %v7608 = vpop.f32.mrf.mxu0
      %v7609 = vadd.f32 %v7408, %v7608
      %v7610 = vpop.f32.mrf.mxu0
      %v7611 = vpop.f32.mrf.mxu0
      %v7612 = vadd.f32 %v7411, %v7611
      %v7613 = vpop.f32.mrf.mxu0
      %7614 = vmatprep.mubr.bf16.mxu0 0
      %7615 = vmatmul.mubr.bf16.gmra.mxu0 %v7487
      %v7616 = vpop.f32.mrf.mxu0
      %v7617 = vadd.f32 %v7416, %v7616
      %v7618 = vpop.f32.mrf.mxu0
      %v7619 = vpop.f32.mrf.mxu0
      %v7620 = vadd.f32 %v7419, %v7619
      %v7621 = vpop.f32.mrf.mxu0
      %7622 = vmatprep.mubr.bf16.mxu0 0
      %7623 = vmatmul.mubr.bf16.gmra.mxu0 %v7489
      %v7624 = vpop.f32.mrf.mxu0
      %v7625 = vadd.f32 %v7424, %v7624
      %v7626 = vpop.f32.mrf.mxu0
      %v7627 = vpop.f32.mrf.mxu0
      %v7628 = vadd.f32 %v7427, %v7627
      %v7629 = vpop.f32.mrf.mxu0
      %7630 = vmatprep.mubr.bf16.mxu0 0
      %7631 = vmatmul.mubr.bf16.gmra.mxu0 %v7491
      %v7632 = vpop.f32.mrf.mxu0
      %v7633 = vadd.f32 %v7432, %v7632
      %v7634 = vpop.f32.mrf.mxu0
      %v7635 = vpop.f32.mrf.mxu0
      %v7636 = vadd.f32 %v7435, %v7635
      %v7637 = vpop.f32.mrf.mxu0
      %7638 = vmatprep.mubr.bf16.mxu0 0
      %7639 = vmatmul.mubr.bf16.gmra.mxu0 %v7493
      %v7640 = vpop.f32.mrf.mxu0
      %v7641 = vadd.f32 %v7440, %v7640
      %v7642 = vpop.f32.mrf.mxu0
      %v7643 = vpop.f32.mrf.mxu0
      %v7644 = vadd.f32 %v7443, %v7643
      %v7645 = vpop.f32.mrf.mxu0
      %7646 = vmatprep.mubr.bf16.mxu0 0
      %7647 = vmatmul.mubr.bf16.gmra.mxu0 %v7495
      %v7648 = vpop.f32.mrf.mxu0
      %v7649 = vadd.f32 %v7448, %v7648
      %v7650 = vpop.f32.mrf.mxu0
      %v7651 = vpop.f32.mrf.mxu0
      %v7652 = vadd.f32 %v7451, %v7651
      %v7653 = vpop.f32.mrf.mxu0
      %7654 = vmatprep.mubr.bf16.mxu0 0
      %7655 = vmatmul.mubr.bf16.gmra.mxu0 %v7497
      %v7656 = vpop.f32.mrf.mxu0
      %v7657 = vadd.f32 %v7456, %v7656
      %v7658 = vpop.f32.mrf.mxu0
      %v7659 = vpop.f32.mrf.mxu0
      %v7660 = vadd.f32 %v7459, %v7659
      %v7661 = vpop.f32.mrf.mxu0
      %7662 = vdwg.mxu0
      %s7663 = scalar_lea.vmem [#allocation2], 24
      %v7664 = vld [vmem:[%s7663] sm:$0xf]
      %v7665 = vld [vmem:[%s7663 + $0x4] sm:$0xf]
      %v7666 = vld [vmem:[%s7663 + $0xc] sm:$0xf]
      %v7667 = vld [vmem:[%s7663 + $0x10] sm:$0xf]
      %v7668 = vld [vmem:[%s7663 + $0x18] sm:$0xf]
      %v7669 = vld [vmem:[%s7663 + $0x1c] sm:$0xf]
      %v7670 = vld [vmem:[%s7663 + $0x24] sm:$0xf]
      %v7671 = vld [vmem:[%s7663 + $0x28] sm:$0xf]
      %v7672 = vld [vmem:[%s7663 + $0x30] sm:$0xf]
      %v7673 = vld [vmem:[%s7663 + $0x34] sm:$0xf]
      %v7674 = vld [vmem:[%s7663 + $0x3c] sm:$0xf]
      %v7675 = vld [vmem:[%s7663 + $0x40] sm:$0xf]
      %v7676 = vld [vmem:[%s7663 + $0x48] sm:$0xf]
      %v7677 = vld [vmem:[%s7663 + $0x4c] sm:$0xf]
      %v7678 = vld [vmem:[%s7663 + $0x54] sm:$0xf]
      %v7679 = vld [vmem:[%s7663 + $0x58] sm:$0xf]
      %v7680 = vld [vmem:[%s7663 + $0x60] sm:$0xf]
      %v7681 = vld [vmem:[%s7663 + $0x64] sm:$0xf]
      %v7682 = vld [vmem:[%s7663 + $0x6c] sm:$0xf]
      %v7683 = vld [vmem:[%s7663 + $0x70] sm:$0xf]
      %v7684 = vld [vmem:[%s7663 + $0x78] sm:$0xf]
      %v7685 = vld [vmem:[%s7663 + $0x7c] sm:$0xf]
      %v7686 = vld [vmem:[%s7663 + $0x84] sm:$0xf]
      %v7687 = vld [vmem:[%s7663 + $0x88] sm:$0xf]
      %v7688 = vld [vmem:[%s7663 + $0x90] sm:$0xf]
      %v7689 = vld [vmem:[%s7663 + $0x94] sm:$0xf]
      %v7690 = vld [vmem:[%s7663 + $0x9c] sm:$0xf]
      %v7691 = vld [vmem:[%s7663 + $0xa0] sm:$0xf]
      %v7692 = vld [vmem:[%s7663 + $0xa8] sm:$0xf]
      %v7693 = vld [vmem:[%s7663 + $0xac] sm:$0xf]
      %v7694 = vld [vmem:[%s7663 + $0xb4] sm:$0xf]
      %v7695 = vld [vmem:[%s7663 + $0xb8] sm:$0xf]
      %v7696 = vld [vmem:[%s7663 + $0x8] sm:$0x1]
      %v7697 = vld [vmem:[%s7663 + $0x14] sm:$0x1]
      %v7698 = vld [vmem:[%s7663 + $0x20] sm:$0x1]
      %v7699 = vld [vmem:[%s7663 + $0x2c] sm:$0x1]
      %v7700 = vld [vmem:[%s7663 + $0x38] sm:$0x1]
      %v7701 = vld [vmem:[%s7663 + $0x44] sm:$0x1]
      %v7702 = vld [vmem:[%s7663 + $0x50] sm:$0x1]
      %v7703 = vld [vmem:[%s7663 + $0x5c] sm:$0x1]
      %v7704 = vld [vmem:[%s7663 + $0x68] sm:$0x1]
      %v7705 = vld [vmem:[%s7663 + $0x74] sm:$0x1]
      %v7706 = vld [vmem:[%s7663 + $0x80] sm:$0x1]
      %v7707 = vld [vmem:[%s7663 + $0x8c] sm:$0x1]
      %v7708 = vld [vmem:[%s7663 + $0x98] sm:$0x1]
      %v7709 = vld [vmem:[%s7663 + $0xa4] sm:$0x1]
      %v7710 = vld [vmem:[%s7663 + $0xb0] sm:$0x1]
      %v7711 = vld [vmem:[%s7663 + $0xbc] sm:$0x1]
      %v7712 = vld [vmem:[%s7663] sm:$0xe]
      %v7713 = vld [vmem:[%s7663 + $0xc] sm:$0xe]
      %v7714 = vld [vmem:[%s7663 + $0x18] sm:$0xe]
      %v7715 = vld [vmem:[%s7663 + $0x24] sm:$0xe]
      %v7716 = vld [vmem:[%s7663 + $0x30] sm:$0xe]
      %v7717 = vld [vmem:[%s7663 + $0x3c] sm:$0xe]
      %v7718 = vld [vmem:[%s7663 + $0x48] sm:$0xe]
      %v7719 = vld [vmem:[%s7663 + $0x54] sm:$0xe]
      %v7720 = vld [vmem:[%s7663 + $0x60] sm:$0xe]
      %v7721 = vld [vmem:[%s7663 + $0x6c] sm:$0xe]
      %v7722 = vld [vmem:[%s7663 + $0x78] sm:$0xe]
      %v7723 = vld [vmem:[%s7663 + $0x84] sm:$0xe]
      %v7724 = vld [vmem:[%s7663 + $0x90] sm:$0xe]
      %v7725 = vld [vmem:[%s7663 + $0x9c] sm:$0xe]
      %v7726 = vld [vmem:[%s7663 + $0xa8] sm:$0xe]
      %v7727 = vld [vmem:[%s7663 + $0xb4] sm:$0xe]
      %v7760 = vunpack.c.l.b16 %v7664
      %v7761 = vunpack.c.l.b16 %v7665
      %v7762 = vunpack.c.l.b16 %v7666
      %v7763 = vunpack.c.l.b16 %v7667
      %v7764 = vunpack.c.l.b16 %v7668
      %v7765 = vunpack.c.l.b16 %v7669
      %v7766 = vunpack.c.l.b16 %v7670
      %v7767 = vunpack.c.l.b16 %v7671
      %v7768 = vunpack.c.l.b16 %v7672
      %v7769 = vunpack.c.l.b16 %v7673
      %v7770 = vunpack.c.l.b16 %v7674
      %v7771 = vunpack.c.l.b16 %v7675
      %v7772 = vunpack.c.l.b16 %v7676
      %v7773 = vunpack.c.l.b16 %v7677
      %v7774 = vunpack.c.l.b16 %v7678
      %v7775 = vunpack.c.l.b16 %v7679
      %v7776 = vunpack.c.l.b16 %v7680
      %v7777 = vunpack.c.l.b16 %v7681
      %v7778 = vunpack.c.l.b16 %v7682
      %v7779 = vunpack.c.l.b16 %v7683
      %v7780 = vunpack.c.l.b16 %v7684
      %v7781 = vunpack.c.l.b16 %v7685
      %v7782 = vunpack.c.l.b16 %v7686
      %v7783 = vunpack.c.l.b16 %v7687
      %v7784 = vunpack.c.l.b16 %v7688
      %v7785 = vunpack.c.l.b16 %v7689
      %v7786 = vunpack.c.l.b16 %v7690
      %v7787 = vunpack.c.l.b16 %v7691
      %v7788 = vunpack.c.l.b16 %v7692
      %v7789 = vunpack.c.l.b16 %v7693
      %v7790 = vunpack.c.l.b16 %v7694
      %v7791 = vunpack.c.l.b16 %v7695
      %v7792 = vpack.c.b16 %v7761, %v7760
      %v7793 = vpack.c.b16 %v7763, %v7762
      %v7794 = vpack.c.b16 %v7765, %v7764
      %v7795 = vpack.c.b16 %v7767, %v7766
      %v7796 = vpack.c.b16 %v7769, %v7768
      %v7797 = vpack.c.b16 %v7771, %v7770
      %v7798 = vpack.c.b16 %v7773, %v7772
      %v7799 = vpack.c.b16 %v7775, %v7774
      %v7800 = vpack.c.b16 %v7777, %v7776
      %v7801 = vpack.c.b16 %v7779, %v7778
      %v7802 = vpack.c.b16 %v7781, %v7780
      %v7803 = vpack.c.b16 %v7783, %v7782
      %v7804 = vpack.c.b16 %v7785, %v7784
      %v7805 = vpack.c.b16 %v7787, %v7786
      %v7806 = vpack.c.b16 %v7789, %v7788
      %v7807 = vpack.c.b16 %v7791, %v7790
      %v7824 = vunpack.c.l.b16 %v7696
      %v7825 = vunpack.c.l.b16 %v7697
      %v7826 = vunpack.c.l.b16 %v7698
      %v7827 = vunpack.c.l.b16 %v7699
      %v7828 = vunpack.c.l.b16 %v7700
      %v7829 = vunpack.c.l.b16 %v7701
      %v7830 = vunpack.c.l.b16 %v7702
      %v7831 = vunpack.c.l.b16 %v7703
      %v7832 = vunpack.c.l.b16 %v7704
      %v7833 = vunpack.c.l.b16 %v7705
      %v7834 = vunpack.c.l.b16 %v7706
      %v7835 = vunpack.c.l.b16 %v7707
      %v7836 = vunpack.c.l.b16 %v7708
      %v7837 = vunpack.c.l.b16 %v7709
      %v7838 = vunpack.c.l.b16 %v7710
      %v7839 = vunpack.c.l.b16 %v7711
      %v7840 = vpack.c.b16 %v7824, %v7824
      %v7841 = vpack.c.b16 %v7825, %v7825
      %v7842 = vpack.c.b16 %v7826, %v7826
      %v7843 = vpack.c.b16 %v7827, %v7827
      %v7844 = vpack.c.b16 %v7828, %v7828
      %v7845 = vpack.c.b16 %v7829, %v7829
      %v7846 = vpack.c.b16 %v7830, %v7830
      %v7847 = vpack.c.b16 %v7831, %v7831
      %v7848 = vpack.c.b16 %v7832, %v7832
      %v7849 = vpack.c.b16 %v7833, %v7833
      %v7850 = vpack.c.b16 %v7834, %v7834
      %v7851 = vpack.c.b16 %v7835, %v7835
      %v7852 = vpack.c.b16 %v7836, %v7836
      %v7853 = vpack.c.b16 %v7837, %v7837
      %v7854 = vpack.c.b16 %v7838, %v7838
      %v7855 = vpack.c.b16 %v7839, %v7839
      %v7857 = vshrl.u32 %v7792, 16
      %v7859 = vshll.u32 %v7792, 16
      %v7861 = vrot.slane %v7859, 1
      %v7862 = vor.u32 %v7857, %v7861
      %v7864 = vshll.u32 %v7840, 16
      %v7866 = vrot.slane %v7864, 1
      %v7867 = vsel %vm3759, %v7862, %v7866
      %v7869 = vshrl.u32 %v7793, 16
      %v7871 = vshll.u32 %v7793, 16
      %v7873 = vrot.slane %v7871, 1
      %v7874 = vor.u32 %v7869, %v7873
      %v7876 = vshll.u32 %v7841, 16
      %v7878 = vrot.slane %v7876, 1
      %v7879 = vsel %vm3759, %v7874, %v7878
      %v7881 = vshrl.u32 %v7794, 16
      %v7883 = vshll.u32 %v7794, 16
      %v7885 = vrot.slane %v7883, 1
      %v7886 = vor.u32 %v7881, %v7885
      %v7888 = vshll.u32 %v7842, 16
      %v7890 = vrot.slane %v7888, 1
      %v7891 = vsel %vm3759, %v7886, %v7890
      %v7893 = vshrl.u32 %v7795, 16
      %v7895 = vshll.u32 %v7795, 16
      %v7897 = vrot.slane %v7895, 1
      %v7898 = vor.u32 %v7893, %v7897
      %v7900 = vshll.u32 %v7843, 16
      %v7902 = vrot.slane %v7900, 1
      %v7903 = vsel %vm3759, %v7898, %v7902
      %v7905 = vshrl.u32 %v7796, 16
      %v7907 = vshll.u32 %v7796, 16
      %v7909 = vrot.slane %v7907, 1
      %v7910 = vor.u32 %v7905, %v7909
      %v7912 = vshll.u32 %v7844, 16
      %v7914 = vrot.slane %v7912, 1
      %v7915 = vsel %vm3759, %v7910, %v7914
      %v7917 = vshrl.u32 %v7797, 16
      %v7919 = vshll.u32 %v7797, 16
      %v7921 = vrot.slane %v7919, 1
      %v7922 = vor.u32 %v7917, %v7921
      %v7924 = vshll.u32 %v7845, 16
      %v7926 = vrot.slane %v7924, 1
      %v7927 = vsel %vm3759, %v7922, %v7926
      %v7929 = vshrl.u32 %v7798, 16
      %v7931 = vshll.u32 %v7798, 16
      %v7933 = vrot.slane %v7931, 1
      %v7934 = vor.u32 %v7929, %v7933
      %v7936 = vshll.u32 %v7846, 16
      %v7938 = vrot.slane %v7936, 1
      %v7939 = vsel %vm3759, %v7934, %v7938
      %v7941 = vshrl.u32 %v7799, 16
      %v7943 = vshll.u32 %v7799, 16
      %v7945 = vrot.slane %v7943, 1
      %v7946 = vor.u32 %v7941, %v7945
      %v7948 = vshll.u32 %v7847, 16
      %v7950 = vrot.slane %v7948, 1
      %v7951 = vsel %vm3759, %v7946, %v7950
      %v7953 = vshrl.u32 %v7800, 16
      %v7955 = vshll.u32 %v7800, 16
      %v7957 = vrot.slane %v7955, 1
      %v7958 = vor.u32 %v7953, %v7957
      %v7960 = vshll.u32 %v7848, 16
      %v7962 = vrot.slane %v7960, 1
      %v7963 = vsel %vm3759, %v7958, %v7962
      %v7965 = vshrl.u32 %v7801, 16
      %v7967 = vshll.u32 %v7801, 16
      %v7969 = vrot.slane %v7967, 1
      %v7970 = vor.u32 %v7965, %v7969
      %v7972 = vshll.u32 %v7849, 16
      %v7974 = vrot.slane %v7972, 1
      %v7975 = vsel %vm3759, %v7970, %v7974
      %v7977 = vshrl.u32 %v7802, 16
      %v7979 = vshll.u32 %v7802, 16
      %v7981 = vrot.slane %v7979, 1
      %v7982 = vor.u32 %v7977, %v7981
      %v7984 = vshll.u32 %v7850, 16
      %v7986 = vrot.slane %v7984, 1
      %v7987 = vsel %vm3759, %v7982, %v7986
      %v7989 = vshrl.u32 %v7803, 16
      %v7991 = vshll.u32 %v7803, 16
      %v7993 = vrot.slane %v7991, 1
      %v7994 = vor.u32 %v7989, %v7993
      %v7996 = vshll.u32 %v7851, 16
      %v7998 = vrot.slane %v7996, 1
      %v7999 = vsel %vm3759, %v7994, %v7998
      %v8001 = vshrl.u32 %v7804, 16
      %v8003 = vshll.u32 %v7804, 16
      %v8005 = vrot.slane %v8003, 1
      %v8006 = vor.u32 %v8001, %v8005
      %v8008 = vshll.u32 %v7852, 16
      %v8010 = vrot.slane %v8008, 1
      %v8011 = vsel %vm3759, %v8006, %v8010
      %v8013 = vshrl.u32 %v7805, 16
      %v8015 = vshll.u32 %v7805, 16
      %v8017 = vrot.slane %v8015, 1
      %v8018 = vor.u32 %v8013, %v8017
      %v8020 = vshll.u32 %v7853, 16
      %v8022 = vrot.slane %v8020, 1
      %v8023 = vsel %vm3759, %v8018, %v8022
      %v8025 = vshrl.u32 %v7806, 16
      %v8027 = vshll.u32 %v7806, 16
      %v8029 = vrot.slane %v8027, 1
      %v8030 = vor.u32 %v8025, %v8029
      %v8032 = vshll.u32 %v7854, 16
      %v8034 = vrot.slane %v8032, 1
      %v8035 = vsel %vm3759, %v8030, %v8034
      %v8037 = vshrl.u32 %v7807, 16
      %v8039 = vshll.u32 %v7807, 16
      %v8041 = vrot.slane %v8039, 1
      %v8042 = vor.u32 %v8037, %v8041
      %v8044 = vshll.u32 %v7855, 16
      %v8046 = vrot.slane %v8044, 1
      %v8047 = vsel %vm3759, %v8042, %v8046
      %8048 = vrot.lane.b32.xlu0 %v7867, 4
      %v8049 = vpop.permute.xlu0 %8048
      %8050 = vrot.lane.b32.xlu0 %v7879, 4
      %v8051 = vpop.permute.xlu0 %8050
      %8052 = vrot.lane.b32.xlu0 %v7891, 4
      %v8053 = vpop.permute.xlu0 %8052
      %8054 = vrot.lane.b32.xlu0 %v7903, 4
      %v8055 = vpop.permute.xlu0 %8054
      %8056 = vrot.lane.b32.xlu0 %v7915, 4
      %v8057 = vpop.permute.xlu0 %8056
      %8058 = vrot.lane.b32.xlu0 %v7927, 4
      %v8059 = vpop.permute.xlu0 %8058
      %8060 = vrot.lane.b32.xlu0 %v7939, 4
      %v8061 = vpop.permute.xlu0 %8060
      %8062 = vrot.lane.b32.xlu0 %v7951, 4
      %v8063 = vpop.permute.xlu0 %8062
      %8064 = vrot.lane.b32.xlu0 %v7963, 4
      %v8065 = vpop.permute.xlu0 %8064
      %8066 = vrot.lane.b32.xlu0 %v7975, 4
      %v8067 = vpop.permute.xlu0 %8066
      %8068 = vrot.lane.b32.xlu0 %v7987, 4
      %v8069 = vpop.permute.xlu0 %8068
      %8070 = vrot.lane.b32.xlu0 %v7999, 4
      %v8071 = vpop.permute.xlu0 %8070
      %8072 = vrot.lane.b32.xlu0 %v8011, 4
      %v8073 = vpop.permute.xlu0 %8072
      %8074 = vrot.lane.b32.xlu0 %v8023, 4
      %v8075 = vpop.permute.xlu0 %8074
      %8076 = vrot.lane.b32.xlu0 %v8035, 4
      %v8077 = vpop.permute.xlu0 %8076
      %8078 = vrot.lane.b32.xlu0 %v8047, 4
      %v8079 = vpop.permute.xlu0 %8078
      %v8096 = vunpack.c.l.b16 %v7712
      %v8097 = vunpack.c.l.b16 %v7713
      %v8098 = vunpack.c.l.b16 %v7714
      %v8099 = vunpack.c.l.b16 %v7715
      %v8100 = vunpack.c.l.b16 %v7716
      %v8101 = vunpack.c.l.b16 %v7717
      %v8102 = vunpack.c.l.b16 %v7718
      %v8103 = vunpack.c.l.b16 %v7719
      %v8104 = vunpack.c.l.b16 %v7720
      %v8105 = vunpack.c.l.b16 %v7721
      %v8106 = vunpack.c.l.b16 %v7722
      %v8107 = vunpack.c.l.b16 %v7723
      %v8108 = vunpack.c.l.b16 %v7724
      %v8109 = vunpack.c.l.b16 %v7725
      %v8110 = vunpack.c.l.b16 %v7726
      %v8111 = vunpack.c.l.b16 %v7727
      %v8112 = vpack.c.b16 %v7761, %v8096
      %v8113 = vpack.c.b16 %v7763, %v8097
      %v8114 = vpack.c.b16 %v7765, %v8098
      %v8115 = vpack.c.b16 %v7767, %v8099
      %v8116 = vpack.c.b16 %v7769, %v8100
      %v8117 = vpack.c.b16 %v7771, %v8101
      %v8118 = vpack.c.b16 %v7773, %v8102
      %v8119 = vpack.c.b16 %v7775, %v8103
      %v8120 = vpack.c.b16 %v7777, %v8104
      %v8121 = vpack.c.b16 %v7779, %v8105
      %v8122 = vpack.c.b16 %v7781, %v8106
      %v8123 = vpack.c.b16 %v7783, %v8107
      %v8124 = vpack.c.b16 %v7785, %v8108
      %v8125 = vpack.c.b16 %v7787, %v8109
      %v8126 = vpack.c.b16 %v7789, %v8110
      %v8127 = vpack.c.b16 %v7791, %v8111
      %v8128 = vrot.slane %v8112, 1
      %v8129 = vrot.slane %v7840, 1
      %v8130 = vsel %vm4032, %v8128, %v8129
      %v8131 = vrot.slane %v8113, 1
      %v8132 = vrot.slane %v7841, 1
      %v8133 = vsel %vm4032, %v8131, %v8132
      %v8134 = vrot.slane %v8114, 1
      %v8135 = vrot.slane %v7842, 1
      %v8136 = vsel %vm4032, %v8134, %v8135
      %v8137 = vrot.slane %v8115, 1
      %v8138 = vrot.slane %v7843, 1
      %v8139 = vsel %vm4032, %v8137, %v8138
      %v8140 = vrot.slane %v8116, 1
      %v8141 = vrot.slane %v7844, 1
      %v8142 = vsel %vm4032, %v8140, %v8141
      %v8143 = vrot.slane %v8117, 1
      %v8144 = vrot.slane %v7845, 1
      %v8145 = vsel %vm4032, %v8143, %v8144
      %v8146 = vrot.slane %v8118, 1
      %v8147 = vrot.slane %v7846, 1
      %v8148 = vsel %vm4032, %v8146, %v8147
      %v8149 = vrot.slane %v8119, 1
      %v8150 = vrot.slane %v7847, 1
      %v8151 = vsel %vm4032, %v8149, %v8150
      %v8152 = vrot.slane %v8120, 1
      %v8153 = vrot.slane %v7848, 1
      %v8154 = vsel %vm4032, %v8152, %v8153
      %v8155 = vrot.slane %v8121, 1
      %v8156 = vrot.slane %v7849, 1
      %v8157 = vsel %vm4032, %v8155, %v8156
      %v8158 = vrot.slane %v8122, 1
      %v8159 = vrot.slane %v7850, 1
      %v8160 = vsel %vm4032, %v8158, %v8159
      %v8161 = vrot.slane %v8123, 1
      %v8162 = vrot.slane %v7851, 1
      %v8163 = vsel %vm4032, %v8161, %v8162
      %v8164 = vrot.slane %v8124, 1
      %v8165 = vrot.slane %v7852, 1
      %v8166 = vsel %vm4032, %v8164, %v8165
      %v8167 = vrot.slane %v8125, 1
      %v8168 = vrot.slane %v7853, 1
      %v8169 = vsel %vm4032, %v8167, %v8168
      %v8170 = vrot.slane %v8126, 1
      %v8171 = vrot.slane %v7854, 1
      %v8172 = vsel %vm4032, %v8170, %v8171
      %v8173 = vrot.slane %v8127, 1
      %v8174 = vrot.slane %v7855, 1
      %v8175 = vsel %vm4032, %v8173, %v8174
      %8176 = vrot.lane.b32.xlu0 %v8130, 8
      %v8177 = vpop.permute.xlu0 %8176
      %8178 = vrot.lane.b32.xlu0 %v8133, 8
      %v8179 = vpop.permute.xlu0 %8178
      %8180 = vrot.lane.b32.xlu0 %v8136, 8
      %v8181 = vpop.permute.xlu0 %8180
      %8182 = vrot.lane.b32.xlu0 %v8139, 8
      %v8183 = vpop.permute.xlu0 %8182
      %8184 = vrot.lane.b32.xlu0 %v8142, 8
      %v8185 = vpop.permute.xlu0 %8184
      %8186 = vrot.lane.b32.xlu0 %v8145, 8
      %v8187 = vpop.permute.xlu0 %8186
      %8188 = vrot.lane.b32.xlu0 %v8148, 8
      %v8189 = vpop.permute.xlu0 %8188
      %8190 = vrot.lane.b32.xlu0 %v8151, 8
      %v8191 = vpop.permute.xlu0 %8190
      %8192 = vrot.lane.b32.xlu0 %v8154, 8
      %v8193 = vpop.permute.xlu0 %8192
      %8194 = vrot.lane.b32.xlu0 %v8157, 8
      %v8195 = vpop.permute.xlu0 %8194
      %8196 = vrot.lane.b32.xlu0 %v8160, 8
      %v8197 = vpop.permute.xlu0 %8196
      %8198 = vrot.lane.b32.xlu0 %v8163, 8
      %v8199 = vpop.permute.xlu0 %8198
      %8200 = vrot.lane.b32.xlu0 %v8166, 8
      %v8201 = vpop.permute.xlu0 %8200
      %8202 = vrot.lane.b32.xlu0 %v8169, 8
      %v8203 = vpop.permute.xlu0 %8202
      %8204 = vrot.lane.b32.xlu0 %v8172, 8
      %v8205 = vpop.permute.xlu0 %8204
      %8206 = vrot.lane.b32.xlu0 %v8175, 8
      %v8207 = vpop.permute.xlu0 %8206
      %v8209 = vsel %vm4113, %v7792, %v8049
      %v8211 = vsel %vm4113, %v7793, %v8051
      %v8213 = vsel %vm4113, %v7794, %v8053
      %v8215 = vsel %vm4113, %v7795, %v8055
      %v8217 = vsel %vm4113, %v7796, %v8057
      %v8219 = vsel %vm4113, %v7797, %v8059
      %v8221 = vsel %vm4113, %v7798, %v8061
      %v8223 = vsel %vm4113, %v7799, %v8063
      %v8225 = vsel %vm4113, %v7800, %v8065
      %v8227 = vsel %vm4113, %v7801, %v8067
      %v8229 = vsel %vm4113, %v7802, %v8069
      %v8231 = vsel %vm4113, %v7803, %v8071
      %v8233 = vsel %vm4113, %v7804, %v8073
      %v8235 = vsel %vm4113, %v7805, %v8075
      %v8237 = vsel %vm4113, %v7806, %v8077
      %v8239 = vsel %vm4113, %v7807, %v8079
      %v8241 = vsel %vm1211, %v8209, %v8177
      %v8243 = vsel %vm1211, %v8211, %v8179
      %v8245 = vsel %vm1211, %v8213, %v8181
      %v8247 = vsel %vm1211, %v8215, %v8183
      %v8249 = vsel %vm1211, %v8217, %v8185
      %v8251 = vsel %vm1211, %v8219, %v8187
      %v8253 = vsel %vm1211, %v8221, %v8189
      %v8255 = vsel %vm1211, %v8223, %v8191
      %v8257 = vsel %vm1211, %v8225, %v8193
      %v8259 = vsel %vm1211, %v8227, %v8195
      %v8261 = vsel %vm1211, %v8229, %v8197
      %v8263 = vsel %vm1211, %v8231, %v8199
      %v8265 = vsel %vm1211, %v8233, %v8201
      %v8267 = vsel %vm1211, %v8235, %v8203
      %v8269 = vsel %vm1211, %v8237, %v8205
      %v8271 = vsel %vm1211, %v8239, %v8207
      %s8272 = scalar_lea.vmem %s5, 16
      %v8273 = vld [vmem:[%s8272] sm:$0xf]
      %v8274 = vld [vmem:[%s8272 + $0x4] sm:$0x3]
      %v8277 = vunpack.c.l.b16 %v8273
      %v8278 = vunpack.c.l.b16 %v8274
      %v8279 = vpack.c.b16 %v8278, %v8277
      %v8280 = vsel %vm4796, %v8241, 0
      %v8282 = vsel %vm4796, %v8243, 0
      %v8284 = vsel %vm4796, %v8245, 0
      %v8286 = vsel %vm4796, %v8247, 0
      %v8288 = vsel %vm4796, %v8249, 0
      %v8290 = vsel %vm4796, %v8251, 0
      %v8292 = vsel %vm4796, %v8253, 0
      %v8294 = vsel %vm4796, %v8255, 0
      %v8296 = vsel %vm4796, %v8257, 0
      %v8298 = vsel %vm4796, %v8259, 0
      %v8300 = vsel %vm4796, %v8261, 0
      %v8302 = vsel %vm4796, %v8263, 0
      %v8304 = vsel %vm4796, %v8265, 0
      %v8306 = vsel %vm4796, %v8267, 0
      %v8308 = vsel %vm4796, %v8269, 0
      %v8310 = vsel %vm4796, %v8271, 0
      %v8313 = vsel %vm4829, %v8279, 0
      %8315 = vmatprep.subr.bf16.mxu0 0
      %8316 = vmatpush1.bf16.msra.mxu0 0
      %8317 = vmatprep.subr.bf16.mxu0 0
      %8318 = vmatpush1.bf16.msra.mxu0 0
      %8319 = vmatprep.subr.bf16.mxu0 0
      %8320 = vmatpush1.bf16.msra.mxu0 0
      %8321 = vmatprep.subr.bf16.mxu0 0
      %8322 = vmatpush1.bf16.msra.mxu0 0
      %8323 = vmatprep.subr.bf16.mxu0 0
      %8324 = vmatpush1.bf16.msra.mxu0 0
      %8325 = vmatprep.subr.bf16.mxu0 0
      %8326 = vmatpush1.bf16.msra.mxu0 0
      %8327 = vmatprep.subr.bf16.mxu0 0
      %8328 = vmatpush1.bf16.msra.mxu0 0
      %8329 = vmatprep.subr.bf16.mxu0 0
      %8330 = vmatpush1.bf16.msra.mxu0 %v8313
      %8331 = vmatprep.subr.bf16.mxu0 0
      %8332 = vmatpush2.bf16.msra.mxu0 0
      %8333 = vmatprep.subr.bf16.mxu0 0
      %8334 = vmatpush2.bf16.msra.mxu0 0
      %8335 = vmatprep.subr.bf16.mxu0 0
      %8336 = vmatpush2.bf16.msra.mxu0 0
      %8337 = vmatprep.subr.bf16.mxu0 0
      %8338 = vmatpush2.bf16.msra.mxu0 0
      %8339 = vmatprep.subr.bf16.mxu0 0
      %8340 = vmatpush2.bf16.msra.mxu0 0
      %8341 = vmatprep.subr.bf16.mxu0 0
      %8342 = vmatpush2.bf16.msra.mxu0 0
      %8343 = vmatprep.subr.bf16.mxu0 0
      %8344 = vmatpush2.bf16.msra.mxu0 0
      %8345 = vmatprep.subr.bf16.mxu0 0
      %8346 = vmatpush2.bf16.msra.mxu0 0
      %8347 = vmatprep.mubr.bf16.mxu0 0
      %8348 = vmatmul.mubr.bf16.gmra.mxu0 %v8280
      %v8349 = vpop.f32.mrf.mxu0
      %v8350 = vadd.f32 0.0, %v8349
      %v8351 = vpop.f32.mrf.mxu0
      %v8352 = vpop.f32.mrf.mxu0
      %v8353 = vadd.f32 0.0, %v8352
      %v8354 = vpop.f32.mrf.mxu0
      %8355 = vmatprep.mubr.bf16.mxu0 0
      %8356 = vmatmul.mubr.bf16.gmra.mxu0 %v8282
      %v8357 = vpop.f32.mrf.mxu0
      %v8358 = vadd.f32 0.0, %v8357
      %v8359 = vpop.f32.mrf.mxu0
      %v8360 = vpop.f32.mrf.mxu0
      %v8361 = vadd.f32 0.0, %v8360
      %v8362 = vpop.f32.mrf.mxu0
      %8363 = vmatprep.mubr.bf16.mxu0 0
      %8364 = vmatmul.mubr.bf16.gmra.mxu0 %v8284
      %v8365 = vpop.f32.mrf.mxu0
      %v8366 = vadd.f32 0.0, %v8365
      %v8367 = vpop.f32.mrf.mxu0
      %v8368 = vpop.f32.mrf.mxu0
      %v8369 = vadd.f32 0.0, %v8368
      %v8370 = vpop.f32.mrf.mxu0
      %8371 = vmatprep.mubr.bf16.mxu0 0
      %8372 = vmatmul.mubr.bf16.gmra.mxu0 %v8286
      %v8373 = vpop.f32.mrf.mxu0
      %v8374 = vadd.f32 0.0, %v8373
      %v8375 = vpop.f32.mrf.mxu0
      %v8376 = vpop.f32.mrf.mxu0
      %v8377 = vadd.f32 0.0, %v8376
      %v8378 = vpop.f32.mrf.mxu0
      %8379 = vmatprep.mubr.bf16.mxu0 0
      %8380 = vmatmul.mubr.bf16.gmra.mxu0 %v8288
      %v8381 = vpop.f32.mrf.mxu0
      %v8382 = vadd.f32 0.0, %v8381
      %v8383 = vpop.f32.mrf.mxu0
      %v8384 = vpop.f32.mrf.mxu0
      %v8385 = vadd.f32 0.0, %v8384
      %v8386 = vpop.f32.mrf.mxu0
      %8387 = vmatprep.mubr.bf16.mxu0 0
      %8388 = vmatmul.mubr.bf16.gmra.mxu0 %v8290
      %v8389 = vpop.f32.mrf.mxu0
      %v8390 = vadd.f32 0.0, %v8389
      %v8391 = vpop.f32.mrf.mxu0
      %v8392 = vpop.f32.mrf.mxu0
      %v8393 = vadd.f32 0.0, %v8392
      %v8394 = vpop.f32.mrf.mxu0
      %8395 = vmatprep.mubr.bf16.mxu0 0
      %8396 = vmatmul.mubr.bf16.gmra.mxu0 %v8292
      %v8397 = vpop.f32.mrf.mxu0
      %v8398 = vadd.f32 0.0, %v8397
      %v8399 = vpop.f32.mrf.mxu0
      %v8400 = vpop.f32.mrf.mxu0
      %v8401 = vadd.f32 0.0, %v8400
      %v8402 = vpop.f32.mrf.mxu0
      %8403 = vmatprep.mubr.bf16.mxu0 0
      %8404 = vmatmul.mubr.bf16.gmra.mxu0 %v8294
      %v8405 = vpop.f32.mrf.mxu0
      %v8406 = vadd.f32 0.0, %v8405
      %v8407 = vpop.f32.mrf.mxu0
      %v8408 = vpop.f32.mrf.mxu0
      %v8409 = vadd.f32 0.0, %v8408
      %v8410 = vpop.f32.mrf.mxu0
      %8411 = vmatprep.mubr.bf16.mxu0 0
      %8412 = vmatmul.mubr.bf16.gmra.mxu0 %v8296
      %v8413 = vpop.f32.mrf.mxu0
      %v8414 = vadd.f32 0.0, %v8413
      %v8415 = vpop.f32.mrf.mxu0
      %v8416 = vpop.f32.mrf.mxu0
      %v8417 = vadd.f32 0.0, %v8416
      %v8418 = vpop.f32.mrf.mxu0
      %8419 = vmatprep.mubr.bf16.mxu0 0
      %8420 = vmatmul.mubr.bf16.gmra.mxu0 %v8298
      %v8421 = vpop.f32.mrf.mxu0
      %v8422 = vadd.f32 0.0, %v8421
      %v8423 = vpop.f32.mrf.mxu0
      %v8424 = vpop.f32.mrf.mxu0
      %v8425 = vadd.f32 0.0, %v8424
      %v8426 = vpop.f32.mrf.mxu0
      %8427 = vmatprep.mubr.bf16.mxu0 0
      %8428 = vmatmul.mubr.bf16.gmra.mxu0 %v8300
      %v8429 = vpop.f32.mrf.mxu0
      %v8430 = vadd.f32 0.0, %v8429
      %v8431 = vpop.f32.mrf.mxu0
      %v8432 = vpop.f32.mrf.mxu0
      %v8433 = vadd.f32 0.0, %v8432
      %v8434 = vpop.f32.mrf.mxu0
      %8435 = vmatprep.mubr.bf16.mxu0 0
      %8436 = vmatmul.mubr.bf16.gmra.mxu0 %v8302
      %v8437 = vpop.f32.mrf.mxu0
      %v8438 = vadd.f32 0.0, %v8437
      %v8439 = vpop.f32.mrf.mxu0
      %v8440 = vpop.f32.mrf.mxu0
      %v8441 = vadd.f32 0.0, %v8440
      %v8442 = vpop.f32.mrf.mxu0
      %8443 = vmatprep.mubr.bf16.mxu0 0
      %8444 = vmatmul.mubr.bf16.gmra.mxu0 %v8304
      %v8445 = vpop.f32.mrf.mxu0
      %v8446 = vadd.f32 0.0, %v8445
      %v8447 = vpop.f32.mrf.mxu0
      %v8448 = vpop.f32.mrf.mxu0
      %v8449 = vadd.f32 0.0, %v8448
      %v8450 = vpop.f32.mrf.mxu0
      %8451 = vmatprep.mubr.bf16.mxu0 0
      %8452 = vmatmul.mubr.bf16.gmra.mxu0 %v8306
      %v8453 = vpop.f32.mrf.mxu0
      %v8454 = vadd.f32 0.0, %v8453
      %v8455 = vpop.f32.mrf.mxu0
      %v8456 = vpop.f32.mrf.mxu0
      %v8457 = vadd.f32 0.0, %v8456
      %v8458 = vpop.f32.mrf.mxu0
      %8459 = vmatprep.mubr.bf16.mxu0 0
      %8460 = vmatmul.mubr.bf16.gmra.mxu0 %v8308
      %v8461 = vpop.f32.mrf.mxu0
      %v8462 = vadd.f32 0.0, %v8461
      %v8463 = vpop.f32.mrf.mxu0
      %v8464 = vpop.f32.mrf.mxu0
      %v8465 = vadd.f32 0.0, %v8464
      %v8466 = vpop.f32.mrf.mxu0
      %8467 = vmatprep.mubr.bf16.mxu0 0
      %8468 = vmatmul.mubr.bf16.gmra.mxu0 %v8310
      %v8469 = vpop.f32.mrf.mxu0
      %v8470 = vadd.f32 0.0, %v8469
      %v8471 = vpop.f32.mrf.mxu0
      %v8472 = vpop.f32.mrf.mxu0
      %v8473 = vadd.f32 0.0, %v8472
      %v8474 = vpop.f32.mrf.mxu0
      %8475 = vdwg.mxu0
      %v8476 = vadd.f32 %v7537, %v8350
      %v8477 = vadd.f32 %v7540, %v8353
      %v8478 = vadd.f32 %v7545, %v8358
      %v8479 = vadd.f32 %v7548, %v8361
      %v8480 = vadd.f32 %v7553, %v8366
      %v8481 = vadd.f32 %v7556, %v8369
      %v8482 = vadd.f32 %v7561, %v8374
      %v8483 = vadd.f32 %v7564, %v8377
      %v8484 = vadd.f32 %v7569, %v8382
      %v8485 = vadd.f32 %v7572, %v8385
      %v8486 = vadd.f32 %v7577, %v8390
      %v8487 = vadd.f32 %v7580, %v8393
      %v8488 = vadd.f32 %v7585, %v8398
      %v8489 = vadd.f32 %v7588, %v8401
      %v8490 = vadd.f32 %v7593, %v8406
      %v8491 = vadd.f32 %v7596, %v8409
      %v8492 = vadd.f32 %v7601, %v8414
      %v8493 = vadd.f32 %v7604, %v8417
      %v8494 = vadd.f32 %v7609, %v8422
      %v8495 = vadd.f32 %v7612, %v8425
      %v8496 = vadd.f32 %v7617, %v8430
      %v8497 = vadd.f32 %v7620, %v8433
      %v8498 = vadd.f32 %v7625, %v8438
      %v8499 = vadd.f32 %v7628, %v8441
      %v8500 = vadd.f32 %v7633, %v8446
      %v8501 = vadd.f32 %v7636, %v8449
      %v8502 = vadd.f32 %v7641, %v8454
      %v8503 = vadd.f32 %v7644, %v8457
      %v8504 = vadd.f32 %v7649, %v8462
      %v8505 = vadd.f32 %v7652, %v8465
      %v8506 = vadd.f32 %v7657, %v8470
      %v8507 = vadd.f32 %v7660, %v8473
      %v8508 = vadd.f32 %v6008, %v8476
      %v8509 = vadd.f32 %v6009, %v8477
      %v8510 = vadd.f32 %v6010, %v8478
      %v8511 = vadd.f32 %v6011, %v8479
      %v8512 = vadd.f32 %v6012, %v8480
      %v8513 = vadd.f32 %v6013, %v8481
      %v8514 = vadd.f32 %v6014, %v8482
      %v8515 = vadd.f32 %v6015, %v8483
      %v8516 = vadd.f32 %v6016, %v8484
      %v8517 = vadd.f32 %v6017, %v8485
      %v8518 = vadd.f32 %v6018, %v8486
      %v8519 = vadd.f32 %v6019, %v8487
      %v8520 = vadd.f32 %v6020, %v8488
      %v8521 = vadd.f32 %v6021, %v8489
      %v8522 = vadd.f32 %v6022, %v8490
      %v8523 = vadd.f32 %v6023, %v8491
      %v8524 = vadd.f32 %v6024, %v8492
      %v8525 = vadd.f32 %v6025, %v8493
      %v8526 = vadd.f32 %v6026, %v8494
      %v8527 = vadd.f32 %v6027, %v8495
      %v8528 = vadd.f32 %v6028, %v8496
      %v8529 = vadd.f32 %v6029, %v8497
      %v8530 = vadd.f32 %v6030, %v8498
      %v8531 = vadd.f32 %v6031, %v8499
      %v8532 = vadd.f32 %v6032, %v8500
      %v8533 = vadd.f32 %v6033, %v8501
      %v8534 = vadd.f32 %v6034, %v8502
      %v8535 = vadd.f32 %v6035, %v8503
      %v8536 = vadd.f32 %v6036, %v8504
      %v8537 = vadd.f32 %v6037, %v8505
      %v8538 = vadd.f32 %v6038, %v8506
      %v8539 = vadd.f32 %v6039, %v8507
      %v8540 = vld [vmem:[%s6] sm:$0x1]
      %v8542 = vlaneseq
      %v8543 = vshrl.u32 %v8542, 7
      %v8544 = vsub.s32 0, %v8543
      %v8545 = vrot.slane %v8540, %v8544
      %v8547 = vadd.f32 %v8508, %v8545
      %v8548 = vadd.f32 %v8509, %v8545
      %v8549 = vadd.f32 %v8510, %v8545
      %v8550 = vadd.f32 %v8511, %v8545
      %v8551 = vadd.f32 %v8512, %v8545
      %v8552 = vadd.f32 %v8513, %v8545
      %v8553 = vadd.f32 %v8514, %v8545
      %v8554 = vadd.f32 %v8515, %v8545
      %v8555 = vadd.f32 %v8516, %v8545
      %v8556 = vadd.f32 %v8517, %v8545
      %v8557 = vadd.f32 %v8518, %v8545
      %v8558 = vadd.f32 %v8519, %v8545
      %v8559 = vadd.f32 %v8520, %v8545
      %v8560 = vadd.f32 %v8521, %v8545
      %v8561 = vadd.f32 %v8522, %v8545
      %v8562 = vadd.f32 %v8523, %v8545
      %v8563 = vadd.f32 %v8524, %v8545
      %v8564 = vadd.f32 %v8525, %v8545
      %v8565 = vadd.f32 %v8526, %v8545
      %v8566 = vadd.f32 %v8527, %v8545
      %v8567 = vadd.f32 %v8528, %v8545
      %v8568 = vadd.f32 %v8529, %v8545
      %v8569 = vadd.f32 %v8530, %v8545
      %v8570 = vadd.f32 %v8531, %v8545
      %v8571 = vadd.f32 %v8532, %v8545
      %v8572 = vadd.f32 %v8533, %v8545
      %v8573 = vadd.f32 %v8534, %v8545
      %v8574 = vadd.f32 %v8535, %v8545
      %v8575 = vadd.f32 %v8536, %v8545
      %v8576 = vadd.f32 %v8537, %v8545
      %v8577 = vadd.f32 %v8538, %v8545
      %v8578 = vadd.f32 %v8539, %v8545
      %v8579 = vmax.f32 %v8547, 0.0
      %v8580 = vmax.f32 %v8548, 0.0
      %v8581 = vmax.f32 %v8549, 0.0
      %v8582 = vmax.f32 %v8550, 0.0
      %v8583 = vmax.f32 %v8551, 0.0
      %v8584 = vmax.f32 %v8552, 0.0
      %v8585 = vmax.f32 %v8553, 0.0
      %v8586 = vmax.f32 %v8554, 0.0
      %v8587 = vmax.f32 %v8555, 0.0
      %v8588 = vmax.f32 %v8556, 0.0
      %v8589 = vmax.f32 %v8557, 0.0
      %v8590 = vmax.f32 %v8558, 0.0
      %v8591 = vmax.f32 %v8559, 0.0
      %v8592 = vmax.f32 %v8560, 0.0
      %v8593 = vmax.f32 %v8561, 0.0
      %v8594 = vmax.f32 %v8562, 0.0
      %v8595 = vmax.f32 %v8563, 0.0
      %v8596 = vmax.f32 %v8564, 0.0
      %v8597 = vmax.f32 %v8565, 0.0
      %v8598 = vmax.f32 %v8566, 0.0
      %v8599 = vmax.f32 %v8567, 0.0
      %v8600 = vmax.f32 %v8568, 0.0
      %v8601 = vmax.f32 %v8569, 0.0
      %v8602 = vmax.f32 %v8570, 0.0
      %v8603 = vmax.f32 %v8571, 0.0
      %v8604 = vmax.f32 %v8572, 0.0
      %v8605 = vmax.f32 %v8573, 0.0
      %v8606 = vmax.f32 %v8574, 0.0
      %v8607 = vmax.f32 %v8575, 0.0
      %v8608 = vmax.f32 %v8576, 0.0
      %v8609 = vmax.f32 %v8577, 0.0
      %v8610 = vmax.f32 %v8578, 0.0
      %v8611 = vpack.c.bf16 %v8580, %v8579
      %v8612 = vpack.c.bf16 %v8582, %v8581
      %v8613 = vpack.c.bf16 %v8584, %v8583
      %v8614 = vpack.c.bf16 %v8586, %v8585
      %v8615 = vpack.c.bf16 %v8588, %v8587
      %v8616 = vpack.c.bf16 %v8590, %v8589
      %v8617 = vpack.c.bf16 %v8592, %v8591
      %v8618 = vpack.c.bf16 %v8594, %v8593
      %v8619 = vpack.c.bf16 %v8596, %v8595
      %v8620 = vpack.c.bf16 %v8598, %v8597
      %v8621 = vpack.c.bf16 %v8600, %v8599
      %v8622 = vpack.c.bf16 %v8602, %v8601
      %v8623 = vpack.c.bf16 %v8604, %v8603
      %v8624 = vpack.c.bf16 %v8606, %v8605
      %v8625 = vpack.c.bf16 %v8608, %v8607
      %v8626 = vpack.c.bf16 %v8610, %v8609
      %v8643 = vunpack.c.l.b16 %v8611
      %v8644 = vunpack.c.h.b16 %v8611
      %v8645 = vunpack.c.l.b16 %v8612
      %v8646 = vunpack.c.h.b16 %v8612
      %v8647 = vunpack.c.l.b16 %v8613
      %v8648 = vunpack.c.h.b16 %v8613
      %v8649 = vunpack.c.l.b16 %v8614
      %v8650 = vunpack.c.h.b16 %v8614
      %v8651 = vunpack.c.l.b16 %v8615
      %v8652 = vunpack.c.h.b16 %v8615
      %v8653 = vunpack.c.l.b16 %v8616
      %v8654 = vunpack.c.h.b16 %v8616
      %v8655 = vunpack.c.l.b16 %v8617
      %v8656 = vunpack.c.h.b16 %v8617
      %v8657 = vunpack.c.l.b16 %v8618
      %v8658 = vunpack.c.h.b16 %v8618
      %v8659 = vunpack.c.l.b16 %v8619
      %v8660 = vunpack.c.h.b16 %v8619
      %v8661 = vunpack.c.l.b16 %v8620
      %v8662 = vunpack.c.h.b16 %v8620
      %v8663 = vunpack.c.l.b16 %v8621
      %v8664 = vunpack.c.h.b16 %v8621
      %v8665 = vunpack.c.l.b16 %v8622
      %v8666 = vunpack.c.h.b16 %v8622
      %v8667 = vunpack.c.l.b16 %v8623
      %v8668 = vunpack.c.h.b16 %v8623
      %v8669 = vunpack.c.l.b16 %v8624
      %v8670 = vunpack.c.h.b16 %v8624
      %v8671 = vunpack.c.l.b16 %v8625
      %v8672 = vunpack.c.h.b16 %v8625
      %v8673 = vunpack.c.l.b16 %v8626
      %v8674 = vunpack.c.h.b16 %v8626
      %v8675 = vpack.c.b16 %v8643, %v8643
      %v8676 = vpack.c.b16 %v8644, %v8644
      %v8677 = vpack.c.b16 %v8645, %v8645
      %v8678 = vpack.c.b16 %v8646, %v8646
      %v8679 = vpack.c.b16 %v8647, %v8647
      %v8680 = vpack.c.b16 %v8648, %v8648
      %v8681 = vpack.c.b16 %v8649, %v8649
      %v8682 = vpack.c.b16 %v8650, %v8650
      %v8683 = vpack.c.b16 %v8651, %v8651
      %v8684 = vpack.c.b16 %v8652, %v8652
      %v8685 = vpack.c.b16 %v8653, %v8653
      %v8686 = vpack.c.b16 %v8654, %v8654
      %v8687 = vpack.c.b16 %v8655, %v8655
      %v8688 = vpack.c.b16 %v8656, %v8656
      %v8689 = vpack.c.b16 %v8657, %v8657
      %v8690 = vpack.c.b16 %v8658, %v8658
      %v8691 = vpack.c.b16 %v8659, %v8659
      %v8692 = vpack.c.b16 %v8660, %v8660
      %v8693 = vpack.c.b16 %v8661, %v8661
      %v8694 = vpack.c.b16 %v8662, %v8662
      %v8695 = vpack.c.b16 %v8663, %v8663
      %v8696 = vpack.c.b16 %v8664, %v8664
      %v8697 = vpack.c.b16 %v8665, %v8665
      %v8698 = vpack.c.b16 %v8666, %v8666
      %v8699 = vpack.c.b16 %v8667, %v8667
      %v8700 = vpack.c.b16 %v8668, %v8668
      %v8701 = vpack.c.b16 %v8669, %v8669
      %v8702 = vpack.c.b16 %v8670, %v8670
      %v8703 = vpack.c.b16 %v8671, %v8671
      %v8704 = vpack.c.b16 %v8672, %v8672
      %v8705 = vpack.c.b16 %v8673, %v8673
      %v8706 = vpack.c.b16 %v8674, %v8674
      %v8708 = vshrl.u32 %v8675, 16
      %v8710 = vrot.slane %v8708, 7
      %v8711 = vshll.u32 %v8675, 16
      %v8713 = vor.u32 %v8710, %v8711
      %v8714 = vrot.slane %v8710, 4
      %v8716 = vshrl.u32 %v8676, 16
      %v8718 = vrot.slane %v8716, 7
      %v8719 = vshll.u32 %v8676, 16
      %v8721 = vor.u32 %v8718, %v8719
      %v8722 = vsel %vm739, %v8714, %v8721
      %v8723 = vrot.slane %v8718, 4
      %v8725 = vshrl.u32 %v8677, 16
      %v8727 = vrot.slane %v8725, 7
      %v8728 = vshll.u32 %v8677, 16
      %v8730 = vor.u32 %v8727, %v8728
      %v8731 = vrot.slane %v8727, 4
      %v8733 = vshrl.u32 %v8678, 16
      %v8735 = vrot.slane %v8733, 7
      %v8736 = vshll.u32 %v8678, 16
      %v8738 = vor.u32 %v8735, %v8736
      %v8739 = vsel %vm739, %v8731, %v8738
      %v8740 = vrot.slane %v8735, 4
      %v8742 = vshrl.u32 %v8679, 16
      %v8744 = vrot.slane %v8742, 7
      %v8745 = vshll.u32 %v8679, 16
      %v8747 = vor.u32 %v8744, %v8745
      %v8748 = vrot.slane %v8744, 4
      %v8750 = vshrl.u32 %v8680, 16
      %v8752 = vrot.slane %v8750, 7
      %v8753 = vshll.u32 %v8680, 16
      %v8755 = vor.u32 %v8752, %v8753
      %v8756 = vsel %vm739, %v8748, %v8755
      %v8757 = vrot.slane %v8752, 4
      %v8759 = vshrl.u32 %v8681, 16
      %v8761 = vrot.slane %v8759, 7
      %v8762 = vshll.u32 %v8681, 16
      %v8764 = vor.u32 %v8761, %v8762
      %v8765 = vrot.slane %v8761, 4
      %v8767 = vshrl.u32 %v8682, 16
      %v8769 = vrot.slane %v8767, 7
      %v8770 = vshll.u32 %v8682, 16
      %v8772 = vor.u32 %v8769, %v8770
      %v8773 = vsel %vm739, %v8765, %v8772
      %v8774 = vrot.slane %v8769, 4
      %v8776 = vshrl.u32 %v8683, 16
      %v8778 = vrot.slane %v8776, 7
      %v8779 = vshll.u32 %v8683, 16
      %v8781 = vor.u32 %v8778, %v8779
      %v8782 = vrot.slane %v8778, 4
      %v8784 = vshrl.u32 %v8684, 16
      %v8786 = vrot.slane %v8784, 7
      %v8787 = vshll.u32 %v8684, 16
      %v8789 = vor.u32 %v8786, %v8787
      %v8790 = vsel %vm739, %v8782, %v8789
      %v8791 = vrot.slane %v8786, 4
      %v8793 = vshrl.u32 %v8685, 16
      %v8795 = vrot.slane %v8793, 7
      %v8796 = vshll.u32 %v8685, 16
      %v8798 = vor.u32 %v8795, %v8796
      %v8799 = vrot.slane %v8795, 4
      %v8801 = vshrl.u32 %v8686, 16
      %v8803 = vrot.slane %v8801, 7
      %v8804 = vshll.u32 %v8686, 16
      %v8806 = vor.u32 %v8803, %v8804
      %v8807 = vsel %vm739, %v8799, %v8806
      %v8808 = vrot.slane %v8803, 4
      %v8810 = vshrl.u32 %v8687, 16
      %v8812 = vrot.slane %v8810, 7
      %v8813 = vshll.u32 %v8687, 16
      %v8815 = vor.u32 %v8812, %v8813
      %v8816 = vrot.slane %v8812, 4
      %v8818 = vshrl.u32 %v8688, 16
      %v8820 = vrot.slane %v8818, 7
      %v8821 = vshll.u32 %v8688, 16
      %v8823 = vor.u32 %v8820, %v8821
      %v8824 = vsel %vm739, %v8816, %v8823
      %v8825 = vrot.slane %v8820, 4
      %v8827 = vshrl.u32 %v8689, 16
      %v8829 = vrot.slane %v8827, 7
      %v8830 = vshll.u32 %v8689, 16
      %v8832 = vor.u32 %v8829, %v8830
      %v8833 = vrot.slane %v8829, 4
      %v8835 = vshrl.u32 %v8690, 16
      %v8837 = vrot.slane %v8835, 7
      %v8838 = vshll.u32 %v8690, 16
      %v8840 = vor.u32 %v8837, %v8838
      %v8841 = vsel %vm739, %v8833, %v8840
      %v8842 = vrot.slane %v8837, 4
      %v8844 = vshrl.u32 %v8691, 16
      %v8846 = vrot.slane %v8844, 7
      %v8847 = vshll.u32 %v8691, 16
      %v8849 = vor.u32 %v8846, %v8847
      %v8850 = vrot.slane %v8846, 4
      %v8852 = vshrl.u32 %v8692, 16
      %v8854 = vrot.slane %v8852, 7
      %v8855 = vshll.u32 %v8692, 16
      %v8857 = vor.u32 %v8854, %v8855
      %v8858 = vsel %vm739, %v8850, %v8857
      %v8859 = vrot.slane %v8854, 4
      %v8861 = vshrl.u32 %v8693, 16
      %v8863 = vrot.slane %v8861, 7
      %v8864 = vshll.u32 %v8693, 16
      %v8866 = vor.u32 %v8863, %v8864
      %v8867 = vrot.slane %v8863, 4
      %v8869 = vshrl.u32 %v8694, 16
      %v8871 = vrot.slane %v8869, 7
      %v8872 = vshll.u32 %v8694, 16
      %v8874 = vor.u32 %v8871, %v8872
      %v8875 = vsel %vm739, %v8867, %v8874
      %v8876 = vrot.slane %v8871, 4
      %v8878 = vshrl.u32 %v8695, 16
      %v8880 = vrot.slane %v8878, 7
      %v8881 = vshll.u32 %v8695, 16
      %v8883 = vor.u32 %v8880, %v8881
      %v8884 = vrot.slane %v8880, 4
      %v8886 = vshrl.u32 %v8696, 16
      %v8888 = vrot.slane %v8886, 7
      %v8889 = vshll.u32 %v8696, 16
      %v8891 = vor.u32 %v8888, %v8889
      %v8892 = vsel %vm739, %v8884, %v8891
      %v8893 = vrot.slane %v8888, 4
      %v8895 = vshrl.u32 %v8697, 16
      %v8897 = vrot.slane %v8895, 7
      %v8898 = vshll.u32 %v8697, 16
      %v8900 = vor.u32 %v8897, %v8898
      %v8901 = vrot.slane %v8897, 4
      %v8903 = vshrl.u32 %v8698, 16
      %v8905 = vrot.slane %v8903, 7
      %v8906 = vshll.u32 %v8698, 16
      %v8908 = vor.u32 %v8905, %v8906
      %v8909 = vsel %vm739, %v8901, %v8908
      %v8910 = vrot.slane %v8905, 4
      %v8912 = vshrl.u32 %v8699, 16
      %v8914 = vrot.slane %v8912, 7
      %v8915 = vshll.u32 %v8699, 16
      %v8917 = vor.u32 %v8914, %v8915
      %v8918 = vrot.slane %v8914, 4
      %v8920 = vshrl.u32 %v8700, 16
      %v8922 = vrot.slane %v8920, 7
      %v8923 = vshll.u32 %v8700, 16
      %v8925 = vor.u32 %v8922, %v8923
      %v8926 = vsel %vm739, %v8918, %v8925
      %v8927 = vrot.slane %v8922, 4
      %v8929 = vshrl.u32 %v8701, 16
      %v8931 = vrot.slane %v8929, 7
      %v8932 = vshll.u32 %v8701, 16
      %v8934 = vor.u32 %v8931, %v8932
      %v8935 = vrot.slane %v8931, 4
      %v8937 = vshrl.u32 %v8702, 16
      %v8939 = vrot.slane %v8937, 7
      %v8940 = vshll.u32 %v8702, 16
      %v8942 = vor.u32 %v8939, %v8940
      %v8943 = vsel %vm739, %v8935, %v8942
      %v8944 = vrot.slane %v8939, 4
      %v8946 = vshrl.u32 %v8703, 16
      %v8948 = vrot.slane %v8946, 7
      %v8949 = vshll.u32 %v8703, 16
      %v8951 = vor.u32 %v8948, %v8949
      %v8952 = vrot.slane %v8948, 4
      %v8954 = vshrl.u32 %v8704, 16
      %v8956 = vrot.slane %v8954, 7
      %v8957 = vshll.u32 %v8704, 16
      %v8959 = vor.u32 %v8956, %v8957
      %v8960 = vsel %vm739, %v8952, %v8959
      %v8961 = vrot.slane %v8956, 4
      %v8963 = vshrl.u32 %v8705, 16
      %v8965 = vrot.slane %v8963, 7
      %v8966 = vshll.u32 %v8705, 16
      %v8968 = vor.u32 %v8965, %v8966
      %v8969 = vrot.slane %v8965, 4
      %v8971 = vshrl.u32 %v8706, 16
      %v8973 = vrot.slane %v8971, 7
      %v8974 = vshll.u32 %v8706, 16
      %v8976 = vor.u32 %v8973, %v8974
      %v8977 = vsel %vm739, %v8969, %v8976
      %v8978 = vrot.slane %v8973, 4
      %s9027 = scalar_lea.vmem [#allocation4], 12
      %v9028 = vld [vmem:[%s9027] sm:$0xf]
      %v9029 = vsel %vm1062, %v8713, %v9028
      %9030 = vst [vmem:[%s9027] sm:$0xf] %v9029
      %9031 = vst.msk [vmem:[%s9027 + $0x4] sm:$0xf] %vm354, %v8722
      %v9032 = vld [vmem:[%s9027 + $0x8] sm:$0x1]
      %v9033 = vsel %vm365, %v8723, %v9032
      %9034 = vst [vmem:[%s9027 + $0x8] sm:$0x1] %v9033
      %v9035 = vld [vmem:[%s9027 + $0xc] sm:$0xf]
      %v9036 = vsel %vm1062, %v8730, %v9035
      %9037 = vst [vmem:[%s9027 + $0xc] sm:$0xf] %v9036
      %9038 = vst.msk [vmem:[%s9027 + $0x10] sm:$0xf] %vm354, %v8739
      %v9039 = vld [vmem:[%s9027 + $0x14] sm:$0x1]
      %v9040 = vsel %vm365, %v8740, %v9039
      %9041 = vst [vmem:[%s9027 + $0x14] sm:$0x1] %v9040
      %v9042 = vld [vmem:[%s9027 + $0x18] sm:$0xf]
      %v9043 = vsel %vm1062, %v8747, %v9042
      %9044 = vst [vmem:[%s9027 + $0x18] sm:$0xf] %v9043
      %9045 = vst.msk [vmem:[%s9027 + $0x1c] sm:$0xf] %vm354, %v8756
      %v9046 = vld [vmem:[%s9027 + $0x20] sm:$0x1]
      %v9047 = vsel %vm365, %v8757, %v9046
      %9048 = vst [vmem:[%s9027 + $0x20] sm:$0x1] %v9047
      %v9049 = vld [vmem:[%s9027 + $0x24] sm:$0xf]
      %v9050 = vsel %vm1062, %v8764, %v9049
      %9051 = vst [vmem:[%s9027 + $0x24] sm:$0xf] %v9050
      %9052 = vst.msk [vmem:[%s9027 + $0x28] sm:$0xf] %vm354, %v8773
      %v9053 = vld [vmem:[%s9027 + $0x2c] sm:$0x1]
      %v9054 = vsel %vm365, %v8774, %v9053
      %9055 = vst [vmem:[%s9027 + $0x2c] sm:$0x1] %v9054
      %v9056 = vld [vmem:[%s9027 + $0x30] sm:$0xf]
      %v9057 = vsel %vm1062, %v8781, %v9056
      %9058 = vst [vmem:[%s9027 + $0x30] sm:$0xf] %v9057
      %9059 = vst.msk [vmem:[%s9027 + $0x34] sm:$0xf] %vm354, %v8790
      %v9060 = vld [vmem:[%s9027 + $0x38] sm:$0x1]
      %v9061 = vsel %vm365, %v8791, %v9060
      %9062 = vst [vmem:[%s9027 + $0x38] sm:$0x1] %v9061
      %v9063 = vld [vmem:[%s9027 + $0x3c] sm:$0xf]
      %v9064 = vsel %vm1062, %v8798, %v9063
      %9065 = vst [vmem:[%s9027 + $0x3c] sm:$0xf] %v9064
      %9066 = vst.msk [vmem:[%s9027 + $0x40] sm:$0xf] %vm354, %v8807
      %v9067 = vld [vmem:[%s9027 + $0x44] sm:$0x1]
      %v9068 = vsel %vm365, %v8808, %v9067
      %9069 = vst [vmem:[%s9027 + $0x44] sm:$0x1] %v9068
      %v9070 = vld [vmem:[%s9027 + $0x48] sm:$0xf]
      %v9071 = vsel %vm1062, %v8815, %v9070
      %9072 = vst [vmem:[%s9027 + $0x48] sm:$0xf] %v9071
      %9073 = vst.msk [vmem:[%s9027 + $0x4c] sm:$0xf] %vm354, %v8824
      %v9074 = vld [vmem:[%s9027 + $0x50] sm:$0x1]
      %v9075 = vsel %vm365, %v8825, %v9074
      %9076 = vst [vmem:[%s9027 + $0x50] sm:$0x1] %v9075
      %v9077 = vld [vmem:[%s9027 + $0x54] sm:$0xf]
      %v9078 = vsel %vm1062, %v8832, %v9077
      %9079 = vst [vmem:[%s9027 + $0x54] sm:$0xf] %v9078
      %9080 = vst.msk [vmem:[%s9027 + $0x58] sm:$0xf] %vm354, %v8841
      %v9081 = vld [vmem:[%s9027 + $0x5c] sm:$0x1]
      %v9082 = vsel %vm365, %v8842, %v9081
      %9083 = vst [vmem:[%s9027 + $0x5c] sm:$0x1] %v9082
      %v9084 = vld [vmem:[%s9027 + $0x60] sm:$0xf]
      %v9085 = vsel %vm1062, %v8849, %v9084
      %9086 = vst [vmem:[%s9027 + $0x60] sm:$0xf] %v9085
      %9087 = vst.msk [vmem:[%s9027 + $0x64] sm:$0xf] %vm354, %v8858
      %v9088 = vld [vmem:[%s9027 + $0x68] sm:$0x1]
      %v9089 = vsel %vm365, %v8859, %v9088
      %9090 = vst [vmem:[%s9027 + $0x68] sm:$0x1] %v9089
      %v9091 = vld [vmem:[%s9027 + $0x6c] sm:$0xf]
      %v9092 = vsel %vm1062, %v8866, %v9091
      %9093 = vst [vmem:[%s9027 + $0x6c] sm:$0xf] %v9092
      %9094 = vst.msk [vmem:[%s9027 + $0x70] sm:$0xf] %vm354, %v8875
      %v9095 = vld [vmem:[%s9027 + $0x74] sm:$0x1]
      %v9096 = vsel %vm365, %v8876, %v9095
      %9097 = vst [vmem:[%s9027 + $0x74] sm:$0x1] %v9096
      %v9098 = vld [vmem:[%s9027 + $0x78] sm:$0xf]
      %v9099 = vsel %vm1062, %v8883, %v9098
      %9100 = vst [vmem:[%s9027 + $0x78] sm:$0xf] %v9099
      %9101 = vst.msk [vmem:[%s9027 + $0x7c] sm:$0xf] %vm354, %v8892
      %v9102 = vld [vmem:[%s9027 + $0x80] sm:$0x1]
      %v9103 = vsel %vm365, %v8893, %v9102
      %9104 = vst [vmem:[%s9027 + $0x80] sm:$0x1] %v9103
      %v9105 = vld [vmem:[%s9027 + $0x84] sm:$0xf]
      %v9106 = vsel %vm1062, %v8900, %v9105
      %9107 = vst [vmem:[%s9027 + $0x84] sm:$0xf] %v9106
      %9108 = vst.msk [vmem:[%s9027 + $0x88] sm:$0xf] %vm354, %v8909
      %v9109 = vld [vmem:[%s9027 + $0x8c] sm:$0x1]
      %v9110 = vsel %vm365, %v8910, %v9109
      %9111 = vst [vmem:[%s9027 + $0x8c] sm:$0x1] %v9110
      %v9112 = vld [vmem:[%s9027 + $0x90] sm:$0xf]
      %v9113 = vsel %vm1062, %v8917, %v9112
      %9114 = vst [vmem:[%s9027 + $0x90] sm:$0xf] %v9113
      %9115 = vst.msk [vmem:[%s9027 + $0x94] sm:$0xf] %vm354, %v8926
      %v9116 = vld [vmem:[%s9027 + $0x98] sm:$0x1]
      %v9117 = vsel %vm365, %v8927, %v9116
      %9118 = vst [vmem:[%s9027 + $0x98] sm:$0x1] %v9117
      %v9119 = vld [vmem:[%s9027 + $0x9c] sm:$0xf]
      %v9120 = vsel %vm1062, %v8934, %v9119
      %9121 = vst [vmem:[%s9027 + $0x9c] sm:$0xf] %v9120
      %9122 = vst.msk [vmem:[%s9027 + $0xa0] sm:$0xf] %vm354, %v8943
      %v9123 = vld [vmem:[%s9027 + $0xa4] sm:$0x1]
      %v9124 = vsel %vm365, %v8944, %v9123
      %9125 = vst [vmem:[%s9027 + $0xa4] sm:$0x1] %v9124
      %v9126 = vld [vmem:[%s9027 + $0xa8] sm:$0xf]
      %v9127 = vsel %vm1062, %v8951, %v9126
      %9128 = vst [vmem:[%s9027 + $0xa8] sm:$0xf] %v9127
      %9129 = vst.msk [vmem:[%s9027 + $0xac] sm:$0xf] %vm354, %v8960
      %v9130 = vld [vmem:[%s9027 + $0xb0] sm:$0x1]
      %v9131 = vsel %vm365, %v8961, %v9130
      %9132 = vst [vmem:[%s9027 + $0xb0] sm:$0x1] %v9131
      %v9133 = vld [vmem:[%s9027 + $0xb4] sm:$0xf]
      %v9134 = vsel %vm1062, %v8968, %v9133
      %9135 = vst [vmem:[%s9027 + $0xb4] sm:$0xf] %v9134
      %9136 = vst.msk [vmem:[%s9027 + $0xb8] sm:$0xf] %vm354, %v8977
      %v9137 = vld [vmem:[%s9027 + $0xbc] sm:$0x1]
      %v9138 = vsel %vm365, %v8978, %v9137
      %9139 = vst [vmem:[%s9027 + $0xbc] sm:$0x1] %v9138
      %v9140 = vld [vmem:[#allocation4] sm:$0xf]
      %v9141 = vld [vmem:[#allocation4 + $0x4] sm:$0xf]
      %v9142 = vld [vmem:[#allocation4 + $0xc] sm:$0xf]
      %v9143 = vld [vmem:[#allocation4 + $0x10] sm:$0xf]
      %v9144 = vld [vmem:[#allocation4 + $0x18] sm:$0xf]
      %v9145 = vld [vmem:[#allocation4 + $0x1c] sm:$0xf]
      %v9146 = vld [vmem:[#allocation4 + $0x24] sm:$0xf]
      %v9147 = vld [vmem:[#allocation4 + $0x28] sm:$0xf]
      %v9148 = vld [vmem:[#allocation4 + $0x30] sm:$0xf]
      %v9149 = vld [vmem:[#allocation4 + $0x34] sm:$0xf]
      %v9150 = vld [vmem:[#allocation4 + $0x3c] sm:$0xf]
      %v9151 = vld [vmem:[#allocation4 + $0x40] sm:$0xf]
      %v9152 = vld [vmem:[#allocation4 + $0x48] sm:$0xf]
      %v9153 = vld [vmem:[#allocation4 + $0x4c] sm:$0xf]
      %v9154 = vld [vmem:[#allocation4 + $0x54] sm:$0xf]
      %v9155 = vld [vmem:[#allocation4 + $0x58] sm:$0xf]
      %v9156 = vld [vmem:[#allocation4 + $0x60] sm:$0xf]
      %v9157 = vld [vmem:[#allocation4 + $0x64] sm:$0xf]
      %v9158 = vld [vmem:[#allocation4 + $0x6c] sm:$0xf]
      %v9159 = vld [vmem:[#allocation4 + $0x70] sm:$0xf]
      %v9160 = vld [vmem:[#allocation4 + $0x78] sm:$0xf]
      %v9161 = vld [vmem:[#allocation4 + $0x7c] sm:$0xf]
      %v9162 = vld [vmem:[#allocation4 + $0x84] sm:$0xf]
      %v9163 = vld [vmem:[#allocation4 + $0x88] sm:$0xf]
      %v9164 = vld [vmem:[#allocation4 + $0x90] sm:$0xf]
      %v9165 = vld [vmem:[#allocation4 + $0x94] sm:$0xf]
      %v9166 = vld [vmem:[#allocation4 + $0x9c] sm:$0xf]
      %v9167 = vld [vmem:[#allocation4 + $0xa0] sm:$0xf]
      %v9168 = vld [vmem:[#allocation4 + $0xa8] sm:$0xf]
      %v9169 = vld [vmem:[#allocation4 + $0xac] sm:$0xf]
      %v9170 = vld [vmem:[#allocation4 + $0xb4] sm:$0xf]
      %v9171 = vld [vmem:[#allocation4 + $0xb8] sm:$0xf]
      %v9172 = vld [vmem:[#allocation4 + $0x8] sm:$0x1]
      %v9173 = vld [vmem:[#allocation4 + $0x14] sm:$0x1]
      %v9174 = vld [vmem:[#allocation4 + $0x20] sm:$0x1]
      %v9175 = vld [vmem:[#allocation4 + $0x2c] sm:$0x1]
      %v9176 = vld [vmem:[#allocation4 + $0x38] sm:$0x1]
      %v9177 = vld [vmem:[#allocation4 + $0x44] sm:$0x1]
      %v9178 = vld [vmem:[#allocation4 + $0x50] sm:$0x1]
      %v9179 = vld [vmem:[#allocation4 + $0x5c] sm:$0x1]
      %v9180 = vld [vmem:[#allocation4 + $0x68] sm:$0x1]
      %v9181 = vld [vmem:[#allocation4 + $0x74] sm:$0x1]
      %v9182 = vld [vmem:[#allocation4 + $0x80] sm:$0x1]
      %v9183 = vld [vmem:[#allocation4 + $0x8c] sm:$0x1]
      %v9184 = vld [vmem:[#allocation4 + $0x98] sm:$0x1]
      %v9185 = vld [vmem:[#allocation4 + $0xa4] sm:$0x1]
      %v9186 = vld [vmem:[#allocation4 + $0xb0] sm:$0x1]
      %v9187 = vld [vmem:[#allocation4 + $0xbc] sm:$0x1]
      %v9188 = vld [vmem:[#allocation4] sm:$0xe]
      %v9189 = vld [vmem:[#allocation4 + $0xc] sm:$0xe]
      %v9190 = vld [vmem:[#allocation4 + $0x18] sm:$0xe]
      %v9191 = vld [vmem:[#allocation4 + $0x24] sm:$0xe]
      %v9192 = vld [vmem:[#allocation4 + $0x30] sm:$0xe]
      %v9193 = vld [vmem:[#allocation4 + $0x3c] sm:$0xe]
      %v9194 = vld [vmem:[#allocation4 + $0x48] sm:$0xe]
      %v9195 = vld [vmem:[#allocation4 + $0x54] sm:$0xe]
      %v9196 = vld [vmem:[#allocation4 + $0x60] sm:$0xe]
      %v9197 = vld [vmem:[#allocation4 + $0x6c] sm:$0xe]
      %v9198 = vld [vmem:[#allocation4 + $0x78] sm:$0xe]
      %v9199 = vld [vmem:[#allocation4 + $0x84] sm:$0xe]
      %v9200 = vld [vmem:[#allocation4 + $0x90] sm:$0xe]
      %v9201 = vld [vmem:[#allocation4 + $0x9c] sm:$0xe]
      %v9202 = vld [vmem:[#allocation4 + $0xa8] sm:$0xe]
      %v9203 = vld [vmem:[#allocation4 + $0xb4] sm:$0xe]
      %v9236 = vunpack.c.l.b16 %v9140
      %v9237 = vunpack.c.l.b16 %v9141
      %v9238 = vunpack.c.l.b16 %v9142
      %v9239 = vunpack.c.l.b16 %v9143
      %v9240 = vunpack.c.l.b16 %v9144
      %v9241 = vunpack.c.l.b16 %v9145
      %v9242 = vunpack.c.l.b16 %v9146
      %v9243 = vunpack.c.l.b16 %v9147
      %v9244 = vunpack.c.l.b16 %v9148
      %v9245 = vunpack.c.l.b16 %v9149
      %v9246 = vunpack.c.l.b16 %v9150
      %v9247 = vunpack.c.l.b16 %v9151
      %v9248 = vunpack.c.l.b16 %v9152
      %v9249 = vunpack.c.l.b16 %v9153
      %v9250 = vunpack.c.l.b16 %v9154
      %v9251 = vunpack.c.l.b16 %v9155
      %v9252 = vunpack.c.l.b16 %v9156
      %v9253 = vunpack.c.l.b16 %v9157
      %v9254 = vunpack.c.l.b16 %v9158
      %v9255 = vunpack.c.l.b16 %v9159
      %v9256 = vunpack.c.l.b16 %v9160
      %v9257 = vunpack.c.l.b16 %v9161
      %v9258 = vunpack.c.l.b16 %v9162
      %v9259 = vunpack.c.l.b16 %v9163
      %v9260 = vunpack.c.l.b16 %v9164
      %v9261 = vunpack.c.l.b16 %v9165
      %v9262 = vunpack.c.l.b16 %v9166
      %v9263 = vunpack.c.l.b16 %v9167
      %v9264 = vunpack.c.l.b16 %v9168
      %v9265 = vunpack.c.l.b16 %v9169
      %v9266 = vunpack.c.l.b16 %v9170
      %v9267 = vunpack.c.l.b16 %v9171
      %v9268 = vpack.c.b16 %v9237, %v9236
      %v9269 = vpack.c.b16 %v9239, %v9238
      %v9270 = vpack.c.b16 %v9241, %v9240
      %v9271 = vpack.c.b16 %v9243, %v9242
      %v9272 = vpack.c.b16 %v9245, %v9244
      %v9273 = vpack.c.b16 %v9247, %v9246
      %v9274 = vpack.c.b16 %v9249, %v9248
      %v9275 = vpack.c.b16 %v9251, %v9250
      %v9276 = vpack.c.b16 %v9253, %v9252
      %v9277 = vpack.c.b16 %v9255, %v9254
      %v9278 = vpack.c.b16 %v9257, %v9256
      %v9279 = vpack.c.b16 %v9259, %v9258
      %v9280 = vpack.c.b16 %v9261, %v9260
      %v9281 = vpack.c.b16 %v9263, %v9262
      %v9282 = vpack.c.b16 %v9265, %v9264
      %v9283 = vpack.c.b16 %v9267, %v9266
      %v9300 = vunpack.c.l.b16 %v9172
      %v9301 = vunpack.c.l.b16 %v9173
      %v9302 = vunpack.c.l.b16 %v9174
      %v9303 = vunpack.c.l.b16 %v9175
      %v9304 = vunpack.c.l.b16 %v9176
      %v9305 = vunpack.c.l.b16 %v9177
      %v9306 = vunpack.c.l.b16 %v9178
      %v9307 = vunpack.c.l.b16 %v9179
      %v9308 = vunpack.c.l.b16 %v9180
      %v9309 = vunpack.c.l.b16 %v9181
      %v9310 = vunpack.c.l.b16 %v9182
      %v9311 = vunpack.c.l.b16 %v9183
      %v9312 = vunpack.c.l.b16 %v9184
      %v9313 = vunpack.c.l.b16 %v9185
      %v9314 = vunpack.c.l.b16 %v9186
      %v9315 = vunpack.c.l.b16 %v9187
      %v9316 = vpack.c.b16 %v9300, %v9300
      %v9317 = vpack.c.b16 %v9301, %v9301
      %v9318 = vpack.c.b16 %v9302, %v9302
      %v9319 = vpack.c.b16 %v9303, %v9303
      %v9320 = vpack.c.b16 %v9304, %v9304
      %v9321 = vpack.c.b16 %v9305, %v9305
      %v9322 = vpack.c.b16 %v9306, %v9306
      %v9323 = vpack.c.b16 %v9307, %v9307
      %v9324 = vpack.c.b16 %v9308, %v9308
      %v9325 = vpack.c.b16 %v9309, %v9309
      %v9326 = vpack.c.b16 %v9310, %v9310
      %v9327 = vpack.c.b16 %v9311, %v9311
      %v9328 = vpack.c.b16 %v9312, %v9312
      %v9329 = vpack.c.b16 %v9313, %v9313
      %v9330 = vpack.c.b16 %v9314, %v9314
      %v9331 = vpack.c.b16 %v9315, %v9315
      %v9333 = vshrl.u32 %v9268, 16
      %v9335 = vshll.u32 %v9268, 16
      %v9337 = vrot.slane %v9335, 1
      %v9338 = vor.u32 %v9333, %v9337
      %v9340 = vshll.u32 %v9316, 16
      %v9342 = vrot.slane %v9340, 1
      %v9343 = vsel %vm3759, %v9338, %v9342
      %v9345 = vshrl.u32 %v9269, 16
      %v9347 = vshll.u32 %v9269, 16
      %v9349 = vrot.slane %v9347, 1
      %v9350 = vor.u32 %v9345, %v9349
      %v9352 = vshll.u32 %v9317, 16
      %v9354 = vrot.slane %v9352, 1
      %v9355 = vsel %vm3759, %v9350, %v9354
      %v9357 = vshrl.u32 %v9270, 16
      %v9359 = vshll.u32 %v9270, 16
      %v9361 = vrot.slane %v9359, 1
      %v9362 = vor.u32 %v9357, %v9361
      %v9364 = vshll.u32 %v9318, 16
      %v9366 = vrot.slane %v9364, 1
      %v9367 = vsel %vm3759, %v9362, %v9366
      %v9369 = vshrl.u32 %v9271, 16
      %v9371 = vshll.u32 %v9271, 16
      %v9373 = vrot.slane %v9371, 1
      %v9374 = vor.u32 %v9369, %v9373
      %v9376 = vshll.u32 %v9319, 16
      %v9378 = vrot.slane %v9376, 1
      %v9379 = vsel %vm3759, %v9374, %v9378
      %v9381 = vshrl.u32 %v9272, 16
      %v9383 = vshll.u32 %v9272, 16
      %v9385 = vrot.slane %v9383, 1
      %v9386 = vor.u32 %v9381, %v9385
      %v9388 = vshll.u32 %v9320, 16
      %v9390 = vrot.slane %v9388, 1
      %v9391 = vsel %vm3759, %v9386, %v9390
      %v9393 = vshrl.u32 %v9273, 16
      %v9395 = vshll.u32 %v9273, 16
      %v9397 = vrot.slane %v9395, 1
      %v9398 = vor.u32 %v9393, %v9397
      %v9400 = vshll.u32 %v9321, 16
      %v9402 = vrot.slane %v9400, 1
      %v9403 = vsel %vm3759, %v9398, %v9402
      %v9405 = vshrl.u32 %v9274, 16
      %v9407 = vshll.u32 %v9274, 16
      %v9409 = vrot.slane %v9407, 1
      %v9410 = vor.u32 %v9405, %v9409
      %v9412 = vshll.u32 %v9322, 16
      %v9414 = vrot.slane %v9412, 1
      %v9415 = vsel %vm3759, %v9410, %v9414
      %v9417 = vshrl.u32 %v9275, 16
      %v9419 = vshll.u32 %v9275, 16
      %v9421 = vrot.slane %v9419, 1
      %v9422 = vor.u32 %v9417, %v9421
      %v9424 = vshll.u32 %v9323, 16
      %v9426 = vrot.slane %v9424, 1
      %v9427 = vsel %vm3759, %v9422, %v9426
      %v9429 = vshrl.u32 %v9276, 16
      %v9431 = vshll.u32 %v9276, 16
      %v9433 = vrot.slane %v9431, 1
      %v9434 = vor.u32 %v9429, %v9433
      %v9436 = vshll.u32 %v9324, 16
      %v9438 = vrot.slane %v9436, 1
      %v9439 = vsel %vm3759, %v9434, %v9438
      %v9441 = vshrl.u32 %v9277, 16
      %v9443 = vshll.u32 %v9277, 16
      %v9445 = vrot.slane %v9443, 1
      %v9446 = vor.u32 %v9441, %v9445
      %v9448 = vshll.u32 %v9325, 16
      %v9450 = vrot.slane %v9448, 1
      %v9451 = vsel %vm3759, %v9446, %v9450
      %v9453 = vshrl.u32 %v9278, 16
      %v9455 = vshll.u32 %v9278, 16
      %v9457 = vrot.slane %v9455, 1
      %v9458 = vor.u32 %v9453, %v9457
      %v9460 = vshll.u32 %v9326, 16
      %v9462 = vrot.slane %v9460, 1
      %v9463 = vsel %vm3759, %v9458, %v9462
      %v9465 = vshrl.u32 %v9279, 16
      %v9467 = vshll.u32 %v9279, 16
      %v9469 = vrot.slane %v9467, 1
      %v9470 = vor.u32 %v9465, %v9469
      %v9472 = vshll.u32 %v9327, 16
      %v9474 = vrot.slane %v9472, 1
      %v9475 = vsel %vm3759, %v9470, %v9474
      %v9477 = vshrl.u32 %v9280, 16
      %v9479 = vshll.u32 %v9280, 16
      %v9481 = vrot.slane %v9479, 1
      %v9482 = vor.u32 %v9477, %v9481
      %v9484 = vshll.u32 %v9328, 16
      %v9486 = vrot.slane %v9484, 1
      %v9487 = vsel %vm3759, %v9482, %v9486
      %v9489 = vshrl.u32 %v9281, 16
      %v9491 = vshll.u32 %v9281, 16
      %v9493 = vrot.slane %v9491, 1
      %v9494 = vor.u32 %v9489, %v9493
      %v9496 = vshll.u32 %v9329, 16
      %v9498 = vrot.slane %v9496, 1
      %v9499 = vsel %vm3759, %v9494, %v9498
      %v9501 = vshrl.u32 %v9282, 16
      %v9503 = vshll.u32 %v9282, 16
      %v9505 = vrot.slane %v9503, 1
      %v9506 = vor.u32 %v9501, %v9505
      %v9508 = vshll.u32 %v9330, 16
      %v9510 = vrot.slane %v9508, 1
      %v9511 = vsel %vm3759, %v9506, %v9510
      %v9513 = vshrl.u32 %v9283, 16
      %v9515 = vshll.u32 %v9283, 16
      %v9517 = vrot.slane %v9515, 1
      %v9518 = vor.u32 %v9513, %v9517
      %v9520 = vshll.u32 %v9331, 16
      %v9522 = vrot.slane %v9520, 1
      %v9523 = vsel %vm3759, %v9518, %v9522
      %9524 = vrot.lane.b32.xlu0 %v9343, 4
      %v9525 = vpop.permute.xlu0 %9524
      %9526 = vrot.lane.b32.xlu0 %v9355, 4
      %v9527 = vpop.permute.xlu0 %9526
      %9528 = vrot.lane.b32.xlu0 %v9367, 4
      %v9529 = vpop.permute.xlu0 %9528
      %9530 = vrot.lane.b32.xlu0 %v9379, 4
      %v9531 = vpop.permute.xlu0 %9530
      %9532 = vrot.lane.b32.xlu0 %v9391, 4
      %v9533 = vpop.permute.xlu0 %9532
      %9534 = vrot.lane.b32.xlu0 %v9403, 4
      %v9535 = vpop.permute.xlu0 %9534
      %9536 = vrot.lane.b32.xlu0 %v9415, 4
      %v9537 = vpop.permute.xlu0 %9536
      %9538 = vrot.lane.b32.xlu0 %v9427, 4
      %v9539 = vpop.permute.xlu0 %9538
      %9540 = vrot.lane.b32.xlu0 %v9439, 4
      %v9541 = vpop.permute.xlu0 %9540
      %9542 = vrot.lane.b32.xlu0 %v9451, 4
      %v9543 = vpop.permute.xlu0 %9542
      %9544 = vrot.lane.b32.xlu0 %v9463, 4
      %v9545 = vpop.permute.xlu0 %9544
      %9546 = vrot.lane.b32.xlu0 %v9475, 4
      %v9547 = vpop.permute.xlu0 %9546
      %9548 = vrot.lane.b32.xlu0 %v9487, 4
      %v9549 = vpop.permute.xlu0 %9548
      %9550 = vrot.lane.b32.xlu0 %v9499, 4
      %v9551 = vpop.permute.xlu0 %9550
      %9552 = vrot.lane.b32.xlu0 %v9511, 4
      %v9553 = vpop.permute.xlu0 %9552
      %9554 = vrot.lane.b32.xlu0 %v9523, 4
      %v9555 = vpop.permute.xlu0 %9554
      %v9572 = vunpack.c.l.b16 %v9188
      %v9573 = vunpack.c.l.b16 %v9189
      %v9574 = vunpack.c.l.b16 %v9190
      %v9575 = vunpack.c.l.b16 %v9191
      %v9576 = vunpack.c.l.b16 %v9192
      %v9577 = vunpack.c.l.b16 %v9193
      %v9578 = vunpack.c.l.b16 %v9194
      %v9579 = vunpack.c.l.b16 %v9195
      %v9580 = vunpack.c.l.b16 %v9196
      %v9581 = vunpack.c.l.b16 %v9197
      %v9582 = vunpack.c.l.b16 %v9198
      %v9583 = vunpack.c.l.b16 %v9199
      %v9584 = vunpack.c.l.b16 %v9200
      %v9585 = vunpack.c.l.b16 %v9201
      %v9586 = vunpack.c.l.b16 %v9202
      %v9587 = vunpack.c.l.b16 %v9203
      %v9588 = vpack.c.b16 %v9237, %v9572
      %v9589 = vpack.c.b16 %v9239, %v9573
      %v9590 = vpack.c.b16 %v9241, %v9574
      %v9591 = vpack.c.b16 %v9243, %v9575
      %v9592 = vpack.c.b16 %v9245, %v9576
      %v9593 = vpack.c.b16 %v9247, %v9577
      %v9594 = vpack.c.b16 %v9249, %v9578
      %v9595 = vpack.c.b16 %v9251, %v9579
      %v9596 = vpack.c.b16 %v9253, %v9580
      %v9597 = vpack.c.b16 %v9255, %v9581
      %v9598 = vpack.c.b16 %v9257, %v9582
      %v9599 = vpack.c.b16 %v9259, %v9583
      %v9600 = vpack.c.b16 %v9261, %v9584
      %v9601 = vpack.c.b16 %v9263, %v9585
      %v9602 = vpack.c.b16 %v9265, %v9586
      %v9603 = vpack.c.b16 %v9267, %v9587
      %v9604 = vrot.slane %v9588, 1
      %v9605 = vrot.slane %v9316, 1
      %v9606 = vsel %vm4032, %v9604, %v9605
      %v9607 = vrot.slane %v9589, 1
      %v9608 = vrot.slane %v9317, 1
      %v9609 = vsel %vm4032, %v9607, %v9608
      %v9610 = vrot.slane %v9590, 1
      %v9611 = vrot.slane %v9318, 1
      %v9612 = vsel %vm4032, %v9610, %v9611
      %v9613 = vrot.slane %v9591, 1
      %v9614 = vrot.slane %v9319, 1
      %v9615 = vsel %vm4032, %v9613, %v9614
      %v9616 = vrot.slane %v9592, 1
      %v9617 = vrot.slane %v9320, 1
      %v9618 = vsel %vm4032, %v9616, %v9617
      %v9619 = vrot.slane %v9593, 1
      %v9620 = vrot.slane %v9321, 1
      %v9621 = vsel %vm4032, %v9619, %v9620
      %v9622 = vrot.slane %v9594, 1
      %v9623 = vrot.slane %v9322, 1
      %v9624 = vsel %vm4032, %v9622, %v9623
      %v9625 = vrot.slane %v9595, 1
      %v9626 = vrot.slane %v9323, 1
      %v9627 = vsel %vm4032, %v9625, %v9626
      %v9628 = vrot.slane %v9596, 1
      %v9629 = vrot.slane %v9324, 1
      %v9630 = vsel %vm4032, %v9628, %v9629
      %v9631 = vrot.slane %v9597, 1
      %v9632 = vrot.slane %v9325, 1
      %v9633 = vsel %vm4032, %v9631, %v9632
      %v9634 = vrot.slane %v9598, 1
      %v9635 = vrot.slane %v9326, 1
      %v9636 = vsel %vm4032, %v9634, %v9635
      %v9637 = vrot.slane %v9599, 1
      %v9638 = vrot.slane %v9327, 1
      %v9639 = vsel %vm4032, %v9637, %v9638
      %v9640 = vrot.slane %v9600, 1
      %v9641 = vrot.slane %v9328, 1
      %v9642 = vsel %vm4032, %v9640, %v9641
      %v9643 = vrot.slane %v9601, 1
      %v9644 = vrot.slane %v9329, 1
      %v9645 = vsel %vm4032, %v9643, %v9644
      %v9646 = vrot.slane %v9602, 1
      %v9647 = vrot.slane %v9330, 1
      %v9648 = vsel %vm4032, %v9646, %v9647
      %v9649 = vrot.slane %v9603, 1
      %v9650 = vrot.slane %v9331, 1
      %v9651 = vsel %vm4032, %v9649, %v9650
      %9652 = vrot.lane.b32.xlu0 %v9606, 8
      %v9653 = vpop.permute.xlu0 %9652
      %9654 = vrot.lane.b32.xlu0 %v9609, 8
      %v9655 = vpop.permute.xlu0 %9654
      %9656 = vrot.lane.b32.xlu0 %v9612, 8
      %v9657 = vpop.permute.xlu0 %9656
      %9658 = vrot.lane.b32.xlu0 %v9615, 8
      %v9659 = vpop.permute.xlu0 %9658
      %9660 = vrot.lane.b32.xlu0 %v9618, 8
      %v9661 = vpop.permute.xlu0 %9660
      %9662 = vrot.lane.b32.xlu0 %v9621, 8
      %v9663 = vpop.permute.xlu0 %9662
      %9664 = vrot.lane.b32.xlu0 %v9624, 8
      %v9665 = vpop.permute.xlu0 %9664
      %9666 = vrot.lane.b32.xlu0 %v9627, 8
      %v9667 = vpop.permute.xlu0 %9666
      %9668 = vrot.lane.b32.xlu0 %v9630, 8
      %v9669 = vpop.permute.xlu0 %9668
      %9670 = vrot.lane.b32.xlu0 %v9633, 8
      %v9671 = vpop.permute.xlu0 %9670
      %9672 = vrot.lane.b32.xlu0 %v9636, 8
      %v9673 = vpop.permute.xlu0 %9672
      %9674 = vrot.lane.b32.xlu0 %v9639, 8
      %v9675 = vpop.permute.xlu0 %9674
      %9676 = vrot.lane.b32.xlu0 %v9642, 8
      %v9677 = vpop.permute.xlu0 %9676
      %9678 = vrot.lane.b32.xlu0 %v9645, 8
      %v9679 = vpop.permute.xlu0 %9678
      %9680 = vrot.lane.b32.xlu0 %v9648, 8
      %v9681 = vpop.permute.xlu0 %9680
      %9682 = vrot.lane.b32.xlu0 %v9651, 8
      %v9683 = vpop.permute.xlu0 %9682
      %v9685 = vsel %vm4113, %v9268, %v9525
      %v9687 = vsel %vm4113, %v9269, %v9527
      %v9689 = vsel %vm4113, %v9270, %v9529
      %v9691 = vsel %vm4113, %v9271, %v9531
      %v9693 = vsel %vm4113, %v9272, %v9533
      %v9695 = vsel %vm4113, %v9273, %v9535
      %v9697 = vsel %vm4113, %v9274, %v9537
      %v9699 = vsel %vm4113, %v9275, %v9539
      %v9701 = vsel %vm4113, %v9276, %v9541
      %v9703 = vsel %vm4113, %v9277, %v9543
      %v9705 = vsel %vm4113, %v9278, %v9545
      %v9707 = vsel %vm4113, %v9279, %v9547
      %v9709 = vsel %vm4113, %v9280, %v9549
      %v9711 = vsel %vm4113, %v9281, %v9551
      %v9713 = vsel %vm4113, %v9282, %v9553
      %v9715 = vsel %vm4113, %v9283, %v9555
      %v9717 = vsel %vm1211, %v9685, %v9653
      %v9719 = vsel %vm1211, %v9687, %v9655
      %v9721 = vsel %vm1211, %v9689, %v9657
      %v9723 = vsel %vm1211, %v9691, %v9659
      %v9725 = vsel %vm1211, %v9693, %v9661
      %v9727 = vsel %vm1211, %v9695, %v9663
      %v9729 = vsel %vm1211, %v9697, %v9665
      %v9731 = vsel %vm1211, %v9699, %v9667
      %v9733 = vsel %vm1211, %v9701, %v9669
      %v9735 = vsel %vm1211, %v9703, %v9671
      %v9737 = vsel %vm1211, %v9705, %v9673
      %v9739 = vsel %vm1211, %v9707, %v9675
      %v9741 = vsel %vm1211, %v9709, %v9677
      %v9743 = vsel %vm1211, %v9711, %v9679
      %v9745 = vsel %vm1211, %v9713, %v9681
      %v9747 = vsel %vm1211, %v9715, %v9683
      %v9748 = vld [vmem:[%s7] sm:$0xf]
      %v9749 = vld [vmem:[%s7 + $0x4] sm:$0x3]
      %v9750 = vld [vmem:[%s9027] sm:$0xf]
      %v9751 = vld [vmem:[%s9027 + $0x4] sm:$0xf]
      %v9752 = vld [vmem:[%s9027 + $0xc] sm:$0xf]
      %v9753 = vld [vmem:[%s9027 + $0x10] sm:$0xf]
      %v9754 = vld [vmem:[%s9027 + $0x18] sm:$0xf]
      %v9755 = vld [vmem:[%s9027 + $0x1c] sm:$0xf]
      %v9756 = vld [vmem:[%s9027 + $0x24] sm:$0xf]
      %v9757 = vld [vmem:[%s9027 + $0x28] sm:$0xf]
      %v9758 = vld [vmem:[%s9027 + $0x30] sm:$0xf]
      %v9759 = vld [vmem:[%s9027 + $0x34] sm:$0xf]
      %v9760 = vld [vmem:[%s9027 + $0x3c] sm:$0xf]
      %v9761 = vld [vmem:[%s9027 + $0x40] sm:$0xf]
      %v9762 = vld [vmem:[%s9027 + $0x48] sm:$0xf]
      %v9763 = vld [vmem:[%s9027 + $0x4c] sm:$0xf]
      %v9764 = vld [vmem:[%s9027 + $0x54] sm:$0xf]
      %v9765 = vld [vmem:[%s9027 + $0x58] sm:$0xf]
      %v9766 = vld [vmem:[%s9027 + $0x60] sm:$0xf]
      %v9767 = vld [vmem:[%s9027 + $0x64] sm:$0xf]
      %v9768 = vld [vmem:[%s9027 + $0x6c] sm:$0xf]
      %v9769 = vld [vmem:[%s9027 + $0x70] sm:$0xf]
      %v9770 = vld [vmem:[%s9027 + $0x78] sm:$0xf]
      %v9771 = vld [vmem:[%s9027 + $0x7c] sm:$0xf]
      %v9772 = vld [vmem:[%s9027 + $0x84] sm:$0xf]
      %v9773 = vld [vmem:[%s9027 + $0x88] sm:$0xf]
      %v9774 = vld [vmem:[%s9027 + $0x90] sm:$0xf]
      %v9775 = vld [vmem:[%s9027 + $0x94] sm:$0xf]
      %v9776 = vld [vmem:[%s9027 + $0x9c] sm:$0xf]
      %v9777 = vld [vmem:[%s9027 + $0xa0] sm:$0xf]
      %v9778 = vld [vmem:[%s9027 + $0xa8] sm:$0xf]
      %v9779 = vld [vmem:[%s9027 + $0xac] sm:$0xf]
      %v9780 = vld [vmem:[%s9027 + $0xb4] sm:$0xf]
      %v9781 = vld [vmem:[%s9027 + $0xb8] sm:$0xf]
      %v9782 = vld [vmem:[%s9027 + $0x8] sm:$0x1]
      %v9783 = vld [vmem:[%s9027 + $0x14] sm:$0x1]
      %v9784 = vld [vmem:[%s9027 + $0x20] sm:$0x1]
      %v9785 = vld [vmem:[%s9027 + $0x2c] sm:$0x1]
      %v9786 = vld [vmem:[%s9027 + $0x38] sm:$0x1]
      %v9787 = vld [vmem:[%s9027 + $0x44] sm:$0x1]
      %v9788 = vld [vmem:[%s9027 + $0x50] sm:$0x1]
      %v9789 = vld [vmem:[%s9027 + $0x5c] sm:$0x1]
      %v9790 = vld [vmem:[%s9027 + $0x68] sm:$0x1]
      %v9791 = vld [vmem:[%s9027 + $0x74] sm:$0x1]
      %v9792 = vld [vmem:[%s9027 + $0x80] sm:$0x1]
      %v9793 = vld [vmem:[%s9027 + $0x8c] sm:$0x1]
      %v9794 = vld [vmem:[%s9027 + $0x98] sm:$0x1]
      %v9795 = vld [vmem:[%s9027 + $0xa4] sm:$0x1]
      %v9796 = vld [vmem:[%s9027 + $0xb0] sm:$0x1]
      %v9797 = vld [vmem:[%s9027 + $0xbc] sm:$0x1]
      %v9798 = vld [vmem:[%s9027] sm:$0xe]
      %v9799 = vld [vmem:[%s9027 + $0xc] sm:$0xe]
      %v9800 = vld [vmem:[%s9027 + $0x18] sm:$0xe]
      %v9801 = vld [vmem:[%s9027 + $0x24] sm:$0xe]
      %v9802 = vld [vmem:[%s9027 + $0x30] sm:$0xe]
      %v9803 = vld [vmem:[%s9027 + $0x3c] sm:$0xe]
      %v9804 = vld [vmem:[%s9027 + $0x48] sm:$0xe]
      %v9805 = vld [vmem:[%s9027 + $0x54] sm:$0xe]
      %v9806 = vld [vmem:[%s9027 + $0x60] sm:$0xe]
      %v9807 = vld [vmem:[%s9027 + $0x6c] sm:$0xe]
      %v9808 = vld [vmem:[%s9027 + $0x78] sm:$0xe]
      %v9809 = vld [vmem:[%s9027 + $0x84] sm:$0xe]
      %v9810 = vld [vmem:[%s9027 + $0x90] sm:$0xe]
      %v9811 = vld [vmem:[%s9027 + $0x9c] sm:$0xe]
      %v9812 = vld [vmem:[%s9027 + $0xa8] sm:$0xe]
      %v9813 = vld [vmem:[%s9027 + $0xb4] sm:$0xe]
      %v9846 = vunpack.c.l.b16 %v9750
      %v9847 = vunpack.c.l.b16 %v9751
      %v9848 = vunpack.c.l.b16 %v9752
      %v9849 = vunpack.c.l.b16 %v9753
      %v9850 = vunpack.c.l.b16 %v9754
      %v9851 = vunpack.c.l.b16 %v9755
      %v9852 = vunpack.c.l.b16 %v9756
      %v9853 = vunpack.c.l.b16 %v9757
      %v9854 = vunpack.c.l.b16 %v9758
      %v9855 = vunpack.c.l.b16 %v9759
      %v9856 = vunpack.c.l.b16 %v9760
      %v9857 = vunpack.c.l.b16 %v9761
      %v9858 = vunpack.c.l.b16 %v9762
      %v9859 = vunpack.c.l.b16 %v9763
      %v9860 = vunpack.c.l.b16 %v9764
      %v9861 = vunpack.c.l.b16 %v9765
      %v9862 = vunpack.c.l.b16 %v9766
      %v9863 = vunpack.c.l.b16 %v9767
      %v9864 = vunpack.c.l.b16 %v9768
      %v9865 = vunpack.c.l.b16 %v9769
      %v9866 = vunpack.c.l.b16 %v9770
      %v9867 = vunpack.c.l.b16 %v9771
      %v9868 = vunpack.c.l.b16 %v9772
      %v9869 = vunpack.c.l.b16 %v9773
      %v9870 = vunpack.c.l.b16 %v9774
      %v9871 = vunpack.c.l.b16 %v9775
      %v9872 = vunpack.c.l.b16 %v9776
      %v9873 = vunpack.c.l.b16 %v9777
      %v9874 = vunpack.c.l.b16 %v9778
      %v9875 = vunpack.c.l.b16 %v9779
      %v9876 = vunpack.c.l.b16 %v9780
      %v9877 = vunpack.c.l.b16 %v9781
      %v9878 = vpack.c.b16 %v9847, %v9846
      %v9879 = vpack.c.b16 %v9849, %v9848
      %v9880 = vpack.c.b16 %v9851, %v9850
      %v9881 = vpack.c.b16 %v9853, %v9852
      %v9882 = vpack.c.b16 %v9855, %v9854
      %v9883 = vpack.c.b16 %v9857, %v9856
      %v9884 = vpack.c.b16 %v9859, %v9858
      %v9885 = vpack.c.b16 %v9861, %v9860
      %v9886 = vpack.c.b16 %v9863, %v9862
      %v9887 = vpack.c.b16 %v9865, %v9864
      %v9888 = vpack.c.b16 %v9867, %v9866
      %v9889 = vpack.c.b16 %v9869, %v9868
      %v9890 = vpack.c.b16 %v9871, %v9870
      %v9891 = vpack.c.b16 %v9873, %v9872
      %v9892 = vpack.c.b16 %v9875, %v9874
      %v9893 = vpack.c.b16 %v9877, %v9876
      %v9910 = vunpack.c.l.b16 %v9782
      %v9911 = vunpack.c.l.b16 %v9783
      %v9912 = vunpack.c.l.b16 %v9784
      %v9913 = vunpack.c.l.b16 %v9785
      %v9914 = vunpack.c.l.b16 %v9786
      %v9915 = vunpack.c.l.b16 %v9787
      %v9916 = vunpack.c.l.b16 %v9788
      %v9917 = vunpack.c.l.b16 %v9789
      %v9918 = vunpack.c.l.b16 %v9790
      %v9919 = vunpack.c.l.b16 %v9791
      %v9920 = vunpack.c.l.b16 %v9792
      %v9921 = vunpack.c.l.b16 %v9793
      %v9922 = vunpack.c.l.b16 %v9794
      %v9923 = vunpack.c.l.b16 %v9795
      %v9924 = vunpack.c.l.b16 %v9796
      %v9925 = vunpack.c.l.b16 %v9797
      %v9926 = vpack.c.b16 %v9910, %v9910
      %v9927 = vpack.c.b16 %v9911, %v9911
      %v9928 = vpack.c.b16 %v9912, %v9912
      %v9929 = vpack.c.b16 %v9913, %v9913
      %v9930 = vpack.c.b16 %v9914, %v9914
      %v9931 = vpack.c.b16 %v9915, %v9915
      %v9932 = vpack.c.b16 %v9916, %v9916
      %v9933 = vpack.c.b16 %v9917, %v9917
      %v9934 = vpack.c.b16 %v9918, %v9918
      %v9935 = vpack.c.b16 %v9919, %v9919
      %v9936 = vpack.c.b16 %v9920, %v9920
      %v9937 = vpack.c.b16 %v9921, %v9921
      %v9938 = vpack.c.b16 %v9922, %v9922
      %v9939 = vpack.c.b16 %v9923, %v9923
      %v9940 = vpack.c.b16 %v9924, %v9924
      %v9941 = vpack.c.b16 %v9925, %v9925
      %v9943 = vshrl.u32 %v9878, 16
      %v9945 = vshll.u32 %v9878, 16
      %v9947 = vrot.slane %v9945, 1
      %v9948 = vor.u32 %v9943, %v9947
      %v9950 = vshll.u32 %v9926, 16
      %v9952 = vrot.slane %v9950, 1
      %v9953 = vsel %vm3759, %v9948, %v9952
      %v9955 = vshrl.u32 %v9879, 16
      %v9957 = vshll.u32 %v9879, 16
      %v9959 = vrot.slane %v9957, 1
      %v9960 = vor.u32 %v9955, %v9959
      %v9962 = vshll.u32 %v9927, 16
      %v9964 = vrot.slane %v9962, 1
      %v9965 = vsel %vm3759, %v9960, %v9964
      %v9967 = vshrl.u32 %v9880, 16
      %v9969 = vshll.u32 %v9880, 16
      %v9971 = vrot.slane %v9969, 1
      %v9972 = vor.u32 %v9967, %v9971
      %v9974 = vshll.u32 %v9928, 16
      %v9976 = vrot.slane %v9974, 1
      %v9977 = vsel %vm3759, %v9972, %v9976
      %v9979 = vshrl.u32 %v9881, 16
      %v9981 = vshll.u32 %v9881, 16
      %v9983 = vrot.slane %v9981, 1
      %v9984 = vor.u32 %v9979, %v9983
      %v9986 = vshll.u32 %v9929, 16
      %v9988 = vrot.slane %v9986, 1
      %v9989 = vsel %vm3759, %v9984, %v9988
      %v9991 = vshrl.u32 %v9882, 16
      %v9993 = vshll.u32 %v9882, 16
      %v9995 = vrot.slane %v9993, 1
      %v9996 = vor.u32 %v9991, %v9995
      %v9998 = vshll.u32 %v9930, 16
      %v10000 = vrot.slane %v9998, 1
      %v10001 = vsel %vm3759, %v9996, %v10000
      %v10003 = vshrl.u32 %v9883, 16
      %v10005 = vshll.u32 %v9883, 16
      %v10007 = vrot.slane %v10005, 1
      %v10008 = vor.u32 %v10003, %v10007
      %v10010 = vshll.u32 %v9931, 16
      %v10012 = vrot.slane %v10010, 1
      %v10013 = vsel %vm3759, %v10008, %v10012
      %v10015 = vshrl.u32 %v9884, 16
      %v10017 = vshll.u32 %v9884, 16
      %v10019 = vrot.slane %v10017, 1
      %v10020 = vor.u32 %v10015, %v10019
      %v10022 = vshll.u32 %v9932, 16
      %v10024 = vrot.slane %v10022, 1
      %v10025 = vsel %vm3759, %v10020, %v10024
      %v10027 = vshrl.u32 %v9885, 16
      %v10029 = vshll.u32 %v9885, 16
      %v10031 = vrot.slane %v10029, 1
      %v10032 = vor.u32 %v10027, %v10031
      %v10034 = vshll.u32 %v9933, 16
      %v10036 = vrot.slane %v10034, 1
      %v10037 = vsel %vm3759, %v10032, %v10036
      %v10039 = vshrl.u32 %v9886, 16
      %v10041 = vshll.u32 %v9886, 16
      %v10043 = vrot.slane %v10041, 1
      %v10044 = vor.u32 %v10039, %v10043
      %v10046 = vshll.u32 %v9934, 16
      %v10048 = vrot.slane %v10046, 1
      %v10049 = vsel %vm3759, %v10044, %v10048
      %v10051 = vshrl.u32 %v9887, 16
      %v10053 = vshll.u32 %v9887, 16
      %v10055 = vrot.slane %v10053, 1
      %v10056 = vor.u32 %v10051, %v10055
      %v10058 = vshll.u32 %v9935, 16
      %v10060 = vrot.slane %v10058, 1
      %v10061 = vsel %vm3759, %v10056, %v10060
      %v10063 = vshrl.u32 %v9888, 16
      %v10065 = vshll.u32 %v9888, 16
      %v10067 = vrot.slane %v10065, 1
      %v10068 = vor.u32 %v10063, %v10067
      %v10070 = vshll.u32 %v9936, 16
      %v10072 = vrot.slane %v10070, 1
      %v10073 = vsel %vm3759, %v10068, %v10072
      %v10075 = vshrl.u32 %v9889, 16
      %v10077 = vshll.u32 %v9889, 16
      %v10079 = vrot.slane %v10077, 1
      %v10080 = vor.u32 %v10075, %v10079
      %v10082 = vshll.u32 %v9937, 16
      %v10084 = vrot.slane %v10082, 1
      %v10085 = vsel %vm3759, %v10080, %v10084
      %v10087 = vshrl.u32 %v9890, 16
      %v10089 = vshll.u32 %v9890, 16
      %v10091 = vrot.slane %v10089, 1
      %v10092 = vor.u32 %v10087, %v10091
      %v10094 = vshll.u32 %v9938, 16
      %v10096 = vrot.slane %v10094, 1
      %v10097 = vsel %vm3759, %v10092, %v10096
      %v10099 = vshrl.u32 %v9891, 16
      %v10101 = vshll.u32 %v9891, 16
      %v10103 = vrot.slane %v10101, 1
      %v10104 = vor.u32 %v10099, %v10103
      %v10106 = vshll.u32 %v9939, 16
      %v10108 = vrot.slane %v10106, 1
      %v10109 = vsel %vm3759, %v10104, %v10108
      %v10111 = vshrl.u32 %v9892, 16
      %v10113 = vshll.u32 %v9892, 16
      %v10115 = vrot.slane %v10113, 1
      %v10116 = vor.u32 %v10111, %v10115
      %v10118 = vshll.u32 %v9940, 16
      %v10120 = vrot.slane %v10118, 1
      %v10121 = vsel %vm3759, %v10116, %v10120
      %v10123 = vshrl.u32 %v9893, 16
      %v10125 = vshll.u32 %v9893, 16
      %v10127 = vrot.slane %v10125, 1
      %v10128 = vor.u32 %v10123, %v10127
      %v10130 = vshll.u32 %v9941, 16
      %v10132 = vrot.slane %v10130, 1
      %v10133 = vsel %vm3759, %v10128, %v10132
      %10134 = vrot.lane.b32.xlu0 %v9953, 4
      %v10135 = vpop.permute.xlu0 %10134
      %10136 = vrot.lane.b32.xlu0 %v9965, 4
      %v10137 = vpop.permute.xlu0 %10136
      %10138 = vrot.lane.b32.xlu0 %v9977, 4
      %v10139 = vpop.permute.xlu0 %10138
      %10140 = vrot.lane.b32.xlu0 %v9989, 4
      %v10141 = vpop.permute.xlu0 %10140
      %10142 = vrot.lane.b32.xlu0 %v10001, 4
      %v10143 = vpop.permute.xlu0 %10142
      %10144 = vrot.lane.b32.xlu0 %v10013, 4
      %v10145 = vpop.permute.xlu0 %10144
      %10146 = vrot.lane.b32.xlu0 %v10025, 4
      %v10147 = vpop.permute.xlu0 %10146
      %10148 = vrot.lane.b32.xlu0 %v10037, 4
      %v10149 = vpop.permute.xlu0 %10148
      %10150 = vrot.lane.b32.xlu0 %v10049, 4
      %v10151 = vpop.permute.xlu0 %10150
      %10152 = vrot.lane.b32.xlu0 %v10061, 4
      %v10153 = vpop.permute.xlu0 %10152
      %10154 = vrot.lane.b32.xlu0 %v10073, 4
      %v10155 = vpop.permute.xlu0 %10154
      %10156 = vrot.lane.b32.xlu0 %v10085, 4
      %v10157 = vpop.permute.xlu0 %10156
      %10158 = vrot.lane.b32.xlu0 %v10097, 4
      %v10159 = vpop.permute.xlu0 %10158
      %10160 = vrot.lane.b32.xlu0 %v10109, 4
      %v10161 = vpop.permute.xlu0 %10160
      %10162 = vrot.lane.b32.xlu0 %v10121, 4
      %v10163 = vpop.permute.xlu0 %10162
      %10164 = vrot.lane.b32.xlu0 %v10133, 4
      %v10165 = vpop.permute.xlu0 %10164
      %v10182 = vunpack.c.l.b16 %v9798
      %v10183 = vunpack.c.l.b16 %v9799
      %v10184 = vunpack.c.l.b16 %v9800
      %v10185 = vunpack.c.l.b16 %v9801
      %v10186 = vunpack.c.l.b16 %v9802
      %v10187 = vunpack.c.l.b16 %v9803
      %v10188 = vunpack.c.l.b16 %v9804
      %v10189 = vunpack.c.l.b16 %v9805
      %v10190 = vunpack.c.l.b16 %v9806
      %v10191 = vunpack.c.l.b16 %v9807
      %v10192 = vunpack.c.l.b16 %v9808
      %v10193 = vunpack.c.l.b16 %v9809
      %v10194 = vunpack.c.l.b16 %v9810
      %v10195 = vunpack.c.l.b16 %v9811
      %v10196 = vunpack.c.l.b16 %v9812
      %v10197 = vunpack.c.l.b16 %v9813
      %v10198 = vpack.c.b16 %v9847, %v10182
      %v10199 = vpack.c.b16 %v9849, %v10183
      %v10200 = vpack.c.b16 %v9851, %v10184
      %v10201 = vpack.c.b16 %v9853, %v10185
      %v10202 = vpack.c.b16 %v9855, %v10186
      %v10203 = vpack.c.b16 %v9857, %v10187
      %v10204 = vpack.c.b16 %v9859, %v10188
      %v10205 = vpack.c.b16 %v9861, %v10189
      %v10206 = vpack.c.b16 %v9863, %v10190
      %v10207 = vpack.c.b16 %v9865, %v10191
      %v10208 = vpack.c.b16 %v9867, %v10192
      %v10209 = vpack.c.b16 %v9869, %v10193
      %v10210 = vpack.c.b16 %v9871, %v10194
      %v10211 = vpack.c.b16 %v9873, %v10195
      %v10212 = vpack.c.b16 %v9875, %v10196
      %v10213 = vpack.c.b16 %v9877, %v10197
      %v10214 = vrot.slane %v10198, 1
      %v10215 = vrot.slane %v9926, 1
      %v10216 = vsel %vm4032, %v10214, %v10215
      %v10217 = vrot.slane %v10199, 1
      %v10218 = vrot.slane %v9927, 1
      %v10219 = vsel %vm4032, %v10217, %v10218
      %v10220 = vrot.slane %v10200, 1
      %v10221 = vrot.slane %v9928, 1
      %v10222 = vsel %vm4032, %v10220, %v10221
      %v10223 = vrot.slane %v10201, 1
      %v10224 = vrot.slane %v9929, 1
      %v10225 = vsel %vm4032, %v10223, %v10224
      %v10226 = vrot.slane %v10202, 1
      %v10227 = vrot.slane %v9930, 1
      %v10228 = vsel %vm4032, %v10226, %v10227
      %v10229 = vrot.slane %v10203, 1
      %v10230 = vrot.slane %v9931, 1
      %v10231 = vsel %vm4032, %v10229, %v10230
      %v10232 = vrot.slane %v10204, 1
      %v10233 = vrot.slane %v9932, 1
      %v10234 = vsel %vm4032, %v10232, %v10233
      %v10235 = vrot.slane %v10205, 1
      %v10236 = vrot.slane %v9933, 1
      %v10237 = vsel %vm4032, %v10235, %v10236
      %v10238 = vrot.slane %v10206, 1
      %v10239 = vrot.slane %v9934, 1
      %v10240 = vsel %vm4032, %v10238, %v10239
      %v10241 = vrot.slane %v10207, 1
      %v10242 = vrot.slane %v9935, 1
      %v10243 = vsel %vm4032, %v10241, %v10242
      %v10244 = vrot.slane %v10208, 1
      %v10245 = vrot.slane %v9936, 1
      %v10246 = vsel %vm4032, %v10244, %v10245
      %v10247 = vrot.slane %v10209, 1
      %v10248 = vrot.slane %v9937, 1
      %v10249 = vsel %vm4032, %v10247, %v10248
      %v10250 = vrot.slane %v10210, 1
      %v10251 = vrot.slane %v9938, 1
      %v10252 = vsel %vm4032, %v10250, %v10251
      %v10253 = vrot.slane %v10211, 1
      %v10254 = vrot.slane %v9939, 1
      %v10255 = vsel %vm4032, %v10253, %v10254
      %v10256 = vrot.slane %v10212, 1
      %v10257 = vrot.slane %v9940, 1
      %v10258 = vsel %vm4032, %v10256, %v10257
      %v10259 = vrot.slane %v10213, 1
      %v10260 = vrot.slane %v9941, 1
      %v10261 = vsel %vm4032, %v10259, %v10260
      %10262 = vrot.lane.b32.xlu0 %v10216, 8
      %v10263 = vpop.permute.xlu0 %10262
      %10264 = vrot.lane.b32.xlu0 %v10219, 8
      %v10265 = vpop.permute.xlu0 %10264
      %10266 = vrot.lane.b32.xlu0 %v10222, 8
      %v10267 = vpop.permute.xlu0 %10266
      %10268 = vrot.lane.b32.xlu0 %v10225, 8
      %v10269 = vpop.permute.xlu0 %10268
      %10270 = vrot.lane.b32.xlu0 %v10228, 8
      %v10271 = vpop.permute.xlu0 %10270
      %10272 = vrot.lane.b32.xlu0 %v10231, 8
      %v10273 = vpop.permute.xlu0 %10272
      %10274 = vrot.lane.b32.xlu0 %v10234, 8
      %v10275 = vpop.permute.xlu0 %10274
      %10276 = vrot.lane.b32.xlu0 %v10237, 8
      %v10277 = vpop.permute.xlu0 %10276
      %10278 = vrot.lane.b32.xlu0 %v10240, 8
      %v10279 = vpop.permute.xlu0 %10278
      %10280 = vrot.lane.b32.xlu0 %v10243, 8
      %v10281 = vpop.permute.xlu0 %10280
      %10282 = vrot.lane.b32.xlu0 %v10246, 8
      %v10283 = vpop.permute.xlu0 %10282
      %10284 = vrot.lane.b32.xlu0 %v10249, 8
      %v10285 = vpop.permute.xlu0 %10284
      %10286 = vrot.lane.b32.xlu0 %v10252, 8
      %v10287 = vpop.permute.xlu0 %10286
      %10288 = vrot.lane.b32.xlu0 %v10255, 8
      %v10289 = vpop.permute.xlu0 %10288
      %10290 = vrot.lane.b32.xlu0 %v10258, 8
      %v10291 = vpop.permute.xlu0 %10290
      %10292 = vrot.lane.b32.xlu0 %v10261, 8
      %v10293 = vpop.permute.xlu0 %10292
      %v10295 = vsel %vm4113, %v9878, %v10135
      %v10297 = vsel %vm4113, %v9879, %v10137
      %v10299 = vsel %vm4113, %v9880, %v10139
      %v10301 = vsel %vm4113, %v9881, %v10141
      %v10303 = vsel %vm4113, %v9882, %v10143
      %v10305 = vsel %vm4113, %v9883, %v10145
      %v10307 = vsel %vm4113, %v9884, %v10147
      %v10309 = vsel %vm4113, %v9885, %v10149
      %v10311 = vsel %vm4113, %v9886, %v10151
      %v10313 = vsel %vm4113, %v9887, %v10153
      %v10315 = vsel %vm4113, %v9888, %v10155
      %v10317 = vsel %vm4113, %v9889, %v10157
      %v10319 = vsel %vm4113, %v9890, %v10159
      %v10321 = vsel %vm4113, %v9891, %v10161
      %v10323 = vsel %vm4113, %v9892, %v10163
      %v10325 = vsel %vm4113, %v9893, %v10165
      %v10327 = vsel %vm1211, %v10295, %v10263
      %v10329 = vsel %vm1211, %v10297, %v10265
      %v10331 = vsel %vm1211, %v10299, %v10267
      %v10333 = vsel %vm1211, %v10301, %v10269
      %v10335 = vsel %vm1211, %v10303, %v10271
      %v10337 = vsel %vm1211, %v10305, %v10273
      %v10339 = vsel %vm1211, %v10307, %v10275
      %v10341 = vsel %vm1211, %v10309, %v10277
      %v10343 = vsel %vm1211, %v10311, %v10279
      %v10345 = vsel %vm1211, %v10313, %v10281
      %v10347 = vsel %vm1211, %v10315, %v10283
      %v10349 = vsel %vm1211, %v10317, %v10285
      %v10351 = vsel %vm1211, %v10319, %v10287
      %v10353 = vsel %vm1211, %v10321, %v10289
      %v10355 = vsel %vm1211, %v10323, %v10291
      %v10357 = vsel %vm1211, %v10325, %v10293
      %s10358 = scalar_lea.vmem %s7, 8
      %v10359 = vld [vmem:[%s10358] sm:$0xf]
      %v10360 = vld [vmem:[%s10358 + $0x4] sm:$0x3]
      %v10363 = vunpack.c.l.b16 %v10359
      %v10364 = vunpack.c.l.b16 %v10360
      %v10365 = vpack.c.b16 %v10364, %v10363
      %v10366 = vsel %vm4796, %v10327, 0
      %v10368 = vsel %vm4796, %v10329, 0
      %v10370 = vsel %vm4796, %v10331, 0
      %v10372 = vsel %vm4796, %v10333, 0
      %v10374 = vsel %vm4796, %v10335, 0
      %v10376 = vsel %vm4796, %v10337, 0
      %v10378 = vsel %vm4796, %v10339, 0
      %v10380 = vsel %vm4796, %v10341, 0
      %v10382 = vsel %vm4796, %v10343, 0
      %v10384 = vsel %vm4796, %v10345, 0
      %v10386 = vsel %vm4796, %v10347, 0
      %v10388 = vsel %vm4796, %v10349, 0
      %v10390 = vsel %vm4796, %v10351, 0
      %v10392 = vsel %vm4796, %v10353, 0
      %v10394 = vsel %vm4796, %v10355, 0
      %v10396 = vsel %vm4796, %v10357, 0
      %v10399 = vsel %vm4829, %v10365, 0
      %10401 = vmatprep.subr.bf16.mxu0 0
      %10402 = vmatpush1.bf16.msra.mxu0 0
      %10403 = vmatprep.subr.bf16.mxu0 0
      %10404 = vmatpush1.bf16.msra.mxu0 0
      %10405 = vmatprep.subr.bf16.mxu0 0
      %10406 = vmatpush1.bf16.msra.mxu0 0
      %10407 = vmatprep.subr.bf16.mxu0 0
      %10408 = vmatpush1.bf16.msra.mxu0 0
      %10409 = vmatprep.subr.bf16.mxu0 0
      %10410 = vmatpush1.bf16.msra.mxu0 0
      %10411 = vmatprep.subr.bf16.mxu0 0
      %10412 = vmatpush1.bf16.msra.mxu0 0
      %10413 = vmatprep.subr.bf16.mxu0 0
      %10414 = vmatpush1.bf16.msra.mxu0 0
      %10415 = vmatprep.subr.bf16.mxu0 0
      %10416 = vmatpush1.bf16.msra.mxu0 %v10399
      %10417 = vmatprep.subr.bf16.mxu0 0
      %10418 = vmatpush2.bf16.msra.mxu0 0
      %10419 = vmatprep.subr.bf16.mxu0 0
      %10420 = vmatpush2.bf16.msra.mxu0 0
      %10421 = vmatprep.subr.bf16.mxu0 0
      %10422 = vmatpush2.bf16.msra.mxu0 0
      %10423 = vmatprep.subr.bf16.mxu0 0
      %10424 = vmatpush2.bf16.msra.mxu0 0
      %10425 = vmatprep.subr.bf16.mxu0 0
      %10426 = vmatpush2.bf16.msra.mxu0 0
      %10427 = vmatprep.subr.bf16.mxu0 0
      %10428 = vmatpush2.bf16.msra.mxu0 0
      %10429 = vmatprep.subr.bf16.mxu0 0
      %10430 = vmatpush2.bf16.msra.mxu0 0
      %10431 = vmatprep.subr.bf16.mxu0 0
      %10432 = vmatpush2.bf16.msra.mxu0 0
      %10433 = vmatprep.mubr.bf16.mxu0 0
      %10434 = vmatmul.mubr.bf16.gmra.mxu0 %v10366
      %v10435 = vpop.f32.mrf.mxu0
      %v10436 = vadd.f32 0.0, %v10435
      %v10437 = vpop.f32.mrf.mxu0
      %v10438 = vpop.f32.mrf.mxu0
      %v10439 = vadd.f32 0.0, %v10438
      %v10440 = vpop.f32.mrf.mxu0
      %10441 = vmatprep.mubr.bf16.mxu0 0
      %10442 = vmatmul.mubr.bf16.gmra.mxu0 %v10368
      %v10443 = vpop.f32.mrf.mxu0
      %v10444 = vadd.f32 0.0, %v10443
      %v10445 = vpop.f32.mrf.mxu0
      %v10446 = vpop.f32.mrf.mxu0
      %v10447 = vadd.f32 0.0, %v10446
      %v10448 = vpop.f32.mrf.mxu0
      %10449 = vmatprep.mubr.bf16.mxu0 0
      %10450 = vmatmul.mubr.bf16.gmra.mxu0 %v10370
      %v10451 = vpop.f32.mrf.mxu0
      %v10452 = vadd.f32 0.0, %v10451
      %v10453 = vpop.f32.mrf.mxu0
      %v10454 = vpop.f32.mrf.mxu0
      %v10455 = vadd.f32 0.0, %v10454
      %v10456 = vpop.f32.mrf.mxu0
      %10457 = vmatprep.mubr.bf16.mxu0 0
      %10458 = vmatmul.mubr.bf16.gmra.mxu0 %v10372
      %v10459 = vpop.f32.mrf.mxu0
      %v10460 = vadd.f32 0.0, %v10459
      %v10461 = vpop.f32.mrf.mxu0
      %v10462 = vpop.f32.mrf.mxu0
      %v10463 = vadd.f32 0.0, %v10462
      %v10464 = vpop.f32.mrf.mxu0
      %10465 = vmatprep.mubr.bf16.mxu0 0
      %10466 = vmatmul.mubr.bf16.gmra.mxu0 %v10374
      %v10467 = vpop.f32.mrf.mxu0
      %v10468 = vadd.f32 0.0, %v10467
      %v10469 = vpop.f32.mrf.mxu0
      %v10470 = vpop.f32.mrf.mxu0
      %v10471 = vadd.f32 0.0, %v10470
      %v10472 = vpop.f32.mrf.mxu0
      %10473 = vmatprep.mubr.bf16.mxu0 0
      %10474 = vmatmul.mubr.bf16.gmra.mxu0 %v10376
      %v10475 = vpop.f32.mrf.mxu0
      %v10476 = vadd.f32 0.0, %v10475
      %v10477 = vpop.f32.mrf.mxu0
      %v10478 = vpop.f32.mrf.mxu0
      %v10479 = vadd.f32 0.0, %v10478
      %v10480 = vpop.f32.mrf.mxu0
      %10481 = vmatprep.mubr.bf16.mxu0 0
      %10482 = vmatmul.mubr.bf16.gmra.mxu0 %v10378
      %v10483 = vpop.f32.mrf.mxu0
      %v10484 = vadd.f32 0.0, %v10483
      %v10485 = vpop.f32.mrf.mxu0
      %v10486 = vpop.f32.mrf.mxu0
      %v10487 = vadd.f32 0.0, %v10486
      %v10488 = vpop.f32.mrf.mxu0
      %10489 = vmatprep.mubr.bf16.mxu0 0
      %10490 = vmatmul.mubr.bf16.gmra.mxu0 %v10380
      %v10491 = vpop.f32.mrf.mxu0
      %v10492 = vadd.f32 0.0, %v10491
      %v10493 = vpop.f32.mrf.mxu0
      %v10494 = vpop.f32.mrf.mxu0
      %v10495 = vadd.f32 0.0, %v10494
      %v10496 = vpop.f32.mrf.mxu0
      %10497 = vmatprep.mubr.bf16.mxu0 0
      %10498 = vmatmul.mubr.bf16.gmra.mxu0 %v10382
      %v10499 = vpop.f32.mrf.mxu0
      %v10500 = vadd.f32 0.0, %v10499
      %v10501 = vpop.f32.mrf.mxu0
      %v10502 = vpop.f32.mrf.mxu0
      %v10503 = vadd.f32 0.0, %v10502
      %v10504 = vpop.f32.mrf.mxu0
      %10505 = vmatprep.mubr.bf16.mxu0 0
      %10506 = vmatmul.mubr.bf16.gmra.mxu0 %v10384
      %v10507 = vpop.f32.mrf.mxu0
      %v10508 = vadd.f32 0.0, %v10507
      %v10509 = vpop.f32.mrf.mxu0
      %v10510 = vpop.f32.mrf.mxu0
      %v10511 = vadd.f32 0.0, %v10510
      %v10512 = vpop.f32.mrf.mxu0
      %10513 = vmatprep.mubr.bf16.mxu0 0
      %10514 = vmatmul.mubr.bf16.gmra.mxu0 %v10386
      %v10515 = vpop.f32.mrf.mxu0
      %v10516 = vadd.f32 0.0, %v10515
      %v10517 = vpop.f32.mrf.mxu0
      %v10518 = vpop.f32.mrf.mxu0
      %v10519 = vadd.f32 0.0, %v10518
      %v10520 = vpop.f32.mrf.mxu0
      %10521 = vmatprep.mubr.bf16.mxu0 0
      %10522 = vmatmul.mubr.bf16.gmra.mxu0 %v10388
      %v10523 = vpop.f32.mrf.mxu0
      %v10524 = vadd.f32 0.0, %v10523
      %v10525 = vpop.f32.mrf.mxu0
      %v10526 = vpop.f32.mrf.mxu0
      %v10527 = vadd.f32 0.0, %v10526
      %v10528 = vpop.f32.mrf.mxu0
      %10529 = vmatprep.mubr.bf16.mxu0 0
      %10530 = vmatmul.mubr.bf16.gmra.mxu0 %v10390
      %v10531 = vpop.f32.mrf.mxu0
      %v10532 = vadd.f32 0.0, %v10531
      %v10533 = vpop.f32.mrf.mxu0
      %v10534 = vpop.f32.mrf.mxu0
      %v10535 = vadd.f32 0.0, %v10534
      %v10536 = vpop.f32.mrf.mxu0
      %10537 = vmatprep.mubr.bf16.mxu0 0
      %10538 = vmatmul.mubr.bf16.gmra.mxu0 %v10392
      %v10539 = vpop.f32.mrf.mxu0
      %v10540 = vadd.f32 0.0, %v10539
      %v10541 = vpop.f32.mrf.mxu0
      %v10542 = vpop.f32.mrf.mxu0
      %v10543 = vadd.f32 0.0, %v10542
      %v10544 = vpop.f32.mrf.mxu0
      %10545 = vmatprep.mubr.bf16.mxu0 0
      %10546 = vmatmul.mubr.bf16.gmra.mxu0 %v10394
      %v10547 = vpop.f32.mrf.mxu0
      %v10548 = vadd.f32 0.0, %v10547
      %v10549 = vpop.f32.mrf.mxu0
      %v10550 = vpop.f32.mrf.mxu0
      %v10551 = vadd.f32 0.0, %v10550
      %v10552 = vpop.f32.mrf.mxu0
      %10553 = vmatprep.mubr.bf16.mxu0 0
      %10554 = vmatmul.mubr.bf16.gmra.mxu0 %v10396
      %v10555 = vpop.f32.mrf.mxu0
      %v10556 = vadd.f32 0.0, %v10555
      %v10557 = vpop.f32.mrf.mxu0
      %v10558 = vpop.f32.mrf.mxu0
      %v10559 = vadd.f32 0.0, %v10558
      %v10560 = vpop.f32.mrf.mxu0
      %10561 = vdwg.mxu0
      %v10564 = vunpack.c.l.b16 %v9748
      %v10565 = vunpack.c.l.b16 %v9749
      %v10566 = vpack.c.b16 %v10565, %v10564
      %v10567 = vsel %vm4796, %v9717, 0
      %v10569 = vsel %vm4796, %v9719, 0
      %v10571 = vsel %vm4796, %v9721, 0
      %v10573 = vsel %vm4796, %v9723, 0
      %v10575 = vsel %vm4796, %v9725, 0
      %v10577 = vsel %vm4796, %v9727, 0
      %v10579 = vsel %vm4796, %v9729, 0
      %v10581 = vsel %vm4796, %v9731, 0
      %v10583 = vsel %vm4796, %v9733, 0
      %v10585 = vsel %vm4796, %v9735, 0
      %v10587 = vsel %vm4796, %v9737, 0
      %v10589 = vsel %vm4796, %v9739, 0
      %v10591 = vsel %vm4796, %v9741, 0
      %v10593 = vsel %vm4796, %v9743, 0
      %v10595 = vsel %vm4796, %v9745, 0
      %v10597 = vsel %vm4796, %v9747, 0
      %v10600 = vsel %vm4829, %v10566, 0
      %10602 = vmatprep.subr.bf16.mxu0 0
      %10603 = vmatpush1.bf16.msra.mxu0 0
      %10604 = vmatprep.subr.bf16.mxu0 0
      %10605 = vmatpush1.bf16.msra.mxu0 0
      %10606 = vmatprep.subr.bf16.mxu0 0
      %10607 = vmatpush1.bf16.msra.mxu0 0
      %10608 = vmatprep.subr.bf16.mxu0 0
      %10609 = vmatpush1.bf16.msra.mxu0 0
      %10610 = vmatprep.subr.bf16.mxu0 0
      %10611 = vmatpush1.bf16.msra.mxu0 0
      %10612 = vmatprep.subr.bf16.mxu0 0
      %10613 = vmatpush1.bf16.msra.mxu0 0
      %10614 = vmatprep.subr.bf16.mxu0 0
      %10615 = vmatpush1.bf16.msra.mxu0 0
      %10616 = vmatprep.subr.bf16.mxu0 0
      %10617 = vmatpush1.bf16.msra.mxu0 %v10600
      %10618 = vmatprep.subr.bf16.mxu0 0
      %10619 = vmatpush2.bf16.msra.mxu0 0
      %10620 = vmatprep.subr.bf16.mxu0 0
      %10621 = vmatpush2.bf16.msra.mxu0 0
      %10622 = vmatprep.subr.bf16.mxu0 0
      %10623 = vmatpush2.bf16.msra.mxu0 0
      %10624 = vmatprep.subr.bf16.mxu0 0
      %10625 = vmatpush2.bf16.msra.mxu0 0
      %10626 = vmatprep.subr.bf16.mxu0 0
      %10627 = vmatpush2.bf16.msra.mxu0 0
      %10628 = vmatprep.subr.bf16.mxu0 0
      %10629 = vmatpush2.bf16.msra.mxu0 0
      %10630 = vmatprep.subr.bf16.mxu0 0
      %10631 = vmatpush2.bf16.msra.mxu0 0
      %10632 = vmatprep.subr.bf16.mxu0 0
      %10633 = vmatpush2.bf16.msra.mxu0 0
      %10634 = vmatprep.mubr.bf16.mxu0 0
      %10635 = vmatmul.mubr.bf16.gmra.mxu0 %v10567
      %v10636 = vpop.f32.mrf.mxu0
      %v10637 = vadd.f32 %v10436, %v10636
      %v10638 = vpop.f32.mrf.mxu0
      %v10639 = vpop.f32.mrf.mxu0
      %v10640 = vadd.f32 %v10439, %v10639
      %v10641 = vpop.f32.mrf.mxu0
      %10642 = vmatprep.mubr.bf16.mxu0 0
      %10643 = vmatmul.mubr.bf16.gmra.mxu0 %v10569
      %v10644 = vpop.f32.mrf.mxu0
      %v10645 = vadd.f32 %v10444, %v10644
      %v10646 = vpop.f32.mrf.mxu0
      %v10647 = vpop.f32.mrf.mxu0
      %v10648 = vadd.f32 %v10447, %v10647
      %v10649 = vpop.f32.mrf.mxu0
      %10650 = vmatprep.mubr.bf16.mxu0 0
      %10651 = vmatmul.mubr.bf16.gmra.mxu0 %v10571
      %v10652 = vpop.f32.mrf.mxu0
      %v10653 = vadd.f32 %v10452, %v10652
      %v10654 = vpop.f32.mrf.mxu0
      %v10655 = vpop.f32.mrf.mxu0
      %v10656 = vadd.f32 %v10455, %v10655
      %v10657 = vpop.f32.mrf.mxu0
      %10658 = vmatprep.mubr.bf16.mxu0 0
      %10659 = vmatmul.mubr.bf16.gmra.mxu0 %v10573
      %v10660 = vpop.f32.mrf.mxu0
      %v10661 = vadd.f32 %v10460, %v10660
      %v10662 = vpop.f32.mrf.mxu0
      %v10663 = vpop.f32.mrf.mxu0
      %v10664 = vadd.f32 %v10463, %v10663
      %v10665 = vpop.f32.mrf.mxu0
      %10666 = vmatprep.mubr.bf16.mxu0 0
      %10667 = vmatmul.mubr.bf16.gmra.mxu0 %v10575
      %v10668 = vpop.f32.mrf.mxu0
      %v10669 = vadd.f32 %v10468, %v10668
      %v10670 = vpop.f32.mrf.mxu0
      %v10671 = vpop.f32.mrf.mxu0
      %v10672 = vadd.f32 %v10471, %v10671
      %v10673 = vpop.f32.mrf.mxu0
      %10674 = vmatprep.mubr.bf16.mxu0 0
      %10675 = vmatmul.mubr.bf16.gmra.mxu0 %v10577
      %v10676 = vpop.f32.mrf.mxu0
      %v10677 = vadd.f32 %v10476, %v10676
      %v10678 = vpop.f32.mrf.mxu0
      %v10679 = vpop.f32.mrf.mxu0
      %v10680 = vadd.f32 %v10479, %v10679
      %v10681 = vpop.f32.mrf.mxu0
      %10682 = vmatprep.mubr.bf16.mxu0 0
      %10683 = vmatmul.mubr.bf16.gmra.mxu0 %v10579
      %v10684 = vpop.f32.mrf.mxu0
      %v10685 = vadd.f32 %v10484, %v10684
      %v10686 = vpop.f32.mrf.mxu0
      %v10687 = vpop.f32.mrf.mxu0
      %v10688 = vadd.f32 %v10487, %v10687
      %v10689 = vpop.f32.mrf.mxu0
      %10690 = vmatprep.mubr.bf16.mxu0 0
      %10691 = vmatmul.mubr.bf16.gmra.mxu0 %v10581
      %v10692 = vpop.f32.mrf.mxu0
      %v10693 = vadd.f32 %v10492, %v10692
      %v10694 = vpop.f32.mrf.mxu0
      %v10695 = vpop.f32.mrf.mxu0
      %v10696 = vadd.f32 %v10495, %v10695
      %v10697 = vpop.f32.mrf.mxu0
      %10698 = vmatprep.mubr.bf16.mxu0 0
      %10699 = vmatmul.mubr.bf16.gmra.mxu0 %v10583
      %v10700 = vpop.f32.mrf.mxu0
      %v10701 = vadd.f32 %v10500, %v10700
      %v10702 = vpop.f32.mrf.mxu0
      %v10703 = vpop.f32.mrf.mxu0
      %v10704 = vadd.f32 %v10503, %v10703
      %v10705 = vpop.f32.mrf.mxu0
      %10706 = vmatprep.mubr.bf16.mxu0 0
      %10707 = vmatmul.mubr.bf16.gmra.mxu0 %v10585
      %v10708 = vpop.f32.mrf.mxu0
      %v10709 = vadd.f32 %v10508, %v10708
      %v10710 = vpop.f32.mrf.mxu0
      %v10711 = vpop.f32.mrf.mxu0
      %v10712 = vadd.f32 %v10511, %v10711
      %v10713 = vpop.f32.mrf.mxu0
      %10714 = vmatprep.mubr.bf16.mxu0 0
      %10715 = vmatmul.mubr.bf16.gmra.mxu0 %v10587
      %v10716 = vpop.f32.mrf.mxu0
      %v10717 = vadd.f32 %v10516, %v10716
      %v10718 = vpop.f32.mrf.mxu0
      %v10719 = vpop.f32.mrf.mxu0
      %v10720 = vadd.f32 %v10519, %v10719
      %v10721 = vpop.f32.mrf.mxu0
      %10722 = vmatprep.mubr.bf16.mxu0 0
      %10723 = vmatmul.mubr.bf16.gmra.mxu0 %v10589
      %v10724 = vpop.f32.mrf.mxu0
      %v10725 = vadd.f32 %v10524, %v10724
      %v10726 = vpop.f32.mrf.mxu0
      %v10727 = vpop.f32.mrf.mxu0
      %v10728 = vadd.f32 %v10527, %v10727
      %v10729 = vpop.f32.mrf.mxu0
      %10730 = vmatprep.mubr.bf16.mxu0 0
      %10731 = vmatmul.mubr.bf16.gmra.mxu0 %v10591
      %v10732 = vpop.f32.mrf.mxu0
      %v10733 = vadd.f32 %v10532, %v10732
      %v10734 = vpop.f32.mrf.mxu0
      %v10735 = vpop.f32.mrf.mxu0
      %v10736 = vadd.f32 %v10535, %v10735
      %v10737 = vpop.f32.mrf.mxu0
      %10738 = vmatprep.mubr.bf16.mxu0 0
      %10739 = vmatmul.mubr.bf16.gmra.mxu0 %v10593
      %v10740 = vpop.f32.mrf.mxu0
      %v10741 = vadd.f32 %v10540, %v10740
      %v10742 = vpop.f32.mrf.mxu0
      %v10743 = vpop.f32.mrf.mxu0
      %v10744 = vadd.f32 %v10543, %v10743
      %v10745 = vpop.f32.mrf.mxu0
      %10746 = vmatprep.mubr.bf16.mxu0 0
      %10747 = vmatmul.mubr.bf16.gmra.mxu0 %v10595
      %v10748 = vpop.f32.mrf.mxu0
      %v10749 = vadd.f32 %v10548, %v10748
      %v10750 = vpop.f32.mrf.mxu0
      %v10751 = vpop.f32.mrf.mxu0
      %v10752 = vadd.f32 %v10551, %v10751
      %v10753 = vpop.f32.mrf.mxu0
      %10754 = vmatprep.mubr.bf16.mxu0 0
      %10755 = vmatmul.mubr.bf16.gmra.mxu0 %v10597
      %v10756 = vpop.f32.mrf.mxu0
      %v10757 = vadd.f32 %v10556, %v10756
      %v10758 = vpop.f32.mrf.mxu0
      %v10759 = vpop.f32.mrf.mxu0
      %v10760 = vadd.f32 %v10559, %v10759
      %v10761 = vpop.f32.mrf.mxu0
      %10762 = vdwg.mxu0
      %s10763 = scalar_lea.vmem [#allocation4], 24
      %v10764 = vld [vmem:[%s10763] sm:$0xf]
      %v10765 = vld [vmem:[%s10763 + $0x4] sm:$0xf]
      %v10766 = vld [vmem:[%s10763 + $0xc] sm:$0xf]
      %v10767 = vld [vmem:[%s10763 + $0x10] sm:$0xf]
      %v10768 = vld [vmem:[%s10763 + $0x18] sm:$0xf]
      %v10769 = vld [vmem:[%s10763 + $0x1c] sm:$0xf]
      %v10770 = vld [vmem:[%s10763 + $0x24] sm:$0xf]
      %v10771 = vld [vmem:[%s10763 + $0x28] sm:$0xf]
      %v10772 = vld [vmem:[%s10763 + $0x30] sm:$0xf]
      %v10773 = vld [vmem:[%s10763 + $0x34] sm:$0xf]
      %v10774 = vld [vmem:[%s10763 + $0x3c] sm:$0xf]
      %v10775 = vld [vmem:[%s10763 + $0x40] sm:$0xf]
      %v10776 = vld [vmem:[%s10763 + $0x48] sm:$0xf]
      %v10777 = vld [vmem:[%s10763 + $0x4c] sm:$0xf]
      %v10778 = vld [vmem:[%s10763 + $0x54] sm:$0xf]
      %v10779 = vld [vmem:[%s10763 + $0x58] sm:$0xf]
      %v10780 = vld [vmem:[%s10763 + $0x60] sm:$0xf]
      %v10781 = vld [vmem:[%s10763 + $0x64] sm:$0xf]
      %v10782 = vld [vmem:[%s10763 + $0x6c] sm:$0xf]
      %v10783 = vld [vmem:[%s10763 + $0x70] sm:$0xf]
      %v10784 = vld [vmem:[%s10763 + $0x78] sm:$0xf]
      %v10785 = vld [vmem:[%s10763 + $0x7c] sm:$0xf]
      %v10786 = vld [vmem:[%s10763 + $0x84] sm:$0xf]
      %v10787 = vld [vmem:[%s10763 + $0x88] sm:$0xf]
      %v10788 = vld [vmem:[%s10763 + $0x90] sm:$0xf]
      %v10789 = vld [vmem:[%s10763 + $0x94] sm:$0xf]
      %v10790 = vld [vmem:[%s10763 + $0x9c] sm:$0xf]
      %v10791 = vld [vmem:[%s10763 + $0xa0] sm:$0xf]
      %v10792 = vld [vmem:[%s10763 + $0xa8] sm:$0xf]
      %v10793 = vld [vmem:[%s10763 + $0xac] sm:$0xf]
      %v10794 = vld [vmem:[%s10763 + $0xb4] sm:$0xf]
      %v10795 = vld [vmem:[%s10763 + $0xb8] sm:$0xf]
      %v10796 = vld [vmem:[%s10763 + $0x8] sm:$0x1]
      %v10797 = vld [vmem:[%s10763 + $0x14] sm:$0x1]
      %v10798 = vld [vmem:[%s10763 + $0x20] sm:$0x1]
      %v10799 = vld [vmem:[%s10763 + $0x2c] sm:$0x1]
      %v10800 = vld [vmem:[%s10763 + $0x38] sm:$0x1]
      %v10801 = vld [vmem:[%s10763 + $0x44] sm:$0x1]
      %v10802 = vld [vmem:[%s10763 + $0x50] sm:$0x1]
      %v10803 = vld [vmem:[%s10763 + $0x5c] sm:$0x1]
      %v10804 = vld [vmem:[%s10763 + $0x68] sm:$0x1]
      %v10805 = vld [vmem:[%s10763 + $0x74] sm:$0x1]
      %v10806 = vld [vmem:[%s10763 + $0x80] sm:$0x1]
      %v10807 = vld [vmem:[%s10763 + $0x8c] sm:$0x1]
      %v10808 = vld [vmem:[%s10763 + $0x98] sm:$0x1]
      %v10809 = vld [vmem:[%s10763 + $0xa4] sm:$0x1]
      %v10810 = vld [vmem:[%s10763 + $0xb0] sm:$0x1]
      %v10811 = vld [vmem:[%s10763 + $0xbc] sm:$0x1]
      %v10812 = vld [vmem:[%s10763] sm:$0xe]
      %v10813 = vld [vmem:[%s10763 + $0xc] sm:$0xe]
      %v10814 = vld [vmem:[%s10763 + $0x18] sm:$0xe]
      %v10815 = vld [vmem:[%s10763 + $0x24] sm:$0xe]
      %v10816 = vld [vmem:[%s10763 + $0x30] sm:$0xe]
      %v10817 = vld [vmem:[%s10763 + $0x3c] sm:$0xe]
      %v10818 = vld [vmem:[%s10763 + $0x48] sm:$0xe]
      %v10819 = vld [vmem:[%s10763 + $0x54] sm:$0xe]
      %v10820 = vld [vmem:[%s10763 + $0x60] sm:$0xe]
      %v10821 = vld [vmem:[%s10763 + $0x6c] sm:$0xe]
      %v10822 = vld [vmem:[%s10763 + $0x78] sm:$0xe]
      %v10823 = vld [vmem:[%s10763 + $0x84] sm:$0xe]
      %v10824 = vld [vmem:[%s10763 + $0x90] sm:$0xe]
      %v10825 = vld [vmem:[%s10763 + $0x9c] sm:$0xe]
      %v10826 = vld [vmem:[%s10763 + $0xa8] sm:$0xe]
      %v10827 = vld [vmem:[%s10763 + $0xb4] sm:$0xe]
      %v10860 = vunpack.c.l.b16 %v10764
      %v10861 = vunpack.c.l.b16 %v10765
      %v10862 = vunpack.c.l.b16 %v10766
      %v10863 = vunpack.c.l.b16 %v10767
      %v10864 = vunpack.c.l.b16 %v10768
      %v10865 = vunpack.c.l.b16 %v10769
      %v10866 = vunpack.c.l.b16 %v10770
      %v10867 = vunpack.c.l.b16 %v10771
      %v10868 = vunpack.c.l.b16 %v10772
      %v10869 = vunpack.c.l.b16 %v10773
      %v10870 = vunpack.c.l.b16 %v10774
      %v10871 = vunpack.c.l.b16 %v10775
      %v10872 = vunpack.c.l.b16 %v10776
      %v10873 = vunpack.c.l.b16 %v10777
      %v10874 = vunpack.c.l.b16 %v10778
      %v10875 = vunpack.c.l.b16 %v10779
      %v10876 = vunpack.c.l.b16 %v10780
      %v10877 = vunpack.c.l.b16 %v10781
      %v10878 = vunpack.c.l.b16 %v10782
      %v10879 = vunpack.c.l.b16 %v10783
      %v10880 = vunpack.c.l.b16 %v10784
      %v10881 = vunpack.c.l.b16 %v10785
      %v10882 = vunpack.c.l.b16 %v10786
      %v10883 = vunpack.c.l.b16 %v10787
      %v10884 = vunpack.c.l.b16 %v10788
      %v10885 = vunpack.c.l.b16 %v10789
      %v10886 = vunpack.c.l.b16 %v10790
      %v10887 = vunpack.c.l.b16 %v10791
      %v10888 = vunpack.c.l.b16 %v10792
      %v10889 = vunpack.c.l.b16 %v10793
      %v10890 = vunpack.c.l.b16 %v10794
      %v10891 = vunpack.c.l.b16 %v10795
      %v10892 = vpack.c.b16 %v10861, %v10860
      %v10893 = vpack.c.b16 %v10863, %v10862
      %v10894 = vpack.c.b16 %v10865, %v10864
      %v10895 = vpack.c.b16 %v10867, %v10866
      %v10896 = vpack.c.b16 %v10869, %v10868
      %v10897 = vpack.c.b16 %v10871, %v10870
      %v10898 = vpack.c.b16 %v10873, %v10872
      %v10899 = vpack.c.b16 %v10875, %v10874
      %v10900 = vpack.c.b16 %v10877, %v10876
      %v10901 = vpack.c.b16 %v10879, %v10878
      %v10902 = vpack.c.b16 %v10881, %v10880
      %v10903 = vpack.c.b16 %v10883, %v10882
      %v10904 = vpack.c.b16 %v10885, %v10884
      %v10905 = vpack.c.b16 %v10887, %v10886
      %v10906 = vpack.c.b16 %v10889, %v10888
      %v10907 = vpack.c.b16 %v10891, %v10890
      %v10924 = vunpack.c.l.b16 %v10796
      %v10925 = vunpack.c.l.b16 %v10797
      %v10926 = vunpack.c.l.b16 %v10798
      %v10927 = vunpack.c.l.b16 %v10799
      %v10928 = vunpack.c.l.b16 %v10800
      %v10929 = vunpack.c.l.b16 %v10801
      %v10930 = vunpack.c.l.b16 %v10802
      %v10931 = vunpack.c.l.b16 %v10803
      %v10932 = vunpack.c.l.b16 %v10804
      %v10933 = vunpack.c.l.b16 %v10805
      %v10934 = vunpack.c.l.b16 %v10806
      %v10935 = vunpack.c.l.b16 %v10807
      %v10936 = vunpack.c.l.b16 %v10808
      %v10937 = vunpack.c.l.b16 %v10809
      %v10938 = vunpack.c.l.b16 %v10810
      %v10939 = vunpack.c.l.b16 %v10811
      %v10940 = vpack.c.b16 %v10924, %v10924
      %v10941 = vpack.c.b16 %v10925, %v10925
      %v10942 = vpack.c.b16 %v10926, %v10926
      %v10943 = vpack.c.b16 %v10927, %v10927
      %v10944 = vpack.c.b16 %v10928, %v10928
      %v10945 = vpack.c.b16 %v10929, %v10929
      %v10946 = vpack.c.b16 %v10930, %v10930
      %v10947 = vpack.c.b16 %v10931, %v10931
      %v10948 = vpack.c.b16 %v10932, %v10932
      %v10949 = vpack.c.b16 %v10933, %v10933
      %v10950 = vpack.c.b16 %v10934, %v10934
      %v10951 = vpack.c.b16 %v10935, %v10935
      %v10952 = vpack.c.b16 %v10936, %v10936
      %v10953 = vpack.c.b16 %v10937, %v10937
      %v10954 = vpack.c.b16 %v10938, %v10938
      %v10955 = vpack.c.b16 %v10939, %v10939
      %v10957 = vshrl.u32 %v10892, 16
      %v10959 = vshll.u32 %v10892, 16
      %v10961 = vrot.slane %v10959, 1
      %v10962 = vor.u32 %v10957, %v10961
      %v10964 = vshll.u32 %v10940, 16
      %v10966 = vrot.slane %v10964, 1
      %v10967 = vsel %vm3759, %v10962, %v10966
      %v10969 = vshrl.u32 %v10893, 16
      %v10971 = vshll.u32 %v10893, 16
      %v10973 = vrot.slane %v10971, 1
      %v10974 = vor.u32 %v10969, %v10973
      %v10976 = vshll.u32 %v10941, 16
      %v10978 = vrot.slane %v10976, 1
      %v10979 = vsel %vm3759, %v10974, %v10978
      %v10981 = vshrl.u32 %v10894, 16
      %v10983 = vshll.u32 %v10894, 16
      %v10985 = vrot.slane %v10983, 1
      %v10986 = vor.u32 %v10981, %v10985
      %v10988 = vshll.u32 %v10942, 16
      %v10990 = vrot.slane %v10988, 1
      %v10991 = vsel %vm3759, %v10986, %v10990
      %v10993 = vshrl.u32 %v10895, 16
      %v10995 = vshll.u32 %v10895, 16
      %v10997 = vrot.slane %v10995, 1
      %v10998 = vor.u32 %v10993, %v10997
      %v11000 = vshll.u32 %v10943, 16
      %v11002 = vrot.slane %v11000, 1
      %v11003 = vsel %vm3759, %v10998, %v11002
      %v11005 = vshrl.u32 %v10896, 16
      %v11007 = vshll.u32 %v10896, 16
      %v11009 = vrot.slane %v11007, 1
      %v11010 = vor.u32 %v11005, %v11009
      %v11012 = vshll.u32 %v10944, 16
      %v11014 = vrot.slane %v11012, 1
      %v11015 = vsel %vm3759, %v11010, %v11014
      %v11017 = vshrl.u32 %v10897, 16
      %v11019 = vshll.u32 %v10897, 16
      %v11021 = vrot.slane %v11019, 1
      %v11022 = vor.u32 %v11017, %v11021
      %v11024 = vshll.u32 %v10945, 16
      %v11026 = vrot.slane %v11024, 1
      %v11027 = vsel %vm3759, %v11022, %v11026
      %v11029 = vshrl.u32 %v10898, 16
      %v11031 = vshll.u32 %v10898, 16
      %v11033 = vrot.slane %v11031, 1
      %v11034 = vor.u32 %v11029, %v11033
      %v11036 = vshll.u32 %v10946, 16
      %v11038 = vrot.slane %v11036, 1
      %v11039 = vsel %vm3759, %v11034, %v11038
      %v11041 = vshrl.u32 %v10899, 16
      %v11043 = vshll.u32 %v10899, 16
      %v11045 = vrot.slane %v11043, 1
      %v11046 = vor.u32 %v11041, %v11045
      %v11048 = vshll.u32 %v10947, 16
      %v11050 = vrot.slane %v11048, 1
      %v11051 = vsel %vm3759, %v11046, %v11050
      %v11053 = vshrl.u32 %v10900, 16
      %v11055 = vshll.u32 %v10900, 16
      %v11057 = vrot.slane %v11055, 1
      %v11058 = vor.u32 %v11053, %v11057
      %v11060 = vshll.u32 %v10948, 16
      %v11062 = vrot.slane %v11060, 1
      %v11063 = vsel %vm3759, %v11058, %v11062
      %v11065 = vshrl.u32 %v10901, 16
      %v11067 = vshll.u32 %v10901, 16
      %v11069 = vrot.slane %v11067, 1
      %v11070 = vor.u32 %v11065, %v11069
      %v11072 = vshll.u32 %v10949, 16
      %v11074 = vrot.slane %v11072, 1
      %v11075 = vsel %vm3759, %v11070, %v11074
      %v11077 = vshrl.u32 %v10902, 16
      %v11079 = vshll.u32 %v10902, 16
      %v11081 = vrot.slane %v11079, 1
      %v11082 = vor.u32 %v11077, %v11081
      %v11084 = vshll.u32 %v10950, 16
      %v11086 = vrot.slane %v11084, 1
      %v11087 = vsel %vm3759, %v11082, %v11086
      %v11089 = vshrl.u32 %v10903, 16
      %v11091 = vshll.u32 %v10903, 16
      %v11093 = vrot.slane %v11091, 1
      %v11094 = vor.u32 %v11089, %v11093
      %v11096 = vshll.u32 %v10951, 16
      %v11098 = vrot.slane %v11096, 1
      %v11099 = vsel %vm3759, %v11094, %v11098
      %v11101 = vshrl.u32 %v10904, 16
      %v11103 = vshll.u32 %v10904, 16
      %v11105 = vrot.slane %v11103, 1
      %v11106 = vor.u32 %v11101, %v11105
      %v11108 = vshll.u32 %v10952, 16
      %v11110 = vrot.slane %v11108, 1
      %v11111 = vsel %vm3759, %v11106, %v11110
      %v11113 = vshrl.u32 %v10905, 16
      %v11115 = vshll.u32 %v10905, 16
      %v11117 = vrot.slane %v11115, 1
      %v11118 = vor.u32 %v11113, %v11117
      %v11120 = vshll.u32 %v10953, 16
      %v11122 = vrot.slane %v11120, 1
      %v11123 = vsel %vm3759, %v11118, %v11122
      %v11125 = vshrl.u32 %v10906, 16
      %v11127 = vshll.u32 %v10906, 16
      %v11129 = vrot.slane %v11127, 1
      %v11130 = vor.u32 %v11125, %v11129
      %v11132 = vshll.u32 %v10954, 16
      %v11134 = vrot.slane %v11132, 1
      %v11135 = vsel %vm3759, %v11130, %v11134
      %v11137 = vshrl.u32 %v10907, 16
      %v11139 = vshll.u32 %v10907, 16
      %v11141 = vrot.slane %v11139, 1
      %v11142 = vor.u32 %v11137, %v11141
      %v11144 = vshll.u32 %v10955, 16
      %v11146 = vrot.slane %v11144, 1
      %v11147 = vsel %vm3759, %v11142, %v11146
      %11148 = vrot.lane.b32.xlu0 %v10967, 4
      %v11149 = vpop.permute.xlu0 %11148
      %11150 = vrot.lane.b32.xlu0 %v10979, 4
      %v11151 = vpop.permute.xlu0 %11150
      %11152 = vrot.lane.b32.xlu0 %v10991, 4
      %v11153 = vpop.permute.xlu0 %11152
      %11154 = vrot.lane.b32.xlu0 %v11003, 4
      %v11155 = vpop.permute.xlu0 %11154
      %11156 = vrot.lane.b32.xlu0 %v11015, 4
      %v11157 = vpop.permute.xlu0 %11156
      %11158 = vrot.lane.b32.xlu0 %v11027, 4
      %v11159 = vpop.permute.xlu0 %11158
      %11160 = vrot.lane.b32.xlu0 %v11039, 4
      %v11161 = vpop.permute.xlu0 %11160
      %11162 = vrot.lane.b32.xlu0 %v11051, 4
      %v11163 = vpop.permute.xlu0 %11162
      %11164 = vrot.lane.b32.xlu0 %v11063, 4
      %v11165 = vpop.permute.xlu0 %11164
      %11166 = vrot.lane.b32.xlu0 %v11075, 4
      %v11167 = vpop.permute.xlu0 %11166
      %11168 = vrot.lane.b32.xlu0 %v11087, 4
      %v11169 = vpop.permute.xlu0 %11168
      %11170 = vrot.lane.b32.xlu0 %v11099, 4
      %v11171 = vpop.permute.xlu0 %11170
      %11172 = vrot.lane.b32.xlu0 %v11111, 4
      %v11173 = vpop.permute.xlu0 %11172
      %11174 = vrot.lane.b32.xlu0 %v11123, 4
      %v11175 = vpop.permute.xlu0 %11174
      %11176 = vrot.lane.b32.xlu0 %v11135, 4
      %v11177 = vpop.permute.xlu0 %11176
      %11178 = vrot.lane.b32.xlu0 %v11147, 4
      %v11179 = vpop.permute.xlu0 %11178
      %v11196 = vunpack.c.l.b16 %v10812
      %v11197 = vunpack.c.l.b16 %v10813
      %v11198 = vunpack.c.l.b16 %v10814
      %v11199 = vunpack.c.l.b16 %v10815
      %v11200 = vunpack.c.l.b16 %v10816
      %v11201 = vunpack.c.l.b16 %v10817
      %v11202 = vunpack.c.l.b16 %v10818
      %v11203 = vunpack.c.l.b16 %v10819
      %v11204 = vunpack.c.l.b16 %v10820
      %v11205 = vunpack.c.l.b16 %v10821
      %v11206 = vunpack.c.l.b16 %v10822
      %v11207 = vunpack.c.l.b16 %v10823
      %v11208 = vunpack.c.l.b16 %v10824
      %v11209 = vunpack.c.l.b16 %v10825
      %v11210 = vunpack.c.l.b16 %v10826
      %v11211 = vunpack.c.l.b16 %v10827
      %v11212 = vpack.c.b16 %v10861, %v11196
      %v11213 = vpack.c.b16 %v10863, %v11197
      %v11214 = vpack.c.b16 %v10865, %v11198
      %v11215 = vpack.c.b16 %v10867, %v11199
      %v11216 = vpack.c.b16 %v10869, %v11200
      %v11217 = vpack.c.b16 %v10871, %v11201
      %v11218 = vpack.c.b16 %v10873, %v11202
      %v11219 = vpack.c.b16 %v10875, %v11203
      %v11220 = vpack.c.b16 %v10877, %v11204
      %v11221 = vpack.c.b16 %v10879, %v11205
      %v11222 = vpack.c.b16 %v10881, %v11206
      %v11223 = vpack.c.b16 %v10883, %v11207
      %v11224 = vpack.c.b16 %v10885, %v11208
      %v11225 = vpack.c.b16 %v10887, %v11209
      %v11226 = vpack.c.b16 %v10889, %v11210
      %v11227 = vpack.c.b16 %v10891, %v11211
      %v11228 = vrot.slane %v11212, 1
      %v11229 = vrot.slane %v10940, 1
      %v11230 = vsel %vm4032, %v11228, %v11229
      %v11231 = vrot.slane %v11213, 1
      %v11232 = vrot.slane %v10941, 1
      %v11233 = vsel %vm4032, %v11231, %v11232
      %v11234 = vrot.slane %v11214, 1
      %v11235 = vrot.slane %v10942, 1
      %v11236 = vsel %vm4032, %v11234, %v11235
      %v11237 = vrot.slane %v11215, 1
      %v11238 = vrot.slane %v10943, 1
      %v11239 = vsel %vm4032, %v11237, %v11238
      %v11240 = vrot.slane %v11216, 1
      %v11241 = vrot.slane %v10944, 1
      %v11242 = vsel %vm4032, %v11240, %v11241
      %v11243 = vrot.slane %v11217, 1
      %v11244 = vrot.slane %v10945, 1
      %v11245 = vsel %vm4032, %v11243, %v11244
      %v11246 = vrot.slane %v11218, 1
      %v11247 = vrot.slane %v10946, 1
      %v11248 = vsel %vm4032, %v11246, %v11247
      %v11249 = vrot.slane %v11219, 1
      %v11250 = vrot.slane %v10947, 1
      %v11251 = vsel %vm4032, %v11249, %v11250
      %v11252 = vrot.slane %v11220, 1
      %v11253 = vrot.slane %v10948, 1
      %v11254 = vsel %vm4032, %v11252, %v11253
      %v11255 = vrot.slane %v11221, 1
      %v11256 = vrot.slane %v10949, 1
      %v11257 = vsel %vm4032, %v11255, %v11256
      %v11258 = vrot.slane %v11222, 1
      %v11259 = vrot.slane %v10950, 1
      %v11260 = vsel %vm4032, %v11258, %v11259
      %v11261 = vrot.slane %v11223, 1
      %v11262 = vrot.slane %v10951, 1
      %v11263 = vsel %vm4032, %v11261, %v11262
      %v11264 = vrot.slane %v11224, 1
      %v11265 = vrot.slane %v10952, 1
      %v11266 = vsel %vm4032, %v11264, %v11265
      %v11267 = vrot.slane %v11225, 1
      %v11268 = vrot.slane %v10953, 1
      %v11269 = vsel %vm4032, %v11267, %v11268
      %v11270 = vrot.slane %v11226, 1
      %v11271 = vrot.slane %v10954, 1
      %v11272 = vsel %vm4032, %v11270, %v11271
      %v11273 = vrot.slane %v11227, 1
      %v11274 = vrot.slane %v10955, 1
      %v11275 = vsel %vm4032, %v11273, %v11274
      %11276 = vrot.lane.b32.xlu0 %v11230, 8
      %v11277 = vpop.permute.xlu0 %11276
      %11278 = vrot.lane.b32.xlu0 %v11233, 8
      %v11279 = vpop.permute.xlu0 %11278
      %11280 = vrot.lane.b32.xlu0 %v11236, 8
      %v11281 = vpop.permute.xlu0 %11280
      %11282 = vrot.lane.b32.xlu0 %v11239, 8
      %v11283 = vpop.permute.xlu0 %11282
      %11284 = vrot.lane.b32.xlu0 %v11242, 8
      %v11285 = vpop.permute.xlu0 %11284
      %11286 = vrot.lane.b32.xlu0 %v11245, 8
      %v11287 = vpop.permute.xlu0 %11286
      %11288 = vrot.lane.b32.xlu0 %v11248, 8
      %v11289 = vpop.permute.xlu0 %11288
      %11290 = vrot.lane.b32.xlu0 %v11251, 8
      %v11291 = vpop.permute.xlu0 %11290
      %11292 = vrot.lane.b32.xlu0 %v11254, 8
      %v11293 = vpop.permute.xlu0 %11292
      %11294 = vrot.lane.b32.xlu0 %v11257, 8
      %v11295 = vpop.permute.xlu0 %11294
      %11296 = vrot.lane.b32.xlu0 %v11260, 8
      %v11297 = vpop.permute.xlu0 %11296
      %11298 = vrot.lane.b32.xlu0 %v11263, 8
      %v11299 = vpop.permute.xlu0 %11298
      %11300 = vrot.lane.b32.xlu0 %v11266, 8
      %v11301 = vpop.permute.xlu0 %11300
      %11302 = vrot.lane.b32.xlu0 %v11269, 8
      %v11303 = vpop.permute.xlu0 %11302
      %11304 = vrot.lane.b32.xlu0 %v11272, 8
      %v11305 = vpop.permute.xlu0 %11304
      %11306 = vrot.lane.b32.xlu0 %v11275, 8
      %v11307 = vpop.permute.xlu0 %11306
      %v11309 = vsel %vm4113, %v10892, %v11149
      %v11311 = vsel %vm4113, %v10893, %v11151
      %v11313 = vsel %vm4113, %v10894, %v11153
      %v11315 = vsel %vm4113, %v10895, %v11155
      %v11317 = vsel %vm4113, %v10896, %v11157
      %v11319 = vsel %vm4113, %v10897, %v11159
      %v11321 = vsel %vm4113, %v10898, %v11161
      %v11323 = vsel %vm4113, %v10899, %v11163
      %v11325 = vsel %vm4113, %v10900, %v11165
      %v11327 = vsel %vm4113, %v10901, %v11167
      %v11329 = vsel %vm4113, %v10902, %v11169
      %v11331 = vsel %vm4113, %v10903, %v11171
      %v11333 = vsel %vm4113, %v10904, %v11173
      %v11335 = vsel %vm4113, %v10905, %v11175
      %v11337 = vsel %vm4113, %v10906, %v11177
      %v11339 = vsel %vm4113, %v10907, %v11179
      %v11341 = vsel %vm1211, %v11309, %v11277
      %v11343 = vsel %vm1211, %v11311, %v11279
      %v11345 = vsel %vm1211, %v11313, %v11281
      %v11347 = vsel %vm1211, %v11315, %v11283
      %v11349 = vsel %vm1211, %v11317, %v11285
      %v11351 = vsel %vm1211, %v11319, %v11287
      %v11353 = vsel %vm1211, %v11321, %v11289
      %v11355 = vsel %vm1211, %v11323, %v11291
      %v11357 = vsel %vm1211, %v11325, %v11293
      %v11359 = vsel %vm1211, %v11327, %v11295
      %v11361 = vsel %vm1211, %v11329, %v11297
      %v11363 = vsel %vm1211, %v11331, %v11299
      %v11365 = vsel %vm1211, %v11333, %v11301
      %v11367 = vsel %vm1211, %v11335, %v11303
      %v11369 = vsel %vm1211, %v11337, %v11305
      %v11371 = vsel %vm1211, %v11339, %v11307
      %s11372 = scalar_lea.vmem %s7, 16
      %v11373 = vld [vmem:[%s11372] sm:$0xf]
      %v11374 = vld [vmem:[%s11372 + $0x4] sm:$0x3]
      %v11377 = vunpack.c.l.b16 %v11373
      %v11378 = vunpack.c.l.b16 %v11374
      %v11379 = vpack.c.b16 %v11378, %v11377
      %v11380 = vsel %vm4796, %v11341, 0
      %v11382 = vsel %vm4796, %v11343, 0
      %v11384 = vsel %vm4796, %v11345, 0
      %v11386 = vsel %vm4796, %v11347, 0
      %v11388 = vsel %vm4796, %v11349, 0
      %v11390 = vsel %vm4796, %v11351, 0
      %v11392 = vsel %vm4796, %v11353, 0
      %v11394 = vsel %vm4796, %v11355, 0
      %v11396 = vsel %vm4796, %v11357, 0
      %v11398 = vsel %vm4796, %v11359, 0
      %v11400 = vsel %vm4796, %v11361, 0
      %v11402 = vsel %vm4796, %v11363, 0
      %v11404 = vsel %vm4796, %v11365, 0
      %v11406 = vsel %vm4796, %v11367, 0
      %v11408 = vsel %vm4796, %v11369, 0
      %v11410 = vsel %vm4796, %v11371, 0
      %v11413 = vsel %vm4829, %v11379, 0
      %11415 = vmatprep.subr.bf16.mxu0 0
      %11416 = vmatpush1.bf16.msra.mxu0 0
      %11417 = vmatprep.subr.bf16.mxu0 0
      %11418 = vmatpush1.bf16.msra.mxu0 0
      %11419 = vmatprep.subr.bf16.mxu0 0
      %11420 = vmatpush1.bf16.msra.mxu0 0
      %11421 = vmatprep.subr.bf16.mxu0 0
      %11422 = vmatpush1.bf16.msra.mxu0 0
      %11423 = vmatprep.subr.bf16.mxu0 0
      %11424 = vmatpush1.bf16.msra.mxu0 0
      %11425 = vmatprep.subr.bf16.mxu0 0
      %11426 = vmatpush1.bf16.msra.mxu0 0
      %11427 = vmatprep.subr.bf16.mxu0 0
      %11428 = vmatpush1.bf16.msra.mxu0 0
      %11429 = vmatprep.subr.bf16.mxu0 0
      %11430 = vmatpush1.bf16.msra.mxu0 %v11413
      %11431 = vmatprep.subr.bf16.mxu0 0
      %11432 = vmatpush2.bf16.msra.mxu0 0
      %11433 = vmatprep.subr.bf16.mxu0 0
      %11434 = vmatpush2.bf16.msra.mxu0 0
      %11435 = vmatprep.subr.bf16.mxu0 0
      %11436 = vmatpush2.bf16.msra.mxu0 0
      %11437 = vmatprep.subr.bf16.mxu0 0
      %11438 = vmatpush2.bf16.msra.mxu0 0
      %11439 = vmatprep.subr.bf16.mxu0 0
      %11440 = vmatpush2.bf16.msra.mxu0 0
      %11441 = vmatprep.subr.bf16.mxu0 0
      %11442 = vmatpush2.bf16.msra.mxu0 0
      %11443 = vmatprep.subr.bf16.mxu0 0
      %11444 = vmatpush2.bf16.msra.mxu0 0
      %11445 = vmatprep.subr.bf16.mxu0 0
      %11446 = vmatpush2.bf16.msra.mxu0 0
      %11447 = vmatprep.mubr.bf16.mxu0 0
      %11448 = vmatmul.mubr.bf16.gmra.mxu0 %v11380
      %v11449 = vpop.f32.mrf.mxu0
      %v11450 = vadd.f32 0.0, %v11449
      %v11451 = vpop.f32.mrf.mxu0
      %v11452 = vpop.f32.mrf.mxu0
      %v11453 = vadd.f32 0.0, %v11452
      %v11454 = vpop.f32.mrf.mxu0
      %11455 = vmatprep.mubr.bf16.mxu0 0
      %11456 = vmatmul.mubr.bf16.gmra.mxu0 %v11382
      %v11457 = vpop.f32.mrf.mxu0
      %v11458 = vadd.f32 0.0, %v11457
      %v11459 = vpop.f32.mrf.mxu0
      %v11460 = vpop.f32.mrf.mxu0
      %v11461 = vadd.f32 0.0, %v11460
      %v11462 = vpop.f32.mrf.mxu0
      %11463 = vmatprep.mubr.bf16.mxu0 0
      %11464 = vmatmul.mubr.bf16.gmra.mxu0 %v11384
      %v11465 = vpop.f32.mrf.mxu0
      %v11466 = vadd.f32 0.0, %v11465
      %v11467 = vpop.f32.mrf.mxu0
      %v11468 = vpop.f32.mrf.mxu0
      %v11469 = vadd.f32 0.0, %v11468
      %v11470 = vpop.f32.mrf.mxu0
      %11471 = vmatprep.mubr.bf16.mxu0 0
      %11472 = vmatmul.mubr.bf16.gmra.mxu0 %v11386
      %v11473 = vpop.f32.mrf.mxu0
      %v11474 = vadd.f32 0.0, %v11473
      %v11475 = vpop.f32.mrf.mxu0
      %v11476 = vpop.f32.mrf.mxu0
      %v11477 = vadd.f32 0.0, %v11476
      %v11478 = vpop.f32.mrf.mxu0
      %11479 = vmatprep.mubr.bf16.mxu0 0
      %11480 = vmatmul.mubr.bf16.gmra.mxu0 %v11388
      %v11481 = vpop.f32.mrf.mxu0
      %v11482 = vadd.f32 0.0, %v11481
      %v11483 = vpop.f32.mrf.mxu0
      %v11484 = vpop.f32.mrf.mxu0
      %v11485 = vadd.f32 0.0, %v11484
      %v11486 = vpop.f32.mrf.mxu0
      %11487 = vmatprep.mubr.bf16.mxu0 0
      %11488 = vmatmul.mubr.bf16.gmra.mxu0 %v11390
      %v11489 = vpop.f32.mrf.mxu0
      %v11490 = vadd.f32 0.0, %v11489
      %v11491 = vpop.f32.mrf.mxu0
      %v11492 = vpop.f32.mrf.mxu0
      %v11493 = vadd.f32 0.0, %v11492
      %v11494 = vpop.f32.mrf.mxu0
      %11495 = vmatprep.mubr.bf16.mxu0 0
      %11496 = vmatmul.mubr.bf16.gmra.mxu0 %v11392
      %v11497 = vpop.f32.mrf.mxu0
      %v11498 = vadd.f32 0.0, %v11497
      %v11499 = vpop.f32.mrf.mxu0
      %v11500 = vpop.f32.mrf.mxu0
      %v11501 = vadd.f32 0.0, %v11500
      %v11502 = vpop.f32.mrf.mxu0
      %11503 = vmatprep.mubr.bf16.mxu0 0
      %11504 = vmatmul.mubr.bf16.gmra.mxu0 %v11394
      %v11505 = vpop.f32.mrf.mxu0
      %v11506 = vadd.f32 0.0, %v11505
      %v11507 = vpop.f32.mrf.mxu0
      %v11508 = vpop.f32.mrf.mxu0
      %v11509 = vadd.f32 0.0, %v11508
      %v11510 = vpop.f32.mrf.mxu0
      %11511 = vmatprep.mubr.bf16.mxu0 0
      %11512 = vmatmul.mubr.bf16.gmra.mxu0 %v11396
      %v11513 = vpop.f32.mrf.mxu0
      %v11514 = vadd.f32 0.0, %v11513
      %v11515 = vpop.f32.mrf.mxu0
      %v11516 = vpop.f32.mrf.mxu0
      %v11517 = vadd.f32 0.0, %v11516
      %v11518 = vpop.f32.mrf.mxu0
      %11519 = vmatprep.mubr.bf16.mxu0 0
      %11520 = vmatmul.mubr.bf16.gmra.mxu0 %v11398
      %v11521 = vpop.f32.mrf.mxu0
      %v11522 = vadd.f32 0.0, %v11521
      %v11523 = vpop.f32.mrf.mxu0
      %v11524 = vpop.f32.mrf.mxu0
      %v11525 = vadd.f32 0.0, %v11524
      %v11526 = vpop.f32.mrf.mxu0
      %11527 = vmatprep.mubr.bf16.mxu0 0
      %11528 = vmatmul.mubr.bf16.gmra.mxu0 %v11400
      %v11529 = vpop.f32.mrf.mxu0
      %v11530 = vadd.f32 0.0, %v11529
      %v11531 = vpop.f32.mrf.mxu0
      %v11532 = vpop.f32.mrf.mxu0
      %v11533 = vadd.f32 0.0, %v11532
      %v11534 = vpop.f32.mrf.mxu0
      %11535 = vmatprep.mubr.bf16.mxu0 0
      %11536 = vmatmul.mubr.bf16.gmra.mxu0 %v11402
      %v11537 = vpop.f32.mrf.mxu0
      %v11538 = vadd.f32 0.0, %v11537
      %v11539 = vpop.f32.mrf.mxu0
      %v11540 = vpop.f32.mrf.mxu0
      %v11541 = vadd.f32 0.0, %v11540
      %v11542 = vpop.f32.mrf.mxu0
      %11543 = vmatprep.mubr.bf16.mxu0 0
      %11544 = vmatmul.mubr.bf16.gmra.mxu0 %v11404
      %v11545 = vpop.f32.mrf.mxu0
      %v11546 = vadd.f32 0.0, %v11545
      %v11547 = vpop.f32.mrf.mxu0
      %v11548 = vpop.f32.mrf.mxu0
      %v11549 = vadd.f32 0.0, %v11548
      %v11550 = vpop.f32.mrf.mxu0
      %11551 = vmatprep.mubr.bf16.mxu0 0
      %11552 = vmatmul.mubr.bf16.gmra.mxu0 %v11406
      %v11553 = vpop.f32.mrf.mxu0
      %v11554 = vadd.f32 0.0, %v11553
      %v11555 = vpop.f32.mrf.mxu0
      %v11556 = vpop.f32.mrf.mxu0
      %v11557 = vadd.f32 0.0, %v11556
      %v11558 = vpop.f32.mrf.mxu0
      %11559 = vmatprep.mubr.bf16.mxu0 0
      %11560 = vmatmul.mubr.bf16.gmra.mxu0 %v11408
      %v11561 = vpop.f32.mrf.mxu0
      %v11562 = vadd.f32 0.0, %v11561
      %v11563 = vpop.f32.mrf.mxu0
      %v11564 = vpop.f32.mrf.mxu0
      %v11565 = vadd.f32 0.0, %v11564
      %v11566 = vpop.f32.mrf.mxu0
      %11567 = vmatprep.mubr.bf16.mxu0 0
      %11568 = vmatmul.mubr.bf16.gmra.mxu0 %v11410
      %v11569 = vpop.f32.mrf.mxu0
      %v11570 = vadd.f32 0.0, %v11569
      %v11571 = vpop.f32.mrf.mxu0
      %v11572 = vpop.f32.mrf.mxu0
      %v11573 = vadd.f32 0.0, %v11572
      %v11574 = vpop.f32.mrf.mxu0
      %11575 = vdwg.mxu0
      %v11576 = vadd.f32 %v10637, %v11450
      %v11577 = vadd.f32 %v10640, %v11453
      %v11578 = vadd.f32 %v10645, %v11458
      %v11579 = vadd.f32 %v10648, %v11461
      %v11580 = vadd.f32 %v10653, %v11466
      %v11581 = vadd.f32 %v10656, %v11469
      %v11582 = vadd.f32 %v10661, %v11474
      %v11583 = vadd.f32 %v10664, %v11477
      %v11584 = vadd.f32 %v10669, %v11482
      %v11585 = vadd.f32 %v10672, %v11485
      %v11586 = vadd.f32 %v10677, %v11490
      %v11587 = vadd.f32 %v10680, %v11493
      %v11588 = vadd.f32 %v10685, %v11498
      %v11589 = vadd.f32 %v10688, %v11501
      %v11590 = vadd.f32 %v10693, %v11506
      %v11591 = vadd.f32 %v10696, %v11509
      %v11592 = vadd.f32 %v10701, %v11514
      %v11593 = vadd.f32 %v10704, %v11517
      %v11594 = vadd.f32 %v10709, %v11522
      %v11595 = vadd.f32 %v10712, %v11525
      %v11596 = vadd.f32 %v10717, %v11530
      %v11597 = vadd.f32 %v10720, %v11533
      %v11598 = vadd.f32 %v10725, %v11538
      %v11599 = vadd.f32 %v10728, %v11541
      %v11600 = vadd.f32 %v10733, %v11546
      %v11601 = vadd.f32 %v10736, %v11549
      %v11602 = vadd.f32 %v10741, %v11554
      %v11603 = vadd.f32 %v10744, %v11557
      %v11604 = vadd.f32 %v10749, %v11562
      %v11605 = vadd.f32 %v10752, %v11565
      %v11606 = vadd.f32 %v10757, %v11570
      %v11607 = vadd.f32 %v10760, %v11573
      %v11608 = vld [vmem:[%s8] sm:$0x1]
      %v11610 = vlaneseq
      %v11611 = vshrl.u32 %v11610, 7
      %v11612 = vsub.s32 0, %v11611
      %v11613 = vrot.slane %v11608, %v11612
      %v11615 = vadd.f32 %v11576, %v11613
      %v11616 = vadd.f32 %v11577, %v11613
      %v11617 = vadd.f32 %v11578, %v11613
      %v11618 = vadd.f32 %v11579, %v11613
      %v11619 = vadd.f32 %v11580, %v11613
      %v11620 = vadd.f32 %v11581, %v11613
      %v11621 = vadd.f32 %v11582, %v11613
      %v11622 = vadd.f32 %v11583, %v11613
      %v11623 = vadd.f32 %v11584, %v11613
      %v11624 = vadd.f32 %v11585, %v11613
      %v11625 = vadd.f32 %v11586, %v11613
      %v11626 = vadd.f32 %v11587, %v11613
      %v11627 = vadd.f32 %v11588, %v11613
      %v11628 = vadd.f32 %v11589, %v11613
      %v11629 = vadd.f32 %v11590, %v11613
      %v11630 = vadd.f32 %v11591, %v11613
      %v11631 = vadd.f32 %v11592, %v11613
      %v11632 = vadd.f32 %v11593, %v11613
      %v11633 = vadd.f32 %v11594, %v11613
      %v11634 = vadd.f32 %v11595, %v11613
      %v11635 = vadd.f32 %v11596, %v11613
      %v11636 = vadd.f32 %v11597, %v11613
      %v11637 = vadd.f32 %v11598, %v11613
      %v11638 = vadd.f32 %v11599, %v11613
      %v11639 = vadd.f32 %v11600, %v11613
      %v11640 = vadd.f32 %v11601, %v11613
      %v11641 = vadd.f32 %v11602, %v11613
      %v11642 = vadd.f32 %v11603, %v11613
      %v11643 = vadd.f32 %v11604, %v11613
      %v11644 = vadd.f32 %v11605, %v11613
      %v11645 = vadd.f32 %v11606, %v11613
      %v11646 = vadd.f32 %v11607, %v11613
      %v11647 = vmax.f32 %v11615, 0.0
      %v11648 = vmax.f32 %v11616, 0.0
      %v11649 = vmax.f32 %v11617, 0.0
      %v11650 = vmax.f32 %v11618, 0.0
      %v11651 = vmax.f32 %v11619, 0.0
      %v11652 = vmax.f32 %v11620, 0.0
      %v11653 = vmax.f32 %v11621, 0.0
      %v11654 = vmax.f32 %v11622, 0.0
      %v11655 = vmax.f32 %v11623, 0.0
      %v11656 = vmax.f32 %v11624, 0.0
      %v11657 = vmax.f32 %v11625, 0.0
      %v11658 = vmax.f32 %v11626, 0.0
      %v11659 = vmax.f32 %v11627, 0.0
      %v11660 = vmax.f32 %v11628, 0.0
      %v11661 = vmax.f32 %v11629, 0.0
      %v11662 = vmax.f32 %v11630, 0.0
      %v11663 = vmax.f32 %v11631, 0.0
      %v11664 = vmax.f32 %v11632, 0.0
      %v11665 = vmax.f32 %v11633, 0.0
      %v11666 = vmax.f32 %v11634, 0.0
      %v11667 = vmax.f32 %v11635, 0.0
      %v11668 = vmax.f32 %v11636, 0.0
      %v11669 = vmax.f32 %v11637, 0.0
      %v11670 = vmax.f32 %v11638, 0.0
      %v11671 = vmax.f32 %v11639, 0.0
      %v11672 = vmax.f32 %v11640, 0.0
      %v11673 = vmax.f32 %v11641, 0.0
      %v11674 = vmax.f32 %v11642, 0.0
      %v11675 = vmax.f32 %v11643, 0.0
      %v11676 = vmax.f32 %v11644, 0.0
      %v11677 = vmax.f32 %v11645, 0.0
      %v11678 = vmax.f32 %v11646, 0.0
      %v11679 = vpack.c.bf16 %v11648, %v11647
      %v11680 = vpack.c.bf16 %v11650, %v11649
      %v11681 = vpack.c.bf16 %v11652, %v11651
      %v11682 = vpack.c.bf16 %v11654, %v11653
      %v11683 = vpack.c.bf16 %v11656, %v11655
      %v11684 = vpack.c.bf16 %v11658, %v11657
      %v11685 = vpack.c.bf16 %v11660, %v11659
      %v11686 = vpack.c.bf16 %v11662, %v11661
      %v11687 = vpack.c.bf16 %v11664, %v11663
      %v11688 = vpack.c.bf16 %v11666, %v11665
      %v11689 = vpack.c.bf16 %v11668, %v11667
      %v11690 = vpack.c.bf16 %v11670, %v11669
      %v11691 = vpack.c.bf16 %v11672, %v11671
      %v11692 = vpack.c.bf16 %v11674, %v11673
      %v11693 = vpack.c.bf16 %v11676, %v11675
      %v11694 = vpack.c.bf16 %v11678, %v11677
      %v11711 = vunpack.c.l.b16 %v11679
      %v11712 = vunpack.c.h.b16 %v11679
      %v11713 = vunpack.c.l.b16 %v11680
      %v11714 = vunpack.c.h.b16 %v11680
      %v11715 = vunpack.c.l.b16 %v11681
      %v11716 = vunpack.c.h.b16 %v11681
      %v11717 = vunpack.c.l.b16 %v11682
      %v11718 = vunpack.c.h.b16 %v11682
      %v11719 = vunpack.c.l.b16 %v11683
      %v11720 = vunpack.c.h.b16 %v11683
      %v11721 = vunpack.c.l.b16 %v11684
      %v11722 = vunpack.c.h.b16 %v11684
      %v11723 = vunpack.c.l.b16 %v11685
      %v11724 = vunpack.c.h.b16 %v11685
      %v11725 = vunpack.c.l.b16 %v11686
      %v11726 = vunpack.c.h.b16 %v11686
      %v11727 = vunpack.c.l.b16 %v11687
      %v11728 = vunpack.c.h.b16 %v11687
      %v11729 = vunpack.c.l.b16 %v11688
      %v11730 = vunpack.c.h.b16 %v11688
      %v11731 = vunpack.c.l.b16 %v11689
      %v11732 = vunpack.c.h.b16 %v11689
      %v11733 = vunpack.c.l.b16 %v11690
      %v11734 = vunpack.c.h.b16 %v11690
      %v11735 = vunpack.c.l.b16 %v11691
      %v11736 = vunpack.c.h.b16 %v11691
      %v11737 = vunpack.c.l.b16 %v11692
      %v11738 = vunpack.c.h.b16 %v11692
      %v11739 = vunpack.c.l.b16 %v11693
      %v11740 = vunpack.c.h.b16 %v11693
      %v11741 = vunpack.c.l.b16 %v11694
      %v11742 = vunpack.c.h.b16 %v11694
      %v11743 = vpack.c.b16 %v11711, %v11711
      %v11744 = vpack.c.b16 %v11712, %v11712
      %v11745 = vpack.c.b16 %v11713, %v11713
      %v11746 = vpack.c.b16 %v11714, %v11714
      %v11747 = vpack.c.b16 %v11715, %v11715
      %v11748 = vpack.c.b16 %v11716, %v11716
      %v11749 = vpack.c.b16 %v11717, %v11717
      %v11750 = vpack.c.b16 %v11718, %v11718
      %v11751 = vpack.c.b16 %v11719, %v11719
      %v11752 = vpack.c.b16 %v11720, %v11720
      %v11753 = vpack.c.b16 %v11721, %v11721
      %v11754 = vpack.c.b16 %v11722, %v11722
      %v11755 = vpack.c.b16 %v11723, %v11723
      %v11756 = vpack.c.b16 %v11724, %v11724
      %v11757 = vpack.c.b16 %v11725, %v11725
      %v11758 = vpack.c.b16 %v11726, %v11726
      %v11759 = vpack.c.b16 %v11727, %v11727
      %v11760 = vpack.c.b16 %v11728, %v11728
      %v11761 = vpack.c.b16 %v11729, %v11729
      %v11762 = vpack.c.b16 %v11730, %v11730
      %v11763 = vpack.c.b16 %v11731, %v11731
      %v11764 = vpack.c.b16 %v11732, %v11732
      %v11765 = vpack.c.b16 %v11733, %v11733
      %v11766 = vpack.c.b16 %v11734, %v11734
      %v11767 = vpack.c.b16 %v11735, %v11735
      %v11768 = vpack.c.b16 %v11736, %v11736
      %v11769 = vpack.c.b16 %v11737, %v11737
      %v11770 = vpack.c.b16 %v11738, %v11738
      %v11771 = vpack.c.b16 %v11739, %v11739
      %v11772 = vpack.c.b16 %v11740, %v11740
      %v11773 = vpack.c.b16 %v11741, %v11741
      %v11774 = vpack.c.b16 %v11742, %v11742
      %11807 = vst.msk [vmem:[%s352] sm:$0xf] %vm354, %v11743
      %11808 = vst.msk [vmem:[%s352 + $0x4] sm:$0xf] %vm354, %v11744
      %11809 = vst.msk [vmem:[%s352 + $0x8] sm:$0xf] %vm354, %v11745
      %11810 = vst.msk [vmem:[%s352 + $0xc] sm:$0xf] %vm354, %v11746
      %11811 = vst.msk [vmem:[%s352 + $0x10] sm:$0xf] %vm354, %v11747
      %11812 = vst.msk [vmem:[%s352 + $0x14] sm:$0xf] %vm354, %v11748
      %11813 = vst.msk [vmem:[%s352 + $0x18] sm:$0xf] %vm354, %v11749
      %11814 = vst.msk [vmem:[%s352 + $0x1c] sm:$0xf] %vm354, %v11750
      %11815 = vst.msk [vmem:[%s352 + $0x20] sm:$0xf] %vm354, %v11751
      %11816 = vst.msk [vmem:[%s352 + $0x24] sm:$0xf] %vm354, %v11752
      %11817 = vst.msk [vmem:[%s352 + $0x28] sm:$0xf] %vm354, %v11753
      %11818 = vst.msk [vmem:[%s352 + $0x2c] sm:$0xf] %vm354, %v11754
      %11819 = vst.msk [vmem:[%s352 + $0x30] sm:$0xf] %vm354, %v11755
      %11820 = vst.msk [vmem:[%s352 + $0x34] sm:$0xf] %vm354, %v11756
      %11821 = vst.msk [vmem:[%s352 + $0x38] sm:$0xf] %vm354, %v11757
      %11822 = vst.msk [vmem:[%s352 + $0x3c] sm:$0xf] %vm354, %v11758
      %11823 = vst.msk [vmem:[%s352 + $0x40] sm:$0xf] %vm354, %v11759
      %11824 = vst.msk [vmem:[%s352 + $0x44] sm:$0xf] %vm354, %v11760
      %11825 = vst.msk [vmem:[%s352 + $0x48] sm:$0xf] %vm354, %v11761
      %11826 = vst.msk [vmem:[%s352 + $0x4c] sm:$0xf] %vm354, %v11762
      %11827 = vst.msk [vmem:[%s352 + $0x50] sm:$0xf] %vm354, %v11763
      %11828 = vst.msk [vmem:[%s352 + $0x54] sm:$0xf] %vm354, %v11764
      %11829 = vst.msk [vmem:[%s352 + $0x58] sm:$0xf] %vm354, %v11765
      %11830 = vst.msk [vmem:[%s352 + $0x5c] sm:$0xf] %vm354, %v11766
      %11831 = vst.msk [vmem:[%s352 + $0x60] sm:$0xf] %vm354, %v11767
      %11832 = vst.msk [vmem:[%s352 + $0x64] sm:$0xf] %vm354, %v11768
      %11833 = vst.msk [vmem:[%s352 + $0x68] sm:$0xf] %vm354, %v11769
      %11834 = vst.msk [vmem:[%s352 + $0x6c] sm:$0xf] %vm354, %v11770
      %11835 = vst.msk [vmem:[%s352 + $0x70] sm:$0xf] %vm354, %v11771
      %11836 = vst.msk [vmem:[%s352 + $0x74] sm:$0xf] %vm354, %v11772
      %11837 = vst.msk [vmem:[%s352 + $0x78] sm:$0xf] %vm354, %v11773
      %11838 = vst.msk [vmem:[%s352 + $0x7c] sm:$0xf] %vm354, %v11774
      %p11839 = scmp.lt.s32.totalorder %s20, 1
      %s11840 = scalar_select %p11839, %s20, 1
      %s11841 = smul.addr %s11840, 32
      %s11842 = smul.addr %s11841, 4
      %s11843 = scalar_lea.vmem %s9, %s11842
      // Predicated region
      $region57: #{up_forward.1} parent=55 // pred_check
        %p11844 = pneg %p237
      $region58: #{up_forward.1} parent=55 // pred_check_branch
        %11846 = sbr.rel (%p11844) target = $region60
      $region59: #{up_forward.1} parent=55 // pred_region
        _
      $region60: #{up_forward.1} parent=55 // pred_fallthru
        _
    $region56: #{up_forward.1} parent=5 // pred_fallthru
      _
    %p11847 = scmp.le.s32.totalorder 2, %s15
    // Predicated region
    $region61: #{up_forward.1} parent=5 // pred_check
      %p11848 = pneg %p11847
    $region62: #{up_forward.1} parent=5 // pred_check_branch
      %11850 = sbr.rel (%p11848) target = $region64
    $region63: #{up_forward.1} parent=5 // pred_region
      %s11851 = ssub.s32 %s15, 2
      // Predicated region
      $region65: #{up_forward.1} parent=63 // pred_check
        %p11852 = pneg %p243
      $region66: #{up_forward.1} parent=63 // pred_check_branch
        %11854 = sbr.rel (%p11852) target = $region68
      $region67: #{up_forward.1} parent=63 // pred_region
        %p11855 = scmp.lt.s32.totalorder %s21, 1
        %s11856 = scalar_select %p11855, %s21, 1
        %s11857 = smul.addr %s11856, 32
        %s11858 = smul.addr %s11857, 4
        %s11859 = scalar_lea.vmem %s9, %s11858
      $region68: #{up_forward.1} parent=63 // pred_fallthru
        _
    $region64: #{up_forward.1} parent=5 // pred_fallthru
      _
  $region6: #{up_forward.1} parent=0 // loop_footer
    %s19 = sadd.s32 1, %s15
  $region7: #{up_forward.1} parent=0 // loop_footer_branch
    %14 = sbr.rel target = $region3
  $region8: #{up_forward.1} parent=0 // loop_exit
    _

</llo_original>
